<compile_context>
chip_gen: v5e
topology: v5e:2x2
jax: 0.10.0
libtpu: 0.0.40
codegen_flags: <defaults>
</compile_context>

<pallas_src>
import functools

import jax
import jax.numpy as jnp
from jax.experimental import pallas as pl
from jax.experimental.pallas import tpu as pltpu

# Architecture hyper-parameters (the 8x8 bottleneck forces 64x64 input).
NC = 3        # image channels
NGF = 8       # base feature count
NZ = 16       # latent size
FEAT = NGF * 4 * 8 * 8  # 2048
BN_EPS = 1e-5


def _round_up(x, m):
    return ((x + m - 1) // m) * m


# ----------------------------------------------------------------------------
# Pallas matmul kernel (MXU hot path): C = act(A @ B + bias)
# ----------------------------------------------------------------------------
def _matmul_kernel(a_ref, b_ref, bias_ref, o_ref, *, activation):
    acc = jnp.dot(a_ref[...], b_ref[...], preferred_element_type=jnp.float32)
    acc = acc + bias_ref[...]                       # f32 epilogue (v5e-safe)
    if activation == "tanh":
        acc = jnp.tanh(acc)
    elif activation == "relu":
        acc = jnp.maximum(acc, 0.0)
    o_ref[...] = acc.astype(o_ref.dtype)


def pallas_matmul(a, b, bias=None, activation="none"):
    """A:(M,K) @ B:(K,N) (+bias, +activation).  K,N padded to 128, M tiled."""
    M, K = a.shape
    Kb, N = b.shape
    assert K == Kb
    Kp = _round_up(K, 128)
    Np = _round_up(N, 128)

    # Tile selection: big tiles for big M, always >= 2 grid steps (v7x dual-TC).
    if M >= 1024:
        TM = 512
    elif M >= 256:
        TM = 128
    elif M >= 128:
        TM = 64
    else:
        TM = 16
    M_pad = _round_up(M, TM)

    # bf16 MXU operands, zero-padded to aligned shapes.
    a_p = jnp.pad(a.astype(jnp.bfloat16), ((0, M_pad - M), (0, Kp - K)))
    b_p = jnp.pad(b.astype(jnp.bfloat16), ((0, Kp - K), (0, Np - N)))
    if bias is None:
        bias_p = jnp.zeros((1, Np), jnp.float32)
    else:
        bias_p = jnp.pad(bias.astype(jnp.float32).reshape(1, N),
                         ((0, 0), (0, Np - N)))

    out = pl.pallas_call(
        functools.partial(_matmul_kernel, activation=activation),
        out_shape=jax.ShapeDtypeStruct((M_pad, Np), jnp.float32),
        grid=(M_pad // TM,),
        in_specs=[
            pl.BlockSpec((TM, Kp), lambda i: (i, 0)),
            pl.BlockSpec((Kp, Np), lambda i: (0, 0)),
            pl.BlockSpec((1, Np), lambda i: (0, 0)),
        ],
        out_specs=pl.BlockSpec((TM, Np), lambda i: (i, 0)),
        compiler_params=pltpu.CompilerParams(dimension_semantics=("parallel",)),
    )(a_p, b_p, bias_p)
    return out[:M, :N]


# ----------------------------------------------------------------------------
# Fused encoder-FC / BatchNorm1d / _Sampler / decoder-FC kernel (one launch).
# ----------------------------------------------------------------------------
def _fc_sampler_kernel(hf_ref, w1_ref, b1_ref, g1_ref, be1_ref,
                       wm_ref, bm_ref,
                       w2_ref, b2_ref, g2_ref, be2_ref,
                       wl_ref, bl_ref,
                       eps_ref,
                       wd_ref, bd_ref, gd_ref, bed_ref,
                       o_ref):
    hf = hf_ref[...]                                  # (B, FEAT) f32

    def bn(x, g, b):                                  # PyTorch training-mode BN
        m = jnp.mean(x, axis=0, keepdims=True)
        v = jnp.mean(jnp.square(x - m), axis=0, keepdims=True)   # biased var
        return (x - m) * jax.lax.rsqrt(v + BN_EPS) * g + b

    x1 = jnp.dot(hf, w1_ref[...], preferred_element_type=jnp.float32) + b1_ref[...]
    x1 = bn(x1, g1_ref[...], be1_ref[...])
    mu = jnp.dot(x1, wm_ref[...], preferred_element_type=jnp.float32) + bm_ref[...]

    x2 = jnp.dot(hf, w2_ref[...], preferred_element_type=jnp.float32) + b2_ref[...]
    x2 = bn(x2, g2_ref[...], be2_ref[...])
    logvar = jnp.dot(x2, wl_ref[...], preferred_element_type=jnp.float32) + bl_ref[...]

    # _Sampler.forward: std = exp(0.5*logvar); z = eps*std + mu
    z = eps_ref[...] * jnp.exp(0.5 * logvar) + mu

    h = jnp.dot(z, wd_ref[...], preferred_element_type=jnp.float32) + bd_ref[...]
    h = bn(h, gd_ref[...], bed_ref[...])
    o_ref[...] = jnp.maximum(h, 0.0).astype(o_ref.dtype)      # decoder BN + ReLU


def fused_fc_sampler(hf, eps, p):
    """(B, FEAT) encoder features + (B, NZ) noise -> (B, FEAT) decoder features."""
    B = hf.shape[0]
    r = lambda v: v.astype(jnp.float32).reshape(1, -1)
    f = lambda v: v.astype(jnp.float32)
    args = [
        f(hf),
        f(p["e_fc1_w"]), r(p["e_fc1_b"]), r(p["e_bn1_g"]), r(p["e_bn1_b"]),
        f(p["e_mean_w"]), r(p["e_mean_b"]),
        f(p["e_fc2_w"]), r(p["e_fc2_b"]), r(p["e_bn2_g"]), r(p["e_bn2_b"]),
        f(p["e_lv_w"]), r(p["e_lv_b"]),
        f(eps),
        f(p["d_fc1_w"]), r(p["d_fc1_b"]), r(p["d_bn1_g"]), r(p["d_bn1_b"]),
    ]
    in_specs = [pl.BlockSpec(a.shape, lambda i: (0, 0)) for a in args]
    return pl.pallas_call(
        _fc_sampler_kernel,
        out_shape=jax.ShapeDtypeStruct((B, FEAT), jnp.float32),
        grid=(1,),
        in_specs=in_specs,
        out_specs=pl.BlockSpec((B, FEAT), lambda i: (0, 0)),
    )(*args)


# ----------------------------------------------------------------------------
# Conv / ConvTranspose wrappers (NHWC, FLOPs in pallas_matmul)
# ----------------------------------------------------------------------------
def _im2col_nhwc(x, k, stride, pad):
    """x: (B,H,W,C) -> (B*OH*OW, k*k*C) with (ki,kj,c) column ordering."""
    B, H, W, C = x.shape
    xp = jnp.pad(x, ((0, 0), (pad, pad), (pad, pad), (0, 0)))
    OH = (H + 2 * pad - k) // stride + 1
    OW = (W + 2 * pad - k) // stride + 1
    patches = []
    for i in range(k):
        for j in range(k):
            patches.append(xp[:, i:i + stride * OH:stride, j:j + stride * OW:stride, :])
    p = jnp.stack(patches, axis=3)                 # (B, OH, OW, k*k, C)
    return p.reshape(B * OH * OW, k * k * C), OH, OW


def conv2d_nhwc(x, w, stride, pad, activation="none"):
    """PyTorch Conv2d (bias=False). x NHWC, w: (OC, IC, k, k)."""
    OC, IC, k, _ = w.shape
    B = x.shape[0]
    cols, OH, OW = _im2col_nhwc(x, k, stride, pad)
    wmat = jnp.transpose(w, (2, 3, 1, 0)).reshape(k * k * IC, OC)   # (ki,kj,ic) x OC
    out = pallas_matmul(cols, wmat, activation=activation)
    return out.reshape(B, OH, OW, OC)


def conv_transpose2d_nhwc(x, w, stride, pad, output_padding, activation="none"):
    """PyTorch ConvTranspose2d (bias=False). x NHWC, w: (IC, OC, k, k)."""
    IC, OC, k, _ = w.shape
    if stride == 1:
        # stride-1 deconv == conv with flipped kernel; activation fused in epilogue.
        assert output_padding == 0
        wc = jnp.flip(w, axis=(2, 3)).transpose(1, 0, 2, 3)        # (OC, IC, k, k)
        return conv2d_nhwc(x, wc, stride=1, pad=k - 1 - pad, activation=activation)

    # stride > 1: lane-dense matmul x @ W(IC, OC*k*k), then col2im scatter-add.
    assert activation == "none"
    B, H, W, _ = x.shape
    wmat = w.reshape(IC, OC * k * k)
    y = pallas_matmul(x.reshape(B * H * W, IC), wmat)              # (B*H*W, OC*k*k)
    y = y.reshape(B, H, W, OC, k, k)
    Hfull = (H - 1) * stride + k
    Wfull = (W - 1) * stride + k
    out = jnp.zeros((B, Hfull, Wfull, OC), jnp.float32)
    for ki in range(k):
        for kj in range(k):
            out = out.at[:, ki:ki + (H - 1) * stride + 1:stride,
                            kj:kj + (W - 1) * stride + 1:stride, :].add(y[..., ki, kj])
    OH = (H - 1) * stride - 2 * pad + k + output_padding
    OW = (W - 1) * stride - 2 * pad + k + output_padding
    return out[:, pad:pad + OH, pad:pad + OW, :]


# ----------------------------------------------------------------------------
# Parameters (deterministic synthetic init; FC weights stored pre-transposed
# as (in_features, out_features)) and forward pass
# ----------------------------------------------------------------------------
def init_params(key):
    ks = jax.random.split(key, 18)
    n = lambda k, shape, s=0.05: s * jax.random.normal(k, shape, jnp.float32)
    p = {}
    # Encoder convs (PyTorch Conv2d layout (OC, IC, k, k))
    p["e_conv1"] = n(ks[0], (NGF, NC, 5, 5))
    p["e_conv2"] = n(ks[1], (NGF * 2, NGF, 5, 5))
    p["e_conv3"] = n(ks[2], (NGF * 4, NGF * 2, 5, 5))
    # Encoder FC heads (pre-transposed: (in, out))
    p["e_fc1_w"] = n(ks[3], (FEAT, NZ)); p["e_fc1_b"] = n(ks[4], (NZ,))
    p["e_bn1_g"] = jnp.ones((NZ,), jnp.float32); p["e_bn1_b"] = jnp.zeros((NZ,), jnp.float32)
    p["e_mean_w"] = n(ks[5], (NZ, NZ)); p["e_mean_b"] = n(ks[6], (NZ,))
    p["e_fc2_w"] = n(ks[7], (FEAT, NZ)); p["e_fc2_b"] = n(ks[8], (NZ,))
    p["e_bn2_g"] = jnp.ones((NZ,), jnp.float32); p["e_bn2_b"] = jnp.zeros((NZ,), jnp.float32)
    p["e_lv_w"] = n(ks[9], (NZ, NZ)); p["e_lv_b"] = n(ks[10], (NZ,))
    # Decoder FC (pre-transposed) + BN
    p["d_fc1_w"] = n(ks[11], (NZ, FEAT)); p["d_fc1_b"] = n(ks[12], (FEAT,))
    p["d_bn1_g"] = jnp.ones((FEAT,), jnp.float32); p["d_bn1_b"] = jnp.zeros((FEAT,), jnp.float32)
    # Decoder deconvs (PyTorch ConvTranspose2d layout (IC, OC, k, k))
    p["d_dc1"] = n(ks[13], (NGF * 4, NGF * 4, 5, 5))
    p["d_dc2"] = n(ks[14], (NGF * 4, NGF * 2, 5, 5))
    p["d_dc3"] = n(ks[15], (NGF * 2, int(NGF * 0.5), 5, 5))
    p["d_dc4"] = n(ks[16], (int(NGF * 0.5), NC, 5, 5))
    return p


def netG_forward(params, x, eps):
    """x: (B, NC, 64, 64) NCHW; eps: (B, NZ) reparameterization noise."""
    B = x.shape[0]
    # ---- Encoder (NHWC inside) ----
    h = jnp.transpose(x, (0, 2, 3, 1))                               # NCHW -> NHWC (once)
    h = conv2d_nhwc(h, params["e_conv1"], 2, 2)                      # (B, 32, 32, NGF)
    h = conv2d_nhwc(h, params["e_conv2"], 2, 2)                      # (B, 16, 16, 2NGF)
    h = conv2d_nhwc(h, params["e_conv3"], 2, 2)                      # (B,  8,  8, 4NGF)
    hf = jnp.transpose(h, (0, 3, 1, 2)).reshape(B, FEAT)             # torch .view parity (C,H,W)
    # ---- Fused FC1/FC2 + BN + mean/logvar heads + _Sampler + decoder FC + BN/ReLU ----
    h = fused_fc_sampler(hf, eps, params)                            # (B, FEAT)
    # ---- Decoder (NHWC inside) ----
    h = h.reshape(B, NGF * 4, 8, 8).transpose(0, 2, 3, 1)            # NCHW -> NHWC (once)
    h = conv_transpose2d_nhwc(h, params["d_dc1"], 2, 2, 1)           # (B, 16, 16, 4NGF)
    h = conv_transpose2d_nhwc(h, params["d_dc2"], 2, 2, 1)           # (B, 32, 32, 2NGF)
    h = conv_transpose2d_nhwc(h, params["d_dc3"], 2, 2, 1)           # (B, 64, 64, NGF/2)
    h = conv_transpose2d_nhwc(h, params["d_dc4"], 1, 2, 0, "tanh")   # (B, 64, 64, NC)
    return jnp.transpose(h, (0, 3, 1, 2))                            # NHWC -> NCHW (once)


if __name__ == "__main__":
    key = jax.random.PRNGKey(0)
    k_par, k_x, k_eps = jax.random.split(key, 3)
    params = init_params(k_par)
    # spatial must be 64x64 so the encoder bottleneck is 8x8 (fc shapes imply it)
    x = jax.random.normal(k_x, (2, NC, 64, 64), jnp.float32)
    eps = jax.random.normal(k_eps, (2, NZ), jnp.float32)

    out = jax.jit(netG_forward)(params, x, eps)
    out = jax.block_until_ready(out)
    assert out.shape == (2, NC, 64, 64)
    assert bool(jnp.all(jnp.isfinite(out)))
    print("KERNEL_OK")
</pallas_src>

<mosaic_0001>
module attributes {stable_mosaic.version = 11 : i64} {
  func.func @_matmul_kernel(%arg0: i32, %arg1: memref<512x128xbf16, #tpu.memory_space<vmem>>, %arg2: memref<128x128xbf16, #tpu.memory_space<vmem>>, %arg3: memref<1x128xf32, #tpu.memory_space<vmem>>, %arg4: memref<512x128xf32, #tpu.memory_space<vmem>>) attributes {dimension_semantics = [#tpu.dimension_semantics<parallel>], iteration_bounds = array<i64: 4>, scalar_prefetch = 0 : i64, scratch_operands = 0 : i64, tpu.core_type = #tpu.core_type<tc>, window_params = [{transform_indices = @transform_0, window_bounds = array<i64: 512, 128>}, {pipeline_mode = #tpu.pipeline_mode<synchronous>, transform_indices = @transform_1, window_bounds = array<i64: 128, 128>}, {pipeline_mode = #tpu.pipeline_mode<synchronous>, transform_indices = @transform_2, window_bounds = array<i64: 1, 128>}, {transform_indices = @transform_3, window_bounds = array<i64: 512, 128>}]} {
    %c0 = arith.constant 0 : index
    %c0_0 = arith.constant 0 : index
    %0 = vector.load %arg1[%c0, %c0_0] : memref<512x128xbf16, #tpu.memory_space<vmem>>, vector<512x128xbf16>
    %c0_1 = arith.constant 0 : index
    %c0_2 = arith.constant 0 : index
    %1 = vector.load %arg2[%c0_1, %c0_2] : memref<128x128xbf16, #tpu.memory_space<vmem>>, vector<128x128xbf16>
    %cst = arith.constant dense<0.000000e+00> : vector<512x128xf32>
    %2 = tpu.matmul %0, %1, %cst {dimension_numbers = #tpu.dot_dimension_numbers<[1], [0], [0], [1], [0, 0, 1, 1], [], []>} : vector<512x128xbf16>, vector<128x128xbf16>, vector<512x128xf32> -> vector<512x128xf32>
    %c0_3 = arith.constant 0 : index
    %c0_4 = arith.constant 0 : index
    %3 = vector.load %arg3[%c0_3, %c0_4] : memref<1x128xf32, #tpu.memory_space<vmem>>, vector<1x128xf32>
    %4 = vector.broadcast %3 : vector<1x128xf32> to vector<512x128xf32>
    %5 = arith.addf %2, %4 : vector<512x128xf32>
    %c0_5 = arith.constant 0 : index
    %c0_6 = arith.constant 0 : index
    %6 = vector.load %arg4[%c0_5, %c0_6] : memref<512x128xf32, #tpu.memory_space<vmem>>, vector<512x128xf32>
    tpu.vector_store %arg4[%c0_5, %c0_6], %5 {strides = array<i32>} : memref<512x128xf32, #tpu.memory_space<vmem>>, vector<512x128xf32>,
    return
  }
  func.func @transform_0(%arg0: i32) -> (i32, i32) {
    %c0_i32 = arith.constant 0 : i32
    %c0_i32_0 = arith.constant 0 : i32
    return %arg0, %c0_i32 : i32, i32
  }
  func.func @transform_1(%arg0: i32) -> (i32, i32) {
    %c0_i32 = arith.constant 0 : i32
    %c0_i32_0 = arith.constant 0 : i32
    %c0_i32_1 = arith.constant 0 : i32
    return %c0_i32, %c0_i32_0 : i32, i32
  }
  func.func @transform_2(%arg0: i32) -> (i32, i32) {
    %c0_i32 = arith.constant 0 : i32
    %c0_i32_0 = arith.constant 0 : i32
    %c0_i32_1 = arith.constant 0 : i32
    return %c0_i32, %c0_i32_0 : i32, i32
  }
  func.func @transform_3(%arg0: i32) -> (i32, i32) {
    %c0_i32 = arith.constant 0 : i32
    %c0_i32_0 = arith.constant 0 : i32
    return %arg0, %c0_i32 : i32, i32
  }
}

module attributes {stable_mosaic.version = 11 : i64} {
  func.func @_matmul_kernel(%arg0: i32, %arg1: memref<128x256xbf16, #tpu.memory_space<vmem>>, %arg2: memref<256x128xbf16, #tpu.memory_space<vmem>>, %arg3: memref<1x128xf32, #tpu.memory_space<vmem>>, %arg4: memref<128x128xf32, #tpu.memory_space<vmem>>) attributes {dimension_semantics = [#tpu.dimension_semantics<parallel>], iteration_bounds = array<i64: 4>, scalar_prefetch = 0 : i64, scratch_operands = 0 : i64, tpu.core_type = #tpu.core_type<tc>, window_params = [{transform_indices = @transform_0, window_bounds = array<i64: 128, 256>}, {pipeline_mode = #tpu.pipeline_mode<synchronous>, transform_indices = @transform_1, window_bounds = array<i64: 256, 128>}, {pipeline_mode = #tpu.pipeline_mode<synchronous>, transform_indices = @transform_2, window_bounds = array<i64: 1, 128>}, {transform_indices = @transform_3, window_bounds = array<i64: 128, 128>}]} {
    %c0 = arith.constant 0 : index
    %c0_0 = arith.constant 0 : index
    %0 = vector.load %arg1[%c0, %c0_0] : memref<128x256xbf16, #tpu.memory_space<vmem>>, vector<128x256xbf16>
    %c0_1 = arith.constant 0 : index
    %c0_2 = arith.constant 0 : index
    %1 = vector.load %arg2[%c0_1, %c0_2] : memref<256x128xbf16, #tpu.memory_space<vmem>>, vector<256x128xbf16>
    %cst = arith.constant dense<0.000000e+00> : vector<128x128xf32>
    %2 = tpu.matmul %0, %1, %cst {dimension_numbers = #tpu.dot_dimension_numbers<[1], [0], [0], [1], [0, 0, 1, 1], [], []>} : vector<128x256xbf16>, vector<256x128xbf16>, vector<128x128xf32> -> vector<128x128xf32>
    %c0_3 = arith.constant 0 : index
    %c0_4 = arith.constant 0 : index
    %3 = vector.load %arg3[%c0_3, %c0_4] : memref<1x128xf32, #tpu.memory_space<vmem>>, vector<1x128xf32>
    %4 = vector.broadcast %3 : vector<1x128xf32> to vector<128x128xf32>
    %5 = arith.addf %2, %4 : vector<128x128xf32>
    %c0_5 = arith.constant 0 : index
    %c0_6 = arith.constant 0 : index
    %6 = vector.load %arg4[%c0_5, %c0_6] : memref<128x128xf32, #tpu.memory_space<vmem>>, vector<128x128xf32>
    tpu.vector_store %arg4[%c0_5, %c0_6], %5 {strides = array<i32>} : memref<128x128xf32, #tpu.memory_space<vmem>>, vector<128x128xf32>,
    return
  }
  func.func @transform_0(%arg0: i32) -> (i32, i32) {
    %c0_i32 = arith.constant 0 : i32
    %c0_i32_0 = arith.constant 0 : i32
    return %arg0, %c0_i32 : i32, i32
  }
  func.func @transform_1(%arg0: i32) -> (i32, i32) {
    %c0_i32 = arith.constant 0 : i32
    %c0_i32_0 = arith.constant 0 : i32
    %c0_i32_1 = arith.constant 0 : i32
    return %c0_i32, %c0_i32_0 : i32, i32
  }
  func.func @transform_2(%arg0: i32) -> (i32, i32) {
    %c0_i32 = arith.constant 0 : i32
    %c0_i32_0 = arith.constant 0 : i32
    %c0_i32_1 = arith.constant 0 : i32
    return %c0_i32, %c0_i32_0 : i32, i32
  }
  func.func @transform_3(%arg0: i32) -> (i32, i32) {
    %c0_i32 = arith.constant 0 : i32
    %c0_i32_0 = arith.constant 0 : i32
    return %arg0, %c0_i32 : i32, i32
  }
}

module attributes {stable_mosaic.version = 11 : i64} {
  func.func @_matmul_kernel(%arg0: i32, %arg1: memref<64x512xbf16, #tpu.memory_space<vmem>>, %arg2: memref<512x128xbf16, #tpu.memory_space<vmem>>, %arg3: memref<1x128xf32, #tpu.memory_space<vmem>>, %arg4: memref<64x128xf32, #tpu.memory_space<vmem>>) attributes {dimension_semantics = [#tpu.dimension_semantics<parallel>], iteration_bounds = array<i64: 2>, scalar_prefetch = 0 : i64, scratch_operands = 0 : i64, tpu.core_type = #tpu.core_type<tc>, window_params = [{transform_indices = @transform_0, window_bounds = array<i64: 64, 512>}, {pipeline_mode = #tpu.pipeline_mode<synchronous>, transform_indices = @transform_1, window_bounds = array<i64: 512, 128>}, {pipeline_mode = #tpu.pipeline_mode<synchronous>, transform_indices = @transform_2, window_bounds = array<i64: 1, 128>}, {transform_indices = @transform_3, window_bounds = array<i64: 64, 128>}]} {
    %c0 = arith.constant 0 : index
    %c0_0 = arith.constant 0 : index
    %0 = vector.load %arg1[%c0, %c0_0] : memref<64x512xbf16, #tpu.memory_space<vmem>>, vector<64x512xbf16>
    %c0_1 = arith.constant 0 : index
    %c0_2 = arith.constant 0 : index
    %1 = vector.load %arg2[%c0_1, %c0_2] : memref<512x128xbf16, #tpu.memory_space<vmem>>, vector<512x128xbf16>
    %cst = arith.constant dense<0.000000e+00> : vector<64x128xf32>
    %2 = tpu.matmul %0, %1, %cst {dimension_numbers = #tpu.dot_dimension_numbers<[1], [0], [0], [1], [0, 0, 1, 1], [], []>} : vector<64x512xbf16>, vector<512x128xbf16>, vector<64x128xf32> -> vector<64x128xf32>
    %c0_3 = arith.constant 0 : index
    %c0_4 = arith.constant 0 : index
    %3 = vector.load %arg3[%c0_3, %c0_4] : memref<1x128xf32, #tpu.memory_space<vmem>>, vector<1x128xf32>
    %4 = vector.broadcast %3 : vector<1x128xf32> to vector<64x128xf32>
    %5 = arith.addf %2, %4 : vector<64x128xf32>
    %c0_5 = arith.constant 0 : index
    %c0_6 = arith.constant 0 : index
    %6 = vector.load %arg4[%c0_5, %c0_6] : memref<64x128xf32, #tpu.memory_space<vmem>>, vector<64x128xf32>
    tpu.vector_store %arg4[%c0_5, %c0_6], %5 {strides = array<i32>} : memref<64x128xf32, #tpu.memory_space<vmem>>, vector<64x128xf32>,
    return
  }
  func.func @transform_0(%arg0: i32) -> (i32, i32) {
    %c0_i32 = arith.constant 0 : i32
    %c0_i32_0 = arith.constant 0 : i32
    return %arg0, %c0_i32 : i32, i32
  }
  func.func @transform_1(%arg0: i32) -> (i32, i32) {
    %c0_i32 = arith.constant 0 : i32
    %c0_i32_0 = arith.constant 0 : i32
    %c0_i32_1 = arith.constant 0 : i32
    return %c0_i32, %c0_i32_0 : i32, i32
  }
  func.func @transform_2(%arg0: i32) -> (i32, i32) {
    %c0_i32 = arith.constant 0 : i32
    %c0_i32_0 = arith.constant 0 : i32
    %c0_i32_1 = arith.constant 0 : i32
    return %c0_i32, %c0_i32_0 : i32, i32
  }
  func.func @transform_3(%arg0: i32) -> (i32, i32) {
    %c0_i32 = arith.constant 0 : i32
    %c0_i32_0 = arith.constant 0 : i32
    return %arg0, %c0_i32 : i32, i32
  }
}

module attributes {stable_mosaic.version = 11 : i64} {
  func.func @_fc_sampler_kernel(%arg0: i32, %arg1: memref<2x2048xf32, #tpu.memory_space<vmem>>, %arg2: memref<2048x16xf32, #tpu.memory_space<vmem>>, %arg3: memref<1x16xf32, #tpu.memory_space<vmem>>, %arg4: memref<1x16xf32, #tpu.memory_space<vmem>>, %arg5: memref<1x16xf32, #tpu.memory_space<vmem>>, %arg6: memref<16x16xf32, #tpu.memory_space<vmem>>, %arg7: memref<1x16xf32, #tpu.memory_space<vmem>>, %arg8: memref<2048x16xf32, #tpu.memory_space<vmem>>, %arg9: memref<1x16xf32, #tpu.memory_space<vmem>>, %arg10: memref<1x16xf32, #tpu.memory_space<vmem>>, %arg11: memref<1x16xf32, #tpu.memory_space<vmem>>, %arg12: memref<16x16xf32, #tpu.memory_space<vmem>>, %arg13: memref<1x16xf32, #tpu.memory_space<vmem>>, %arg14: memref<2x16xf32, #tpu.memory_space<vmem>>, %arg15: memref<16x2048xf32, #tpu.memory_space<vmem>>, %arg16: memref<1x2048xf32, #tpu.memory_space<vmem>>, %arg17: memref<1x2048xf32, #tpu.memory_space<vmem>>, %arg18: memref<1x2048xf32, #tpu.memory_space<vmem>>, %arg19: memref<2x2048xf32, #tpu.memory_space<vmem>>) attributes {dimension_semantics = [#tpu.dimension_semantics<arbitrary>], iteration_bounds = array<i64: 1>, scalar_prefetch = 0 : i64, scratch_operands = 0 : i64, tpu.core_type = #tpu.core_type<tc>, window_params = [{pipeline_mode = #tpu.pipeline_mode<synchronous>, transform_indices = @transform_0, window_bounds = array<i64: 2, 2048>}, {pipeline_mode = #tpu.pipeline_mode<synchronous>, transform_indices = @transform_1, window_bounds = array<i64: 2048, 16>}, {pipeline_mode = #tpu.pipeline_mode<synchronous>, transform_indices = @transform_2, window_bounds = array<i64: 1, 16>}, {pipeline_mode = #tpu.pipeline_mode<synchronous>, transform_indices = @transform_3, window_bounds = array<i64: 1, 16>}, {pipeline_mode = #tpu.pipeline_mode<synchronous>, transform_indices = @transform_4, window_bounds = array<i64: 1, 16>}, {pipeline_mode = #tpu.pipeline_mode<synchronous>, transform_indices = @transform_5, window_bounds = array<i64: 16, 16>}, {pipeline_mode = #tpu.pipeline_mode<synchronous>, transform_indices = @transform_6, window_bounds = array<i64: 1, 16>}, {pipeline_mode = #tpu.pipeline_mode<synchronous>, transform_indices = @transform_7, window_bounds = array<i64: 2048, 16>}, {pipeline_mode = #tpu.pipeline_mode<synchronous>, transform_indices = @transform_8, window_bounds = array<i64: 1, 16>}, {pipeline_mode = #tpu.pipeline_mode<synchronous>, transform_indices = @transform_9, window_bounds = array<i64: 1, 16>}, {pipeline_mode = #tpu.pipeline_mode<synchronous>, transform_indices = @transform_10, window_bounds = array<i64: 1, 16>}, {pipeline_mode = #tpu.pipeline_mode<synchronous>, transform_indices = @transform_11, window_bounds = array<i64: 16, 16>}, {pipeline_mode = #tpu.pipeline_mode<synchronous>, transform_indices = @transform_12, window_bounds = array<i64: 1, 16>}, {pipeline_mode = #tpu.pipeline_mode<synchronous>, transform_indices = @transform_13, window_bounds = array<i64: 2, 16>}, {pipeline_mode = #tpu.pipeline_mode<synchronous>, transform_indices = @transform_14, window_bounds = array<i64: 16, 2048>}, {pipeline_mode = #tpu.pipeline_mode<synchronous>, transform_indices = @transform_15, window_bounds = array<i64: 1, 2048>}, {pipeline_mode = #tpu.pipeline_mode<synchronous>, transform_indices = @transform_16, window_bounds = array<i64: 1, 2048>}, {pipeline_mode = #tpu.pipeline_mode<synchronous>, transform_indices = @transform_17, window_bounds = array<i64: 1, 2048>}, {pipeline_mode = #tpu.pipeline_mode<synchronous>, transform_indices = @transform_18, window_bounds = array<i64: 2, 2048>}]} {
    %c0 = arith.constant 0 : index
    %c0_0 = arith.constant 0 : index
    %0 = vector.load %arg1[%c0, %c0_0] : memref<2x2048xf32, #tpu.memory_space<vmem>>, vector<2x2048xf32>
    %c0_1 = arith.constant 0 : index
    %c0_2 = arith.constant 0 : index
    %1 = vector.load %arg2[%c0_1, %c0_2] : memref<2048x16xf32, #tpu.memory_space<vmem>>, vector<2048x16xf32>
    %cst = arith.constant dense<0.000000e+00> : vector<2x16xf32>
    %2 = tpu.matmul %0, %1, %cst {dimension_numbers = #tpu.dot_dimension_numbers<[1], [0], [0], [1], [0, 0, 1, 1], [], []>} : vector<2x2048xf32>, vector<2048x16xf32>, vector<2x16xf32> -> vector<2x16xf32>
    %c0_3 = arith.constant 0 : index
    %c0_4 = arith.constant 0 : index
    %3 = vector.load %arg3[%c0_3, %c0_4] : memref<1x16xf32, #tpu.memory_space<vmem>>, vector<1x16xf32>
    %4 = vector.broadcast %3 : vector<1x16xf32> to vector<2x16xf32>
    %5 = arith.addf %2, %4 : vector<2x16xf32>
    %c0_5 = arith.constant 0 : index
    %c0_6 = arith.constant 0 : index
    %6 = vector.load %arg4[%c0_5, %c0_6] : memref<1x16xf32, #tpu.memory_space<vmem>>, vector<1x16xf32>
    %c0_7 = arith.constant 0 : index
    %c0_8 = arith.constant 0 : index
    %7 = vector.load %arg5[%c0_7, %c0_8] : memref<1x16xf32, #tpu.memory_space<vmem>>, vector<1x16xf32>
    %cst_9 = arith.constant dense<0.000000e+00> : vector<16xf32>
    %8 = vector.multi_reduction <add>, %5, %cst_9 [0] : vector<2x16xf32> to vector<16xf32>
    %9 = vector.shape_cast %8 : vector<16xf32> to vector<1x16xf32>
    %cst_10 = arith.constant 2.000000e+00 : f32
    %10 = vector.broadcast %cst_10 : f32 to vector<1x16xf32>
    %11 = arith.divf %9, %10 : vector<1x16xf32>
    %12 = vector.broadcast %11 : vector<1x16xf32> to vector<2x16xf32>
    %13 = arith.subf %5, %12 : vector<2x16xf32>
    %14 = arith.mulf %13, %13 : vector<2x16xf32>
    %cst_11 = arith.constant dense<0.000000e+00> : vector<16xf32>
    %15 = vector.multi_reduction <add>, %14, %cst_11 [0] : vector<2x16xf32> to vector<16xf32>
    %16 = vector.shape_cast %15 : vector<16xf32> to vector<1x16xf32>
    %cst_12 = arith.constant 2.000000e+00 : f32
    %17 = vector.broadcast %cst_12 : f32 to vector<1x16xf32>
    %18 = arith.divf %16, %17 : vector<1x16xf32>
    %19 = vector.broadcast %11 : vector<1x16xf32> to vector<2x16xf32>
    %20 = arith.subf %5, %19 : vector<2x16xf32>
    %cst_13 = arith.constant 9.99999974E-6 : f32
    %21 = vector.broadcast %cst_13 : f32 to vector<1x16xf32>
    %22 = arith.addf %18, %21 : vector<1x16xf32>
    %23 = math.rsqrt %22 : vector<1x16xf32>
    %24 = vector.broadcast %23 : vector<1x16xf32> to vector<2x16xf32>
    %25 = arith.mulf %20, %24 : vector<2x16xf32>
    %26 = vector.broadcast %6 : vector<1x16xf32> to vector<2x16xf32>
    %27 = arith.mulf %25, %26 : vector<2x16xf32>
    %28 = vector.broadcast %7 : vector<1x16xf32> to vector<2x16xf32>
    %29 = arith.addf %27, %28 : vector<2x16xf32>
    %c0_14 = arith.constant 0 : index
    %c0_15 = arith.constant 0 : index
    %30 = vector.load %arg6[%c0_14, %c0_15] : memref<16x16xf32, #tpu.memory_space<vmem>>, vector<16x16xf32>
    %cst_16 = arith.constant dense<0.000000e+00> : vector<2x16xf32>
    %31 = tpu.matmul %29, %30, %cst_16 {dimension_numbers = #tpu.dot_dimension_numbers<[1], [0], [0], [1], [0, 0, 1, 1], [], []>} : vector<2x16xf32>, vector<16x16xf32>, vector<2x16xf32> -> vector<2x16xf32>
    %c0_17 = arith.constant 0 : index
    %c0_18 = arith.constant 0 : index
    %32 = vector.load %arg7[%c0_17, %c0_18] : memref<1x16xf32, #tpu.memory_space<vmem>>, vector<1x16xf32>
    %33 = vector.broadcast %32 : vector<1x16xf32> to vector<2x16xf32>
    %34 = arith.addf %31, %33 : vector<2x16xf32>
    %c0_19 = arith.constant 0 : index
    %c0_20 = arith.constant 0 : index
    %35 = vector.load %arg8[%c0_19, %c0_20] : memref<2048x16xf32, #tpu.memory_space<vmem>>, vector<2048x16xf32>
    %cst_21 = arith.constant dense<0.000000e+00> : vector<2x16xf32>
    %36 = tpu.matmul %0, %35, %cst_21 {dimension_numbers = #tpu.dot_dimension_numbers<[1], [0], [0], [1], [0, 0, 1, 1], [], []>} : vector<2x2048xf32>, vector<2048x16xf32>, vector<2x16xf32> -> vector<2x16xf32>
    %c0_22 = arith.constant 0 : index
    %c0_23 = arith.constant 0 : index
    %37 = vector.load %arg9[%c0_22, %c0_23] : memref<1x16xf32, #tpu.memory_space<vmem>>, vector<1x16xf32>
    %38 = vector.broadcast %37 : vector<1x16xf32> to vector<2x16xf32>
    %39 = arith.addf %36, %38 : vector<2x16xf32>
    %c0_24 = arith.constant 0 : index
    %c0_25 = arith.constant 0 : index
    %40 = vector.load %arg10[%c0_24, %c0_25] : memref<1x16xf32, #tpu.memory_space<vmem>>, vector<1x16xf32>
    %c0_26 = arith.constant 0 : index
    %c0_27 = arith.constant 0 : index
    %41 = vector.load %arg11[%c0_26, %c0_27] : memref<1x16xf32, #tpu.memory_space<vmem>>, vector<1x16xf32>
    %cst_28 = arith.constant dense<0.000000e+00> : vector<16xf32>
    %42 = vector.multi_reduction <add>, %39, %cst_28 [0] : vector<2x16xf32> to vector<16xf32>
    %43 = vector.shape_cast %42 : vector<16xf32> to vector<1x16xf32>
    %cst_29 = arith.constant 2.000000e+00 : f32
    %44 = vector.broadcast %cst_29 : f32 to vector<1x16xf32>
    %45 = arith.divf %43, %44 : vector<1x16xf32>
    %46 = vector.broadcast %45 : vector<1x16xf32> to vector<2x16xf32>
    %47 = arith.subf %39, %46 : vector<2x16xf32>
    %48 = arith.mulf %47, %47 : vector<2x16xf32>
    %cst_30 = arith.constant dense<0.000000e+00> : vector<16xf32>
    %49 = vector.multi_reduction <add>, %48, %cst_30 [0] : vector<2x16xf32> to vector<16xf32>
    %50 = vector.shape_cast %49 : vector<16xf32> to vector<1x16xf32>
    %cst_31 = arith.constant 2.000000e+00 : f32
    %51 = vector.broadcast %cst_31 : f32 to vector<1x16xf32>
    %52 = arith.divf %50, %51 : vector<1x16xf32>
    %53 = vector.broadcast %45 : vector<1x16xf32> to vector<2x16xf32>
    %54 = arith.subf %39, %53 : vector<2x16xf32>
    %cst_32 = arith.constant 9.99999974E-6 : f32
    %55 = vector.broadcast %cst_32 : f32 to vector<1x16xf32>
    %56 = arith.addf %52, %55 : vector<1x16xf32>
    %57 = math.rsqrt %56 : vector<1x16xf32>
    %58 = vector.broadcast %57 : vector<1x16xf32> to vector<2x16xf32>
    %59 = arith.mulf %54, %58 : vector<2x16xf32>
    %60 = vector.broadcast %40 : vector<1x16xf32> to vector<2x16xf32>
    %61 = arith.mulf %59, %60 : vector<2x16xf32>
    %62 = vector.broadcast %41 : vector<1x16xf32> to vector<2x16xf32>
    %63 = arith.addf %61, %62 : vector<2x16xf32>
    %c0_33 = arith.constant 0 : index
    %c0_34 = arith.constant 0 : index
    %64 = vector.load %arg12[%c0_33, %c0_34] : memref<16x16xf32, #tpu.memory_space<vmem>>, vector<16x16xf32>
    %cst_35 = arith.constant dense<0.000000e+00> : vector<2x16xf32>
    %65 = tpu.matmul %63, %64, %cst_35 {dimension_numbers = #tpu.dot_dimension_numbers<[1], [0], [0], [1], [0, 0, 1, 1], [], []>} : vector<2x16xf32>, vector<16x16xf32>, vector<2x16xf32> -> vector<2x16xf32>
    %c0_36 = arith.constant 0 : index
    %c0_37 = arith.constant 0 : index
    %66 = vector.load %arg13[%c0_36, %c0_37] : memref<1x16xf32, #tpu.memory_space<vmem>>, vector<1x16xf32>
    %67 = vector.broadcast %66 : vector<1x16xf32> to vector<2x16xf32>
    %68 = arith.addf %65, %67 : vector<2x16xf32>
    %c0_38 = arith.constant 0 : index
    %c0_39 = arith.constant 0 : index
    %69 = vector.load %arg14[%c0_38, %c0_39] : memref<2x16xf32, #tpu.memory_space<vmem>>, vector<2x16xf32>
    %cst_40 = arith.constant 5.000000e-01 : f32
    %70 = vector.broadcast %cst_40 : f32 to vector<2x16xf32>
    %71 = arith.mulf %70, %68 : vector<2x16xf32>
    %72 = math.exp %71 : vector<2x16xf32>
    %73 = arith.mulf %69, %72 : vector<2x16xf32>
    %74 = arith.addf %73, %34 : vector<2x16xf32>
    %c0_41 = arith.constant 0 : index
    %c0_42 = arith.constant 0 : index
    %75 = vector.load %arg15[%c0_41, %c0_42] : memref<16x2048xf32, #tpu.memory_space<vmem>>, vector<16x2048xf32>
    %cst_43 = arith.constant dense<0.000000e+00> : vector<2x2048xf32>
    %76 = tpu.matmul %74, %75, %cst_43 {dimension_numbers = #tpu.dot_dimension_numbers<[1], [0], [0], [1], [0, 0, 1, 1], [], []>} : vector<2x16xf32>, vector<16x2048xf32>, vector<2x2048xf32> -> vector<2x2048xf32>
    %c0_44 = arith.constant 0 : index
    %c0_45 = arith.constant 0 : index
    %77 = vector.load %arg16[%c0_44, %c0_45] : memref<1x2048xf32, #tpu.memory_space<vmem>>, vector<1x2048xf32>
    %78 = vector.broadcast %77 : vector<1x2048xf32> to vector<2x2048xf32>
    %79 = arith.addf %76, %78 : vector<2x2048xf32>
    %c0_46 = arith.constant 0 : index
    %c0_47 = arith.constant 0 : index
    %80 = vector.load %arg17[%c0_46, %c0_47] : memref<1x2048xf32, #tpu.memory_space<vmem>>, vector<1x2048xf32>
    %c0_48 = arith.constant 0 : index
    %c0_49 = arith.constant 0 : index
    %81 = vector.load %arg18[%c0_48, %c0_49] : memref<1x2048xf32, #tpu.memory_space<vmem>>, vector<1x2048xf32>
    %cst_50 = arith.constant dense<0.000000e+00> : vector<2048xf32>
    %82 = vector.multi_reduction <add>, %79, %cst_50 [0] : vector<2x2048xf32> to vector<2048xf32>
    %83 = vector.shape_cast %82 : vector<2048xf32> to vector<1x2048xf32>
    %cst_51 = arith.constant 2.000000e+00 : f32
    %84 = vector.broadcast %cst_51 : f32 to vector<1x2048xf32>
    %85 = arith.divf %83, %84 : vector<1x2048xf32>
    %86 = vector.broadcast %85 : vector<1x2048xf32> to vector<2x2048xf32>
    %87 = arith.subf %79, %86 : vector<2x2048xf32>
    %88 = arith.mulf %87, %87 : vector<2x2048xf32>
    %cst_52 = arith.constant dense<0.000000e+00> : vector<2048xf32>
    %89 = vector.multi_reduction <add>, %88, %cst_52 [0] : vector<2x2048xf32> to vector<2048xf32>
    %90 = vector.shape_cast %89 : vector<2048xf32> to vector<1x2048xf32>
    %cst_53 = arith.constant 2.000000e+00 : f32
    %91 = vector.broadcast %cst_53 : f32 to vector<1x2048xf32>
    %92 = arith.divf %90, %91 : vector<1x2048xf32>
    %93 = vector.broadcast %85 : vector<1x2048xf32> to vector<2x2048xf32>
    %94 = arith.subf %79, %93 : vector<2x2048xf32>
    %cst_54 = arith.constant 9.99999974E-6 : f32
    %95 = vector.broadcast %cst_54 : f32 to vector<1x2048xf32>
    %96 = arith.addf %92, %95 : vector<1x2048xf32>
    %97 = math.rsqrt %96 : vector<1x2048xf32>
    %98 = vector.broadcast %97 : vector<1x2048xf32> to vector<2x2048xf32>
    %99 = arith.mulf %94, %98 : vector<2x2048xf32>
    %100 = vector.broadcast %80 : vector<1x2048xf32> to vector<2x2048xf32>
    %101 = arith.mulf %99, %100 : vector<2x2048xf32>
    %102 = vector.broadcast %81 : vector<1x2048xf32> to vector<2x2048xf32>
    %103 = arith.addf %101, %102 : vector<2x2048xf32>
    %cst_55 = arith.constant 0.000000e+00 : f32
    %104 = vector.broadcast %cst_55 : f32 to vector<2x2048xf32>
    %105 = arith.maximumf %103, %104 : vector<2x2048xf32>
    %c0_56 = arith.constant 0 : index
    %c0_57 = arith.constant 0 : index
    %106 = vector.load %arg19[%c0_56, %c0_57] : memref<2x2048xf32, #tpu.memory_space<vmem>>, vector<2x2048xf32>
    tpu.vector_store %arg19[%c0_56, %c0_57], %105 {strides = array<i32>} : memref<2x2048xf32, #tpu.memory_space<vmem>>, vector<2x2048xf32>,
    return
  }
  func.func @transform_0(%arg0: i32) -> (i32, i32) {
    %c0_i32 = arith.constant 0 : i32
    %c0_i32_0 = arith.constant 0 : i32
    %c0_i32_1 = arith.constant 0 : i32
    return %c0_i32, %c0_i32_0 : i32, i32
  }
  func.func @transform_1(%arg0: i32) -> (i32, i32) {
    %c0_i32 = arith.constant 0 : i32
    %c0_i32_0 = arith.constant 0 : i32
    %c0_i32_1 = arith.constant 0 : i32
    return %c0_i32, %c0_i32_0 : i32, i32
  }
  func.func @transform_2(%arg0: i32) -> (i32, i32) {
    %c0_i32 = arith.constant 0 : i32
    %c0_i32_0 = arith.constant 0 : i32
    %c0_i32_1 = arith.constant 0 : i32
    return %c0_i32, %c0_i32_0 : i32, i32
  }
  func.func @transform_3(%arg0: i32) -> (i32, i32) {
    %c0_i32 = arith.constant 0 : i32
    %c0_i32_0 = arith.constant 0 : i32
    %c0_i32_1 = arith.constant 0 : i32
    return %c0_i32, %c0_i32_0 : i32, i32
  }
  func.func @transform_4(%arg0: i32) -> (i32, i32) {
    %c0_i32 = arith.constant 0 : i32
    %c0_i32_0 = arith.constant 0 : i32
    %c0_i32_1 = arith.constant 0 : i32
    return %c0_i32, %c0_i32_0 : i32, i32
  }
  func.func @transform_5(%arg0: i32) -> (i32, i32) {
    %c0_i32 = arith.constant 0 : i32
    %c0_i32_0 = arith.constant 0 : i32
    %c0_i32_1 = arith.constant 0 : i32
    return %c0_i32, %c0_i32_0 : i32, i32
  }
  func.func @transform_6(%arg0: i32) -> (i32, i32) {
    %c0_i32 = arith.constant 0 : i32
    %c0_i32_0 = arith.constant 0 : i32
    %c0_i32_1 = arith.constant 0 : i32
    return %c0_i32, %c0_i32_0 : i32, i32
  }
  func.func @transform_7(%arg0: i32) -> (i32, i32) {
    %c0_i32 = arith.constant 0 : i32
    %c0_i32_0 = arith.constant 0 : i32
    %c0_i32_1 = arith.constant 0 : i32
    return %c0_i32, %c0_i32_0 : i32, i32
  }
  func.func @transform_8(%arg0: i32) -> (i32, i32) {
    %c0_i32 = arith.constant 0 : i32
    %c0_i32_0 = arith.constant 0 : i32
    %c0_i32_1 = arith.constant 0 : i32
    return %c0_i32, %c0_i32_0 : i32, i32
  }
  func.func @transform_9(%arg0: i32) -> (i32, i32) {
    %c0_i32 = arith.constant 0 : i32
    %c0_i32_0 = arith.constant 0 : i32
    %c0_i32_1 = arith.constant 0 : i32
    return %c0_i32, %c0_i32_0 : i32, i32
  }
  func.func @transform_10(%arg0: i32) -> (i32, i32) {
    %c0_i32 = arith.constant 0 : i32
    %c0_i32_0 = arith.constant 0 : i32
    %c0_i32_1 = arith.constant 0 : i32
    return %c0_i32, %c0_i32_0 : i32, i32
  }
  func.func @transform_11(%arg0: i32) -> (i32, i32) {
    %c0_i32 = arith.constant 0 : i32
    %c0_i32_0 = arith.constant 0 : i32
    %c0_i32_1 = arith.constant 0 : i32
    return %c0_i32, %c0_i32_0 : i32, i32
  }
  func.func @transform_12(%arg0: i32) -> (i32, i32) {
    %c0_i32 = arith.constant 0 : i32
    %c0_i32_0 = arith.constant 0 : i32
    %c0_i32_1 = arith.constant 0 : i32
    return %c0_i32, %c0_i32_0 : i32, i32
  }
  func.func @transform_13(%arg0: i32) -> (i32, i32) {
    %c0_i32 = arith.constant 0 : i32
    %c0_i32_0 = arith.constant 0 : i32
    %c0_i32_1 = arith.constant 0 : i32
    return %c0_i32, %c0_i32_0 : i32, i32
  }
  func.func @transform_14(%arg0: i32) -> (i32, i32) {
    %c0_i32 = arith.constant 0 : i32
    %c0_i32_0 = arith.constant 0 : i32
    %c0_i32_1 = arith.constant 0 : i32
    return %c0_i32, %c0_i32_0 : i32, i32
  }
  func.func @transform_15(%arg0: i32) -> (i32, i32) {
    %c0_i32 = arith.constant 0 : i32
    %c0_i32_0 = arith.constant 0 : i32
    %c0_i32_1 = arith.constant 0 : i32
    return %c0_i32, %c0_i32_0 : i32, i32
  }
  func.func @transform_16(%arg0: i32) -> (i32, i32) {
    %c0_i32 = arith.constant 0 : i32
    %c0_i32_0 = arith.constant 0 : i32
    %c0_i32_1 = arith.constant 0 : i32
    return %c0_i32, %c0_i32_0 : i32, i32
  }
  func.func @transform_17(%arg0: i32) -> (i32, i32) {
    %c0_i32 = arith.constant 0 : i32
    %c0_i32_0 = arith.constant 0 : i32
    %c0_i32_1 = arith.constant 0 : i32
    return %c0_i32, %c0_i32_0 : i32, i32
  }
  func.func @transform_18(%arg0: i32) -> (i32, i32) {
    %c0_i32 = arith.constant 0 : i32
    %c0_i32_0 = arith.constant 0 : i32
    %c0_i32_1 = arith.constant 0 : i32
    return %c0_i32, %c0_i32_0 : i32, i32
  }
}

module attributes {stable_mosaic.version = 11 : i64} {
  func.func @_matmul_kernel(%arg0: i32, %arg1: memref<64x128xbf16, #tpu.memory_space<vmem>>, %arg2: memref<128x896xbf16, #tpu.memory_space<vmem>>, %arg3: memref<1x896xf32, #tpu.memory_space<vmem>>, %arg4: memref<64x896xf32, #tpu.memory_space<vmem>>) attributes {dimension_semantics = [#tpu.dimension_semantics<parallel>], iteration_bounds = array<i64: 2>, scalar_prefetch = 0 : i64, scratch_operands = 0 : i64, tpu.core_type = #tpu.core_type<tc>, window_params = [{transform_indices = @transform_0, window_bounds = array<i64: 64, 128>}, {pipeline_mode = #tpu.pipeline_mode<synchronous>, transform_indices = @transform_1, window_bounds = array<i64: 128, 896>}, {pipeline_mode = #tpu.pipeline_mode<synchronous>, transform_indices = @transform_2, window_bounds = array<i64: 1, 896>}, {transform_indices = @transform_3, window_bounds = array<i64: 64, 896>}]} {
    %c0 = arith.constant 0 : index
    %c0_0 = arith.constant 0 : index
    %0 = vector.load %arg1[%c0, %c0_0] : memref<64x128xbf16, #tpu.memory_space<vmem>>, vector<64x128xbf16>
    %c0_1 = arith.constant 0 : index
    %c0_2 = arith.constant 0 : index
    %1 = vector.load %arg2[%c0_1, %c0_2] : memref<128x896xbf16, #tpu.memory_space<vmem>>, vector<128x896xbf16>
    %cst = arith.constant dense<0.000000e+00> : vector<64x896xf32>
    %2 = tpu.matmul %0, %1, %cst {dimension_numbers = #tpu.dot_dimension_numbers<[1], [0], [0], [1], [0, 0, 1, 1], [], []>} : vector<64x128xbf16>, vector<128x896xbf16>, vector<64x896xf32> -> vector<64x896xf32>
    %c0_3 = arith.constant 0 : index
    %c0_4 = arith.constant 0 : index
    %3 = vector.load %arg3[%c0_3, %c0_4] : memref<1x896xf32, #tpu.memory_space<vmem>>, vector<1x896xf32>
    %4 = vector.broadcast %3 : vector<1x896xf32> to vector<64x896xf32>
    %5 = arith.addf %2, %4 : vector<64x896xf32>
    %c0_5 = arith.constant 0 : index
    %c0_6 = arith.constant 0 : index
    %6 = vector.load %arg4[%c0_5, %c0_6] : memref<64x896xf32, #tpu.memory_space<vmem>>, vector<64x896xf32>
    tpu.vector_store %arg4[%c0_5, %c0_6], %5 {strides = array<i32>} : memref<64x896xf32, #tpu.memory_space<vmem>>, vector<64x896xf32>,
    return
  }
  func.func @transform_0(%arg0: i32) -> (i32, i32) {
    %c0_i32 = arith.constant 0 : i32
    %c0_i32_0 = arith.constant 0 : i32
    return %arg0, %c0_i32 : i32, i32
  }
  func.func @transform_1(%arg0: i32) -> (i32, i32) {
    %c0_i32 = arith.constant 0 : i32
    %c0_i32_0 = arith.constant 0 : i32
    %c0_i32_1 = arith.constant 0 : i32
    return %c0_i32, %c0_i32_0 : i32, i32
  }
  func.func @transform_2(%arg0: i32) -> (i32, i32) {
    %c0_i32 = arith.constant 0 : i32
    %c0_i32_0 = arith.constant 0 : i32
    %c0_i32_1 = arith.constant 0 : i32
    return %c0_i32, %c0_i32_0 : i32, i32
  }
  func.func @transform_3(%arg0: i32) -> (i32, i32) {
    %c0_i32 = arith.constant 0 : i32
    %c0_i32_0 = arith.constant 0 : i32
    return %arg0, %c0_i32 : i32, i32
  }
}

module attributes {stable_mosaic.version = 11 : i64} {
  func.func @_matmul_kernel(%arg0: i32, %arg1: memref<128x128xbf16, #tpu.memory_space<vmem>>, %arg2: memref<128x512xbf16, #tpu.memory_space<vmem>>, %arg3: memref<1x512xf32, #tpu.memory_space<vmem>>, %arg4: memref<128x512xf32, #tpu.memory_space<vmem>>) attributes {dimension_semantics = [#tpu.dimension_semantics<parallel>], iteration_bounds = array<i64: 4>, scalar_prefetch = 0 : i64, scratch_operands = 0 : i64, tpu.core_type = #tpu.core_type<tc>, window_params = [{transform_indices = @transform_0, window_bounds = array<i64: 128, 128>}, {pipeline_mode = #tpu.pipeline_mode<synchronous>, transform_indices = @transform_1, window_bounds = array<i64: 128, 512>}, {pipeline_mode = #tpu.pipeline_mode<synchronous>, transform_indices = @transform_2, window_bounds = array<i64: 1, 512>}, {transform_indices = @transform_3, window_bounds = array<i64: 128, 512>}]} {
    %c0 = arith.constant 0 : index
    %c0_0 = arith.constant 0 : index
    %0 = vector.load %arg1[%c0, %c0_0] : memref<128x128xbf16, #tpu.memory_space<vmem>>, vector<128x128xbf16>
    %c0_1 = arith.constant 0 : index
    %c0_2 = arith.constant 0 : index
    %1 = vector.load %arg2[%c0_1, %c0_2] : memref<128x512xbf16, #tpu.memory_space<vmem>>, vector<128x512xbf16>
    %cst = arith.constant dense<0.000000e+00> : vector<128x512xf32>
    %2 = tpu.matmul %0, %1, %cst {dimension_numbers = #tpu.dot_dimension_numbers<[1], [0], [0], [1], [0, 0, 1, 1], [], []>} : vector<128x128xbf16>, vector<128x512xbf16>, vector<128x512xf32> -> vector<128x512xf32>
    %c0_3 = arith.constant 0 : index
    %c0_4 = arith.constant 0 : index
    %3 = vector.load %arg3[%c0_3, %c0_4] : memref<1x512xf32, #tpu.memory_space<vmem>>, vector<1x512xf32>
    %4 = vector.broadcast %3 : vector<1x512xf32> to vector<128x512xf32>
    %5 = arith.addf %2, %4 : vector<128x512xf32>
    %c0_5 = arith.constant 0 : index
    %c0_6 = arith.constant 0 : index
    %6 = vector.load %arg4[%c0_5, %c0_6] : memref<128x512xf32, #tpu.memory_space<vmem>>, vector<128x512xf32>
    tpu.vector_store %arg4[%c0_5, %c0_6], %5 {strides = array<i32>} : memref<128x512xf32, #tpu.memory_space<vmem>>, vector<128x512xf32>,
    return
  }
  func.func @transform_0(%arg0: i32) -> (i32, i32) {
    %c0_i32 = arith.constant 0 : i32
    %c0_i32_0 = arith.constant 0 : i32
    return %arg0, %c0_i32 : i32, i32
  }
  func.func @transform_1(%arg0: i32) -> (i32, i32) {
    %c0_i32 = arith.constant 0 : i32
    %c0_i32_0 = arith.constant 0 : i32
    %c0_i32_1 = arith.constant 0 : i32
    return %c0_i32, %c0_i32_0 : i32, i32
  }
  func.func @transform_2(%arg0: i32) -> (i32, i32) {
    %c0_i32 = arith.constant 0 : i32
    %c0_i32_0 = arith.constant 0 : i32
    %c0_i32_1 = arith.constant 0 : i32
    return %c0_i32, %c0_i32_0 : i32, i32
  }
  func.func @transform_3(%arg0: i32) -> (i32, i32) {
    %c0_i32 = arith.constant 0 : i32
    %c0_i32_0 = arith.constant 0 : i32
    return %arg0, %c0_i32 : i32, i32
  }
}

module attributes {stable_mosaic.version = 11 : i64} {
  func.func @_matmul_kernel(%arg0: i32, %arg1: memref<512x128xbf16, #tpu.memory_space<vmem>>, %arg2: memref<128x128xbf16, #tpu.memory_space<vmem>>, %arg3: memref<1x128xf32, #tpu.memory_space<vmem>>, %arg4: memref<512x128xf32, #tpu.memory_space<vmem>>) attributes {dimension_semantics = [#tpu.dimension_semantics<parallel>], iteration_bounds = array<i64: 16>, scalar_prefetch = 0 : i64, scratch_operands = 0 : i64, tpu.core_type = #tpu.core_type<tc>, window_params = [{transform_indices = @transform_0, window_bounds = array<i64: 512, 128>}, {pipeline_mode = #tpu.pipeline_mode<synchronous>, transform_indices = @transform_1, window_bounds = array<i64: 128, 128>}, {pipeline_mode = #tpu.pipeline_mode<synchronous>, transform_indices = @transform_2, window_bounds = array<i64: 1, 128>}, {transform_indices = @transform_3, window_bounds = array<i64: 512, 128>}]} {
    %c0 = arith.constant 0 : index
    %c0_0 = arith.constant 0 : index
    %0 = vector.load %arg1[%c0, %c0_0] : memref<512x128xbf16, #tpu.memory_space<vmem>>, vector<512x128xbf16>
    %c0_1 = arith.constant 0 : index
    %c0_2 = arith.constant 0 : index
    %1 = vector.load %arg2[%c0_1, %c0_2] : memref<128x128xbf16, #tpu.memory_space<vmem>>, vector<128x128xbf16>
    %cst = arith.constant dense<0.000000e+00> : vector<512x128xf32>
    %2 = tpu.matmul %0, %1, %cst {dimension_numbers = #tpu.dot_dimension_numbers<[1], [0], [0], [1], [0, 0, 1, 1], [], []>} : vector<512x128xbf16>, vector<128x128xbf16>, vector<512x128xf32> -> vector<512x128xf32>
    %c0_3 = arith.constant 0 : index
    %c0_4 = arith.constant 0 : index
    %3 = vector.load %arg3[%c0_3, %c0_4] : memref<1x128xf32, #tpu.memory_space<vmem>>, vector<1x128xf32>
    %4 = vector.broadcast %3 : vector<1x128xf32> to vector<512x128xf32>
    %5 = arith.addf %2, %4 : vector<512x128xf32>
    %6 = math.tanh %5 : vector<512x128xf32>
    %c0_5 = arith.constant 0 : index
    %c0_6 = arith.constant 0 : index
    %7 = vector.load %arg4[%c0_5, %c0_6] : memref<512x128xf32, #tpu.memory_space<vmem>>, vector<512x128xf32>
    tpu.vector_store %arg4[%c0_5, %c0_6], %6 {strides = array<i32>} : memref<512x128xf32, #tpu.memory_space<vmem>>, vector<512x128xf32>,
    return
  }
  func.func @transform_0(%arg0: i32) -> (i32, i32) {
    %c0_i32 = arith.constant 0 : i32
    %c0_i32_0 = arith.constant 0 : i32
    return %arg0, %c0_i32 : i32, i32
  }
  func.func @transform_1(%arg0: i32) -> (i32, i32) {
    %c0_i32 = arith.constant 0 : i32
    %c0_i32_0 = arith.constant 0 : i32
    %c0_i32_1 = arith.constant 0 : i32
    return %c0_i32, %c0_i32_0 : i32, i32
  }
  func.func @transform_2(%arg0: i32) -> (i32, i32) {
    %c0_i32 = arith.constant 0 : i32
    %c0_i32_0 = arith.constant 0 : i32
    %c0_i32_1 = arith.constant 0 : i32
    return %c0_i32, %c0_i32_0 : i32, i32
  }
  func.func @transform_3(%arg0: i32) -> (i32, i32) {
    %c0_i32 = arith.constant 0 : i32
    %c0_i32_0 = arith.constant 0 : i32
    return %arg0, %c0_i32 : i32, i32
  }
}

</mosaic_0001>

<llo_original>
// kernel: netG_forward.8
$region0: #{netG_forward.8}
  #allocation0 [shape = 'u32[]', space=smem, size = 0x4, offset = 0x4, fixed_abs, tag = 'smem constant byte address 0x4 - core index']
  #allocation1 [shape = 'u32[72,128]{1,0:T(1,128)}', space=vmem, size = 0x9000, scoped, tag = 'internal scratch']
  %s0 = inlined_call_operand.vmem [shape: bf16[2048,128], index: 0, kind: input, shape index: {}]
  %s1 = inlined_call_operand.vmem [shape: bf16[128,128], index: 1, kind: input, shape index: {}]
  %s2 = inlined_call_operand.vmem [shape: f32[1,128], index: 2, kind: input, shape index: {}]
  %s3 = inlined_call_operand.vmem [shape: f32[2048,128], index: 3, kind: output, shape index: {}]
  %s4 = sld [smem:[#allocation0]]
  $region45: #{netG_forward.8} parent=0
    _
  %s6 = ssub.s32 1, %s4
  %s7 = scalar_select 0, %s6, %s4
  loop: start=0, step=1, limit=6
  $region2: #{netG_forward.8} parent=0 // loop_pre_header
    _
  $region3: #{netG_forward.8} parent=0 // loop_header
    %s9 = sphi 0, %s13
    %p10 = scmp.ge.s32.totalorder %s9, 6
    %s19 = sphi 0, %s21
    %s22 = sphi 0, %s19
    %s23 = sphi 0, %s22
    %s39 = sphi 0, %s23
    %s43 = sphi 0, %s43
    %s45 = sphi 0, %s43
    %s46 = sphi 0, %s45
    %s60 = sphi 0, %s46
    %s64 = sphi 0, %s64
    %s66 = sphi 0, %s64
    %s67 = sphi 0, %s66
    %s81 = sphi 0, %s67
    %s87 = sphi 0, %s89
    %s90 = sphi 0, %s87
    %s91 = sphi 0, %s90
    %s107 = sphi 0, %s91
  $region4: #{netG_forward.8} parent=0 // loop_header_branch
    %12 = sbr.rel (%p10) target = $region8
  $region5: #{netG_forward.8} parent=0 // loop_body
    %s14 = ssub.s32 %s9, 1
    %s15 = ssub.s32 %s9, 2
    %s16 = sadd.s32 %s9, 1
    %s17 = ssub.s32 %s9, %s16
    %p18 = scmp.eq.s32.totalorder %s17, 0
    %s20 = sadd.s32 %s19, 1
    %s21 = scalar_select %p18, %s19, %s20
    %p24 = pneg %p18
    %p25 = scmp.eq.s32.totalorder %s9, 3
    %p26 = por %p24, %p25
    %p27 = scmp.ne.s32.totalorder %s19, %s22
    %p28 = scmp.eq.s32.totalorder %s9, 0
    %p29 = por %p27, %p28
    %p30 = scmp.ne.s32.totalorder %s19, %s22
    %p31 = scmp.eq.s32.totalorder %s14, 3
    %p32 = por %p30, %p31
    %p33 = scmp.ne.s32.totalorder %s22, %s23
    %p34 = scmp.eq.s32.totalorder %s14, 0
    %p35 = por %p33, %p34
    %p36 = scmp.ne.s32.totalorder %s22, %s23
    %p37 = scmp.eq.s32.totalorder %s15, 3
    %p38 = por %p36, %p37
    %p40 = scmp.ne.s32.totalorder %s23, %s39
    %p41 = scmp.eq.s32.totalorder %s15, 0
    %p42 = por %p40, %p41
    %s44 = sadd.s32 %s43, 1
    %p47 = scmp.eq.s32.totalorder %s9, 3
    %p48 = scmp.ne.s32.totalorder %s43, %s45
    %p49 = scmp.eq.s32.totalorder %s9, 0
    %p50 = por %p48, %p49
    %p51 = scmp.ne.s32.totalorder %s43, %s45
    %p52 = scmp.eq.s32.totalorder %s14, 3
    %p53 = por %p51, %p52
    %p54 = scmp.ne.s32.totalorder %s45, %s46
    %p55 = scmp.eq.s32.totalorder %s14, 0
    %p56 = por %p54, %p55
    %p57 = scmp.ne.s32.totalorder %s45, %s46
    %p58 = scmp.eq.s32.totalorder %s15, 3
    %p59 = por %p57, %p58
    %p61 = scmp.ne.s32.totalorder %s46, %s60
    %p62 = scmp.eq.s32.totalorder %s15, 0
    %p63 = por %p61, %p62
    %s65 = sadd.s32 %s64, 1
    %p68 = scmp.eq.s32.totalorder %s9, 3
    %p69 = scmp.ne.s32.totalorder %s64, %s66
    %p70 = scmp.eq.s32.totalorder %s9, 0
    %p71 = por %p69, %p70
    %p72 = scmp.ne.s32.totalorder %s64, %s66
    %p73 = scmp.eq.s32.totalorder %s14, 3
    %p74 = por %p72, %p73
    %p75 = scmp.ne.s32.totalorder %s66, %s67
    %p76 = scmp.eq.s32.totalorder %s14, 0
    %p77 = por %p75, %p76
    %p78 = scmp.ne.s32.totalorder %s66, %s67
    %p79 = scmp.eq.s32.totalorder %s15, 3
    %p80 = por %p78, %p79
    %p82 = scmp.ne.s32.totalorder %s67, %s81
    %p83 = scmp.eq.s32.totalorder %s15, 0
    %p84 = por %p82, %p83
    %s85 = ssub.s32 %s9, %s16
    %p86 = scmp.eq.s32.totalorder %s85, 0
    %s88 = sadd.s32 %s87, 1
    %s89 = scalar_select %p86, %s87, %s88
    %p92 = pneg %p86
    %p93 = scmp.eq.s32.totalorder %s9, 3
    %p94 = por %p92, %p93
    %p95 = scmp.ne.s32.totalorder %s87, %s90
    %p96 = scmp.eq.s32.totalorder %s9, 0
    %p97 = por %p95, %p96
    %p98 = scmp.ne.s32.totalorder %s87, %s90
    %p99 = scmp.eq.s32.totalorder %s14, 3
    %p100 = por %p98, %p99
    %p101 = scmp.ne.s32.totalorder %s90, %s91
    %p102 = scmp.eq.s32.totalorder %s14, 0
    %p103 = por %p101, %p102
    %p104 = scmp.ne.s32.totalorder %s90, %s91
    %p105 = scmp.eq.s32.totalorder %s15, 3
    %p106 = por %p104, %p105
    %p108 = scmp.ne.s32.totalorder %s91, %s107
    %p109 = scmp.eq.s32.totalorder %s15, 0
    %p110 = por %p108, %p109
    %p111 = scmp.le.s32.totalorder 1, %s9
    %p112 = scmp.lt.s32.totalorder %s9, 5
    %p113 = pnand %p111, %p112
    %p114 = pneg %p113
    // Predicated region
    $region9: #{netG_forward.8} parent=5 // pred_check
      _
    $region10: #{netG_forward.8} parent=5 // pred_check_branch
      %116 = sbr.rel (%p113) target = $region12
    $region11: #{netG_forward.8} parent=5 // pred_region
      %s117 = ssub.s32 %s9, 1
      // Predicated region
      $region13: #{netG_forward.8} parent=11 // pred_check
        %p118 = pneg %p56
      $region14: #{netG_forward.8} parent=11 // pred_check_branch
        %120 = sbr.rel (%p118) target = $region16
      $region15: #{netG_forward.8} parent=11 // pred_region
        _
      $region16: #{netG_forward.8} parent=11 // pred_fallthru
        _
      // Predicated region
      $region17: #{netG_forward.8} parent=11 // pred_check
        %p121 = pneg %p77
      $region18: #{netG_forward.8} parent=11 // pred_check_branch
        %123 = sbr.rel (%p121) target = $region20
      $region19: #{netG_forward.8} parent=11 // pred_region
        _
      $region20: #{netG_forward.8} parent=11 // pred_fallthru
        _
    $region12: #{netG_forward.8} parent=5 // pred_fallthru
      _
    %p124 = scmp.lt.s32.totalorder %s9, 4
    // Predicated region
    $region21: #{netG_forward.8} parent=5 // pred_check
      %p125 = pneg %p124
    $region22: #{netG_forward.8} parent=5 // pred_check_branch
      %127 = sbr.rel (%p125) target = $region24
    $region23: #{netG_forward.8} parent=5 // pred_region
      // Predicated region
      $region25: #{netG_forward.8} parent=23 // pred_check
        %p128 = pneg %p29
      $region26: #{netG_forward.8} parent=23 // pred_check_branch
        %130 = sbr.rel (%p128) target = $region28
      $region27: #{netG_forward.8} parent=23 // pred_region
        %s131 = smul.u32 64, %s9
        %p132 = scmp.lt.s32.totalorder %s131, 255
        %s133 = scalar_select %p132, %s131, 255
        %s134 = smul.addr %s133, 4
        %s135 = scalar_lea.vmem %s0, %s134
        %s136 = smul.u32 64, %s9
      $region28: #{netG_forward.8} parent=23 // pred_fallthru
        _
    $region24: #{netG_forward.8} parent=5 // pred_fallthru
      _
    %p137 = scmp.le.s32.totalorder 1, %s9
    %p138 = scmp.lt.s32.totalorder %s9, 5
    %p139 = pnand %p137, %p138
    %p140 = pneg %p139
    // Predicated region
    $region29: #{netG_forward.8} parent=5 // pred_check
      _
    $region30: #{netG_forward.8} parent=5 // pred_check_branch
      %142 = sbr.rel (%p139) target = $region32
    $region31: #{netG_forward.8} parent=5 // pred_region
      %s143 = ssub.s32 %s9, 1
      %s144 = smul.u32 64, %s14
      %p145 = scmp.lt.s32.totalorder %s144, 255
      %s146 = scalar_select %p145, %s144, 255
      %s147 = smul.addr %s146, 4
      %s148 = scalar_lea.vmem %s0, %s147
      %p149 = pneg %p35
      %p150 = pneg %p32
      %p151 = pneg %p56
      %p152 = pneg %p53
      %p153 = pneg %p77
      %p154 = pneg %p74
      %p155 = pneg %p103
      %p156 = pneg %p100
      %s157 = smul.u32 64, %s14
      %p158 = scmp.lt.s32.totalorder %s157, 255
      %s159 = scalar_select %p158, %s157, 255
      %s160 = smul.addr %s159, 8
      %s161 = scalar_lea.vmem %s3, %s160
      %s162 = smul.u32 64, %s14
      %p163 = scmp.lt.s32.totalorder %s162, 255
      %s164 = scalar_select %p163, %s162, 255
      %s165 = smul.addr %s164, 4
      %s166 = scalar_lea.vmem %s0, %s165
      %s167 = smul.u32 64, %s14
      %s168 = smul.u32 64, %s14
      %p169 = scmp.lt.s32.totalorder %s168, 255
      %s170 = scalar_select %p169, %s168, 255
      %s171 = smul.addr %s170, 8
      %s172 = scalar_lea.vmem %s3, %s171
      %s173 = smul.u32 64, %s14
      %v174 = vld [vmem:[%s166] sm:$0xf]
      %v175 = vld [vmem:[%s166 + $0x4] sm:$0xf]
      %v176 = vld [vmem:[%s166 + $0x8] sm:$0xf]
      %v177 = vld [vmem:[%s166 + $0xc] sm:$0xf]
      %v178 = vld [vmem:[%s166 + $0x10] sm:$0xf]
      %v179 = vld [vmem:[%s166 + $0x14] sm:$0xf]
      %v180 = vld [vmem:[%s166 + $0x18] sm:$0xf]
      %v181 = vld [vmem:[%s166 + $0x1c] sm:$0xf]
      %v182 = vld [vmem:[%s166 + $0x20] sm:$0xf]
      %v183 = vld [vmem:[%s166 + $0x24] sm:$0xf]
      %v184 = vld [vmem:[%s166 + $0x28] sm:$0xf]
      %v185 = vld [vmem:[%s166 + $0x2c] sm:$0xf]
      %v186 = vld [vmem:[%s166 + $0x30] sm:$0xf]
      %v187 = vld [vmem:[%s166 + $0x34] sm:$0xf]
      %v188 = vld [vmem:[%s166 + $0x38] sm:$0xf]
      %v189 = vld [vmem:[%s166 + $0x3c] sm:$0xf]
      %v190 = vld [vmem:[%s166 + $0x40] sm:$0xf]
      %v191 = vld [vmem:[%s166 + $0x44] sm:$0xf]
      %v192 = vld [vmem:[%s166 + $0x48] sm:$0xf]
      %v193 = vld [vmem:[%s166 + $0x4c] sm:$0xf]
      %v194 = vld [vmem:[%s166 + $0x50] sm:$0xf]
      %v195 = vld [vmem:[%s166 + $0x54] sm:$0xf]
      %v196 = vld [vmem:[%s166 + $0x58] sm:$0xf]
      %v197 = vld [vmem:[%s166 + $0x5c] sm:$0xf]
      %v198 = vld [vmem:[%s166 + $0x60] sm:$0xf]
      %v199 = vld [vmem:[%s166 + $0x64] sm:$0xf]
      %v200 = vld [vmem:[%s166 + $0x68] sm:$0xf]
      %v201 = vld [vmem:[%s166 + $0x6c] sm:$0xf]
      %v202 = vld [vmem:[%s166 + $0x70] sm:$0xf]
      %v203 = vld [vmem:[%s166 + $0x74] sm:$0xf]
      %v204 = vld [vmem:[%s166 + $0x78] sm:$0xf]
      %v205 = vld [vmem:[%s166 + $0x7c] sm:$0xf]
      %v206 = vld [vmem:[%s166 + $0x80] sm:$0xf]
      %v207 = vld [vmem:[%s166 + $0x84] sm:$0xf]
      %v208 = vld [vmem:[%s166 + $0x88] sm:$0xf]
      %v209 = vld [vmem:[%s166 + $0x8c] sm:$0xf]
      %v210 = vld [vmem:[%s166 + $0x90] sm:$0xf]
      %v211 = vld [vmem:[%s166 + $0x94] sm:$0xf]
      %v212 = vld [vmem:[%s166 + $0x98] sm:$0xf]
      %v213 = vld [vmem:[%s166 + $0x9c] sm:$0xf]
      %v214 = vld [vmem:[%s166 + $0xa0] sm:$0xf]
      %v215 = vld [vmem:[%s166 + $0xa4] sm:$0xf]
      %v216 = vld [vmem:[%s166 + $0xa8] sm:$0xf]
      %v217 = vld [vmem:[%s166 + $0xac] sm:$0xf]
      %v218 = vld [vmem:[%s166 + $0xb0] sm:$0xf]
      %v219 = vld [vmem:[%s166 + $0xb4] sm:$0xf]
      %v220 = vld [vmem:[%s166 + $0xb8] sm:$0xf]
      %v221 = vld [vmem:[%s166 + $0xbc] sm:$0xf]
      %v222 = vld [vmem:[%s166 + $0xc0] sm:$0xf]
      %v223 = vld [vmem:[%s166 + $0xc4] sm:$0xf]
      %v224 = vld [vmem:[%s166 + $0xc8] sm:$0xf]
      %v225 = vld [vmem:[%s166 + $0xcc] sm:$0xf]
      %v226 = vld [vmem:[%s166 + $0xd0] sm:$0xf]
      %v227 = vld [vmem:[%s166 + $0xd4] sm:$0xf]
      %v228 = vld [vmem:[%s166 + $0xd8] sm:$0xf]
      %v229 = vld [vmem:[%s166 + $0xdc] sm:$0xf]
      %v230 = vld [vmem:[%s166 + $0xe0] sm:$0xf]
      %v231 = vld [vmem:[%s166 + $0xe4] sm:$0xf]
      %v232 = vld [vmem:[%s166 + $0xe8] sm:$0xf]
      %v233 = vld [vmem:[%s166 + $0xec] sm:$0xf]
      %v234 = vld [vmem:[%s166 + $0xf0] sm:$0xf]
      %v235 = vld [vmem:[%s166 + $0xf4] sm:$0xf]
      %v236 = vld [vmem:[%s166 + $0xf8] sm:$0xf]
      %v237 = vld [vmem:[%s166 + $0xfc] sm:$0xf]
      %v238 = vld [vmem:[%s1] sm:$0xf]
      %v239 = vld [vmem:[%s1 + $0x4] sm:$0xf]
      %v240 = vld [vmem:[%s1 + $0x8] sm:$0xf]
      %v241 = vld [vmem:[%s1 + $0xc] sm:$0xf]
      %v242 = vld [vmem:[%s1 + $0x10] sm:$0xf]
      %v243 = vld [vmem:[%s1 + $0x14] sm:$0xf]
      %v244 = vld [vmem:[%s1 + $0x18] sm:$0xf]
      %v245 = vld [vmem:[%s1 + $0x1c] sm:$0xf]
      %v246 = vld [vmem:[%s1 + $0x20] sm:$0xf]
      %v247 = vld [vmem:[%s1 + $0x24] sm:$0xf]
      %v248 = vld [vmem:[%s1 + $0x28] sm:$0xf]
      %v249 = vld [vmem:[%s1 + $0x2c] sm:$0xf]
      %v250 = vld [vmem:[%s1 + $0x30] sm:$0xf]
      %v251 = vld [vmem:[%s1 + $0x34] sm:$0xf]
      %v252 = vld [vmem:[%s1 + $0x38] sm:$0xf]
      %v253 = vld [vmem:[%s1 + $0x3c] sm:$0xf]
      %v254 = vld [vmem:[%s2] sm:$0x1]
      %v256 = vperm.slane %v254, 0
      %v322 = vunpack.c.l.b16 %v174
      %v323 = vunpack.c.l.b16 %v175
      %v324 = vunpack.c.l.b16 %v176
      %v325 = vunpack.c.l.b16 %v177
      %v326 = vunpack.c.l.b16 %v178
      %v327 = vunpack.c.l.b16 %v179
      %v328 = vunpack.c.l.b16 %v180
      %v329 = vunpack.c.l.b16 %v181
      %v330 = vunpack.c.l.b16 %v182
      %v331 = vunpack.c.l.b16 %v183
      %v332 = vunpack.c.l.b16 %v184
      %v333 = vunpack.c.l.b16 %v185
      %v334 = vunpack.c.l.b16 %v186
      %v335 = vunpack.c.l.b16 %v187
      %v336 = vunpack.c.l.b16 %v188
      %v337 = vunpack.c.l.b16 %v189
      %v338 = vunpack.c.l.b16 %v190
      %v339 = vunpack.c.l.b16 %v191
      %v340 = vunpack.c.l.b16 %v192
      %v341 = vunpack.c.l.b16 %v193
      %v342 = vunpack.c.l.b16 %v194
      %v343 = vunpack.c.l.b16 %v195
      %v344 = vunpack.c.l.b16 %v196
      %v345 = vunpack.c.l.b16 %v197
      %v346 = vunpack.c.l.b16 %v198
      %v347 = vunpack.c.l.b16 %v199
      %v348 = vunpack.c.l.b16 %v200
      %v349 = vunpack.c.l.b16 %v201
      %v350 = vunpack.c.l.b16 %v202
      %v351 = vunpack.c.l.b16 %v203
      %v352 = vunpack.c.l.b16 %v204
      %v353 = vunpack.c.l.b16 %v205
      %v354 = vunpack.c.l.b16 %v206
      %v355 = vunpack.c.l.b16 %v207
      %v356 = vunpack.c.l.b16 %v208
      %v357 = vunpack.c.l.b16 %v209
      %v358 = vunpack.c.l.b16 %v210
      %v359 = vunpack.c.l.b16 %v211
      %v360 = vunpack.c.l.b16 %v212
      %v361 = vunpack.c.l.b16 %v213
      %v362 = vunpack.c.l.b16 %v214
      %v363 = vunpack.c.l.b16 %v215
      %v364 = vunpack.c.l.b16 %v216
      %v365 = vunpack.c.l.b16 %v217
      %v366 = vunpack.c.l.b16 %v218
      %v367 = vunpack.c.l.b16 %v219
      %v368 = vunpack.c.l.b16 %v220
      %v369 = vunpack.c.l.b16 %v221
      %v370 = vunpack.c.l.b16 %v222
      %v371 = vunpack.c.l.b16 %v223
      %v372 = vunpack.c.l.b16 %v224
      %v373 = vunpack.c.l.b16 %v225
      %v374 = vunpack.c.l.b16 %v226
      %v375 = vunpack.c.l.b16 %v227
      %v376 = vunpack.c.l.b16 %v228
      %v377 = vunpack.c.l.b16 %v229
      %v378 = vunpack.c.l.b16 %v230
      %v379 = vunpack.c.l.b16 %v231
      %v380 = vunpack.c.l.b16 %v232
      %v381 = vunpack.c.l.b16 %v233
      %v382 = vunpack.c.l.b16 %v234
      %v383 = vunpack.c.l.b16 %v235
      %v384 = vunpack.c.l.b16 %v236
      %v385 = vunpack.c.l.b16 %v237
      %v386 = vpack.c.b16 %v323, %v322
      %v387 = vpack.c.b16 %v325, %v324
      %v388 = vpack.c.b16 %v327, %v326
      %v389 = vpack.c.b16 %v329, %v328
      %v390 = vpack.c.b16 %v331, %v330
      %v391 = vpack.c.b16 %v333, %v332
      %v392 = vpack.c.b16 %v335, %v334
      %v393 = vpack.c.b16 %v337, %v336
      %v394 = vpack.c.b16 %v339, %v338
      %v395 = vpack.c.b16 %v341, %v340
      %v396 = vpack.c.b16 %v343, %v342
      %v397 = vpack.c.b16 %v345, %v344
      %v398 = vpack.c.b16 %v347, %v346
      %v399 = vpack.c.b16 %v349, %v348
      %v400 = vpack.c.b16 %v351, %v350
      %v401 = vpack.c.b16 %v353, %v352
      %v402 = vpack.c.b16 %v355, %v354
      %v403 = vpack.c.b16 %v357, %v356
      %v404 = vpack.c.b16 %v359, %v358
      %v405 = vpack.c.b16 %v361, %v360
      %v406 = vpack.c.b16 %v363, %v362
      %v407 = vpack.c.b16 %v365, %v364
      %v408 = vpack.c.b16 %v367, %v366
      %v409 = vpack.c.b16 %v369, %v368
      %v410 = vpack.c.b16 %v371, %v370
      %v411 = vpack.c.b16 %v373, %v372
      %v412 = vpack.c.b16 %v375, %v374
      %v413 = vpack.c.b16 %v377, %v376
      %v414 = vpack.c.b16 %v379, %v378
      %v415 = vpack.c.b16 %v381, %v380
      %v416 = vpack.c.b16 %v383, %v382
      %v417 = vpack.c.b16 %v385, %v384
      %v466 = vunpack.c.l.b16 %v238
      %v467 = vunpack.c.l.b16 %v239
      %v468 = vunpack.c.l.b16 %v240
      %v469 = vunpack.c.l.b16 %v241
      %v470 = vunpack.c.l.b16 %v242
      %v471 = vunpack.c.l.b16 %v243
      %v472 = vunpack.c.l.b16 %v244
      %v473 = vunpack.c.l.b16 %v245
      %v474 = vunpack.c.l.b16 %v246
      %v475 = vunpack.c.l.b16 %v247
      %v476 = vunpack.c.l.b16 %v248
      %v477 = vunpack.c.l.b16 %v249
      %v478 = vunpack.c.l.b16 %v250
      %v479 = vunpack.c.l.b16 %v251
      %v480 = vunpack.c.l.b16 %v252
      %v481 = vunpack.c.l.b16 %v253
      %v482 = vpack.c.b16 %v467, %v466
      %v483 = vpack.c.b16 %v469, %v468
      %v484 = vpack.c.b16 %v471, %v470
      %v485 = vpack.c.b16 %v473, %v472
      %v486 = vpack.c.b16 %v475, %v474
      %v487 = vpack.c.b16 %v477, %v476
      %v488 = vpack.c.b16 %v479, %v478
      %v489 = vpack.c.b16 %v481, %v480
      %498 = vmatpush.bf16.msra.mxu0 %v489
      %499 = vmatpush.bf16.msra.mxu0 %v488
      %500 = vmatpush.bf16.msra.mxu0 %v487
      %501 = vmatpush.bf16.msra.mxu0 %v486
      %502 = vmatpush.bf16.msra.mxu0 %v485
      %503 = vmatpush.bf16.msra.mxu0 %v484
      %504 = vmatpush.bf16.msra.mxu0 %v483
      %505 = vmatpush.bf16.msra.mxu0 %v482
      %506 = vmatmul.bf16.gmra.mxu0 %v386
      %v507 = vpop.f32.mrf.mxu0
      %v508 = vadd.f32 %v256, %v507
      %v509 = vpop.f32.mrf.mxu0
      %v510 = vadd.f32 %v256, %v509
      %511 = vmatmul.bf16.gmra.mxu0 %v387
      %v512 = vpop.f32.mrf.mxu0
      %v513 = vadd.f32 %v256, %v512
      %v514 = vpop.f32.mrf.mxu0
      %v515 = vadd.f32 %v256, %v514
      %516 = vmatmul.bf16.gmra.mxu0 %v388
      %v517 = vpop.f32.mrf.mxu0
      %v518 = vadd.f32 %v256, %v517
      %v519 = vpop.f32.mrf.mxu0
      %v520 = vadd.f32 %v256, %v519
      %521 = vmatmul.bf16.gmra.mxu0 %v389
      %v522 = vpop.f32.mrf.mxu0
      %v523 = vadd.f32 %v256, %v522
      %v524 = vpop.f32.mrf.mxu0
      %v525 = vadd.f32 %v256, %v524
      %526 = vmatmul.bf16.gmra.mxu0 %v390
      %v527 = vpop.f32.mrf.mxu0
      %v528 = vadd.f32 %v256, %v527
      %v529 = vpop.f32.mrf.mxu0
      %v530 = vadd.f32 %v256, %v529
      %531 = vmatmul.bf16.gmra.mxu0 %v391
      %v532 = vpop.f32.mrf.mxu0
      %v533 = vadd.f32 %v256, %v532
      %v534 = vpop.f32.mrf.mxu0
      %v535 = vadd.f32 %v256, %v534
      %536 = vmatmul.bf16.gmra.mxu0 %v392
      %v537 = vpop.f32.mrf.mxu0
      %v538 = vadd.f32 %v256, %v537
      %v539 = vpop.f32.mrf.mxu0
      %v540 = vadd.f32 %v256, %v539
      %541 = vmatmul.bf16.gmra.mxu0 %v393
      %v542 = vpop.f32.mrf.mxu0
      %v543 = vadd.f32 %v256, %v542
      %v544 = vpop.f32.mrf.mxu0
      %v545 = vadd.f32 %v256, %v544
      %546 = vmatmul.bf16.gmra.mxu0 %v394
      %v547 = vpop.f32.mrf.mxu0
      %v548 = vadd.f32 %v256, %v547
      %v549 = vpop.f32.mrf.mxu0
      %v550 = vadd.f32 %v256, %v549
      %551 = vmatmul.bf16.gmra.mxu0 %v395
      %v552 = vpop.f32.mrf.mxu0
      %v553 = vadd.f32 %v256, %v552
      %v554 = vpop.f32.mrf.mxu0
      %v555 = vadd.f32 %v256, %v554
      %556 = vmatmul.bf16.gmra.mxu0 %v396
      %v557 = vpop.f32.mrf.mxu0
      %v558 = vadd.f32 %v256, %v557
      %v559 = vpop.f32.mrf.mxu0
      %v560 = vadd.f32 %v256, %v559
      %561 = vmatmul.bf16.gmra.mxu0 %v397
      %v562 = vpop.f32.mrf.mxu0
      %v563 = vadd.f32 %v256, %v562
      %v564 = vpop.f32.mrf.mxu0
      %v565 = vadd.f32 %v256, %v564
      %566 = vmatmul.bf16.gmra.mxu0 %v398
      %v567 = vpop.f32.mrf.mxu0
      %v568 = vadd.f32 %v256, %v567
      %v569 = vpop.f32.mrf.mxu0
      %v570 = vadd.f32 %v256, %v569
      %571 = vmatmul.bf16.gmra.mxu0 %v399
      %v572 = vpop.f32.mrf.mxu0
      %v573 = vadd.f32 %v256, %v572
      %v574 = vpop.f32.mrf.mxu0
      %v575 = vadd.f32 %v256, %v574
      %576 = vmatmul.bf16.gmra.mxu0 %v400
      %v577 = vpop.f32.mrf.mxu0
      %v578 = vadd.f32 %v256, %v577
      %v579 = vpop.f32.mrf.mxu0
      %v580 = vadd.f32 %v256, %v579
      %581 = vmatmul.bf16.gmra.mxu0 %v401
      %v582 = vpop.f32.mrf.mxu0
      %v583 = vadd.f32 %v256, %v582
      %v584 = vpop.f32.mrf.mxu0
      %v585 = vadd.f32 %v256, %v584
      %586 = vmatmul.bf16.gmra.mxu0 %v402
      %v587 = vpop.f32.mrf.mxu0
      %v588 = vadd.f32 %v256, %v587
      %v589 = vpop.f32.mrf.mxu0
      %v590 = vadd.f32 %v256, %v589
      %591 = vmatmul.bf16.gmra.mxu0 %v403
      %v592 = vpop.f32.mrf.mxu0
      %v593 = vadd.f32 %v256, %v592
      %v594 = vpop.f32.mrf.mxu0
      %v595 = vadd.f32 %v256, %v594
      %596 = vmatmul.bf16.gmra.mxu0 %v404
      %v597 = vpop.f32.mrf.mxu0
      %v598 = vadd.f32 %v256, %v597
      %v599 = vpop.f32.mrf.mxu0
      %v600 = vadd.f32 %v256, %v599
      %601 = vmatmul.bf16.gmra.mxu0 %v405
      %v602 = vpop.f32.mrf.mxu0
      %v603 = vadd.f32 %v256, %v602
      %v604 = vpop.f32.mrf.mxu0
      %v605 = vadd.f32 %v256, %v604
      %606 = vmatmul.bf16.gmra.mxu0 %v406
      %v607 = vpop.f32.mrf.mxu0
      %v608 = vadd.f32 %v256, %v607
      %v609 = vpop.f32.mrf.mxu0
      %v610 = vadd.f32 %v256, %v609
      %611 = vmatmul.bf16.gmra.mxu0 %v407
      %v612 = vpop.f32.mrf.mxu0
      %v613 = vadd.f32 %v256, %v612
      %v614 = vpop.f32.mrf.mxu0
      %v615 = vadd.f32 %v256, %v614
      %616 = vmatmul.bf16.gmra.mxu0 %v408
      %v617 = vpop.f32.mrf.mxu0
      %v618 = vadd.f32 %v256, %v617
      %v619 = vpop.f32.mrf.mxu0
      %v620 = vadd.f32 %v256, %v619
      %621 = vmatmul.bf16.gmra.mxu0 %v409
      %v622 = vpop.f32.mrf.mxu0
      %v623 = vadd.f32 %v256, %v622
      %v624 = vpop.f32.mrf.mxu0
      %v625 = vadd.f32 %v256, %v624
      %626 = vmatmul.bf16.gmra.mxu0 %v410
      %v627 = vpop.f32.mrf.mxu0
      %v628 = vadd.f32 %v256, %v627
      %v629 = vpop.f32.mrf.mxu0
      %v630 = vadd.f32 %v256, %v629
      %631 = vmatmul.bf16.gmra.mxu0 %v411
      %v632 = vpop.f32.mrf.mxu0
      %v633 = vadd.f32 %v256, %v632
      %v634 = vpop.f32.mrf.mxu0
      %v635 = vadd.f32 %v256, %v634
      %636 = vmatmul.bf16.gmra.mxu0 %v412
      %v637 = vpop.f32.mrf.mxu0
      %v638 = vadd.f32 %v256, %v637
      %v639 = vpop.f32.mrf.mxu0
      %v640 = vadd.f32 %v256, %v639
      %641 = vmatmul.bf16.gmra.mxu0 %v413
      %v642 = vpop.f32.mrf.mxu0
      %v643 = vadd.f32 %v256, %v642
      %v644 = vpop.f32.mrf.mxu0
      %v645 = vadd.f32 %v256, %v644
      %646 = vmatmul.bf16.gmra.mxu0 %v414
      %v647 = vpop.f32.mrf.mxu0
      %v648 = vadd.f32 %v256, %v647
      %v649 = vpop.f32.mrf.mxu0
      %v650 = vadd.f32 %v256, %v649
      %651 = vmatmul.bf16.gmra.mxu0 %v415
      %v652 = vpop.f32.mrf.mxu0
      %v653 = vadd.f32 %v256, %v652
      %v654 = vpop.f32.mrf.mxu0
      %v655 = vadd.f32 %v256, %v654
      %656 = vmatmul.bf16.gmra.mxu0 %v416
      %v657 = vpop.f32.mrf.mxu0
      %v658 = vadd.f32 %v256, %v657
      %v659 = vpop.f32.mrf.mxu0
      %v660 = vadd.f32 %v256, %v659
      %661 = vmatmul.bf16.gmra.mxu0 %v417
      %v662 = vpop.f32.mrf.mxu0
      %v663 = vadd.f32 %v256, %v662
      %v664 = vpop.f32.mrf.mxu0
      %v665 = vadd.f32 %v256, %v664
      %666 = vdwg.mxu0
      %667 = vst [vmem:[%s172] sm:$0xff] %v508
      %668 = vst [vmem:[%s172 + $0x8] sm:$0xff] %v510
      %669 = vst [vmem:[%s172 + $0x10] sm:$0xff] %v513
      %670 = vst [vmem:[%s172 + $0x18] sm:$0xff] %v515
      %671 = vst [vmem:[%s172 + $0x20] sm:$0xff] %v518
      %672 = vst [vmem:[%s172 + $0x28] sm:$0xff] %v520
      %673 = vst [vmem:[%s172 + $0x30] sm:$0xff] %v523
      %674 = vst [vmem:[%s172 + $0x38] sm:$0xff] %v525
      %675 = vst [vmem:[%s172 + $0x40] sm:$0xff] %v528
      %676 = vst [vmem:[%s172 + $0x48] sm:$0xff] %v530
      %677 = vst [vmem:[%s172 + $0x50] sm:$0xff] %v533
      %678 = vst [vmem:[%s172 + $0x58] sm:$0xff] %v535
      %679 = vst [vmem:[%s172 + $0x60] sm:$0xff] %v538
      %680 = vst [vmem:[%s172 + $0x68] sm:$0xff] %v540
      %681 = vst [vmem:[%s172 + $0x70] sm:$0xff] %v543
      %682 = vst [vmem:[%s172 + $0x78] sm:$0xff] %v545
      %683 = vst [vmem:[%s172 + $0x80] sm:$0xff] %v548
      %684 = vst [vmem:[%s172 + $0x88] sm:$0xff] %v550
      %685 = vst [vmem:[%s172 + $0x90] sm:$0xff] %v553
      %686 = vst [vmem:[%s172 + $0x98] sm:$0xff] %v555
      %687 = vst [vmem:[%s172 + $0xa0] sm:$0xff] %v558
      %688 = vst [vmem:[%s172 + $0xa8] sm:$0xff] %v560
      %689 = vst [vmem:[%s172 + $0xb0] sm:$0xff] %v563
      %690 = vst [vmem:[%s172 + $0xb8] sm:$0xff] %v565
      %691 = vst [vmem:[%s172 + $0xc0] sm:$0xff] %v568
      %692 = vst [vmem:[%s172 + $0xc8] sm:$0xff] %v570
      %693 = vst [vmem:[%s172 + $0xd0] sm:$0xff] %v573
      %694 = vst [vmem:[%s172 + $0xd8] sm:$0xff] %v575
      %695 = vst [vmem:[%s172 + $0xe0] sm:$0xff] %v578
      %696 = vst [vmem:[%s172 + $0xe8] sm:$0xff] %v580
      %697 = vst [vmem:[%s172 + $0xf0] sm:$0xff] %v583
      %698 = vst [vmem:[%s172 + $0xf8] sm:$0xff] %v585
      %699 = vst [vmem:[%s172 + $0x100] sm:$0xff] %v588
      %700 = vst [vmem:[%s172 + $0x108] sm:$0xff] %v590
      %701 = vst [vmem:[%s172 + $0x110] sm:$0xff] %v593
      %702 = vst [vmem:[%s172 + $0x118] sm:$0xff] %v595
      %703 = vst [vmem:[%s172 + $0x120] sm:$0xff] %v598
      %704 = vst [vmem:[%s172 + $0x128] sm:$0xff] %v600
      %705 = vst [vmem:[%s172 + $0x130] sm:$0xff] %v603
      %706 = vst [vmem:[%s172 + $0x138] sm:$0xff] %v605
      %707 = vst [vmem:[%s172 + $0x140] sm:$0xff] %v608
      %708 = vst [vmem:[%s172 + $0x148] sm:$0xff] %v610
      %709 = vst [vmem:[%s172 + $0x150] sm:$0xff] %v613
      %710 = vst [vmem:[%s172 + $0x158] sm:$0xff] %v615
      %711 = vst [vmem:[%s172 + $0x160] sm:$0xff] %v618
      %712 = vst [vmem:[%s172 + $0x168] sm:$0xff] %v620
      %713 = vst [vmem:[%s172 + $0x170] sm:$0xff] %v623
      %714 = vst [vmem:[%s172 + $0x178] sm:$0xff] %v625
      %715 = vst [vmem:[%s172 + $0x180] sm:$0xff] %v628
      %716 = vst [vmem:[%s172 + $0x188] sm:$0xff] %v630
      %717 = vst [vmem:[%s172 + $0x190] sm:$0xff] %v633
      %718 = vst [vmem:[%s172 + $0x198] sm:$0xff] %v635
      %719 = vst [vmem:[%s172 + $0x1a0] sm:$0xff] %v638
      %720 = vst [vmem:[%s172 + $0x1a8] sm:$0xff] %v640
      %721 = vst [vmem:[%s172 + $0x1b0] sm:$0xff] %v643
      %722 = vst [vmem:[%s172 + $0x1b8] sm:$0xff] %v645
      %723 = vst [vmem:[%s172 + $0x1c0] sm:$0xff] %v648
      %724 = vst [vmem:[%s172 + $0x1c8] sm:$0xff] %v650
      %725 = vst [vmem:[%s172 + $0x1d0] sm:$0xff] %v653
      %726 = vst [vmem:[%s172 + $0x1d8] sm:$0xff] %v655
      %727 = vst [vmem:[%s172 + $0x1e0] sm:$0xff] %v658
      %728 = vst [vmem:[%s172 + $0x1e8] sm:$0xff] %v660
      %729 = vst [vmem:[%s172 + $0x1f0] sm:$0xff] %v663
      %730 = vst [vmem:[%s172 + $0x1f8] sm:$0xff] %v665
      %s731 = smul.u32 64, %s14
      %p732 = scmp.lt.s32.totalorder %s731, 255
      %s733 = scalar_select %p732, %s731, 255
      %s734 = smul.addr %s733, 8
      %s735 = scalar_lea.vmem %s3, %s734
      // Predicated region
      $region33: #{netG_forward.8} parent=31 // pred_check
        %p736 = pneg %p100
      $region34: #{netG_forward.8} parent=31 // pred_check_branch
        %738 = sbr.rel (%p736) target = $region36
      $region35: #{netG_forward.8} parent=31 // pred_region
        %s739 = smul.u32 64, %s14
      $region36: #{netG_forward.8} parent=31 // pred_fallthru
        _
    $region32: #{netG_forward.8} parent=5 // pred_fallthru
      _
    %p740 = scmp.le.s32.totalorder 2, %s9
    // Predicated region
    $region37: #{netG_forward.8} parent=5 // pred_check
      %p741 = pneg %p740
    $region38: #{netG_forward.8} parent=5 // pred_check_branch
      %743 = sbr.rel (%p741) target = $region40
    $region39: #{netG_forward.8} parent=5 // pred_region
      %s744 = ssub.s32 %s9, 2
      // Predicated region
      $region41: #{netG_forward.8} parent=39 // pred_check
        %p745 = pneg %p106
      $region42: #{netG_forward.8} parent=39 // pred_check_branch
        %747 = sbr.rel (%p745) target = $region44
      $region43: #{netG_forward.8} parent=39 // pred_region
        %s748 = smul.u32 64, %s15
        %p749 = scmp.lt.s32.totalorder %s748, 255
        %s750 = scalar_select %p749, %s748, 255
        %s751 = smul.addr %s750, 8
        %s752 = scalar_lea.vmem %s3, %s751
      $region44: #{netG_forward.8} parent=39 // pred_fallthru
        _
    $region40: #{netG_forward.8} parent=5 // pred_fallthru
      _
  $region6: #{netG_forward.8} parent=0 // loop_footer
    %s13 = sadd.s32 1, %s9
  $region7: #{netG_forward.8} parent=0 // loop_footer_branch
    %8 = sbr.rel target = $region3
  $region8: #{netG_forward.8} parent=0 // loop_exit
    _

// kernel: netG_forward.9
$region0: #{netG_forward.9}
  #allocation0 [shape = 'u32[]', space=smem, size = 0x4, offset = 0x4, fixed_abs, tag = 'smem constant byte address 0x4 - core index']
  #allocation1 [shape = 'u32[72,128]{1,0:T(1,128)}', space=vmem, size = 0x9000, scoped, tag = 'internal scratch']
  %s0 = inlined_call_operand.vmem [shape: bf16[512,256], index: 0, kind: input, shape index: {}]
  %s1 = inlined_call_operand.vmem [shape: bf16[256,128], index: 1, kind: input, shape index: {}]
  %s2 = inlined_call_operand.vmem [shape: f32[1,128], index: 2, kind: input, shape index: {}]
  %s3 = inlined_call_operand.vmem [shape: f32[512,128], index: 3, kind: output, shape index: {}]
  %s4 = sld [smem:[#allocation0]]
  $region45: #{netG_forward.9} parent=0
    _
  %s6 = ssub.s32 1, %s4
  %s7 = scalar_select 0, %s6, %s4
  loop: start=0, step=1, limit=6
  $region2: #{netG_forward.9} parent=0 // loop_pre_header
    _
  $region3: #{netG_forward.9} parent=0 // loop_header
    %s9 = sphi 0, %s13
    %p10 = scmp.ge.s32.totalorder %s9, 6
    %s19 = sphi 0, %s21
    %s22 = sphi 0, %s19
    %s23 = sphi 0, %s22
    %s39 = sphi 0, %s23
    %s43 = sphi 0, %s43
    %s45 = sphi 0, %s43
    %s46 = sphi 0, %s45
    %s60 = sphi 0, %s46
    %s64 = sphi 0, %s64
    %s66 = sphi 0, %s64
    %s67 = sphi 0, %s66
    %s81 = sphi 0, %s67
    %s87 = sphi 0, %s89
    %s90 = sphi 0, %s87
    %s91 = sphi 0, %s90
    %s107 = sphi 0, %s91
  $region4: #{netG_forward.9} parent=0 // loop_header_branch
    %12 = sbr.rel (%p10) target = $region8
  $region5: #{netG_forward.9} parent=0 // loop_body
    %s14 = ssub.s32 %s9, 1
    %s15 = ssub.s32 %s9, 2
    %s16 = sadd.s32 %s9, 1
    %s17 = ssub.s32 %s9, %s16
    %p18 = scmp.eq.s32.totalorder %s17, 0
    %s20 = sadd.s32 %s19, 1
    %s21 = scalar_select %p18, %s19, %s20
    %p24 = pneg %p18
    %p25 = scmp.eq.s32.totalorder %s9, 3
    %p26 = por %p24, %p25
    %p27 = scmp.ne.s32.totalorder %s19, %s22
    %p28 = scmp.eq.s32.totalorder %s9, 0
    %p29 = por %p27, %p28
    %p30 = scmp.ne.s32.totalorder %s19, %s22
    %p31 = scmp.eq.s32.totalorder %s14, 3
    %p32 = por %p30, %p31
    %p33 = scmp.ne.s32.totalorder %s22, %s23
    %p34 = scmp.eq.s32.totalorder %s14, 0
    %p35 = por %p33, %p34
    %p36 = scmp.ne.s32.totalorder %s22, %s23
    %p37 = scmp.eq.s32.totalorder %s15, 3
    %p38 = por %p36, %p37
    %p40 = scmp.ne.s32.totalorder %s23, %s39
    %p41 = scmp.eq.s32.totalorder %s15, 0
    %p42 = por %p40, %p41
    %s44 = sadd.s32 %s43, 1
    %p47 = scmp.eq.s32.totalorder %s9, 3
    %p48 = scmp.ne.s32.totalorder %s43, %s45
    %p49 = scmp.eq.s32.totalorder %s9, 0
    %p50 = por %p48, %p49
    %p51 = scmp.ne.s32.totalorder %s43, %s45
    %p52 = scmp.eq.s32.totalorder %s14, 3
    %p53 = por %p51, %p52
    %p54 = scmp.ne.s32.totalorder %s45, %s46
    %p55 = scmp.eq.s32.totalorder %s14, 0
    %p56 = por %p54, %p55
    %p57 = scmp.ne.s32.totalorder %s45, %s46
    %p58 = scmp.eq.s32.totalorder %s15, 3
    %p59 = por %p57, %p58
    %p61 = scmp.ne.s32.totalorder %s46, %s60
    %p62 = scmp.eq.s32.totalorder %s15, 0
    %p63 = por %p61, %p62
    %s65 = sadd.s32 %s64, 1
    %p68 = scmp.eq.s32.totalorder %s9, 3
    %p69 = scmp.ne.s32.totalorder %s64, %s66
    %p70 = scmp.eq.s32.totalorder %s9, 0
    %p71 = por %p69, %p70
    %p72 = scmp.ne.s32.totalorder %s64, %s66
    %p73 = scmp.eq.s32.totalorder %s14, 3
    %p74 = por %p72, %p73
    %p75 = scmp.ne.s32.totalorder %s66, %s67
    %p76 = scmp.eq.s32.totalorder %s14, 0
    %p77 = por %p75, %p76
    %p78 = scmp.ne.s32.totalorder %s66, %s67
    %p79 = scmp.eq.s32.totalorder %s15, 3
    %p80 = por %p78, %p79
    %p82 = scmp.ne.s32.totalorder %s67, %s81
    %p83 = scmp.eq.s32.totalorder %s15, 0
    %p84 = por %p82, %p83
    %s85 = ssub.s32 %s9, %s16
    %p86 = scmp.eq.s32.totalorder %s85, 0
    %s88 = sadd.s32 %s87, 1
    %s89 = scalar_select %p86, %s87, %s88
    %p92 = pneg %p86
    %p93 = scmp.eq.s32.totalorder %s9, 3
    %p94 = por %p92, %p93
    %p95 = scmp.ne.s32.totalorder %s87, %s90
    %p96 = scmp.eq.s32.totalorder %s9, 0
    %p97 = por %p95, %p96
    %p98 = scmp.ne.s32.totalorder %s87, %s90
    %p99 = scmp.eq.s32.totalorder %s14, 3
    %p100 = por %p98, %p99
    %p101 = scmp.ne.s32.totalorder %s90, %s91
    %p102 = scmp.eq.s32.totalorder %s14, 0
    %p103 = por %p101, %p102
    %p104 = scmp.ne.s32.totalorder %s90, %s91
    %p105 = scmp.eq.s32.totalorder %s15, 3
    %p106 = por %p104, %p105
    %p108 = scmp.ne.s32.totalorder %s91, %s107
    %p109 = scmp.eq.s32.totalorder %s15, 0
    %p110 = por %p108, %p109
    %p111 = scmp.le.s32.totalorder 1, %s9
    %p112 = scmp.lt.s32.totalorder %s9, 5
    %p113 = pnand %p111, %p112
    %p114 = pneg %p113
    // Predicated region
    $region9: #{netG_forward.9} parent=5 // pred_check
      _
    $region10: #{netG_forward.9} parent=5 // pred_check_branch
      %116 = sbr.rel (%p113) target = $region12
    $region11: #{netG_forward.9} parent=5 // pred_region
      %s117 = ssub.s32 %s9, 1
      // Predicated region
      $region13: #{netG_forward.9} parent=11 // pred_check
        %p118 = pneg %p56
      $region14: #{netG_forward.9} parent=11 // pred_check_branch
        %120 = sbr.rel (%p118) target = $region16
      $region15: #{netG_forward.9} parent=11 // pred_region
        _
      $region16: #{netG_forward.9} parent=11 // pred_fallthru
        _
      // Predicated region
      $region17: #{netG_forward.9} parent=11 // pred_check
        %p121 = pneg %p77
      $region18: #{netG_forward.9} parent=11 // pred_check_branch
        %123 = sbr.rel (%p121) target = $region20
      $region19: #{netG_forward.9} parent=11 // pred_region
        _
      $region20: #{netG_forward.9} parent=11 // pred_fallthru
        _
    $region12: #{netG_forward.9} parent=5 // pred_fallthru
      _
    %p124 = scmp.lt.s32.totalorder %s9, 4
    // Predicated region
    $region21: #{netG_forward.9} parent=5 // pred_check
      %p125 = pneg %p124
    $region22: #{netG_forward.9} parent=5 // pred_check_branch
      %127 = sbr.rel (%p125) target = $region24
    $region23: #{netG_forward.9} parent=5 // pred_region
      // Predicated region
      $region25: #{netG_forward.9} parent=23 // pred_check
        %p128 = pneg %p29
      $region26: #{netG_forward.9} parent=23 // pred_check_branch
        %130 = sbr.rel (%p128) target = $region28
      $region27: #{netG_forward.9} parent=23 // pred_region
        %s131 = smul.u32 16, %s9
        %p132 = scmp.lt.s32.totalorder %s131, 63
        %s133 = scalar_select %p132, %s131, 63
        %s134 = smul.addr %s133, 2
        %s135 = smul.addr %s134, 4
        %s136 = scalar_lea.vmem %s0, %s135
        %s137 = smul.u32 16, %s9
      $region28: #{netG_forward.9} parent=23 // pred_fallthru
        _
    $region24: #{netG_forward.9} parent=5 // pred_fallthru
      _
    %p138 = scmp.le.s32.totalorder 1, %s9
    %p139 = scmp.lt.s32.totalorder %s9, 5
    %p140 = pnand %p138, %p139
    %p141 = pneg %p140
    // Predicated region
    $region29: #{netG_forward.9} parent=5 // pred_check
      _
    $region30: #{netG_forward.9} parent=5 // pred_check_branch
      %143 = sbr.rel (%p140) target = $region32
    $region31: #{netG_forward.9} parent=5 // pred_region
      %s144 = ssub.s32 %s9, 1
      %s145 = smul.u32 16, %s14
      %p146 = scmp.lt.s32.totalorder %s145, 63
      %s147 = scalar_select %p146, %s145, 63
      %s148 = smul.addr %s147, 2
      %s149 = smul.addr %s148, 4
      %s150 = scalar_lea.vmem %s0, %s149
      %p151 = pneg %p35
      %p152 = pneg %p32
      %p153 = pneg %p56
      %p154 = pneg %p53
      %p155 = pneg %p77
      %p156 = pneg %p74
      %p157 = pneg %p103
      %p158 = pneg %p100
      %s159 = smul.u32 16, %s14
      %p160 = scmp.lt.s32.totalorder %s159, 63
      %s161 = scalar_select %p160, %s159, 63
      %s162 = smul.addr %s161, 8
      %s163 = scalar_lea.vmem %s3, %s162
      %s164 = smul.u32 16, %s14
      %p165 = scmp.lt.s32.totalorder %s164, 63
      %s166 = scalar_select %p165, %s164, 63
      %s167 = smul.addr %s166, 2
      %s168 = smul.addr %s167, 4
      %s169 = scalar_lea.vmem %s0, %s168
      %s170 = smul.u32 16, %s14
      %s171 = smul.u32 16, %s14
      %p172 = scmp.lt.s32.totalorder %s171, 63
      %s173 = scalar_select %p172, %s171, 63
      %s174 = smul.addr %s173, 8
      %s175 = scalar_lea.vmem %s3, %s174
      %s176 = smul.u32 16, %s14
      %v177 = vld [vmem:[%s169] sm:$0xff]
      %v178 = vld [vmem:[%s169 + $0x8] sm:$0xff]
      %v179 = vld [vmem:[%s169 + $0x10] sm:$0xff]
      %v180 = vld [vmem:[%s169 + $0x18] sm:$0xff]
      %v181 = vld [vmem:[%s169 + $0x20] sm:$0xff]
      %v182 = vld [vmem:[%s169 + $0x28] sm:$0xff]
      %v183 = vld [vmem:[%s169 + $0x30] sm:$0xff]
      %v184 = vld [vmem:[%s169 + $0x38] sm:$0xff]
      %v185 = vld [vmem:[%s169 + $0x40] sm:$0xff]
      %v186 = vld [vmem:[%s169 + $0x48] sm:$0xff]
      %v187 = vld [vmem:[%s169 + $0x50] sm:$0xff]
      %v188 = vld [vmem:[%s169 + $0x58] sm:$0xff]
      %v189 = vld [vmem:[%s169 + $0x60] sm:$0xff]
      %v190 = vld [vmem:[%s169 + $0x68] sm:$0xff]
      %v191 = vld [vmem:[%s169 + $0x70] sm:$0xff]
      %v192 = vld [vmem:[%s169 + $0x78] sm:$0xff]
      %v193 = vld [vmem:[%s1] sm:$0xf]
      %v194 = vld [vmem:[%s1 + $0x4] sm:$0xf]
      %v195 = vld [vmem:[%s1 + $0x8] sm:$0xf]
      %v196 = vld [vmem:[%s1 + $0xc] sm:$0xf]
      %v197 = vld [vmem:[%s1 + $0x10] sm:$0xf]
      %v198 = vld [vmem:[%s1 + $0x14] sm:$0xf]
      %v199 = vld [vmem:[%s1 + $0x18] sm:$0xf]
      %v200 = vld [vmem:[%s1 + $0x1c] sm:$0xf]
      %v201 = vld [vmem:[%s1 + $0x20] sm:$0xf]
      %v202 = vld [vmem:[%s1 + $0x24] sm:$0xf]
      %v203 = vld [vmem:[%s1 + $0x28] sm:$0xf]
      %v204 = vld [vmem:[%s1 + $0x2c] sm:$0xf]
      %v205 = vld [vmem:[%s1 + $0x30] sm:$0xf]
      %v206 = vld [vmem:[%s1 + $0x34] sm:$0xf]
      %v207 = vld [vmem:[%s1 + $0x38] sm:$0xf]
      %v208 = vld [vmem:[%s1 + $0x3c] sm:$0xf]
      %v209 = vld [vmem:[%s1 + $0x40] sm:$0xf]
      %v210 = vld [vmem:[%s1 + $0x44] sm:$0xf]
      %v211 = vld [vmem:[%s1 + $0x48] sm:$0xf]
      %v212 = vld [vmem:[%s1 + $0x4c] sm:$0xf]
      %v213 = vld [vmem:[%s1 + $0x50] sm:$0xf]
      %v214 = vld [vmem:[%s1 + $0x54] sm:$0xf]
      %v215 = vld [vmem:[%s1 + $0x58] sm:$0xf]
      %v216 = vld [vmem:[%s1 + $0x5c] sm:$0xf]
      %v217 = vld [vmem:[%s1 + $0x60] sm:$0xf]
      %v218 = vld [vmem:[%s1 + $0x64] sm:$0xf]
      %v219 = vld [vmem:[%s1 + $0x68] sm:$0xf]
      %v220 = vld [vmem:[%s1 + $0x6c] sm:$0xf]
      %v221 = vld [vmem:[%s1 + $0x70] sm:$0xf]
      %v222 = vld [vmem:[%s1 + $0x74] sm:$0xf]
      %v223 = vld [vmem:[%s1 + $0x78] sm:$0xf]
      %v224 = vld [vmem:[%s1 + $0x7c] sm:$0xf]
      %v225 = vld [vmem:[%s2] sm:$0x1]
      %v227 = vperm.slane %v225, 0
      %v245 = vunpack.c.l.b16 %v177
      %v246 = vunpack.c.h.b16 %v177
      %v247 = vunpack.c.l.b16 %v178
      %v248 = vunpack.c.h.b16 %v178
      %v249 = vunpack.c.l.b16 %v179
      %v250 = vunpack.c.h.b16 %v179
      %v251 = vunpack.c.l.b16 %v180
      %v252 = vunpack.c.h.b16 %v180
      %v253 = vunpack.c.l.b16 %v181
      %v254 = vunpack.c.h.b16 %v181
      %v255 = vunpack.c.l.b16 %v182
      %v256 = vunpack.c.h.b16 %v182
      %v257 = vunpack.c.l.b16 %v183
      %v258 = vunpack.c.h.b16 %v183
      %v259 = vunpack.c.l.b16 %v184
      %v260 = vunpack.c.h.b16 %v184
      %v261 = vunpack.c.l.b16 %v185
      %v262 = vunpack.c.h.b16 %v185
      %v263 = vunpack.c.l.b16 %v186
      %v264 = vunpack.c.h.b16 %v186
      %v265 = vunpack.c.l.b16 %v187
      %v266 = vunpack.c.h.b16 %v187
      %v267 = vunpack.c.l.b16 %v188
      %v268 = vunpack.c.h.b16 %v188
      %v269 = vunpack.c.l.b16 %v189
      %v270 = vunpack.c.h.b16 %v189
      %v271 = vunpack.c.l.b16 %v190
      %v272 = vunpack.c.h.b16 %v190
      %v273 = vunpack.c.l.b16 %v191
      %v274 = vunpack.c.h.b16 %v191
      %v275 = vunpack.c.l.b16 %v192
      %v276 = vunpack.c.h.b16 %v192
      %v277 = vpack.c.b16 %v247, %v245
      %v278 = vpack.c.b16 %v248, %v246
      %v279 = vpack.c.b16 %v251, %v249
      %v280 = vpack.c.b16 %v252, %v250
      %v281 = vpack.c.b16 %v255, %v253
      %v282 = vpack.c.b16 %v256, %v254
      %v283 = vpack.c.b16 %v259, %v257
      %v284 = vpack.c.b16 %v260, %v258
      %v285 = vpack.c.b16 %v263, %v261
      %v286 = vpack.c.b16 %v264, %v262
      %v287 = vpack.c.b16 %v267, %v265
      %v288 = vpack.c.b16 %v268, %v266
      %v289 = vpack.c.b16 %v271, %v269
      %v290 = vpack.c.b16 %v272, %v270
      %v291 = vpack.c.b16 %v275, %v273
      %v292 = vpack.c.b16 %v276, %v274
      %v341 = vunpack.c.l.b16 %v193
      %v342 = vunpack.c.l.b16 %v194
      %v343 = vunpack.c.l.b16 %v195
      %v344 = vunpack.c.l.b16 %v196
      %v345 = vunpack.c.l.b16 %v197
      %v346 = vunpack.c.l.b16 %v198
      %v347 = vunpack.c.l.b16 %v199
      %v348 = vunpack.c.l.b16 %v200
      %v349 = vunpack.c.l.b16 %v201
      %v350 = vunpack.c.l.b16 %v202
      %v351 = vunpack.c.l.b16 %v203
      %v352 = vunpack.c.l.b16 %v204
      %v353 = vunpack.c.l.b16 %v205
      %v354 = vunpack.c.l.b16 %v206
      %v355 = vunpack.c.l.b16 %v207
      %v356 = vunpack.c.l.b16 %v208
      %v357 = vunpack.c.l.b16 %v209
      %v358 = vunpack.c.l.b16 %v210
      %v359 = vunpack.c.l.b16 %v211
      %v360 = vunpack.c.l.b16 %v212
      %v361 = vunpack.c.l.b16 %v213
      %v362 = vunpack.c.l.b16 %v214
      %v363 = vunpack.c.l.b16 %v215
      %v364 = vunpack.c.l.b16 %v216
      %v365 = vunpack.c.l.b16 %v217
      %v366 = vunpack.c.l.b16 %v218
      %v367 = vunpack.c.l.b16 %v219
      %v368 = vunpack.c.l.b16 %v220
      %v369 = vunpack.c.l.b16 %v221
      %v370 = vunpack.c.l.b16 %v222
      %v371 = vunpack.c.l.b16 %v223
      %v372 = vunpack.c.l.b16 %v224
      %v373 = vpack.c.b16 %v342, %v341
      %v374 = vpack.c.b16 %v344, %v343
      %v375 = vpack.c.b16 %v346, %v345
      %v376 = vpack.c.b16 %v348, %v347
      %v377 = vpack.c.b16 %v350, %v349
      %v378 = vpack.c.b16 %v352, %v351
      %v379 = vpack.c.b16 %v354, %v353
      %v380 = vpack.c.b16 %v356, %v355
      %v381 = vpack.c.b16 %v358, %v357
      %v382 = vpack.c.b16 %v360, %v359
      %v383 = vpack.c.b16 %v362, %v361
      %v384 = vpack.c.b16 %v364, %v363
      %v385 = vpack.c.b16 %v366, %v365
      %v386 = vpack.c.b16 %v368, %v367
      %v387 = vpack.c.b16 %v370, %v369
      %v388 = vpack.c.b16 %v372, %v371
      %405 = vmatpush.bf16.msra.mxu0 %v380
      %406 = vmatpush.bf16.msra.mxu0 %v379
      %407 = vmatpush.bf16.msra.mxu0 %v378
      %408 = vmatpush.bf16.msra.mxu0 %v377
      %409 = vmatpush.bf16.msra.mxu0 %v376
      %410 = vmatpush.bf16.msra.mxu0 %v375
      %411 = vmatpush.bf16.msra.mxu0 %v374
      %412 = vmatpush.bf16.msra.mxu0 %v373
      %413 = vmatmul.bf16.gmra.mxu0 %v277
      %v414 = vpop.f32.mrf.mxu0
      %v415 = vadd.f32 %v227, %v414
      %v416 = vpop.f32.mrf.mxu0
      %v417 = vadd.f32 %v227, %v416
      %418 = vmatmul.bf16.gmra.mxu0 %v279
      %v419 = vpop.f32.mrf.mxu0
      %v420 = vadd.f32 %v227, %v419
      %v421 = vpop.f32.mrf.mxu0
      %v422 = vadd.f32 %v227, %v421
      %423 = vmatmul.bf16.gmra.mxu0 %v281
      %v424 = vpop.f32.mrf.mxu0
      %v425 = vadd.f32 %v227, %v424
      %v426 = vpop.f32.mrf.mxu0
      %v427 = vadd.f32 %v227, %v426
      %428 = vmatmul.bf16.gmra.mxu0 %v283
      %v429 = vpop.f32.mrf.mxu0
      %v430 = vadd.f32 %v227, %v429
      %v431 = vpop.f32.mrf.mxu0
      %v432 = vadd.f32 %v227, %v431
      %433 = vmatmul.bf16.gmra.mxu0 %v285
      %v434 = vpop.f32.mrf.mxu0
      %v435 = vadd.f32 %v227, %v434
      %v436 = vpop.f32.mrf.mxu0
      %v437 = vadd.f32 %v227, %v436
      %438 = vmatmul.bf16.gmra.mxu0 %v287
      %v439 = vpop.f32.mrf.mxu0
      %v440 = vadd.f32 %v227, %v439
      %v441 = vpop.f32.mrf.mxu0
      %v442 = vadd.f32 %v227, %v441
      %443 = vmatmul.bf16.gmra.mxu0 %v289
      %v444 = vpop.f32.mrf.mxu0
      %v445 = vadd.f32 %v227, %v444
      %v446 = vpop.f32.mrf.mxu0
      %v447 = vadd.f32 %v227, %v446
      %448 = vmatmul.bf16.gmra.mxu0 %v291
      %v449 = vpop.f32.mrf.mxu0
      %v450 = vadd.f32 %v227, %v449
      %v451 = vpop.f32.mrf.mxu0
      %v452 = vadd.f32 %v227, %v451
      %453 = vdwg.mxu0
      %454 = vmatpush.bf16.msra.mxu0 %v388
      %455 = vmatpush.bf16.msra.mxu0 %v387
      %456 = vmatpush.bf16.msra.mxu0 %v386
      %457 = vmatpush.bf16.msra.mxu0 %v385
      %458 = vmatpush.bf16.msra.mxu0 %v384
      %459 = vmatpush.bf16.msra.mxu0 %v383
      %460 = vmatpush.bf16.msra.mxu0 %v382
      %461 = vmatpush.bf16.msra.mxu0 %v381
      %462 = vmatmul.bf16.gmra.mxu0 %v278
      %v463 = vpop.f32.mrf.mxu0
      %v464 = vadd.f32 %v415, %v463
      %v465 = vpop.f32.mrf.mxu0
      %v466 = vadd.f32 %v417, %v465
      %467 = vmatmul.bf16.gmra.mxu0 %v280
      %v468 = vpop.f32.mrf.mxu0
      %v469 = vadd.f32 %v420, %v468
      %v470 = vpop.f32.mrf.mxu0
      %v471 = vadd.f32 %v422, %v470
      %472 = vmatmul.bf16.gmra.mxu0 %v282
      %v473 = vpop.f32.mrf.mxu0
      %v474 = vadd.f32 %v425, %v473
      %v475 = vpop.f32.mrf.mxu0
      %v476 = vadd.f32 %v427, %v475
      %477 = vmatmul.bf16.gmra.mxu0 %v284
      %v478 = vpop.f32.mrf.mxu0
      %v479 = vadd.f32 %v430, %v478
      %v480 = vpop.f32.mrf.mxu0
      %v481 = vadd.f32 %v432, %v480
      %482 = vmatmul.bf16.gmra.mxu0 %v286
      %v483 = vpop.f32.mrf.mxu0
      %v484 = vadd.f32 %v435, %v483
      %v485 = vpop.f32.mrf.mxu0
      %v486 = vadd.f32 %v437, %v485
      %487 = vmatmul.bf16.gmra.mxu0 %v288
      %v488 = vpop.f32.mrf.mxu0
      %v489 = vadd.f32 %v440, %v488
      %v490 = vpop.f32.mrf.mxu0
      %v491 = vadd.f32 %v442, %v490
      %492 = vmatmul.bf16.gmra.mxu0 %v290
      %v493 = vpop.f32.mrf.mxu0
      %v494 = vadd.f32 %v445, %v493
      %v495 = vpop.f32.mrf.mxu0
      %v496 = vadd.f32 %v447, %v495
      %497 = vmatmul.bf16.gmra.mxu0 %v292
      %v498 = vpop.f32.mrf.mxu0
      %v499 = vadd.f32 %v450, %v498
      %v500 = vpop.f32.mrf.mxu0
      %v501 = vadd.f32 %v452, %v500
      %502 = vdwg.mxu0
      %503 = vst [vmem:[%s175] sm:$0xff] %v464
      %504 = vst [vmem:[%s175 + $0x8] sm:$0xff] %v466
      %505 = vst [vmem:[%s175 + $0x10] sm:$0xff] %v469
      %506 = vst [vmem:[%s175 + $0x18] sm:$0xff] %v471
      %507 = vst [vmem:[%s175 + $0x20] sm:$0xff] %v474
      %508 = vst [vmem:[%s175 + $0x28] sm:$0xff] %v476
      %509 = vst [vmem:[%s175 + $0x30] sm:$0xff] %v479
      %510 = vst [vmem:[%s175 + $0x38] sm:$0xff] %v481
      %511 = vst [vmem:[%s175 + $0x40] sm:$0xff] %v484
      %512 = vst [vmem:[%s175 + $0x48] sm:$0xff] %v486
      %513 = vst [vmem:[%s175 + $0x50] sm:$0xff] %v489
      %514 = vst [vmem:[%s175 + $0x58] sm:$0xff] %v491
      %515 = vst [vmem:[%s175 + $0x60] sm:$0xff] %v494
      %516 = vst [vmem:[%s175 + $0x68] sm:$0xff] %v496
      %517 = vst [vmem:[%s175 + $0x70] sm:$0xff] %v499
      %518 = vst [vmem:[%s175 + $0x78] sm:$0xff] %v501
      %s519 = smul.u32 16, %s14
      %p520 = scmp.lt.s32.totalorder %s519, 63
      %s521 = scalar_select %p520, %s519, 63
      %s522 = smul.addr %s521, 8
      %s523 = scalar_lea.vmem %s3, %s522
      // Predicated region
      $region33: #{netG_forward.9} parent=31 // pred_check
        %p524 = pneg %p100
      $region34: #{netG_forward.9} parent=31 // pred_check_branch
        %526 = sbr.rel (%p524) target = $region36
      $region35: #{netG_forward.9} parent=31 // pred_region
        %s527 = smul.u32 16, %s14
      $region36: #{netG_forward.9} parent=31 // pred_fallthru
        _
    $region32: #{netG_forward.9} parent=5 // pred_fallthru
      _
    %p528 = scmp.le.s32.totalorder 2, %s9
    // Predicated region
    $region37: #{netG_forward.9} parent=5 // pred_check
      %p529 = pneg %p528
    $region38: #{netG_forward.9} parent=5 // pred_check_branch
      %531 = sbr.rel (%p529) target = $region40
    $region39: #{netG_forward.9} parent=5 // pred_region
      %s532 = ssub.s32 %s9, 2
      // Predicated region
      $region41: #{netG_forward.9} parent=39 // pred_check
        %p533 = pneg %p106
      $region42: #{netG_forward.9} parent=39 // pred_check_branch
        %535 = sbr.rel (%p533) target = $region44
      $region43: #{netG_forward.9} parent=39 // pred_region
        %s536 = smul.u32 16, %s15
        %p537 = scmp.lt.s32.totalorder %s536, 63
        %s538 = scalar_select %p537, %s536, 63
        %s539 = smul.addr %s538, 8
        %s540 = scalar_lea.vmem %s3, %s539
      $region44: #{netG_forward.9} parent=39 // pred_fallthru
        _
    $region40: #{netG_forward.9} parent=5 // pred_fallthru
      _
  $region6: #{netG_forward.9} parent=0 // loop_footer
    %s13 = sadd.s32 1, %s9
  $region7: #{netG_forward.9} parent=0 // loop_footer_branch
    %8 = sbr.rel target = $region3
  $region8: #{netG_forward.9} parent=0 // loop_exit
    _

// kernel: netG_forward.10
$region0: #{netG_forward.10}
  #allocation0 [shape = 'u32[]', space=smem, size = 0x4, offset = 0x4, fixed_abs, tag = 'smem constant byte address 0x4 - core index']
  #allocation1 [shape = 'u32[72,128]{1,0:T(1,128)}', space=vmem, size = 0x9000, scoped, tag = 'internal scratch']
  %s0 = inlined_call_operand.vmem [shape: bf16[128,512], index: 0, kind: input, shape index: {}]
  %s1 = inlined_call_operand.vmem [shape: bf16[512,128], index: 1, kind: input, shape index: {}]
  %s2 = inlined_call_operand.vmem [shape: f32[1,128], index: 2, kind: input, shape index: {}]
  %s3 = inlined_call_operand.vmem [shape: f32[128,128], index: 3, kind: output, shape index: {}]
  %s4 = sld [smem:[#allocation0]]
  $region45: #{netG_forward.10} parent=0
    _
  %s6 = ssub.s32 1, %s4
  %s7 = scalar_select 0, %s6, %s4
  loop: start=0, step=1, limit=4
  $region2: #{netG_forward.10} parent=0 // loop_pre_header
    _
  $region3: #{netG_forward.10} parent=0 // loop_header
    %s9 = sphi 0, %s13
    %p10 = scmp.ge.s32.totalorder %s9, 4
    %s19 = sphi 0, %s21
    %s22 = sphi 0, %s19
    %s23 = sphi 0, %s22
    %s39 = sphi 0, %s23
    %s43 = sphi 0, %s43
    %s45 = sphi 0, %s43
    %s46 = sphi 0, %s45
    %s60 = sphi 0, %s46
    %s64 = sphi 0, %s64
    %s66 = sphi 0, %s64
    %s67 = sphi 0, %s66
    %s81 = sphi 0, %s67
    %s87 = sphi 0, %s89
    %s90 = sphi 0, %s87
    %s91 = sphi 0, %s90
    %s107 = sphi 0, %s91
  $region4: #{netG_forward.10} parent=0 // loop_header_branch
    %12 = sbr.rel (%p10) target = $region8
  $region5: #{netG_forward.10} parent=0 // loop_body
    %s14 = ssub.s32 %s9, 1
    %s15 = ssub.s32 %s9, 2
    %s16 = sadd.s32 %s9, 1
    %s17 = ssub.s32 %s9, %s16
    %p18 = scmp.eq.s32.totalorder %s17, 0
    %s20 = sadd.s32 %s19, 1
    %s21 = scalar_select %p18, %s19, %s20
    %p24 = pneg %p18
    %p25 = scmp.eq.s32.totalorder %s9, 1
    %p26 = por %p24, %p25
    %p27 = scmp.ne.s32.totalorder %s19, %s22
    %p28 = scmp.eq.s32.totalorder %s9, 0
    %p29 = por %p27, %p28
    %p30 = scmp.ne.s32.totalorder %s19, %s22
    %p31 = scmp.eq.s32.totalorder %s14, 1
    %p32 = por %p30, %p31
    %p33 = scmp.ne.s32.totalorder %s22, %s23
    %p34 = scmp.eq.s32.totalorder %s14, 0
    %p35 = por %p33, %p34
    %p36 = scmp.ne.s32.totalorder %s22, %s23
    %p37 = scmp.eq.s32.totalorder %s15, 1
    %p38 = por %p36, %p37
    %p40 = scmp.ne.s32.totalorder %s23, %s39
    %p41 = scmp.eq.s32.totalorder %s15, 0
    %p42 = por %p40, %p41
    %s44 = sadd.s32 %s43, 1
    %p47 = scmp.eq.s32.totalorder %s9, 1
    %p48 = scmp.ne.s32.totalorder %s43, %s45
    %p49 = scmp.eq.s32.totalorder %s9, 0
    %p50 = por %p48, %p49
    %p51 = scmp.ne.s32.totalorder %s43, %s45
    %p52 = scmp.eq.s32.totalorder %s14, 1
    %p53 = por %p51, %p52
    %p54 = scmp.ne.s32.totalorder %s45, %s46
    %p55 = scmp.eq.s32.totalorder %s14, 0
    %p56 = por %p54, %p55
    %p57 = scmp.ne.s32.totalorder %s45, %s46
    %p58 = scmp.eq.s32.totalorder %s15, 1
    %p59 = por %p57, %p58
    %p61 = scmp.ne.s32.totalorder %s46, %s60
    %p62 = scmp.eq.s32.totalorder %s15, 0
    %p63 = por %p61, %p62
    %s65 = sadd.s32 %s64, 1
    %p68 = scmp.eq.s32.totalorder %s9, 1
    %p69 = scmp.ne.s32.totalorder %s64, %s66
    %p70 = scmp.eq.s32.totalorder %s9, 0
    %p71 = por %p69, %p70
    %p72 = scmp.ne.s32.totalorder %s64, %s66
    %p73 = scmp.eq.s32.totalorder %s14, 1
    %p74 = por %p72, %p73
    %p75 = scmp.ne.s32.totalorder %s66, %s67
    %p76 = scmp.eq.s32.totalorder %s14, 0
    %p77 = por %p75, %p76
    %p78 = scmp.ne.s32.totalorder %s66, %s67
    %p79 = scmp.eq.s32.totalorder %s15, 1
    %p80 = por %p78, %p79
    %p82 = scmp.ne.s32.totalorder %s67, %s81
    %p83 = scmp.eq.s32.totalorder %s15, 0
    %p84 = por %p82, %p83
    %s85 = ssub.s32 %s9, %s16
    %p86 = scmp.eq.s32.totalorder %s85, 0
    %s88 = sadd.s32 %s87, 1
    %s89 = scalar_select %p86, %s87, %s88
    %p92 = pneg %p86
    %p93 = scmp.eq.s32.totalorder %s9, 1
    %p94 = por %p92, %p93
    %p95 = scmp.ne.s32.totalorder %s87, %s90
    %p96 = scmp.eq.s32.totalorder %s9, 0
    %p97 = por %p95, %p96
    %p98 = scmp.ne.s32.totalorder %s87, %s90
    %p99 = scmp.eq.s32.totalorder %s14, 1
    %p100 = por %p98, %p99
    %p101 = scmp.ne.s32.totalorder %s90, %s91
    %p102 = scmp.eq.s32.totalorder %s14, 0
    %p103 = por %p101, %p102
    %p104 = scmp.ne.s32.totalorder %s90, %s91
    %p105 = scmp.eq.s32.totalorder %s15, 1
    %p106 = por %p104, %p105
    %p108 = scmp.ne.s32.totalorder %s91, %s107
    %p109 = scmp.eq.s32.totalorder %s15, 0
    %p110 = por %p108, %p109
    %p111 = scmp.le.s32.totalorder 1, %s9
    %p112 = scmp.lt.s32.totalorder %s9, 3
    %p113 = pnand %p111, %p112
    %p114 = pneg %p113
    // Predicated region
    $region9: #{netG_forward.10} parent=5 // pred_check
      _
    $region10: #{netG_forward.10} parent=5 // pred_check_branch
      %116 = sbr.rel (%p113) target = $region12
    $region11: #{netG_forward.10} parent=5 // pred_region
      %s117 = ssub.s32 %s9, 1
      // Predicated region
      $region13: #{netG_forward.10} parent=11 // pred_check
        %p118 = pneg %p56
      $region14: #{netG_forward.10} parent=11 // pred_check_branch
        %120 = sbr.rel (%p118) target = $region16
      $region15: #{netG_forward.10} parent=11 // pred_region
        _
      $region16: #{netG_forward.10} parent=11 // pred_fallthru
        _
      // Predicated region
      $region17: #{netG_forward.10} parent=11 // pred_check
        %p121 = pneg %p77
      $region18: #{netG_forward.10} parent=11 // pred_check_branch
        %123 = sbr.rel (%p121) target = $region20
      $region19: #{netG_forward.10} parent=11 // pred_region
        _
      $region20: #{netG_forward.10} parent=11 // pred_fallthru
        _
    $region12: #{netG_forward.10} parent=5 // pred_fallthru
      _
    %p124 = scmp.lt.s32.totalorder %s9, 2
    // Predicated region
    $region21: #{netG_forward.10} parent=5 // pred_check
      %p125 = pneg %p124
    $region22: #{netG_forward.10} parent=5 // pred_check_branch
      %127 = sbr.rel (%p125) target = $region24
    $region23: #{netG_forward.10} parent=5 // pred_region
      // Predicated region
      $region25: #{netG_forward.10} parent=23 // pred_check
        %p128 = pneg %p29
      $region26: #{netG_forward.10} parent=23 // pred_check_branch
        %130 = sbr.rel (%p128) target = $region28
      $region27: #{netG_forward.10} parent=23 // pred_region
        %s131 = smul.u32 8, %s9
        %p132 = scmp.lt.s32.totalorder %s131, 15
        %s133 = scalar_select %p132, %s131, 15
        %s134 = smul.addr %s133, 4
        %s135 = smul.addr %s134, 4
        %s136 = scalar_lea.vmem %s0, %s135
        %s137 = smul.u32 8, %s9
      $region28: #{netG_forward.10} parent=23 // pred_fallthru
        _
    $region24: #{netG_forward.10} parent=5 // pred_fallthru
      _
    %p138 = scmp.le.s32.totalorder 1, %s9
    %p139 = scmp.lt.s32.totalorder %s9, 3
    %p140 = pnand %p138, %p139
    %p141 = pneg %p140
    // Predicated region
    $region29: #{netG_forward.10} parent=5 // pred_check
      _
    $region30: #{netG_forward.10} parent=5 // pred_check_branch
      %143 = sbr.rel (%p140) target = $region32
    $region31: #{netG_forward.10} parent=5 // pred_region
      %s144 = ssub.s32 %s9, 1
      %s145 = smul.u32 8, %s14
      %p146 = scmp.lt.s32.totalorder %s145, 15
      %s147 = scalar_select %p146, %s145, 15
      %s148 = smul.addr %s147, 4
      %s149 = smul.addr %s148, 4
      %s150 = scalar_lea.vmem %s0, %s149
      %p151 = pneg %p35
      %p152 = pneg %p32
      %p153 = pneg %p56
      %p154 = pneg %p53
      %p155 = pneg %p77
      %p156 = pneg %p74
      %p157 = pneg %p103
      %p158 = pneg %p100
      %s159 = smul.u32 8, %s14
      %p160 = scmp.lt.s32.totalorder %s159, 15
      %s161 = scalar_select %p160, %s159, 15
      %s162 = smul.addr %s161, 8
      %s163 = scalar_lea.vmem %s3, %s162
      %s164 = smul.u32 8, %s14
      %p165 = scmp.lt.s32.totalorder %s164, 15
      %s166 = scalar_select %p165, %s164, 15
      %s167 = smul.addr %s166, 4
      %s168 = smul.addr %s167, 4
      %s169 = scalar_lea.vmem %s0, %s168
      %s170 = smul.u32 8, %s14
      %s171 = smul.u32 8, %s14
      %p172 = scmp.lt.s32.totalorder %s171, 15
      %s173 = scalar_select %p172, %s171, 15
      %s174 = smul.addr %s173, 8
      %s175 = scalar_lea.vmem %s3, %s174
      %s176 = smul.u32 8, %s14
      %v177 = vld [vmem:[%s169] sm:$0xff]
      %v178 = vld [vmem:[%s169 + $0x8] sm:$0xff]
      %v179 = vld [vmem:[%s169 + $0x10] sm:$0xff]
      %v180 = vld [vmem:[%s169 + $0x18] sm:$0xff]
      %v181 = vld [vmem:[%s169 + $0x20] sm:$0xff]
      %v182 = vld [vmem:[%s169 + $0x28] sm:$0xff]
      %v183 = vld [vmem:[%s169 + $0x30] sm:$0xff]
      %v184 = vld [vmem:[%s169 + $0x38] sm:$0xff]
      %v185 = vld [vmem:[%s169 + $0x40] sm:$0xff]
      %v186 = vld [vmem:[%s169 + $0x48] sm:$0xff]
      %v187 = vld [vmem:[%s169 + $0x50] sm:$0xff]
      %v188 = vld [vmem:[%s169 + $0x58] sm:$0xff]
      %v189 = vld [vmem:[%s169 + $0x60] sm:$0xff]
      %v190 = vld [vmem:[%s169 + $0x68] sm:$0xff]
      %v191 = vld [vmem:[%s169 + $0x70] sm:$0xff]
      %v192 = vld [vmem:[%s169 + $0x78] sm:$0xff]
      %v193 = vld [vmem:[%s1] sm:$0xf]
      %v194 = vld [vmem:[%s1 + $0x4] sm:$0xf]
      %v195 = vld [vmem:[%s1 + $0x8] sm:$0xf]
      %v196 = vld [vmem:[%s1 + $0xc] sm:$0xf]
      %v197 = vld [vmem:[%s1 + $0x10] sm:$0xf]
      %v198 = vld [vmem:[%s1 + $0x14] sm:$0xf]
      %v199 = vld [vmem:[%s1 + $0x18] sm:$0xf]
      %v200 = vld [vmem:[%s1 + $0x1c] sm:$0xf]
      %v201 = vld [vmem:[%s1 + $0x20] sm:$0xf]
      %v202 = vld [vmem:[%s1 + $0x24] sm:$0xf]
      %v203 = vld [vmem:[%s1 + $0x28] sm:$0xf]
      %v204 = vld [vmem:[%s1 + $0x2c] sm:$0xf]
      %v205 = vld [vmem:[%s1 + $0x30] sm:$0xf]
      %v206 = vld [vmem:[%s1 + $0x34] sm:$0xf]
      %v207 = vld [vmem:[%s1 + $0x38] sm:$0xf]
      %v208 = vld [vmem:[%s1 + $0x3c] sm:$0xf]
      %v209 = vld [vmem:[%s1 + $0x40] sm:$0xf]
      %v210 = vld [vmem:[%s1 + $0x44] sm:$0xf]
      %v211 = vld [vmem:[%s1 + $0x48] sm:$0xf]
      %v212 = vld [vmem:[%s1 + $0x4c] sm:$0xf]
      %v213 = vld [vmem:[%s1 + $0x50] sm:$0xf]
      %v214 = vld [vmem:[%s1 + $0x54] sm:$0xf]
      %v215 = vld [vmem:[%s1 + $0x58] sm:$0xf]
      %v216 = vld [vmem:[%s1 + $0x5c] sm:$0xf]
      %v217 = vld [vmem:[%s1 + $0x60] sm:$0xf]
      %v218 = vld [vmem:[%s1 + $0x64] sm:$0xf]
      %v219 = vld [vmem:[%s1 + $0x68] sm:$0xf]
      %v220 = vld [vmem:[%s1 + $0x6c] sm:$0xf]
      %v221 = vld [vmem:[%s1 + $0x70] sm:$0xf]
      %v222 = vld [vmem:[%s1 + $0x74] sm:$0xf]
      %v223 = vld [vmem:[%s1 + $0x78] sm:$0xf]
      %v224 = vld [vmem:[%s1 + $0x7c] sm:$0xf]
      %v225 = vld [vmem:[%s1 + $0x80] sm:$0xf]
      %v226 = vld [vmem:[%s1 + $0x84] sm:$0xf]
      %v227 = vld [vmem:[%s1 + $0x88] sm:$0xf]
      %v228 = vld [vmem:[%s1 + $0x8c] sm:$0xf]
      %v229 = vld [vmem:[%s1 + $0x90] sm:$0xf]
      %v230 = vld [vmem:[%s1 + $0x94] sm:$0xf]
      %v231 = vld [vmem:[%s1 + $0x98] sm:$0xf]
      %v232 = vld [vmem:[%s1 + $0x9c] sm:$0xf]
      %v233 = vld [vmem:[%s1 + $0xa0] sm:$0xf]
      %v234 = vld [vmem:[%s1 + $0xa4] sm:$0xf]
      %v235 = vld [vmem:[%s1 + $0xa8] sm:$0xf]
      %v236 = vld [vmem:[%s1 + $0xac] sm:$0xf]
      %v237 = vld [vmem:[%s1 + $0xb0] sm:$0xf]
      %v238 = vld [vmem:[%s1 + $0xb4] sm:$0xf]
      %v239 = vld [vmem:[%s1 + $0xb8] sm:$0xf]
      %v240 = vld [vmem:[%s1 + $0xbc] sm:$0xf]
      %v241 = vld [vmem:[%s1 + $0xc0] sm:$0xf]
      %v242 = vld [vmem:[%s1 + $0xc4] sm:$0xf]
      %v243 = vld [vmem:[%s1 + $0xc8] sm:$0xf]
      %v244 = vld [vmem:[%s1 + $0xcc] sm:$0xf]
      %v245 = vld [vmem:[%s1 + $0xd0] sm:$0xf]
      %v246 = vld [vmem:[%s1 + $0xd4] sm:$0xf]
      %v247 = vld [vmem:[%s1 + $0xd8] sm:$0xf]
      %v248 = vld [vmem:[%s1 + $0xdc] sm:$0xf]
      %v249 = vld [vmem:[%s1 + $0xe0] sm:$0xf]
      %v250 = vld [vmem:[%s1 + $0xe4] sm:$0xf]
      %v251 = vld [vmem:[%s1 + $0xe8] sm:$0xf]
      %v252 = vld [vmem:[%s1 + $0xec] sm:$0xf]
      %v253 = vld [vmem:[%s1 + $0xf0] sm:$0xf]
      %v254 = vld [vmem:[%s1 + $0xf4] sm:$0xf]
      %v255 = vld [vmem:[%s1 + $0xf8] sm:$0xf]
      %v256 = vld [vmem:[%s1 + $0xfc] sm:$0xf]
      %v257 = vld [vmem:[%s2] sm:$0x1]
      %v259 = vperm.slane %v257, 0
      %v277 = vunpack.c.l.b16 %v177
      %v278 = vunpack.c.h.b16 %v177
      %v279 = vunpack.c.l.b16 %v178
      %v280 = vunpack.c.h.b16 %v178
      %v281 = vunpack.c.l.b16 %v179
      %v282 = vunpack.c.h.b16 %v179
      %v283 = vunpack.c.l.b16 %v180
      %v284 = vunpack.c.h.b16 %v180
      %v285 = vunpack.c.l.b16 %v181
      %v286 = vunpack.c.h.b16 %v181
      %v287 = vunpack.c.l.b16 %v182
      %v288 = vunpack.c.h.b16 %v182
      %v289 = vunpack.c.l.b16 %v183
      %v290 = vunpack.c.h.b16 %v183
      %v291 = vunpack.c.l.b16 %v184
      %v292 = vunpack.c.h.b16 %v184
      %v293 = vunpack.c.l.b16 %v185
      %v294 = vunpack.c.h.b16 %v185
      %v295 = vunpack.c.l.b16 %v186
      %v296 = vunpack.c.h.b16 %v186
      %v297 = vunpack.c.l.b16 %v187
      %v298 = vunpack.c.h.b16 %v187
      %v299 = vunpack.c.l.b16 %v188
      %v300 = vunpack.c.h.b16 %v188
      %v301 = vunpack.c.l.b16 %v189
      %v302 = vunpack.c.h.b16 %v189
      %v303 = vunpack.c.l.b16 %v190
      %v304 = vunpack.c.h.b16 %v190
      %v305 = vunpack.c.l.b16 %v191
      %v306 = vunpack.c.h.b16 %v191
      %v307 = vunpack.c.l.b16 %v192
      %v308 = vunpack.c.h.b16 %v192
      %v309 = vpack.c.b16 %v281, %v277
      %v310 = vpack.c.b16 %v282, %v278
      %v311 = vpack.c.b16 %v283, %v279
      %v312 = vpack.c.b16 %v284, %v280
      %v313 = vpack.c.b16 %v289, %v285
      %v314 = vpack.c.b16 %v290, %v286
      %v315 = vpack.c.b16 %v291, %v287
      %v316 = vpack.c.b16 %v292, %v288
      %v317 = vpack.c.b16 %v297, %v293
      %v318 = vpack.c.b16 %v298, %v294
      %v319 = vpack.c.b16 %v299, %v295
      %v320 = vpack.c.b16 %v300, %v296
      %v321 = vpack.c.b16 %v305, %v301
      %v322 = vpack.c.b16 %v306, %v302
      %v323 = vpack.c.b16 %v307, %v303
      %v324 = vpack.c.b16 %v308, %v304
      %v405 = vunpack.c.l.b16 %v193
      %v406 = vunpack.c.l.b16 %v194
      %v407 = vunpack.c.l.b16 %v195
      %v408 = vunpack.c.l.b16 %v196
      %v409 = vunpack.c.l.b16 %v197
      %v410 = vunpack.c.l.b16 %v198
      %v411 = vunpack.c.l.b16 %v199
      %v412 = vunpack.c.l.b16 %v200
      %v413 = vunpack.c.l.b16 %v201
      %v414 = vunpack.c.l.b16 %v202
      %v415 = vunpack.c.l.b16 %v203
      %v416 = vunpack.c.l.b16 %v204
      %v417 = vunpack.c.l.b16 %v205
      %v418 = vunpack.c.l.b16 %v206
      %v419 = vunpack.c.l.b16 %v207
      %v420 = vunpack.c.l.b16 %v208
      %v421 = vunpack.c.l.b16 %v209
      %v422 = vunpack.c.l.b16 %v210
      %v423 = vunpack.c.l.b16 %v211
      %v424 = vunpack.c.l.b16 %v212
      %v425 = vunpack.c.l.b16 %v213
      %v426 = vunpack.c.l.b16 %v214
      %v427 = vunpack.c.l.b16 %v215
      %v428 = vunpack.c.l.b16 %v216
      %v429 = vunpack.c.l.b16 %v217
      %v430 = vunpack.c.l.b16 %v218
      %v431 = vunpack.c.l.b16 %v219
      %v432 = vunpack.c.l.b16 %v220
      %v433 = vunpack.c.l.b16 %v221
      %v434 = vunpack.c.l.b16 %v222
      %v435 = vunpack.c.l.b16 %v223
      %v436 = vunpack.c.l.b16 %v224
      %v437 = vunpack.c.l.b16 %v225
      %v438 = vunpack.c.l.b16 %v226
      %v439 = vunpack.c.l.b16 %v227
      %v440 = vunpack.c.l.b16 %v228
      %v441 = vunpack.c.l.b16 %v229
      %v442 = vunpack.c.l.b16 %v230
      %v443 = vunpack.c.l.b16 %v231
      %v444 = vunpack.c.l.b16 %v232
      %v445 = vunpack.c.l.b16 %v233
      %v446 = vunpack.c.l.b16 %v234
      %v447 = vunpack.c.l.b16 %v235
      %v448 = vunpack.c.l.b16 %v236
      %v449 = vunpack.c.l.b16 %v237
      %v450 = vunpack.c.l.b16 %v238
      %v451 = vunpack.c.l.b16 %v239
      %v452 = vunpack.c.l.b16 %v240
      %v453 = vunpack.c.l.b16 %v241
      %v454 = vunpack.c.l.b16 %v242
      %v455 = vunpack.c.l.b16 %v243
      %v456 = vunpack.c.l.b16 %v244
      %v457 = vunpack.c.l.b16 %v245
      %v458 = vunpack.c.l.b16 %v246
      %v459 = vunpack.c.l.b16 %v247
      %v460 = vunpack.c.l.b16 %v248
      %v461 = vunpack.c.l.b16 %v249
      %v462 = vunpack.c.l.b16 %v250
      %v463 = vunpack.c.l.b16 %v251
      %v464 = vunpack.c.l.b16 %v252
      %v465 = vunpack.c.l.b16 %v253
      %v466 = vunpack.c.l.b16 %v254
      %v467 = vunpack.c.l.b16 %v255
      %v468 = vunpack.c.l.b16 %v256
      %v469 = vpack.c.b16 %v406, %v405
      %v470 = vpack.c.b16 %v408, %v407
      %v471 = vpack.c.b16 %v410, %v409
      %v472 = vpack.c.b16 %v412, %v411
      %v473 = vpack.c.b16 %v414, %v413
      %v474 = vpack.c.b16 %v416, %v415
      %v475 = vpack.c.b16 %v418, %v417
      %v476 = vpack.c.b16 %v420, %v419
      %v477 = vpack.c.b16 %v422, %v421
      %v478 = vpack.c.b16 %v424, %v423
      %v479 = vpack.c.b16 %v426, %v425
      %v480 = vpack.c.b16 %v428, %v427
      %v481 = vpack.c.b16 %v430, %v429
      %v482 = vpack.c.b16 %v432, %v431
      %v483 = vpack.c.b16 %v434, %v433
      %v484 = vpack.c.b16 %v436, %v435
      %v485 = vpack.c.b16 %v438, %v437
      %v486 = vpack.c.b16 %v440, %v439
      %v487 = vpack.c.b16 %v442, %v441
      %v488 = vpack.c.b16 %v444, %v443
      %v489 = vpack.c.b16 %v446, %v445
      %v490 = vpack.c.b16 %v448, %v447
      %v491 = vpack.c.b16 %v450, %v449
      %v492 = vpack.c.b16 %v452, %v451
      %v493 = vpack.c.b16 %v454, %v453
      %v494 = vpack.c.b16 %v456, %v455
      %v495 = vpack.c.b16 %v458, %v457
      %v496 = vpack.c.b16 %v460, %v459
      %v497 = vpack.c.b16 %v462, %v461
      %v498 = vpack.c.b16 %v464, %v463
      %v499 = vpack.c.b16 %v466, %v465
      %v500 = vpack.c.b16 %v468, %v467
      %533 = vmatpush.bf16.msra.mxu0 %v476
      %534 = vmatpush.bf16.msra.mxu0 %v475
      %535 = vmatpush.bf16.msra.mxu0 %v474
      %536 = vmatpush.bf16.msra.mxu0 %v473
      %537 = vmatpush.bf16.msra.mxu0 %v472
      %538 = vmatpush.bf16.msra.mxu0 %v471
      %539 = vmatpush.bf16.msra.mxu0 %v470
      %540 = vmatpush.bf16.msra.mxu0 %v469
      %541 = vmatmul.bf16.gmra.mxu0 %v309
      %v542 = vpop.f32.mrf.mxu0
      %v543 = vadd.f32 %v259, %v542
      %v544 = vpop.f32.mrf.mxu0
      %v545 = vadd.f32 %v259, %v544
      %546 = vmatmul.bf16.gmra.mxu0 %v313
      %v547 = vpop.f32.mrf.mxu0
      %v548 = vadd.f32 %v259, %v547
      %v549 = vpop.f32.mrf.mxu0
      %v550 = vadd.f32 %v259, %v549
      %551 = vmatmul.bf16.gmra.mxu0 %v317
      %v552 = vpop.f32.mrf.mxu0
      %v553 = vadd.f32 %v259, %v552
      %v554 = vpop.f32.mrf.mxu0
      %v555 = vadd.f32 %v259, %v554
      %556 = vmatmul.bf16.gmra.mxu0 %v321
      %v557 = vpop.f32.mrf.mxu0
      %v558 = vadd.f32 %v259, %v557
      %v559 = vpop.f32.mrf.mxu0
      %v560 = vadd.f32 %v259, %v559
      %561 = vdwg.mxu0
      %562 = vmatpush.bf16.msra.mxu0 %v484
      %563 = vmatpush.bf16.msra.mxu0 %v483
      %564 = vmatpush.bf16.msra.mxu0 %v482
      %565 = vmatpush.bf16.msra.mxu0 %v481
      %566 = vmatpush.bf16.msra.mxu0 %v480
      %567 = vmatpush.bf16.msra.mxu0 %v479
      %568 = vmatpush.bf16.msra.mxu0 %v478
      %569 = vmatpush.bf16.msra.mxu0 %v477
      %570 = vmatmul.bf16.gmra.mxu0 %v310
      %v571 = vpop.f32.mrf.mxu0
      %v572 = vadd.f32 %v543, %v571
      %v573 = vpop.f32.mrf.mxu0
      %v574 = vadd.f32 %v545, %v573
      %575 = vmatmul.bf16.gmra.mxu0 %v314
      %v576 = vpop.f32.mrf.mxu0
      %v577 = vadd.f32 %v548, %v576
      %v578 = vpop.f32.mrf.mxu0
      %v579 = vadd.f32 %v550, %v578
      %580 = vmatmul.bf16.gmra.mxu0 %v318
      %v581 = vpop.f32.mrf.mxu0
      %v582 = vadd.f32 %v553, %v581
      %v583 = vpop.f32.mrf.mxu0
      %v584 = vadd.f32 %v555, %v583
      %585 = vmatmul.bf16.gmra.mxu0 %v322
      %v586 = vpop.f32.mrf.mxu0
      %v587 = vadd.f32 %v558, %v586
      %v588 = vpop.f32.mrf.mxu0
      %v589 = vadd.f32 %v560, %v588
      %590 = vdwg.mxu0
      %591 = vmatpush.bf16.msra.mxu0 %v492
      %592 = vmatpush.bf16.msra.mxu0 %v491
      %593 = vmatpush.bf16.msra.mxu0 %v490
      %594 = vmatpush.bf16.msra.mxu0 %v489
      %595 = vmatpush.bf16.msra.mxu0 %v488
      %596 = vmatpush.bf16.msra.mxu0 %v487
      %597 = vmatpush.bf16.msra.mxu0 %v486
      %598 = vmatpush.bf16.msra.mxu0 %v485
      %599 = vmatmul.bf16.gmra.mxu0 %v311
      %v600 = vpop.f32.mrf.mxu0
      %v601 = vadd.f32 %v572, %v600
      %v602 = vpop.f32.mrf.mxu0
      %v603 = vadd.f32 %v574, %v602
      %604 = vmatmul.bf16.gmra.mxu0 %v315
      %v605 = vpop.f32.mrf.mxu0
      %v606 = vadd.f32 %v577, %v605
      %v607 = vpop.f32.mrf.mxu0
      %v608 = vadd.f32 %v579, %v607
      %609 = vmatmul.bf16.gmra.mxu0 %v319
      %v610 = vpop.f32.mrf.mxu0
      %v611 = vadd.f32 %v582, %v610
      %v612 = vpop.f32.mrf.mxu0
      %v613 = vadd.f32 %v584, %v612
      %614 = vmatmul.bf16.gmra.mxu0 %v323
      %v615 = vpop.f32.mrf.mxu0
      %v616 = vadd.f32 %v587, %v615
      %v617 = vpop.f32.mrf.mxu0
      %v618 = vadd.f32 %v589, %v617
      %619 = vdwg.mxu0
      %620 = vmatpush.bf16.msra.mxu0 %v500
      %621 = vmatpush.bf16.msra.mxu0 %v499
      %622 = vmatpush.bf16.msra.mxu0 %v498
      %623 = vmatpush.bf16.msra.mxu0 %v497
      %624 = vmatpush.bf16.msra.mxu0 %v496
      %625 = vmatpush.bf16.msra.mxu0 %v495
      %626 = vmatpush.bf16.msra.mxu0 %v494
      %627 = vmatpush.bf16.msra.mxu0 %v493
      %628 = vmatmul.bf16.gmra.mxu0 %v312
      %v629 = vpop.f32.mrf.mxu0
      %v630 = vadd.f32 %v601, %v629
      %v631 = vpop.f32.mrf.mxu0
      %v632 = vadd.f32 %v603, %v631
      %633 = vmatmul.bf16.gmra.mxu0 %v316
      %v634 = vpop.f32.mrf.mxu0
      %v635 = vadd.f32 %v606, %v634
      %v636 = vpop.f32.mrf.mxu0
      %v637 = vadd.f32 %v608, %v636
      %638 = vmatmul.bf16.gmra.mxu0 %v320
      %v639 = vpop.f32.mrf.mxu0
      %v640 = vadd.f32 %v611, %v639
      %v641 = vpop.f32.mrf.mxu0
      %v642 = vadd.f32 %v613, %v641
      %643 = vmatmul.bf16.gmra.mxu0 %v324
      %v644 = vpop.f32.mrf.mxu0
      %v645 = vadd.f32 %v616, %v644
      %v646 = vpop.f32.mrf.mxu0
      %v647 = vadd.f32 %v618, %v646
      %648 = vdwg.mxu0
      %649 = vst [vmem:[%s175] sm:$0xff] %v630
      %650 = vst [vmem:[%s175 + $0x8] sm:$0xff] %v632
      %651 = vst [vmem:[%s175 + $0x10] sm:$0xff] %v635
      %652 = vst [vmem:[%s175 + $0x18] sm:$0xff] %v637
      %653 = vst [vmem:[%s175 + $0x20] sm:$0xff] %v640
      %654 = vst [vmem:[%s175 + $0x28] sm:$0xff] %v642
      %655 = vst [vmem:[%s175 + $0x30] sm:$0xff] %v645
      %656 = vst [vmem:[%s175 + $0x38] sm:$0xff] %v647
      %s657 = smul.u32 8, %s14
      %p658 = scmp.lt.s32.totalorder %s657, 15
      %s659 = scalar_select %p658, %s657, 15
      %s660 = smul.addr %s659, 8
      %s661 = scalar_lea.vmem %s3, %s660
      // Predicated region
      $region33: #{netG_forward.10} parent=31 // pred_check
        %p662 = pneg %p100
      $region34: #{netG_forward.10} parent=31 // pred_check_branch
        %664 = sbr.rel (%p662) target = $region36
      $region35: #{netG_forward.10} parent=31 // pred_region
        %s665 = smul.u32 8, %s14
      $region36: #{netG_forward.10} parent=31 // pred_fallthru
        _
    $region32: #{netG_forward.10} parent=5 // pred_fallthru
      _
    %p666 = scmp.le.s32.totalorder 2, %s9
    // Predicated region
    $region37: #{netG_forward.10} parent=5 // pred_check
      %p667 = pneg %p666
    $region38: #{netG_forward.10} parent=5 // pred_check_branch
      %669 = sbr.rel (%p667) target = $region40
    $region39: #{netG_forward.10} parent=5 // pred_region
      %s670 = ssub.s32 %s9, 2
      // Predicated region
      $region41: #{netG_forward.10} parent=39 // pred_check
        %p671 = pneg %p106
      $region42: #{netG_forward.10} parent=39 // pred_check_branch
        %673 = sbr.rel (%p671) target = $region44
      $region43: #{netG_forward.10} parent=39 // pred_region
        %s674 = smul.u32 8, %s15
        %p675 = scmp.lt.s32.totalorder %s674, 15
        %s676 = scalar_select %p675, %s674, 15
        %s677 = smul.addr %s676, 8
        %s678 = scalar_lea.vmem %s3, %s677
      $region44: #{netG_forward.10} parent=39 // pred_fallthru
        _
    $region40: #{netG_forward.10} parent=5 // pred_fallthru
      _
  $region6: #{netG_forward.10} parent=0 // loop_footer
    %s13 = sadd.s32 1, %s9
  $region7: #{netG_forward.10} parent=0 // loop_footer_branch
    %8 = sbr.rel target = $region3
  $region8: #{netG_forward.10} parent=0 // loop_exit
    _

// kernel: netG_forward.11
$region0: #{netG_forward.11}
  #allocation0 [shape = 'u32[]', space=smem, size = 0x4, offset = 0x4, fixed_abs, tag = 'smem constant byte address 0x4 - core index']
  #allocation1 [shape = 'u32[72,128]{1,0:T(1,128)}', space=vmem, size = 0x9000, scoped, tag = 'internal scratch']
  %s0 = inlined_call_operand.vmem [shape: f32[2,2048], index: 0, kind: input, shape index: {}]
  %s1 = inlined_call_operand.vmem [shape: f32[2048,16], index: 1, kind: input, shape index: {}]
  %s2 = inlined_call_operand.vmem [shape: f32[1,16], index: 2, kind: input, shape index: {}]
  %s3 = inlined_call_operand.vmem [shape: f32[1,16], index: 3, kind: input, shape index: {}]
  %s4 = inlined_call_operand.vmem [shape: f32[1,16], index: 4, kind: input, shape index: {}]
  %s5 = inlined_call_operand.vmem [shape: f32[16,16], index: 5, kind: input, shape index: {}]
  %s6 = inlined_call_operand.vmem [shape: f32[1,16], index: 6, kind: input, shape index: {}]
  %s7 = inlined_call_operand.vmem [shape: f32[2048,16], index: 7, kind: input, shape index: {}]
  %s8 = inlined_call_operand.vmem [shape: f32[1,16], index: 8, kind: input, shape index: {}]
  %s9 = inlined_call_operand.vmem [shape: f32[1,16], index: 9, kind: input, shape index: {}]
  %s10 = inlined_call_operand.vmem [shape: f32[1,16], index: 10, kind: input, shape index: {}]
  %s11 = inlined_call_operand.vmem [shape: f32[16,16], index: 11, kind: input, shape index: {}]
  %s12 = inlined_call_operand.vmem [shape: f32[1,16], index: 12, kind: input, shape index: {}]
  %s13 = inlined_call_operand.vmem [shape: f32[2,16], index: 13, kind: input, shape index: {}]
  %s14 = inlined_call_operand.vmem [shape: f32[16,2048], index: 14, kind: input, shape index: {}]
  %s15 = inlined_call_operand.vmem [shape: f32[1,2048], index: 15, kind: input, shape index: {}]
  %s16 = inlined_call_operand.vmem [shape: f32[1,2048], index: 16, kind: input, shape index: {}]
  %s17 = inlined_call_operand.vmem [shape: f32[1,2048], index: 17, kind: input, shape index: {}]
  %s18 = inlined_call_operand.vmem [shape: f32[2,2048], index: 18, kind: output, shape index: {}]
  %s19 = sld [smem:[#allocation0]]
  $region82: #{netG_forward.11} parent=0
    _
  %s21 = ssub.s32 1, %s19
  %s22 = scalar_select 0, %s21, %s19
  // Predicated region
  $region2: #{netG_forward.11} parent=0 // pred_check
    _
  $region3: #{netG_forward.11} parent=0 // pred_check_branch
    %24 = sbr.rel (0) target = $region5
  $region4: #{netG_forward.11} parent=0 // pred_region
    _
  $region5: #{netG_forward.11} parent=0 // pred_fallthru
    _
  // Predicated region
  $region6: #{netG_forward.11} parent=0 // pred_check
    _
  $region7: #{netG_forward.11} parent=0 // pred_check_branch
    %26 = sbr.rel (0) target = $region9
  $region8: #{netG_forward.11} parent=0 // pred_region
    _
  $region9: #{netG_forward.11} parent=0 // pred_fallthru
    _
  // Predicated region
  $region10: #{netG_forward.11} parent=0 // pred_check
    _
  $region11: #{netG_forward.11} parent=0 // pred_check_branch
    %28 = sbr.rel (0) target = $region13
  $region12: #{netG_forward.11} parent=0 // pred_region
    _
  $region13: #{netG_forward.11} parent=0 // pred_fallthru
    _
  // Predicated region
  $region14: #{netG_forward.11} parent=0 // pred_check
    _
  $region15: #{netG_forward.11} parent=0 // pred_check_branch
    %30 = sbr.rel (0) target = $region17
  $region16: #{netG_forward.11} parent=0 // pred_region
    _
  $region17: #{netG_forward.11} parent=0 // pred_fallthru
    _
  // Predicated region
  $region18: #{netG_forward.11} parent=0 // pred_check
    _
  $region19: #{netG_forward.11} parent=0 // pred_check_branch
    %32 = sbr.rel (0) target = $region21
  $region20: #{netG_forward.11} parent=0 // pred_region
    _
  $region21: #{netG_forward.11} parent=0 // pred_fallthru
    _
  // Predicated region
  $region22: #{netG_forward.11} parent=0 // pred_check
    _
  $region23: #{netG_forward.11} parent=0 // pred_check_branch
    %34 = sbr.rel (0) target = $region25
  $region24: #{netG_forward.11} parent=0 // pred_region
    _
  $region25: #{netG_forward.11} parent=0 // pred_fallthru
    _
  // Predicated region
  $region26: #{netG_forward.11} parent=0 // pred_check
    _
  $region27: #{netG_forward.11} parent=0 // pred_check_branch
    %36 = sbr.rel (0) target = $region29
  $region28: #{netG_forward.11} parent=0 // pred_region
    _
  $region29: #{netG_forward.11} parent=0 // pred_fallthru
    _
  // Predicated region
  $region30: #{netG_forward.11} parent=0 // pred_check
    _
  $region31: #{netG_forward.11} parent=0 // pred_check_branch
    %38 = sbr.rel (0) target = $region33
  $region32: #{netG_forward.11} parent=0 // pred_region
    _
  $region33: #{netG_forward.11} parent=0 // pred_fallthru
    _
  // Predicated region
  $region34: #{netG_forward.11} parent=0 // pred_check
    _
  $region35: #{netG_forward.11} parent=0 // pred_check_branch
    %40 = sbr.rel (0) target = $region37
  $region36: #{netG_forward.11} parent=0 // pred_region
    _
  $region37: #{netG_forward.11} parent=0 // pred_fallthru
    _
  // Predicated region
  $region38: #{netG_forward.11} parent=0 // pred_check
    _
  $region39: #{netG_forward.11} parent=0 // pred_check_branch
    %42 = sbr.rel (0) target = $region41
  $region40: #{netG_forward.11} parent=0 // pred_region
    _
  $region41: #{netG_forward.11} parent=0 // pred_fallthru
    _
  // Predicated region
  $region42: #{netG_forward.11} parent=0 // pred_check
    _
  $region43: #{netG_forward.11} parent=0 // pred_check_branch
    %44 = sbr.rel (0) target = $region45
  $region44: #{netG_forward.11} parent=0 // pred_region
    _
  $region45: #{netG_forward.11} parent=0 // pred_fallthru
    _
  // Predicated region
  $region46: #{netG_forward.11} parent=0 // pred_check
    _
  $region47: #{netG_forward.11} parent=0 // pred_check_branch
    %46 = sbr.rel (0) target = $region49
  $region48: #{netG_forward.11} parent=0 // pred_region
    _
  $region49: #{netG_forward.11} parent=0 // pred_fallthru
    _
  // Predicated region
  $region50: #{netG_forward.11} parent=0 // pred_check
    _
  $region51: #{netG_forward.11} parent=0 // pred_check_branch
    %48 = sbr.rel (0) target = $region53
  $region52: #{netG_forward.11} parent=0 // pred_region
    _
  $region53: #{netG_forward.11} parent=0 // pred_fallthru
    _
  // Predicated region
  $region54: #{netG_forward.11} parent=0 // pred_check
    _
  $region55: #{netG_forward.11} parent=0 // pred_check_branch
    %50 = sbr.rel (0) target = $region57
  $region56: #{netG_forward.11} parent=0 // pred_region
    _
  $region57: #{netG_forward.11} parent=0 // pred_fallthru
    _
  // Predicated region
  $region58: #{netG_forward.11} parent=0 // pred_check
    _
  $region59: #{netG_forward.11} parent=0 // pred_check_branch
    %52 = sbr.rel (0) target = $region61
  $region60: #{netG_forward.11} parent=0 // pred_region
    _
  $region61: #{netG_forward.11} parent=0 // pred_fallthru
    _
  // Predicated region
  $region62: #{netG_forward.11} parent=0 // pred_check
    _
  $region63: #{netG_forward.11} parent=0 // pred_check_branch
    %54 = sbr.rel (0) target = $region65
  $region64: #{netG_forward.11} parent=0 // pred_region
    _
  $region65: #{netG_forward.11} parent=0 // pred_fallthru
    _
  // Predicated region
  $region66: #{netG_forward.11} parent=0 // pred_check
    _
  $region67: #{netG_forward.11} parent=0 // pred_check_branch
    %56 = sbr.rel (0) target = $region69
  $region68: #{netG_forward.11} parent=0 // pred_region
    _
  $region69: #{netG_forward.11} parent=0 // pred_fallthru
    _
  // Predicated region
  $region70: #{netG_forward.11} parent=0 // pred_check
    _
  $region71: #{netG_forward.11} parent=0 // pred_check_branch
    %58 = sbr.rel (0) target = $region73
  $region72: #{netG_forward.11} parent=0 // pred_region
    _
  $region73: #{netG_forward.11} parent=0 // pred_fallthru
    _
  %v59 = vld [vmem:[%s0] sm:$0xff]
  %v60 = vld [vmem:[%s0 + $0x8] sm:$0xff]
  %v61 = vld [vmem:[%s0 + $0x10] sm:$0xff]
  %v62 = vld [vmem:[%s0 + $0x18] sm:$0xff]
  %v63 = vld [vmem:[%s1] sm:$0xff]
  %v64 = vld [vmem:[%s1 + $0x8] sm:$0xff]
  %v65 = vld [vmem:[%s1 + $0x10] sm:$0xff]
  %v66 = vld [vmem:[%s1 + $0x18] sm:$0xff]
  %v67 = vld [vmem:[%s1 + $0x20] sm:$0xff]
  %v68 = vld [vmem:[%s1 + $0x28] sm:$0xff]
  %v69 = vld [vmem:[%s1 + $0x30] sm:$0xff]
  %v70 = vld [vmem:[%s1 + $0x38] sm:$0xff]
  %v71 = vld [vmem:[%s1 + $0x40] sm:$0xff]
  %v72 = vld [vmem:[%s1 + $0x48] sm:$0xff]
  %v73 = vld [vmem:[%s1 + $0x50] sm:$0xff]
  %v74 = vld [vmem:[%s1 + $0x58] sm:$0xff]
  %v75 = vld [vmem:[%s1 + $0x60] sm:$0xff]
  %v76 = vld [vmem:[%s1 + $0x68] sm:$0xff]
  %v77 = vld [vmem:[%s1 + $0x70] sm:$0xff]
  %v78 = vld [vmem:[%s1 + $0x78] sm:$0xff]
  %v79 = vld [vmem:[%s1 + $0x80] sm:$0xff]
  %v80 = vld [vmem:[%s1 + $0x88] sm:$0xff]
  %v81 = vld [vmem:[%s1 + $0x90] sm:$0xff]
  %v82 = vld [vmem:[%s1 + $0x98] sm:$0xff]
  %v83 = vld [vmem:[%s1 + $0xa0] sm:$0xff]
  %v84 = vld [vmem:[%s1 + $0xa8] sm:$0xff]
  %v85 = vld [vmem:[%s1 + $0xb0] sm:$0xff]
  %v86 = vld [vmem:[%s1 + $0xb8] sm:$0xff]
  %v87 = vld [vmem:[%s1 + $0xc0] sm:$0xff]
  %v88 = vld [vmem:[%s1 + $0xc8] sm:$0xff]
  %v89 = vld [vmem:[%s1 + $0xd0] sm:$0xff]
  %v90 = vld [vmem:[%s1 + $0xd8] sm:$0xff]
  %v91 = vld [vmem:[%s1 + $0xe0] sm:$0xff]
  %v92 = vld [vmem:[%s1 + $0xe8] sm:$0xff]
  %v93 = vld [vmem:[%s1 + $0xf0] sm:$0xff]
  %v94 = vld [vmem:[%s1 + $0xf8] sm:$0xff]
  %v95 = vld [vmem:[%s1 + $0x100] sm:$0xff]
  %v96 = vld [vmem:[%s1 + $0x108] sm:$0xff]
  %v97 = vld [vmem:[%s1 + $0x110] sm:$0xff]
  %v98 = vld [vmem:[%s1 + $0x118] sm:$0xff]
  %v99 = vld [vmem:[%s1 + $0x120] sm:$0xff]
  %v100 = vld [vmem:[%s1 + $0x128] sm:$0xff]
  %v101 = vld [vmem:[%s1 + $0x130] sm:$0xff]
  %v102 = vld [vmem:[%s1 + $0x138] sm:$0xff]
  %v103 = vld [vmem:[%s1 + $0x140] sm:$0xff]
  %v104 = vld [vmem:[%s1 + $0x148] sm:$0xff]
  %v105 = vld [vmem:[%s1 + $0x150] sm:$0xff]
  %v106 = vld [vmem:[%s1 + $0x158] sm:$0xff]
  %v107 = vld [vmem:[%s1 + $0x160] sm:$0xff]
  %v108 = vld [vmem:[%s1 + $0x168] sm:$0xff]
  %v109 = vld [vmem:[%s1 + $0x170] sm:$0xff]
  %v110 = vld [vmem:[%s1 + $0x178] sm:$0xff]
  %v111 = vld [vmem:[%s1 + $0x180] sm:$0xff]
  %v112 = vld [vmem:[%s1 + $0x188] sm:$0xff]
  %v113 = vld [vmem:[%s1 + $0x190] sm:$0xff]
  %v114 = vld [vmem:[%s1 + $0x198] sm:$0xff]
  %v115 = vld [vmem:[%s1 + $0x1a0] sm:$0xff]
  %v116 = vld [vmem:[%s1 + $0x1a8] sm:$0xff]
  %v117 = vld [vmem:[%s1 + $0x1b0] sm:$0xff]
  %v118 = vld [vmem:[%s1 + $0x1b8] sm:$0xff]
  %v119 = vld [vmem:[%s1 + $0x1c0] sm:$0xff]
  %v120 = vld [vmem:[%s1 + $0x1c8] sm:$0xff]
  %v121 = vld [vmem:[%s1 + $0x1d0] sm:$0xff]
  %v122 = vld [vmem:[%s1 + $0x1d8] sm:$0xff]
  %v123 = vld [vmem:[%s1 + $0x1e0] sm:$0xff]
  %v124 = vld [vmem:[%s1 + $0x1e8] sm:$0xff]
  %v125 = vld [vmem:[%s1 + $0x1f0] sm:$0xff]
  %v126 = vld [vmem:[%s1 + $0x1f8] sm:$0xff]
  %v127 = vld [vmem:[%s1 + $0x200] sm:$0xff]
  %v128 = vld [vmem:[%s1 + $0x208] sm:$0xff]
  %v129 = vld [vmem:[%s1 + $0x210] sm:$0xff]
  %v130 = vld [vmem:[%s1 + $0x218] sm:$0xff]
  %v131 = vld [vmem:[%s1 + $0x220] sm:$0xff]
  %v132 = vld [vmem:[%s1 + $0x228] sm:$0xff]
  %v133 = vld [vmem:[%s1 + $0x230] sm:$0xff]
  %v134 = vld [vmem:[%s1 + $0x238] sm:$0xff]
  %v135 = vld [vmem:[%s1 + $0x240] sm:$0xff]
  %v136 = vld [vmem:[%s1 + $0x248] sm:$0xff]
  %v137 = vld [vmem:[%s1 + $0x250] sm:$0xff]
  %v138 = vld [vmem:[%s1 + $0x258] sm:$0xff]
  %v139 = vld [vmem:[%s1 + $0x260] sm:$0xff]
  %v140 = vld [vmem:[%s1 + $0x268] sm:$0xff]
  %v141 = vld [vmem:[%s1 + $0x270] sm:$0xff]
  %v142 = vld [vmem:[%s1 + $0x278] sm:$0xff]
  %v143 = vld [vmem:[%s1 + $0x280] sm:$0xff]
  %v144 = vld [vmem:[%s1 + $0x288] sm:$0xff]
  %v145 = vld [vmem:[%s1 + $0x290] sm:$0xff]
  %v146 = vld [vmem:[%s1 + $0x298] sm:$0xff]
  %v147 = vld [vmem:[%s1 + $0x2a0] sm:$0xff]
  %v148 = vld [vmem:[%s1 + $0x2a8] sm:$0xff]
  %v149 = vld [vmem:[%s1 + $0x2b0] sm:$0xff]
  %v150 = vld [vmem:[%s1 + $0x2b8] sm:$0xff]
  %v151 = vld [vmem:[%s1 + $0x2c0] sm:$0xff]
  %v152 = vld [vmem:[%s1 + $0x2c8] sm:$0xff]
  %v153 = vld [vmem:[%s1 + $0x2d0] sm:$0xff]
  %v154 = vld [vmem:[%s1 + $0x2d8] sm:$0xff]
  %v155 = vld [vmem:[%s1 + $0x2e0] sm:$0xff]
  %v156 = vld [vmem:[%s1 + $0x2e8] sm:$0xff]
  %v157 = vld [vmem:[%s1 + $0x2f0] sm:$0xff]
  %v158 = vld [vmem:[%s1 + $0x2f8] sm:$0xff]
  %v159 = vld [vmem:[%s1 + $0x300] sm:$0xff]
  %v160 = vld [vmem:[%s1 + $0x308] sm:$0xff]
  %v161 = vld [vmem:[%s1 + $0x310] sm:$0xff]
  %v162 = vld [vmem:[%s1 + $0x318] sm:$0xff]
  %v163 = vld [vmem:[%s1 + $0x320] sm:$0xff]
  %v164 = vld [vmem:[%s1 + $0x328] sm:$0xff]
  %v165 = vld [vmem:[%s1 + $0x330] sm:$0xff]
  %v166 = vld [vmem:[%s1 + $0x338] sm:$0xff]
  %v167 = vld [vmem:[%s1 + $0x340] sm:$0xff]
  %v168 = vld [vmem:[%s1 + $0x348] sm:$0xff]
  %v169 = vld [vmem:[%s1 + $0x350] sm:$0xff]
  %v170 = vld [vmem:[%s1 + $0x358] sm:$0xff]
  %v171 = vld [vmem:[%s1 + $0x360] sm:$0xff]
  %v172 = vld [vmem:[%s1 + $0x368] sm:$0xff]
  %v173 = vld [vmem:[%s1 + $0x370] sm:$0xff]
  %v174 = vld [vmem:[%s1 + $0x378] sm:$0xff]
  %v175 = vld [vmem:[%s1 + $0x380] sm:$0xff]
  %v176 = vld [vmem:[%s1 + $0x388] sm:$0xff]
  %v177 = vld [vmem:[%s1 + $0x390] sm:$0xff]
  %v178 = vld [vmem:[%s1 + $0x398] sm:$0xff]
  %v179 = vld [vmem:[%s1 + $0x3a0] sm:$0xff]
  %v180 = vld [vmem:[%s1 + $0x3a8] sm:$0xff]
  %v181 = vld [vmem:[%s1 + $0x3b0] sm:$0xff]
  %v182 = vld [vmem:[%s1 + $0x3b8] sm:$0xff]
  %v183 = vld [vmem:[%s1 + $0x3c0] sm:$0xff]
  %v184 = vld [vmem:[%s1 + $0x3c8] sm:$0xff]
  %v185 = vld [vmem:[%s1 + $0x3d0] sm:$0xff]
  %v186 = vld [vmem:[%s1 + $0x3d8] sm:$0xff]
  %v187 = vld [vmem:[%s1 + $0x3e0] sm:$0xff]
  %v188 = vld [vmem:[%s1 + $0x3e8] sm:$0xff]
  %v189 = vld [vmem:[%s1 + $0x3f0] sm:$0xff]
  %v190 = vld [vmem:[%s1 + $0x3f8] sm:$0xff]
  %v191 = vld [vmem:[%s1 + $0x400] sm:$0xff]
  %v192 = vld [vmem:[%s1 + $0x408] sm:$0xff]
  %v193 = vld [vmem:[%s1 + $0x410] sm:$0xff]
  %v194 = vld [vmem:[%s1 + $0x418] sm:$0xff]
  %v195 = vld [vmem:[%s1 + $0x420] sm:$0xff]
  %v196 = vld [vmem:[%s1 + $0x428] sm:$0xff]
  %v197 = vld [vmem:[%s1 + $0x430] sm:$0xff]
  %v198 = vld [vmem:[%s1 + $0x438] sm:$0xff]
  %v199 = vld [vmem:[%s1 + $0x440] sm:$0xff]
  %v200 = vld [vmem:[%s1 + $0x448] sm:$0xff]
  %v201 = vld [vmem:[%s1 + $0x450] sm:$0xff]
  %v202 = vld [vmem:[%s1 + $0x458] sm:$0xff]
  %v203 = vld [vmem:[%s1 + $0x460] sm:$0xff]
  %v204 = vld [vmem:[%s1 + $0x468] sm:$0xff]
  %v205 = vld [vmem:[%s1 + $0x470] sm:$0xff]
  %v206 = vld [vmem:[%s1 + $0x478] sm:$0xff]
  %v207 = vld [vmem:[%s1 + $0x480] sm:$0xff]
  %v208 = vld [vmem:[%s1 + $0x488] sm:$0xff]
  %v209 = vld [vmem:[%s1 + $0x490] sm:$0xff]
  %v210 = vld [vmem:[%s1 + $0x498] sm:$0xff]
  %v211 = vld [vmem:[%s1 + $0x4a0] sm:$0xff]
  %v212 = vld [vmem:[%s1 + $0x4a8] sm:$0xff]
  %v213 = vld [vmem:[%s1 + $0x4b0] sm:$0xff]
  %v214 = vld [vmem:[%s1 + $0x4b8] sm:$0xff]
  %v215 = vld [vmem:[%s1 + $0x4c0] sm:$0xff]
  %v216 = vld [vmem:[%s1 + $0x4c8] sm:$0xff]
  %v217 = vld [vmem:[%s1 + $0x4d0] sm:$0xff]
  %v218 = vld [vmem:[%s1 + $0x4d8] sm:$0xff]
  %v219 = vld [vmem:[%s1 + $0x4e0] sm:$0xff]
  %v220 = vld [vmem:[%s1 + $0x4e8] sm:$0xff]
  %v221 = vld [vmem:[%s1 + $0x4f0] sm:$0xff]
  %v222 = vld [vmem:[%s1 + $0x4f8] sm:$0xff]
  %v223 = vld [vmem:[%s1 + $0x500] sm:$0xff]
  %v224 = vld [vmem:[%s1 + $0x508] sm:$0xff]
  %v225 = vld [vmem:[%s1 + $0x510] sm:$0xff]
  %v226 = vld [vmem:[%s1 + $0x518] sm:$0xff]
  %v227 = vld [vmem:[%s1 + $0x520] sm:$0xff]
  %v228 = vld [vmem:[%s1 + $0x528] sm:$0xff]
  %v229 = vld [vmem:[%s1 + $0x530] sm:$0xff]
  %v230 = vld [vmem:[%s1 + $0x538] sm:$0xff]
  %v231 = vld [vmem:[%s1 + $0x540] sm:$0xff]
  %v232 = vld [vmem:[%s1 + $0x548] sm:$0xff]
  %v233 = vld [vmem:[%s1 + $0x550] sm:$0xff]
  %v234 = vld [vmem:[%s1 + $0x558] sm:$0xff]
  %v235 = vld [vmem:[%s1 + $0x560] sm:$0xff]
  %v236 = vld [vmem:[%s1 + $0x568] sm:$0xff]
  %v237 = vld [vmem:[%s1 + $0x570] sm:$0xff]
  %v238 = vld [vmem:[%s1 + $0x578] sm:$0xff]
  %v239 = vld [vmem:[%s1 + $0x580] sm:$0xff]
  %v240 = vld [vmem:[%s1 + $0x588] sm:$0xff]
  %v241 = vld [vmem:[%s1 + $0x590] sm:$0xff]
  %v242 = vld [vmem:[%s1 + $0x598] sm:$0xff]
  %v243 = vld [vmem:[%s1 + $0x5a0] sm:$0xff]
  %v244 = vld [vmem:[%s1 + $0x5a8] sm:$0xff]
  %v245 = vld [vmem:[%s1 + $0x5b0] sm:$0xff]
  %v246 = vld [vmem:[%s1 + $0x5b8] sm:$0xff]
  %v247 = vld [vmem:[%s1 + $0x5c0] sm:$0xff]
  %v248 = vld [vmem:[%s1 + $0x5c8] sm:$0xff]
  %v249 = vld [vmem:[%s1 + $0x5d0] sm:$0xff]
  %v250 = vld [vmem:[%s1 + $0x5d8] sm:$0xff]
  %v251 = vld [vmem:[%s1 + $0x5e0] sm:$0xff]
  %v252 = vld [vmem:[%s1 + $0x5e8] sm:$0xff]
  %v253 = vld [vmem:[%s1 + $0x5f0] sm:$0xff]
  %v254 = vld [vmem:[%s1 + $0x5f8] sm:$0xff]
  %v255 = vld [vmem:[%s1 + $0x600] sm:$0xff]
  %v256 = vld [vmem:[%s1 + $0x608] sm:$0xff]
  %v257 = vld [vmem:[%s1 + $0x610] sm:$0xff]
  %v258 = vld [vmem:[%s1 + $0x618] sm:$0xff]
  %v259 = vld [vmem:[%s1 + $0x620] sm:$0xff]
  %v260 = vld [vmem:[%s1 + $0x628] sm:$0xff]
  %v261 = vld [vmem:[%s1 + $0x630] sm:$0xff]
  %v262 = vld [vmem:[%s1 + $0x638] sm:$0xff]
  %v263 = vld [vmem:[%s1 + $0x640] sm:$0xff]
  %v264 = vld [vmem:[%s1 + $0x648] sm:$0xff]
  %v265 = vld [vmem:[%s1 + $0x650] sm:$0xff]
  %v266 = vld [vmem:[%s1 + $0x658] sm:$0xff]
  %v267 = vld [vmem:[%s1 + $0x660] sm:$0xff]
  %v268 = vld [vmem:[%s1 + $0x668] sm:$0xff]
  %v269 = vld [vmem:[%s1 + $0x670] sm:$0xff]
  %v270 = vld [vmem:[%s1 + $0x678] sm:$0xff]
  %v271 = vld [vmem:[%s1 + $0x680] sm:$0xff]
  %v272 = vld [vmem:[%s1 + $0x688] sm:$0xff]
  %v273 = vld [vmem:[%s1 + $0x690] sm:$0xff]
  %v274 = vld [vmem:[%s1 + $0x698] sm:$0xff]
  %v275 = vld [vmem:[%s1 + $0x6a0] sm:$0xff]
  %v276 = vld [vmem:[%s1 + $0x6a8] sm:$0xff]
  %v277 = vld [vmem:[%s1 + $0x6b0] sm:$0xff]
  %v278 = vld [vmem:[%s1 + $0x6b8] sm:$0xff]
  %v279 = vld [vmem:[%s1 + $0x6c0] sm:$0xff]
  %v280 = vld [vmem:[%s1 + $0x6c8] sm:$0xff]
  %v281 = vld [vmem:[%s1 + $0x6d0] sm:$0xff]
  %v282 = vld [vmem:[%s1 + $0x6d8] sm:$0xff]
  %v283 = vld [vmem:[%s1 + $0x6e0] sm:$0xff]
  %v284 = vld [vmem:[%s1 + $0x6e8] sm:$0xff]
  %v285 = vld [vmem:[%s1 + $0x6f0] sm:$0xff]
  %v286 = vld [vmem:[%s1 + $0x6f8] sm:$0xff]
  %v287 = vld [vmem:[%s1 + $0x700] sm:$0xff]
  %v288 = vld [vmem:[%s1 + $0x708] sm:$0xff]
  %v289 = vld [vmem:[%s1 + $0x710] sm:$0xff]
  %v290 = vld [vmem:[%s1 + $0x718] sm:$0xff]
  %v291 = vld [vmem:[%s1 + $0x720] sm:$0xff]
  %v292 = vld [vmem:[%s1 + $0x728] sm:$0xff]
  %v293 = vld [vmem:[%s1 + $0x730] sm:$0xff]
  %v294 = vld [vmem:[%s1 + $0x738] sm:$0xff]
  %v295 = vld [vmem:[%s1 + $0x740] sm:$0xff]
  %v296 = vld [vmem:[%s1 + $0x748] sm:$0xff]
  %v297 = vld [vmem:[%s1 + $0x750] sm:$0xff]
  %v298 = vld [vmem:[%s1 + $0x758] sm:$0xff]
  %v299 = vld [vmem:[%s1 + $0x760] sm:$0xff]
  %v300 = vld [vmem:[%s1 + $0x768] sm:$0xff]
  %v301 = vld [vmem:[%s1 + $0x770] sm:$0xff]
  %v302 = vld [vmem:[%s1 + $0x778] sm:$0xff]
  %v303 = vld [vmem:[%s1 + $0x780] sm:$0xff]
  %v304 = vld [vmem:[%s1 + $0x788] sm:$0xff]
  %v305 = vld [vmem:[%s1 + $0x790] sm:$0xff]
  %v306 = vld [vmem:[%s1 + $0x798] sm:$0xff]
  %v307 = vld [vmem:[%s1 + $0x7a0] sm:$0xff]
  %v308 = vld [vmem:[%s1 + $0x7a8] sm:$0xff]
  %v309 = vld [vmem:[%s1 + $0x7b0] sm:$0xff]
  %v310 = vld [vmem:[%s1 + $0x7b8] sm:$0xff]
  %v311 = vld [vmem:[%s1 + $0x7c0] sm:$0xff]
  %v312 = vld [vmem:[%s1 + $0x7c8] sm:$0xff]
  %v313 = vld [vmem:[%s1 + $0x7d0] sm:$0xff]
  %v314 = vld [vmem:[%s1 + $0x7d8] sm:$0xff]
  %v315 = vld [vmem:[%s1 + $0x7e0] sm:$0xff]
  %v316 = vld [vmem:[%s1 + $0x7e8] sm:$0xff]
  %v317 = vld [vmem:[%s1 + $0x7f0] sm:$0xff]
  %v318 = vld [vmem:[%s1 + $0x7f8] sm:$0xff]
  %v319 = vld [vmem:[%s2] sm:$0x1]
  %v321 = vperm.slane %v319, 0
  %327 = vst [vmem:[#allocation1] ss:$4 sm:$0xff] %v59
  %s328 = scalar_lea.vmem [#allocation1], 32
  %329 = vst [vmem:[%s328] ss:$4 sm:$0xff] %v60
  %v330 = vld.sshfl [vmem:[#allocation1] sm:$0xff pattern:$0x73625140]
  %v331 = vld.sshfl [vmem:[#allocation1 + $0x8] sm:$0xff pattern:$0x73625140]
  %v332 = vld.sshfl [vmem:[#allocation1 + $0x10] sm:$0xff pattern:$0x73625140]
  %v333 = vld.sshfl [vmem:[#allocation1 + $0x18] sm:$0xff pattern:$0x73625140]
  %v334 = vld.sshfl [vmem:[#allocation1 + $0x20] sm:$0xff pattern:$0x73625140]
  %v335 = vld.sshfl [vmem:[#allocation1 + $0x28] sm:$0xff pattern:$0x73625140]
  %v336 = vld.sshfl [vmem:[#allocation1 + $0x30] sm:$0xff pattern:$0x73625140]
  %v337 = vld.sshfl [vmem:[#allocation1 + $0x38] sm:$0xff pattern:$0x73625140]
  %338 = vst [vmem:[#allocation1] ss:$4 sm:$0xff] %v61
  %339 = vst [vmem:[%s328] ss:$4 sm:$0xff] %v62
  %v340 = vld.sshfl [vmem:[#allocation1] sm:$0xff pattern:$0x73625140]
  %v341 = vld.sshfl [vmem:[#allocation1 + $0x8] sm:$0xff pattern:$0x73625140]
  %v342 = vld.sshfl [vmem:[#allocation1 + $0x10] sm:$0xff pattern:$0x73625140]
  %v343 = vld.sshfl [vmem:[#allocation1 + $0x18] sm:$0xff pattern:$0x73625140]
  %v344 = vld.sshfl [vmem:[#allocation1 + $0x20] sm:$0xff pattern:$0x73625140]
  %v345 = vld.sshfl [vmem:[#allocation1 + $0x28] sm:$0xff pattern:$0x73625140]
  %v346 = vld.sshfl [vmem:[#allocation1 + $0x30] sm:$0xff pattern:$0x73625140]
  %v347 = vld.sshfl [vmem:[#allocation1 + $0x38] sm:$0xff pattern:$0x73625140]
  %364 = vmatpush.msra.mxu0 %v78
  %365 = vmatpush.msra.mxu0 %v77
  %366 = vmatpush.msra.mxu0 %v76
  %367 = vmatpush.msra.mxu0 %v75
  %368 = vmatpush.msra.mxu0 %v74
  %369 = vmatpush.msra.mxu0 %v73
  %370 = vmatpush.msra.mxu0 %v72
  %371 = vmatpush.msra.mxu0 %v71
  %372 = vmatpush.msra.mxu0 %v70
  %373 = vmatpush.msra.mxu0 %v69
  %374 = vmatpush.msra.mxu0 %v68
  %375 = vmatpush.msra.mxu0 %v67
  %376 = vmatpush.msra.mxu0 %v66
  %377 = vmatpush.msra.mxu0 %v65
  %378 = vmatpush.msra.mxu0 %v64
  %379 = vmatpush.msra.mxu0 %v63
  %380 = vmatmul.f32.gmra.mxu0 %v330
  %v381 = vpop.f32.mrf.mxu0
  %v382 = vadd.f32 %v321, %v381
  %383 = vdwg.mxu0
  %384 = vmatpush.msra.mxu0 %v94
  %385 = vmatpush.msra.mxu0 %v93
  %386 = vmatpush.msra.mxu0 %v92
  %387 = vmatpush.msra.mxu0 %v91
  %388 = vmatpush.msra.mxu0 %v90
  %389 = vmatpush.msra.mxu0 %v89
  %390 = vmatpush.msra.mxu0 %v88
  %391 = vmatpush.msra.mxu0 %v87
  %392 = vmatpush.msra.mxu0 %v86
  %393 = vmatpush.msra.mxu0 %v85
  %394 = vmatpush.msra.mxu0 %v84
  %395 = vmatpush.msra.mxu0 %v83
  %396 = vmatpush.msra.mxu0 %v82
  %397 = vmatpush.msra.mxu0 %v81
  %398 = vmatpush.msra.mxu0 %v80
  %399 = vmatpush.msra.mxu0 %v79
  %400 = vmatmul.f32.gmra.mxu0 %v331
  %v401 = vpop.f32.mrf.mxu0
  %v402 = vadd.f32 %v382, %v401
  %403 = vdwg.mxu0
  %404 = vmatpush.msra.mxu0 %v110
  %405 = vmatpush.msra.mxu0 %v109
  %406 = vmatpush.msra.mxu0 %v108
  %407 = vmatpush.msra.mxu0 %v107
  %408 = vmatpush.msra.mxu0 %v106
  %409 = vmatpush.msra.mxu0 %v105
  %410 = vmatpush.msra.mxu0 %v104
  %411 = vmatpush.msra.mxu0 %v103
  %412 = vmatpush.msra.mxu0 %v102
  %413 = vmatpush.msra.mxu0 %v101
  %414 = vmatpush.msra.mxu0 %v100
  %415 = vmatpush.msra.mxu0 %v99
  %416 = vmatpush.msra.mxu0 %v98
  %417 = vmatpush.msra.mxu0 %v97
  %418 = vmatpush.msra.mxu0 %v96
  %419 = vmatpush.msra.mxu0 %v95
  %420 = vmatmul.f32.gmra.mxu0 %v332
  %v421 = vpop.f32.mrf.mxu0
  %v422 = vadd.f32 %v402, %v421
  %423 = vdwg.mxu0
  %424 = vmatpush.msra.mxu0 %v126
  %425 = vmatpush.msra.mxu0 %v125
  %426 = vmatpush.msra.mxu0 %v124
  %427 = vmatpush.msra.mxu0 %v123
  %428 = vmatpush.msra.mxu0 %v122
  %429 = vmatpush.msra.mxu0 %v121
  %430 = vmatpush.msra.mxu0 %v120
  %431 = vmatpush.msra.mxu0 %v119
  %432 = vmatpush.msra.mxu0 %v118
  %433 = vmatpush.msra.mxu0 %v117
  %434 = vmatpush.msra.mxu0 %v116
  %435 = vmatpush.msra.mxu0 %v115
  %436 = vmatpush.msra.mxu0 %v114
  %437 = vmatpush.msra.mxu0 %v113
  %438 = vmatpush.msra.mxu0 %v112
  %439 = vmatpush.msra.mxu0 %v111
  %440 = vmatmul.f32.gmra.mxu0 %v333
  %v441 = vpop.f32.mrf.mxu0
  %v442 = vadd.f32 %v422, %v441
  %443 = vdwg.mxu0
  %444 = vmatpush.msra.mxu0 %v142
  %445 = vmatpush.msra.mxu0 %v141
  %446 = vmatpush.msra.mxu0 %v140
  %447 = vmatpush.msra.mxu0 %v139
  %448 = vmatpush.msra.mxu0 %v138
  %449 = vmatpush.msra.mxu0 %v137
  %450 = vmatpush.msra.mxu0 %v136
  %451 = vmatpush.msra.mxu0 %v135
  %452 = vmatpush.msra.mxu0 %v134
  %453 = vmatpush.msra.mxu0 %v133
  %454 = vmatpush.msra.mxu0 %v132
  %455 = vmatpush.msra.mxu0 %v131
  %456 = vmatpush.msra.mxu0 %v130
  %457 = vmatpush.msra.mxu0 %v129
  %458 = vmatpush.msra.mxu0 %v128
  %459 = vmatpush.msra.mxu0 %v127
  %460 = vmatmul.f32.gmra.mxu0 %v334
  %v461 = vpop.f32.mrf.mxu0
  %v462 = vadd.f32 %v442, %v461
  %463 = vdwg.mxu0
  %464 = vmatpush.msra.mxu0 %v158
  %465 = vmatpush.msra.mxu0 %v157
  %466 = vmatpush.msra.mxu0 %v156
  %467 = vmatpush.msra.mxu0 %v155
  %468 = vmatpush.msra.mxu0 %v154
  %469 = vmatpush.msra.mxu0 %v153
  %470 = vmatpush.msra.mxu0 %v152
  %471 = vmatpush.msra.mxu0 %v151
  %472 = vmatpush.msra.mxu0 %v150
  %473 = vmatpush.msra.mxu0 %v149
  %474 = vmatpush.msra.mxu0 %v148
  %475 = vmatpush.msra.mxu0 %v147
  %476 = vmatpush.msra.mxu0 %v146
  %477 = vmatpush.msra.mxu0 %v145
  %478 = vmatpush.msra.mxu0 %v144
  %479 = vmatpush.msra.mxu0 %v143
  %480 = vmatmul.f32.gmra.mxu0 %v335
  %v481 = vpop.f32.mrf.mxu0
  %v482 = vadd.f32 %v462, %v481
  %483 = vdwg.mxu0
  %484 = vmatpush.msra.mxu0 %v174
  %485 = vmatpush.msra.mxu0 %v173
  %486 = vmatpush.msra.mxu0 %v172
  %487 = vmatpush.msra.mxu0 %v171
  %488 = vmatpush.msra.mxu0 %v170
  %489 = vmatpush.msra.mxu0 %v169
  %490 = vmatpush.msra.mxu0 %v168
  %491 = vmatpush.msra.mxu0 %v167
  %492 = vmatpush.msra.mxu0 %v166
  %493 = vmatpush.msra.mxu0 %v165
  %494 = vmatpush.msra.mxu0 %v164
  %495 = vmatpush.msra.mxu0 %v163
  %496 = vmatpush.msra.mxu0 %v162
  %497 = vmatpush.msra.mxu0 %v161
  %498 = vmatpush.msra.mxu0 %v160
  %499 = vmatpush.msra.mxu0 %v159
  %500 = vmatmul.f32.gmra.mxu0 %v336
  %v501 = vpop.f32.mrf.mxu0
  %v502 = vadd.f32 %v482, %v501
  %503 = vdwg.mxu0
  %504 = vmatpush.msra.mxu0 %v190
  %505 = vmatpush.msra.mxu0 %v189
  %506 = vmatpush.msra.mxu0 %v188
  %507 = vmatpush.msra.mxu0 %v187
  %508 = vmatpush.msra.mxu0 %v186
  %509 = vmatpush.msra.mxu0 %v185
  %510 = vmatpush.msra.mxu0 %v184
  %511 = vmatpush.msra.mxu0 %v183
  %512 = vmatpush.msra.mxu0 %v182
  %513 = vmatpush.msra.mxu0 %v181
  %514 = vmatpush.msra.mxu0 %v180
  %515 = vmatpush.msra.mxu0 %v179
  %516 = vmatpush.msra.mxu0 %v178
  %517 = vmatpush.msra.mxu0 %v177
  %518 = vmatpush.msra.mxu0 %v176
  %519 = vmatpush.msra.mxu0 %v175
  %520 = vmatmul.f32.gmra.mxu0 %v337
  %v521 = vpop.f32.mrf.mxu0
  %v522 = vadd.f32 %v502, %v521
  %523 = vdwg.mxu0
  %524 = vmatpush.msra.mxu0 %v206
  %525 = vmatpush.msra.mxu0 %v205
  %526 = vmatpush.msra.mxu0 %v204
  %527 = vmatpush.msra.mxu0 %v203
  %528 = vmatpush.msra.mxu0 %v202
  %529 = vmatpush.msra.mxu0 %v201
  %530 = vmatpush.msra.mxu0 %v200
  %531 = vmatpush.msra.mxu0 %v199
  %532 = vmatpush.msra.mxu0 %v198
  %533 = vmatpush.msra.mxu0 %v197
  %534 = vmatpush.msra.mxu0 %v196
  %535 = vmatpush.msra.mxu0 %v195
  %536 = vmatpush.msra.mxu0 %v194
  %537 = vmatpush.msra.mxu0 %v193
  %538 = vmatpush.msra.mxu0 %v192
  %539 = vmatpush.msra.mxu0 %v191
  %540 = vmatmul.f32.gmra.mxu0 %v340
  %v541 = vpop.f32.mrf.mxu0
  %v542 = vadd.f32 %v522, %v541
  %543 = vdwg.mxu0
  %544 = vmatpush.msra.mxu0 %v222
  %545 = vmatpush.msra.mxu0 %v221
  %546 = vmatpush.msra.mxu0 %v220
  %547 = vmatpush.msra.mxu0 %v219
  %548 = vmatpush.msra.mxu0 %v218
  %549 = vmatpush.msra.mxu0 %v217
  %550 = vmatpush.msra.mxu0 %v216
  %551 = vmatpush.msra.mxu0 %v215
  %552 = vmatpush.msra.mxu0 %v214
  %553 = vmatpush.msra.mxu0 %v213
  %554 = vmatpush.msra.mxu0 %v212
  %555 = vmatpush.msra.mxu0 %v211
  %556 = vmatpush.msra.mxu0 %v210
  %557 = vmatpush.msra.mxu0 %v209
  %558 = vmatpush.msra.mxu0 %v208
  %559 = vmatpush.msra.mxu0 %v207
  %560 = vmatmul.f32.gmra.mxu0 %v341
  %v561 = vpop.f32.mrf.mxu0
  %v562 = vadd.f32 %v542, %v561
  %563 = vdwg.mxu0
  %564 = vmatpush.msra.mxu0 %v238
  %565 = vmatpush.msra.mxu0 %v237
  %566 = vmatpush.msra.mxu0 %v236
  %567 = vmatpush.msra.mxu0 %v235
  %568 = vmatpush.msra.mxu0 %v234
  %569 = vmatpush.msra.mxu0 %v233
  %570 = vmatpush.msra.mxu0 %v232
  %571 = vmatpush.msra.mxu0 %v231
  %572 = vmatpush.msra.mxu0 %v230
  %573 = vmatpush.msra.mxu0 %v229
  %574 = vmatpush.msra.mxu0 %v228
  %575 = vmatpush.msra.mxu0 %v227
  %576 = vmatpush.msra.mxu0 %v226
  %577 = vmatpush.msra.mxu0 %v225
  %578 = vmatpush.msra.mxu0 %v224
  %579 = vmatpush.msra.mxu0 %v223
  %580 = vmatmul.f32.gmra.mxu0 %v342
  %v581 = vpop.f32.mrf.mxu0
  %v582 = vadd.f32 %v562, %v581
  %583 = vdwg.mxu0
  %584 = vmatpush.msra.mxu0 %v254
  %585 = vmatpush.msra.mxu0 %v253
  %586 = vmatpush.msra.mxu0 %v252
  %587 = vmatpush.msra.mxu0 %v251
  %588 = vmatpush.msra.mxu0 %v250
  %589 = vmatpush.msra.mxu0 %v249
  %590 = vmatpush.msra.mxu0 %v248
  %591 = vmatpush.msra.mxu0 %v247
  %592 = vmatpush.msra.mxu0 %v246
  %593 = vmatpush.msra.mxu0 %v245
  %594 = vmatpush.msra.mxu0 %v244
  %595 = vmatpush.msra.mxu0 %v243
  %596 = vmatpush.msra.mxu0 %v242
  %597 = vmatpush.msra.mxu0 %v241
  %598 = vmatpush.msra.mxu0 %v240
  %599 = vmatpush.msra.mxu0 %v239
  %600 = vmatmul.f32.gmra.mxu0 %v343
  %v601 = vpop.f32.mrf.mxu0
  %v602 = vadd.f32 %v582, %v601
  %603 = vdwg.mxu0
  %604 = vmatpush.msra.mxu0 %v270
  %605 = vmatpush.msra.mxu0 %v269
  %606 = vmatpush.msra.mxu0 %v268
  %607 = vmatpush.msra.mxu0 %v267
  %608 = vmatpush.msra.mxu0 %v266
  %609 = vmatpush.msra.mxu0 %v265
  %610 = vmatpush.msra.mxu0 %v264
  %611 = vmatpush.msra.mxu0 %v263
  %612 = vmatpush.msra.mxu0 %v262
  %613 = vmatpush.msra.mxu0 %v261
  %614 = vmatpush.msra.mxu0 %v260
  %615 = vmatpush.msra.mxu0 %v259
  %616 = vmatpush.msra.mxu0 %v258
  %617 = vmatpush.msra.mxu0 %v257
  %618 = vmatpush.msra.mxu0 %v256
  %619 = vmatpush.msra.mxu0 %v255
  %620 = vmatmul.f32.gmra.mxu0 %v344
  %v621 = vpop.f32.mrf.mxu0
  %v622 = vadd.f32 %v602, %v621
  %623 = vdwg.mxu0
  %624 = vmatpush.msra.mxu0 %v286
  %625 = vmatpush.msra.mxu0 %v285
  %626 = vmatpush.msra.mxu0 %v284
  %627 = vmatpush.msra.mxu0 %v283
  %628 = vmatpush.msra.mxu0 %v282
  %629 = vmatpush.msra.mxu0 %v281
  %630 = vmatpush.msra.mxu0 %v280
  %631 = vmatpush.msra.mxu0 %v279
  %632 = vmatpush.msra.mxu0 %v278
  %633 = vmatpush.msra.mxu0 %v277
  %634 = vmatpush.msra.mxu0 %v276
  %635 = vmatpush.msra.mxu0 %v275
  %636 = vmatpush.msra.mxu0 %v274
  %637 = vmatpush.msra.mxu0 %v273
  %638 = vmatpush.msra.mxu0 %v272
  %639 = vmatpush.msra.mxu0 %v271
  %640 = vmatmul.f32.gmra.mxu0 %v345
  %v641 = vpop.f32.mrf.mxu0
  %v642 = vadd.f32 %v622, %v641
  %643 = vdwg.mxu0
  %644 = vmatpush.msra.mxu0 %v302
  %645 = vmatpush.msra.mxu0 %v301
  %646 = vmatpush.msra.mxu0 %v300
  %647 = vmatpush.msra.mxu0 %v299
  %648 = vmatpush.msra.mxu0 %v298
  %649 = vmatpush.msra.mxu0 %v297
  %650 = vmatpush.msra.mxu0 %v296
  %651 = vmatpush.msra.mxu0 %v295
  %652 = vmatpush.msra.mxu0 %v294
  %653 = vmatpush.msra.mxu0 %v293
  %654 = vmatpush.msra.mxu0 %v292
  %655 = vmatpush.msra.mxu0 %v291
  %656 = vmatpush.msra.mxu0 %v290
  %657 = vmatpush.msra.mxu0 %v289
  %658 = vmatpush.msra.mxu0 %v288
  %659 = vmatpush.msra.mxu0 %v287
  %660 = vmatmul.f32.gmra.mxu0 %v346
  %v661 = vpop.f32.mrf.mxu0
  %v662 = vadd.f32 %v642, %v661
  %663 = vdwg.mxu0
  %664 = vmatpush.msra.mxu0 %v318
  %665 = vmatpush.msra.mxu0 %v317
  %666 = vmatpush.msra.mxu0 %v316
  %667 = vmatpush.msra.mxu0 %v315
  %668 = vmatpush.msra.mxu0 %v314
  %669 = vmatpush.msra.mxu0 %v313
  %670 = vmatpush.msra.mxu0 %v312
  %671 = vmatpush.msra.mxu0 %v311
  %672 = vmatpush.msra.mxu0 %v310
  %673 = vmatpush.msra.mxu0 %v309
  %674 = vmatpush.msra.mxu0 %v308
  %675 = vmatpush.msra.mxu0 %v307
  %676 = vmatpush.msra.mxu0 %v306
  %677 = vmatpush.msra.mxu0 %v305
  %678 = vmatpush.msra.mxu0 %v304
  %679 = vmatpush.msra.mxu0 %v303
  %680 = vmatmul.f32.gmra.mxu0 %v347
  %v681 = vpop.f32.mrf.mxu0
  %v682 = vadd.f32 %v662, %v681
  %683 = vdwg.mxu0
  %v684 = vld [vmem:[%s3] sm:$0x1]
  %v685 = vld [vmem:[%s4] sm:$0x1]
  %vm686 = vcmask 123904
  %v687 = vsel %vm686, %v682, 0.0
  %v688 = vrot.slane %v687, 4
  %v689 = vadd.f32 %v687, %v688
  %v690 = vrot.slane %v689, 2
  %v691 = vadd.f32 %v689, %v690
  %v692 = vrot.slane %v691, 1
  %v693 = vadd.f32 %v691, %v692
  %v694 = vrcp.pop 2.0
  %v695 = vmul.f32 2.0, %v694
  %v696 = vsub.f32 1.0, %v695
  %v697 = vmul.f32 %v694, %v696
  %v698 = vadd.f32 %v694, %v697
  %vm699 = vweird.f32 %v694
  %v700 = vsel %vm699, %v694, %v698
  %v701 = vmul.f32 %v693, %v700
  %v702 = vsub.f32 %v682, %v701
  %v703 = vmul.f32 %v702, %v702
  %v704 = vsel %vm686, %v703, 0.0
  %v705 = vrot.slane %v704, 4
  %v706 = vadd.f32 %v704, %v705
  %v707 = vrot.slane %v706, 2
  %v708 = vadd.f32 %v706, %v707
  %v709 = vrot.slane %v708, 1
  %v710 = vadd.f32 %v708, %v709
  %v711 = vmul.f32 %v710, %v700
  %v712 = vadd.f32 %v711, 1e-05
  %v713 = vrsqrt.pop %v712
  %v714 = vmul.f32 %v713, %v712
  %v715 = vmul.f32 %v714, %v713
  %v716 = vmul.f32 0.5, %v715
  %v717 = vsub.f32 1.5, %v716
  %v718 = vmul.f32 %v713, %v717
  %vm719 = vweird.f32 %v712
  %vm720 = vweird.f32 %v713
  %vm721 = vmor %vm719, %vm720
  %v722 = vsel %vm721, %v713, %v718
  %v723 = vmul.f32 %v702, %v722
  %v725 = vperm.slane %v684, 0
  %v727 = vmul.f32 %v723, %v725
  %v729 = vperm.slane %v685, 0
  %v731 = vadd.f32 %v727, %v729
  %v732 = vld [vmem:[%s5] sm:$0xff]
  %v733 = vld [vmem:[%s5 + $0x8] sm:$0xff]
  %v734 = vld [vmem:[%s6] sm:$0x1]
  %v736 = vperm.slane %v734, 0
  %vm738 = vcmask 130048
  %v740 = vsel %vm738, %v731, 0
  %742 = vmatpush.msra.mxu0 0.0
  %743 = vmatpush.msra.mxu0 0.0
  %744 = vmatpush.msra.mxu0 0.0
  %745 = vmatpush.msra.mxu0 0.0
  %746 = vmatpush.msra.mxu0 0.0
  %747 = vmatpush.msra.mxu0 0.0
  %748 = vmatpush.msra.mxu0 0.0
  %749 = vmatpush.msra.mxu0 0.0
  %750 = vmatpush.msra.mxu0 0.0
  %751 = vmatpush.msra.mxu0 0.0
  %752 = vmatpush.msra.mxu0 0.0
  %753 = vmatpush.msra.mxu0 0.0
  %754 = vmatpush.msra.mxu0 0.0
  %755 = vmatpush.msra.mxu0 0.0
  %756 = vmatpush.msra.mxu0 %v733
  %757 = vmatpush.msra.mxu0 %v732
  %758 = vmatmul.f32.gmra.mxu0 %v740
  %v759 = vpop.f32.mrf.mxu0
  %v760 = vadd.f32 %v736, %v759
  %761 = vdwg.mxu0
  %v762 = vld [vmem:[%s7] sm:$0xff]
  %v763 = vld [vmem:[%s7 + $0x8] sm:$0xff]
  %v764 = vld [vmem:[%s7 + $0x10] sm:$0xff]
  %v765 = vld [vmem:[%s7 + $0x18] sm:$0xff]
  %v766 = vld [vmem:[%s7 + $0x20] sm:$0xff]
  %v767 = vld [vmem:[%s7 + $0x28] sm:$0xff]
  %v768 = vld [vmem:[%s7 + $0x30] sm:$0xff]
  %v769 = vld [vmem:[%s7 + $0x38] sm:$0xff]
  %v770 = vld [vmem:[%s7 + $0x40] sm:$0xff]
  %v771 = vld [vmem:[%s7 + $0x48] sm:$0xff]
  %v772 = vld [vmem:[%s7 + $0x50] sm:$0xff]
  %v773 = vld [vmem:[%s7 + $0x58] sm:$0xff]
  %v774 = vld [vmem:[%s7 + $0x60] sm:$0xff]
  %v775 = vld [vmem:[%s7 + $0x68] sm:$0xff]
  %v776 = vld [vmem:[%s7 + $0x70] sm:$0xff]
  %v777 = vld [vmem:[%s7 + $0x78] sm:$0xff]
  %v778 = vld [vmem:[%s7 + $0x80] sm:$0xff]
  %v779 = vld [vmem:[%s7 + $0x88] sm:$0xff]
  %v780 = vld [vmem:[%s7 + $0x90] sm:$0xff]
  %v781 = vld [vmem:[%s7 + $0x98] sm:$0xff]
  %v782 = vld [vmem:[%s7 + $0xa0] sm:$0xff]
  %v783 = vld [vmem:[%s7 + $0xa8] sm:$0xff]
  %v784 = vld [vmem:[%s7 + $0xb0] sm:$0xff]
  %v785 = vld [vmem:[%s7 + $0xb8] sm:$0xff]
  %v786 = vld [vmem:[%s7 + $0xc0] sm:$0xff]
  %v787 = vld [vmem:[%s7 + $0xc8] sm:$0xff]
  %v788 = vld [vmem:[%s7 + $0xd0] sm:$0xff]
  %v789 = vld [vmem:[%s7 + $0xd8] sm:$0xff]
  %v790 = vld [vmem:[%s7 + $0xe0] sm:$0xff]
  %v791 = vld [vmem:[%s7 + $0xe8] sm:$0xff]
  %v792 = vld [vmem:[%s7 + $0xf0] sm:$0xff]
  %v793 = vld [vmem:[%s7 + $0xf8] sm:$0xff]
  %v794 = vld [vmem:[%s7 + $0x100] sm:$0xff]
  %v795 = vld [vmem:[%s7 + $0x108] sm:$0xff]
  %v796 = vld [vmem:[%s7 + $0x110] sm:$0xff]
  %v797 = vld [vmem:[%s7 + $0x118] sm:$0xff]
  %v798 = vld [vmem:[%s7 + $0x120] sm:$0xff]
  %v799 = vld [vmem:[%s7 + $0x128] sm:$0xff]
  %v800 = vld [vmem:[%s7 + $0x130] sm:$0xff]
  %v801 = vld [vmem:[%s7 + $0x138] sm:$0xff]
  %v802 = vld [vmem:[%s7 + $0x140] sm:$0xff]
  %v803 = vld [vmem:[%s7 + $0x148] sm:$0xff]
  %v804 = vld [vmem:[%s7 + $0x150] sm:$0xff]
  %v805 = vld [vmem:[%s7 + $0x158] sm:$0xff]
  %v806 = vld [vmem:[%s7 + $0x160] sm:$0xff]
  %v807 = vld [vmem:[%s7 + $0x168] sm:$0xff]
  %v808 = vld [vmem:[%s7 + $0x170] sm:$0xff]
  %v809 = vld [vmem:[%s7 + $0x178] sm:$0xff]
  %v810 = vld [vmem:[%s7 + $0x180] sm:$0xff]
  %v811 = vld [vmem:[%s7 + $0x188] sm:$0xff]
  %v812 = vld [vmem:[%s7 + $0x190] sm:$0xff]
  %v813 = vld [vmem:[%s7 + $0x198] sm:$0xff]
  %v814 = vld [vmem:[%s7 + $0x1a0] sm:$0xff]
  %v815 = vld [vmem:[%s7 + $0x1a8] sm:$0xff]
  %v816 = vld [vmem:[%s7 + $0x1b0] sm:$0xff]
  %v817 = vld [vmem:[%s7 + $0x1b8] sm:$0xff]
  %v818 = vld [vmem:[%s7 + $0x1c0] sm:$0xff]
  %v819 = vld [vmem:[%s7 + $0x1c8] sm:$0xff]
  %v820 = vld [vmem:[%s7 + $0x1d0] sm:$0xff]
  %v821 = vld [vmem:[%s7 + $0x1d8] sm:$0xff]
  %v822 = vld [vmem:[%s7 + $0x1e0] sm:$0xff]
  %v823 = vld [vmem:[%s7 + $0x1e8] sm:$0xff]
  %v824 = vld [vmem:[%s7 + $0x1f0] sm:$0xff]
  %v825 = vld [vmem:[%s7 + $0x1f8] sm:$0xff]
  %v826 = vld [vmem:[%s7 + $0x200] sm:$0xff]
  %v827 = vld [vmem:[%s7 + $0x208] sm:$0xff]
  %v828 = vld [vmem:[%s7 + $0x210] sm:$0xff]
  %v829 = vld [vmem:[%s7 + $0x218] sm:$0xff]
  %v830 = vld [vmem:[%s7 + $0x220] sm:$0xff]
  %v831 = vld [vmem:[%s7 + $0x228] sm:$0xff]
  %v832 = vld [vmem:[%s7 + $0x230] sm:$0xff]
  %v833 = vld [vmem:[%s7 + $0x238] sm:$0xff]
  %v834 = vld [vmem:[%s7 + $0x240] sm:$0xff]
  %v835 = vld [vmem:[%s7 + $0x248] sm:$0xff]
  %v836 = vld [vmem:[%s7 + $0x250] sm:$0xff]
  %v837 = vld [vmem:[%s7 + $0x258] sm:$0xff]
  %v838 = vld [vmem:[%s7 + $0x260] sm:$0xff]
  %v839 = vld [vmem:[%s7 + $0x268] sm:$0xff]
  %v840 = vld [vmem:[%s7 + $0x270] sm:$0xff]
  %v841 = vld [vmem:[%s7 + $0x278] sm:$0xff]
  %v842 = vld [vmem:[%s7 + $0x280] sm:$0xff]
  %v843 = vld [vmem:[%s7 + $0x288] sm:$0xff]
  %v844 = vld [vmem:[%s7 + $0x290] sm:$0xff]
  %v845 = vld [vmem:[%s7 + $0x298] sm:$0xff]
  %v846 = vld [vmem:[%s7 + $0x2a0] sm:$0xff]
  %v847 = vld [vmem:[%s7 + $0x2a8] sm:$0xff]
  %v848 = vld [vmem:[%s7 + $0x2b0] sm:$0xff]
  %v849 = vld [vmem:[%s7 + $0x2b8] sm:$0xff]
  %v850 = vld [vmem:[%s7 + $0x2c0] sm:$0xff]
  %v851 = vld [vmem:[%s7 + $0x2c8] sm:$0xff]
  %v852 = vld [vmem:[%s7 + $0x2d0] sm:$0xff]
  %v853 = vld [vmem:[%s7 + $0x2d8] sm:$0xff]
  %v854 = vld [vmem:[%s7 + $0x2e0] sm:$0xff]
  %v855 = vld [vmem:[%s7 + $0x2e8] sm:$0xff]
  %v856 = vld [vmem:[%s7 + $0x2f0] sm:$0xff]
  %v857 = vld [vmem:[%s7 + $0x2f8] sm:$0xff]
  %v858 = vld [vmem:[%s7 + $0x300] sm:$0xff]
  %v859 = vld [vmem:[%s7 + $0x308] sm:$0xff]
  %v860 = vld [vmem:[%s7 + $0x310] sm:$0xff]
  %v861 = vld [vmem:[%s7 + $0x318] sm:$0xff]
  %v862 = vld [vmem:[%s7 + $0x320] sm:$0xff]
  %v863 = vld [vmem:[%s7 + $0x328] sm:$0xff]
  %v864 = vld [vmem:[%s7 + $0x330] sm:$0xff]
  %v865 = vld [vmem:[%s7 + $0x338] sm:$0xff]
  %v866 = vld [vmem:[%s7 + $0x340] sm:$0xff]
  %v867 = vld [vmem:[%s7 + $0x348] sm:$0xff]
  %v868 = vld [vmem:[%s7 + $0x350] sm:$0xff]
  %v869 = vld [vmem:[%s7 + $0x358] sm:$0xff]
  %v870 = vld [vmem:[%s7 + $0x360] sm:$0xff]
  %v871 = vld [vmem:[%s7 + $0x368] sm:$0xff]
  %v872 = vld [vmem:[%s7 + $0x370] sm:$0xff]
  %v873 = vld [vmem:[%s7 + $0x378] sm:$0xff]
  %v874 = vld [vmem:[%s7 + $0x380] sm:$0xff]
  %v875 = vld [vmem:[%s7 + $0x388] sm:$0xff]
  %v876 = vld [vmem:[%s7 + $0x390] sm:$0xff]
  %v877 = vld [vmem:[%s7 + $0x398] sm:$0xff]
  %v878 = vld [vmem:[%s7 + $0x3a0] sm:$0xff]
  %v879 = vld [vmem:[%s7 + $0x3a8] sm:$0xff]
  %v880 = vld [vmem:[%s7 + $0x3b0] sm:$0xff]
  %v881 = vld [vmem:[%s7 + $0x3b8] sm:$0xff]
  %v882 = vld [vmem:[%s7 + $0x3c0] sm:$0xff]
  %v883 = vld [vmem:[%s7 + $0x3c8] sm:$0xff]
  %v884 = vld [vmem:[%s7 + $0x3d0] sm:$0xff]
  %v885 = vld [vmem:[%s7 + $0x3d8] sm:$0xff]
  %v886 = vld [vmem:[%s7 + $0x3e0] sm:$0xff]
  %v887 = vld [vmem:[%s7 + $0x3e8] sm:$0xff]
  %v888 = vld [vmem:[%s7 + $0x3f0] sm:$0xff]
  %v889 = vld [vmem:[%s7 + $0x3f8] sm:$0xff]
  %v890 = vld [vmem:[%s7 + $0x400] sm:$0xff]
  %v891 = vld [vmem:[%s7 + $0x408] sm:$0xff]
  %v892 = vld [vmem:[%s7 + $0x410] sm:$0xff]
  %v893 = vld [vmem:[%s7 + $0x418] sm:$0xff]
  %v894 = vld [vmem:[%s7 + $0x420] sm:$0xff]
  %v895 = vld [vmem:[%s7 + $0x428] sm:$0xff]
  %v896 = vld [vmem:[%s7 + $0x430] sm:$0xff]
  %v897 = vld [vmem:[%s7 + $0x438] sm:$0xff]
  %v898 = vld [vmem:[%s7 + $0x440] sm:$0xff]
  %v899 = vld [vmem:[%s7 + $0x448] sm:$0xff]
  %v900 = vld [vmem:[%s7 + $0x450] sm:$0xff]
  %v901 = vld [vmem:[%s7 + $0x458] sm:$0xff]
  %v902 = vld [vmem:[%s7 + $0x460] sm:$0xff]
  %v903 = vld [vmem:[%s7 + $0x468] sm:$0xff]
  %v904 = vld [vmem:[%s7 + $0x470] sm:$0xff]
  %v905 = vld [vmem:[%s7 + $0x478] sm:$0xff]
  %v906 = vld [vmem:[%s7 + $0x480] sm:$0xff]
  %v907 = vld [vmem:[%s7 + $0x488] sm:$0xff]
  %v908 = vld [vmem:[%s7 + $0x490] sm:$0xff]
  %v909 = vld [vmem:[%s7 + $0x498] sm:$0xff]
  %v910 = vld [vmem:[%s7 + $0x4a0] sm:$0xff]
  %v911 = vld [vmem:[%s7 + $0x4a8] sm:$0xff]
  %v912 = vld [vmem:[%s7 + $0x4b0] sm:$0xff]
  %v913 = vld [vmem:[%s7 + $0x4b8] sm:$0xff]
  %v914 = vld [vmem:[%s7 + $0x4c0] sm:$0xff]
  %v915 = vld [vmem:[%s7 + $0x4c8] sm:$0xff]
  %v916 = vld [vmem:[%s7 + $0x4d0] sm:$0xff]
  %v917 = vld [vmem:[%s7 + $0x4d8] sm:$0xff]
  %v918 = vld [vmem:[%s7 + $0x4e0] sm:$0xff]
  %v919 = vld [vmem:[%s7 + $0x4e8] sm:$0xff]
  %v920 = vld [vmem:[%s7 + $0x4f0] sm:$0xff]
  %v921 = vld [vmem:[%s7 + $0x4f8] sm:$0xff]
  %v922 = vld [vmem:[%s7 + $0x500] sm:$0xff]
  %v923 = vld [vmem:[%s7 + $0x508] sm:$0xff]
  %v924 = vld [vmem:[%s7 + $0x510] sm:$0xff]
  %v925 = vld [vmem:[%s7 + $0x518] sm:$0xff]
  %v926 = vld [vmem:[%s7 + $0x520] sm:$0xff]
  %v927 = vld [vmem:[%s7 + $0x528] sm:$0xff]
  %v928 = vld [vmem:[%s7 + $0x530] sm:$0xff]
  %v929 = vld [vmem:[%s7 + $0x538] sm:$0xff]
  %v930 = vld [vmem:[%s7 + $0x540] sm:$0xff]
  %v931 = vld [vmem:[%s7 + $0x548] sm:$0xff]
  %v932 = vld [vmem:[%s7 + $0x550] sm:$0xff]
  %v933 = vld [vmem:[%s7 + $0x558] sm:$0xff]
  %v934 = vld [vmem:[%s7 + $0x560] sm:$0xff]
  %v935 = vld [vmem:[%s7 + $0x568] sm:$0xff]
  %v936 = vld [vmem:[%s7 + $0x570] sm:$0xff]
  %v937 = vld [vmem:[%s7 + $0x578] sm:$0xff]
  %v938 = vld [vmem:[%s7 + $0x580] sm:$0xff]
  %v939 = vld [vmem:[%s7 + $0x588] sm:$0xff]
  %v940 = vld [vmem:[%s7 + $0x590] sm:$0xff]
  %v941 = vld [vmem:[%s7 + $0x598] sm:$0xff]
  %v942 = vld [vmem:[%s7 + $0x5a0] sm:$0xff]
  %v943 = vld [vmem:[%s7 + $0x5a8] sm:$0xff]
  %v944 = vld [vmem:[%s7 + $0x5b0] sm:$0xff]
  %v945 = vld [vmem:[%s7 + $0x5b8] sm:$0xff]
  %v946 = vld [vmem:[%s7 + $0x5c0] sm:$0xff]
  %v947 = vld [vmem:[%s7 + $0x5c8] sm:$0xff]
  %v948 = vld [vmem:[%s7 + $0x5d0] sm:$0xff]
  %v949 = vld [vmem:[%s7 + $0x5d8] sm:$0xff]
  %v950 = vld [vmem:[%s7 + $0x5e0] sm:$0xff]
  %v951 = vld [vmem:[%s7 + $0x5e8] sm:$0xff]
  %v952 = vld [vmem:[%s7 + $0x5f0] sm:$0xff]
  %v953 = vld [vmem:[%s7 + $0x5f8] sm:$0xff]
  %v954 = vld [vmem:[%s7 + $0x600] sm:$0xff]
  %v955 = vld [vmem:[%s7 + $0x608] sm:$0xff]
  %v956 = vld [vmem:[%s7 + $0x610] sm:$0xff]
  %v957 = vld [vmem:[%s7 + $0x618] sm:$0xff]
  %v958 = vld [vmem:[%s7 + $0x620] sm:$0xff]
  %v959 = vld [vmem:[%s7 + $0x628] sm:$0xff]
  %v960 = vld [vmem:[%s7 + $0x630] sm:$0xff]
  %v961 = vld [vmem:[%s7 + $0x638] sm:$0xff]
  %v962 = vld [vmem:[%s7 + $0x640] sm:$0xff]
  %v963 = vld [vmem:[%s7 + $0x648] sm:$0xff]
  %v964 = vld [vmem:[%s7 + $0x650] sm:$0xff]
  %v965 = vld [vmem:[%s7 + $0x658] sm:$0xff]
  %v966 = vld [vmem:[%s7 + $0x660] sm:$0xff]
  %v967 = vld [vmem:[%s7 + $0x668] sm:$0xff]
  %v968 = vld [vmem:[%s7 + $0x670] sm:$0xff]
  %v969 = vld [vmem:[%s7 + $0x678] sm:$0xff]
  %v970 = vld [vmem:[%s7 + $0x680] sm:$0xff]
  %v971 = vld [vmem:[%s7 + $0x688] sm:$0xff]
  %v972 = vld [vmem:[%s7 + $0x690] sm:$0xff]
  %v973 = vld [vmem:[%s7 + $0x698] sm:$0xff]
  %v974 = vld [vmem:[%s7 + $0x6a0] sm:$0xff]
  %v975 = vld [vmem:[%s7 + $0x6a8] sm:$0xff]
  %v976 = vld [vmem:[%s7 + $0x6b0] sm:$0xff]
  %v977 = vld [vmem:[%s7 + $0x6b8] sm:$0xff]
  %v978 = vld [vmem:[%s7 + $0x6c0] sm:$0xff]
  %v979 = vld [vmem:[%s7 + $0x6c8] sm:$0xff]
  %v980 = vld [vmem:[%s7 + $0x6d0] sm:$0xff]
  %v981 = vld [vmem:[%s7 + $0x6d8] sm:$0xff]
  %v982 = vld [vmem:[%s7 + $0x6e0] sm:$0xff]
  %v983 = vld [vmem:[%s7 + $0x6e8] sm:$0xff]
  %v984 = vld [vmem:[%s7 + $0x6f0] sm:$0xff]
  %v985 = vld [vmem:[%s7 + $0x6f8] sm:$0xff]
  %v986 = vld [vmem:[%s7 + $0x700] sm:$0xff]
  %v987 = vld [vmem:[%s7 + $0x708] sm:$0xff]
  %v988 = vld [vmem:[%s7 + $0x710] sm:$0xff]
  %v989 = vld [vmem:[%s7 + $0x718] sm:$0xff]
  %v990 = vld [vmem:[%s7 + $0x720] sm:$0xff]
  %v991 = vld [vmem:[%s7 + $0x728] sm:$0xff]
  %v992 = vld [vmem:[%s7 + $0x730] sm:$0xff]
  %v993 = vld [vmem:[%s7 + $0x738] sm:$0xff]
  %v994 = vld [vmem:[%s7 + $0x740] sm:$0xff]
  %v995 = vld [vmem:[%s7 + $0x748] sm:$0xff]
  %v996 = vld [vmem:[%s7 + $0x750] sm:$0xff]
  %v997 = vld [vmem:[%s7 + $0x758] sm:$0xff]
  %v998 = vld [vmem:[%s7 + $0x760] sm:$0xff]
  %v999 = vld [vmem:[%s7 + $0x768] sm:$0xff]
  %v1000 = vld [vmem:[%s7 + $0x770] sm:$0xff]
  %v1001 = vld [vmem:[%s7 + $0x778] sm:$0xff]
  %v1002 = vld [vmem:[%s7 + $0x780] sm:$0xff]
  %v1003 = vld [vmem:[%s7 + $0x788] sm:$0xff]
  %v1004 = vld [vmem:[%s7 + $0x790] sm:$0xff]
  %v1005 = vld [vmem:[%s7 + $0x798] sm:$0xff]
  %v1006 = vld [vmem:[%s7 + $0x7a0] sm:$0xff]
  %v1007 = vld [vmem:[%s7 + $0x7a8] sm:$0xff]
  %v1008 = vld [vmem:[%s7 + $0x7b0] sm:$0xff]
  %v1009 = vld [vmem:[%s7 + $0x7b8] sm:$0xff]
  %v1010 = vld [vmem:[%s7 + $0x7c0] sm:$0xff]
  %v1011 = vld [vmem:[%s7 + $0x7c8] sm:$0xff]
  %v1012 = vld [vmem:[%s7 + $0x7d0] sm:$0xff]
  %v1013 = vld [vmem:[%s7 + $0x7d8] sm:$0xff]
  %v1014 = vld [vmem:[%s7 + $0x7e0] sm:$0xff]
  %v1015 = vld [vmem:[%s7 + $0x7e8] sm:$0xff]
  %v1016 = vld [vmem:[%s7 + $0x7f0] sm:$0xff]
  %v1017 = vld [vmem:[%s7 + $0x7f8] sm:$0xff]
  %v1018 = vld [vmem:[%s8] sm:$0x1]
  %v1020 = vperm.slane %v1018, 0
  %1022 = vst [vmem:[#allocation1] ss:$4 sm:$0xff] %v59
  %s1023 = scalar_lea.vmem [#allocation1], 32
  %1024 = vst [vmem:[%s1023] ss:$4 sm:$0xff] %v60
  %v1025 = vld.sshfl [vmem:[#allocation1] sm:$0xff pattern:$0x73625140]
  %v1026 = vld.sshfl [vmem:[#allocation1 + $0x8] sm:$0xff pattern:$0x73625140]
  %v1027 = vld.sshfl [vmem:[#allocation1 + $0x10] sm:$0xff pattern:$0x73625140]
  %v1028 = vld.sshfl [vmem:[#allocation1 + $0x18] sm:$0xff pattern:$0x73625140]
  %v1029 = vld.sshfl [vmem:[#allocation1 + $0x20] sm:$0xff pattern:$0x73625140]
  %v1030 = vld.sshfl [vmem:[#allocation1 + $0x28] sm:$0xff pattern:$0x73625140]
  %v1031 = vld.sshfl [vmem:[#allocation1 + $0x30] sm:$0xff pattern:$0x73625140]
  %v1032 = vld.sshfl [vmem:[#allocation1 + $0x38] sm:$0xff pattern:$0x73625140]
  %1033 = vst [vmem:[#allocation1] ss:$4 sm:$0xff] %v61
  %1034 = vst [vmem:[%s1023] ss:$4 sm:$0xff] %v62
  %v1035 = vld.sshfl [vmem:[#allocation1] sm:$0xff pattern:$0x73625140]
  %v1036 = vld.sshfl [vmem:[#allocation1 + $0x8] sm:$0xff pattern:$0x73625140]
  %v1037 = vld.sshfl [vmem:[#allocation1 + $0x10] sm:$0xff pattern:$0x73625140]
  %v1038 = vld.sshfl [vmem:[#allocation1 + $0x18] sm:$0xff pattern:$0x73625140]
  %v1039 = vld.sshfl [vmem:[#allocation1 + $0x20] sm:$0xff pattern:$0x73625140]
  %v1040 = vld.sshfl [vmem:[#allocation1 + $0x28] sm:$0xff pattern:$0x73625140]
  %v1041 = vld.sshfl [vmem:[#allocation1 + $0x30] sm:$0xff pattern:$0x73625140]
  %v1042 = vld.sshfl [vmem:[#allocation1 + $0x38] sm:$0xff pattern:$0x73625140]
  %1059 = vmatpush.msra.mxu0 %v777
  %1060 = vmatpush.msra.mxu0 %v776
  %1061 = vmatpush.msra.mxu0 %v775
  %1062 = vmatpush.msra.mxu0 %v774
  %1063 = vmatpush.msra.mxu0 %v773
  %1064 = vmatpush.msra.mxu0 %v772
  %1065 = vmatpush.msra.mxu0 %v771
  %1066 = vmatpush.msra.mxu0 %v770
  %1067 = vmatpush.msra.mxu0 %v769
  %1068 = vmatpush.msra.mxu0 %v768
  %1069 = vmatpush.msra.mxu0 %v767
  %1070 = vmatpush.msra.mxu0 %v766
  %1071 = vmatpush.msra.mxu0 %v765
  %1072 = vmatpush.msra.mxu0 %v764
  %1073 = vmatpush.msra.mxu0 %v763
  %1074 = vmatpush.msra.mxu0 %v762
  %1075 = vmatmul.f32.gmra.mxu0 %v1025
  %v1076 = vpop.f32.mrf.mxu0
  %v1077 = vadd.f32 %v1020, %v1076
  %1078 = vdwg.mxu0
  %1079 = vmatpush.msra.mxu0 %v793
  %1080 = vmatpush.msra.mxu0 %v792
  %1081 = vmatpush.msra.mxu0 %v791
  %1082 = vmatpush.msra.mxu0 %v790
  %1083 = vmatpush.msra.mxu0 %v789
  %1084 = vmatpush.msra.mxu0 %v788
  %1085 = vmatpush.msra.mxu0 %v787
  %1086 = vmatpush.msra.mxu0 %v786
  %1087 = vmatpush.msra.mxu0 %v785
  %1088 = vmatpush.msra.mxu0 %v784
  %1089 = vmatpush.msra.mxu0 %v783
  %1090 = vmatpush.msra.mxu0 %v782
  %1091 = vmatpush.msra.mxu0 %v781
  %1092 = vmatpush.msra.mxu0 %v780
  %1093 = vmatpush.msra.mxu0 %v779
  %1094 = vmatpush.msra.mxu0 %v778
  %1095 = vmatmul.f32.gmra.mxu0 %v1026
  %v1096 = vpop.f32.mrf.mxu0
  %v1097 = vadd.f32 %v1077, %v1096
  %1098 = vdwg.mxu0
  %1099 = vmatpush.msra.mxu0 %v809
  %1100 = vmatpush.msra.mxu0 %v808
  %1101 = vmatpush.msra.mxu0 %v807
  %1102 = vmatpush.msra.mxu0 %v806
  %1103 = vmatpush.msra.mxu0 %v805
  %1104 = vmatpush.msra.mxu0 %v804
  %1105 = vmatpush.msra.mxu0 %v803
  %1106 = vmatpush.msra.mxu0 %v802
  %1107 = vmatpush.msra.mxu0 %v801
  %1108 = vmatpush.msra.mxu0 %v800
  %1109 = vmatpush.msra.mxu0 %v799
  %1110 = vmatpush.msra.mxu0 %v798
  %1111 = vmatpush.msra.mxu0 %v797
  %1112 = vmatpush.msra.mxu0 %v796
  %1113 = vmatpush.msra.mxu0 %v795
  %1114 = vmatpush.msra.mxu0 %v794
  %1115 = vmatmul.f32.gmra.mxu0 %v1027
  %v1116 = vpop.f32.mrf.mxu0
  %v1117 = vadd.f32 %v1097, %v1116
  %1118 = vdwg.mxu0
  %1119 = vmatpush.msra.mxu0 %v825
  %1120 = vmatpush.msra.mxu0 %v824
  %1121 = vmatpush.msra.mxu0 %v823
  %1122 = vmatpush.msra.mxu0 %v822
  %1123 = vmatpush.msra.mxu0 %v821
  %1124 = vmatpush.msra.mxu0 %v820
  %1125 = vmatpush.msra.mxu0 %v819
  %1126 = vmatpush.msra.mxu0 %v818
  %1127 = vmatpush.msra.mxu0 %v817
  %1128 = vmatpush.msra.mxu0 %v816
  %1129 = vmatpush.msra.mxu0 %v815
  %1130 = vmatpush.msra.mxu0 %v814
  %1131 = vmatpush.msra.mxu0 %v813
  %1132 = vmatpush.msra.mxu0 %v812
  %1133 = vmatpush.msra.mxu0 %v811
  %1134 = vmatpush.msra.mxu0 %v810
  %1135 = vmatmul.f32.gmra.mxu0 %v1028
  %v1136 = vpop.f32.mrf.mxu0
  %v1137 = vadd.f32 %v1117, %v1136
  %1138 = vdwg.mxu0
  %1139 = vmatpush.msra.mxu0 %v841
  %1140 = vmatpush.msra.mxu0 %v840
  %1141 = vmatpush.msra.mxu0 %v839
  %1142 = vmatpush.msra.mxu0 %v838
  %1143 = vmatpush.msra.mxu0 %v837
  %1144 = vmatpush.msra.mxu0 %v836
  %1145 = vmatpush.msra.mxu0 %v835
  %1146 = vmatpush.msra.mxu0 %v834
  %1147 = vmatpush.msra.mxu0 %v833
  %1148 = vmatpush.msra.mxu0 %v832
  %1149 = vmatpush.msra.mxu0 %v831
  %1150 = vmatpush.msra.mxu0 %v830
  %1151 = vmatpush.msra.mxu0 %v829
  %1152 = vmatpush.msra.mxu0 %v828
  %1153 = vmatpush.msra.mxu0 %v827
  %1154 = vmatpush.msra.mxu0 %v826
  %1155 = vmatmul.f32.gmra.mxu0 %v1029
  %v1156 = vpop.f32.mrf.mxu0
  %v1157 = vadd.f32 %v1137, %v1156
  %1158 = vdwg.mxu0
  %1159 = vmatpush.msra.mxu0 %v857
  %1160 = vmatpush.msra.mxu0 %v856
  %1161 = vmatpush.msra.mxu0 %v855
  %1162 = vmatpush.msra.mxu0 %v854
  %1163 = vmatpush.msra.mxu0 %v853
  %1164 = vmatpush.msra.mxu0 %v852
  %1165 = vmatpush.msra.mxu0 %v851
  %1166 = vmatpush.msra.mxu0 %v850
  %1167 = vmatpush.msra.mxu0 %v849
  %1168 = vmatpush.msra.mxu0 %v848
  %1169 = vmatpush.msra.mxu0 %v847
  %1170 = vmatpush.msra.mxu0 %v846
  %1171 = vmatpush.msra.mxu0 %v845
  %1172 = vmatpush.msra.mxu0 %v844
  %1173 = vmatpush.msra.mxu0 %v843
  %1174 = vmatpush.msra.mxu0 %v842
  %1175 = vmatmul.f32.gmra.mxu0 %v1030
  %v1176 = vpop.f32.mrf.mxu0
  %v1177 = vadd.f32 %v1157, %v1176
  %1178 = vdwg.mxu0
  %1179 = vmatpush.msra.mxu0 %v873
  %1180 = vmatpush.msra.mxu0 %v872
  %1181 = vmatpush.msra.mxu0 %v871
  %1182 = vmatpush.msra.mxu0 %v870
  %1183 = vmatpush.msra.mxu0 %v869
  %1184 = vmatpush.msra.mxu0 %v868
  %1185 = vmatpush.msra.mxu0 %v867
  %1186 = vmatpush.msra.mxu0 %v866
  %1187 = vmatpush.msra.mxu0 %v865
  %1188 = vmatpush.msra.mxu0 %v864
  %1189 = vmatpush.msra.mxu0 %v863
  %1190 = vmatpush.msra.mxu0 %v862
  %1191 = vmatpush.msra.mxu0 %v861
  %1192 = vmatpush.msra.mxu0 %v860
  %1193 = vmatpush.msra.mxu0 %v859
  %1194 = vmatpush.msra.mxu0 %v858
  %1195 = vmatmul.f32.gmra.mxu0 %v1031
  %v1196 = vpop.f32.mrf.mxu0
  %v1197 = vadd.f32 %v1177, %v1196
  %1198 = vdwg.mxu0
  %1199 = vmatpush.msra.mxu0 %v889
  %1200 = vmatpush.msra.mxu0 %v888
  %1201 = vmatpush.msra.mxu0 %v887
  %1202 = vmatpush.msra.mxu0 %v886
  %1203 = vmatpush.msra.mxu0 %v885
  %1204 = vmatpush.msra.mxu0 %v884
  %1205 = vmatpush.msra.mxu0 %v883
  %1206 = vmatpush.msra.mxu0 %v882
  %1207 = vmatpush.msra.mxu0 %v881
  %1208 = vmatpush.msra.mxu0 %v880
  %1209 = vmatpush.msra.mxu0 %v879
  %1210 = vmatpush.msra.mxu0 %v878
  %1211 = vmatpush.msra.mxu0 %v877
  %1212 = vmatpush.msra.mxu0 %v876
  %1213 = vmatpush.msra.mxu0 %v875
  %1214 = vmatpush.msra.mxu0 %v874
  %1215 = vmatmul.f32.gmra.mxu0 %v1032
  %v1216 = vpop.f32.mrf.mxu0
  %v1217 = vadd.f32 %v1197, %v1216
  %1218 = vdwg.mxu0
  %1219 = vmatpush.msra.mxu0 %v905
  %1220 = vmatpush.msra.mxu0 %v904
  %1221 = vmatpush.msra.mxu0 %v903
  %1222 = vmatpush.msra.mxu0 %v902
  %1223 = vmatpush.msra.mxu0 %v901
  %1224 = vmatpush.msra.mxu0 %v900
  %1225 = vmatpush.msra.mxu0 %v899
  %1226 = vmatpush.msra.mxu0 %v898
  %1227 = vmatpush.msra.mxu0 %v897
  %1228 = vmatpush.msra.mxu0 %v896
  %1229 = vmatpush.msra.mxu0 %v895
  %1230 = vmatpush.msra.mxu0 %v894
  %1231 = vmatpush.msra.mxu0 %v893
  %1232 = vmatpush.msra.mxu0 %v892
  %1233 = vmatpush.msra.mxu0 %v891
  %1234 = vmatpush.msra.mxu0 %v890
  %1235 = vmatmul.f32.gmra.mxu0 %v1035
  %v1236 = vpop.f32.mrf.mxu0
  %v1237 = vadd.f32 %v1217, %v1236
  %1238 = vdwg.mxu0
  %1239 = vmatpush.msra.mxu0 %v921
  %1240 = vmatpush.msra.mxu0 %v920
  %1241 = vmatpush.msra.mxu0 %v919
  %1242 = vmatpush.msra.mxu0 %v918
  %1243 = vmatpush.msra.mxu0 %v917
  %1244 = vmatpush.msra.mxu0 %v916
  %1245 = vmatpush.msra.mxu0 %v915
  %1246 = vmatpush.msra.mxu0 %v914
  %1247 = vmatpush.msra.mxu0 %v913
  %1248 = vmatpush.msra.mxu0 %v912
  %1249 = vmatpush.msra.mxu0 %v911
  %1250 = vmatpush.msra.mxu0 %v910
  %1251 = vmatpush.msra.mxu0 %v909
  %1252 = vmatpush.msra.mxu0 %v908
  %1253 = vmatpush.msra.mxu0 %v907
  %1254 = vmatpush.msra.mxu0 %v906
  %1255 = vmatmul.f32.gmra.mxu0 %v1036
  %v1256 = vpop.f32.mrf.mxu0
  %v1257 = vadd.f32 %v1237, %v1256
  %1258 = vdwg.mxu0
  %1259 = vmatpush.msra.mxu0 %v937
  %1260 = vmatpush.msra.mxu0 %v936
  %1261 = vmatpush.msra.mxu0 %v935
  %1262 = vmatpush.msra.mxu0 %v934
  %1263 = vmatpush.msra.mxu0 %v933
  %1264 = vmatpush.msra.mxu0 %v932
  %1265 = vmatpush.msra.mxu0 %v931
  %1266 = vmatpush.msra.mxu0 %v930
  %1267 = vmatpush.msra.mxu0 %v929
  %1268 = vmatpush.msra.mxu0 %v928
  %1269 = vmatpush.msra.mxu0 %v927
  %1270 = vmatpush.msra.mxu0 %v926
  %1271 = vmatpush.msra.mxu0 %v925
  %1272 = vmatpush.msra.mxu0 %v924
  %1273 = vmatpush.msra.mxu0 %v923
  %1274 = vmatpush.msra.mxu0 %v922
  %1275 = vmatmul.f32.gmra.mxu0 %v1037
  %v1276 = vpop.f32.mrf.mxu0
  %v1277 = vadd.f32 %v1257, %v1276
  %1278 = vdwg.mxu0
  %1279 = vmatpush.msra.mxu0 %v953
  %1280 = vmatpush.msra.mxu0 %v952
  %1281 = vmatpush.msra.mxu0 %v951
  %1282 = vmatpush.msra.mxu0 %v950
  %1283 = vmatpush.msra.mxu0 %v949
  %1284 = vmatpush.msra.mxu0 %v948
  %1285 = vmatpush.msra.mxu0 %v947
  %1286 = vmatpush.msra.mxu0 %v946
  %1287 = vmatpush.msra.mxu0 %v945
  %1288 = vmatpush.msra.mxu0 %v944
  %1289 = vmatpush.msra.mxu0 %v943
  %1290 = vmatpush.msra.mxu0 %v942
  %1291 = vmatpush.msra.mxu0 %v941
  %1292 = vmatpush.msra.mxu0 %v940
  %1293 = vmatpush.msra.mxu0 %v939
  %1294 = vmatpush.msra.mxu0 %v938
  %1295 = vmatmul.f32.gmra.mxu0 %v1038
  %v1296 = vpop.f32.mrf.mxu0
  %v1297 = vadd.f32 %v1277, %v1296
  %1298 = vdwg.mxu0
  %1299 = vmatpush.msra.mxu0 %v969
  %1300 = vmatpush.msra.mxu0 %v968
  %1301 = vmatpush.msra.mxu0 %v967
  %1302 = vmatpush.msra.mxu0 %v966
  %1303 = vmatpush.msra.mxu0 %v965
  %1304 = vmatpush.msra.mxu0 %v964
  %1305 = vmatpush.msra.mxu0 %v963
  %1306 = vmatpush.msra.mxu0 %v962
  %1307 = vmatpush.msra.mxu0 %v961
  %1308 = vmatpush.msra.mxu0 %v960
  %1309 = vmatpush.msra.mxu0 %v959
  %1310 = vmatpush.msra.mxu0 %v958
  %1311 = vmatpush.msra.mxu0 %v957
  %1312 = vmatpush.msra.mxu0 %v956
  %1313 = vmatpush.msra.mxu0 %v955
  %1314 = vmatpush.msra.mxu0 %v954
  %1315 = vmatmul.f32.gmra.mxu0 %v1039
  %v1316 = vpop.f32.mrf.mxu0
  %v1317 = vadd.f32 %v1297, %v1316
  %1318 = vdwg.mxu0
  %1319 = vmatpush.msra.mxu0 %v985
  %1320 = vmatpush.msra.mxu0 %v984
  %1321 = vmatpush.msra.mxu0 %v983
  %1322 = vmatpush.msra.mxu0 %v982
  %1323 = vmatpush.msra.mxu0 %v981
  %1324 = vmatpush.msra.mxu0 %v980
  %1325 = vmatpush.msra.mxu0 %v979
  %1326 = vmatpush.msra.mxu0 %v978
  %1327 = vmatpush.msra.mxu0 %v977
  %1328 = vmatpush.msra.mxu0 %v976
  %1329 = vmatpush.msra.mxu0 %v975
  %1330 = vmatpush.msra.mxu0 %v974
  %1331 = vmatpush.msra.mxu0 %v973
  %1332 = vmatpush.msra.mxu0 %v972
  %1333 = vmatpush.msra.mxu0 %v971
  %1334 = vmatpush.msra.mxu0 %v970
  %1335 = vmatmul.f32.gmra.mxu0 %v1040
  %v1336 = vpop.f32.mrf.mxu0
  %v1337 = vadd.f32 %v1317, %v1336
  %1338 = vdwg.mxu0
  %1339 = vmatpush.msra.mxu0 %v1001
  %1340 = vmatpush.msra.mxu0 %v1000
  %1341 = vmatpush.msra.mxu0 %v999
  %1342 = vmatpush.msra.mxu0 %v998
  %1343 = vmatpush.msra.mxu0 %v997
  %1344 = vmatpush.msra.mxu0 %v996
  %1345 = vmatpush.msra.mxu0 %v995
  %1346 = vmatpush.msra.mxu0 %v994
  %1347 = vmatpush.msra.mxu0 %v993
  %1348 = vmatpush.msra.mxu0 %v992
  %1349 = vmatpush.msra.mxu0 %v991
  %1350 = vmatpush.msra.mxu0 %v990
  %1351 = vmatpush.msra.mxu0 %v989
  %1352 = vmatpush.msra.mxu0 %v988
  %1353 = vmatpush.msra.mxu0 %v987
  %1354 = vmatpush.msra.mxu0 %v986
  %1355 = vmatmul.f32.gmra.mxu0 %v1041
  %v1356 = vpop.f32.mrf.mxu0
  %v1357 = vadd.f32 %v1337, %v1356
  %1358 = vdwg.mxu0
  %1359 = vmatpush.msra.mxu0 %v1017
  %1360 = vmatpush.msra.mxu0 %v1016
  %1361 = vmatpush.msra.mxu0 %v1015
  %1362 = vmatpush.msra.mxu0 %v1014
  %1363 = vmatpush.msra.mxu0 %v1013
  %1364 = vmatpush.msra.mxu0 %v1012
  %1365 = vmatpush.msra.mxu0 %v1011
  %1366 = vmatpush.msra.mxu0 %v1010
  %1367 = vmatpush.msra.mxu0 %v1009
  %1368 = vmatpush.msra.mxu0 %v1008
  %1369 = vmatpush.msra.mxu0 %v1007
  %1370 = vmatpush.msra.mxu0 %v1006
  %1371 = vmatpush.msra.mxu0 %v1005
  %1372 = vmatpush.msra.mxu0 %v1004
  %1373 = vmatpush.msra.mxu0 %v1003
  %1374 = vmatpush.msra.mxu0 %v1002
  %1375 = vmatmul.f32.gmra.mxu0 %v1042
  %v1376 = vpop.f32.mrf.mxu0
  %v1377 = vadd.f32 %v1357, %v1376
  %1378 = vdwg.mxu0
  %v1379 = vld [vmem:[%s9] sm:$0x1]
  %v1380 = vld [vmem:[%s10] sm:$0x1]
  %v1381 = vsel %vm686, %v1377, 0.0
  %v1382 = vrot.slane %v1381, 4
  %v1383 = vadd.f32 %v1381, %v1382
  %v1384 = vrot.slane %v1383, 2
  %v1385 = vadd.f32 %v1383, %v1384
  %v1386 = vrot.slane %v1385, 1
  %v1387 = vadd.f32 %v1385, %v1386
  %v1388 = vmul.f32 %v1387, %v700
  %v1389 = vsub.f32 %v1377, %v1388
  %v1390 = vmul.f32 %v1389, %v1389
  %v1391 = vsel %vm686, %v1390, 0.0
  %v1392 = vrot.slane %v1391, 4
  %v1393 = vadd.f32 %v1391, %v1392
  %v1394 = vrot.slane %v1393, 2
  %v1395 = vadd.f32 %v1393, %v1394
  %v1396 = vrot.slane %v1395, 1
  %v1397 = vadd.f32 %v1395, %v1396
  %v1398 = vmul.f32 %v1397, %v700
  %v1399 = vadd.f32 %v1398, 1e-05
  %v1400 = vrsqrt.pop %v1399
  %v1401 = vmul.f32 %v1400, %v1399
  %v1402 = vmul.f32 %v1401, %v1400
  %v1403 = vmul.f32 0.5, %v1402
  %v1404 = vsub.f32 1.5, %v1403
  %v1405 = vmul.f32 %v1400, %v1404
  %vm1406 = vweird.f32 %v1399
  %vm1407 = vweird.f32 %v1400
  %vm1408 = vmor %vm1406, %vm1407
  %v1409 = vsel %vm1408, %v1400, %v1405
  %v1410 = vmul.f32 %v1389, %v1409
  %v1412 = vperm.slane %v1379, 0
  %v1414 = vmul.f32 %v1410, %v1412
  %v1416 = vperm.slane %v1380, 0
  %v1418 = vadd.f32 %v1414, %v1416
  %v1419 = vld [vmem:[%s11] sm:$0xff]
  %v1420 = vld [vmem:[%s11 + $0x8] sm:$0xff]
  %v1421 = vld [vmem:[%s12] sm:$0x1]
  %v1423 = vperm.slane %v1421, 0
  %v1426 = vsel %vm738, %v1418, 0
  %1428 = vmatpush.msra.mxu0 0.0
  %1429 = vmatpush.msra.mxu0 0.0
  %1430 = vmatpush.msra.mxu0 0.0
  %1431 = vmatpush.msra.mxu0 0.0
  %1432 = vmatpush.msra.mxu0 0.0
  %1433 = vmatpush.msra.mxu0 0.0
  %1434 = vmatpush.msra.mxu0 0.0
  %1435 = vmatpush.msra.mxu0 0.0
  %1436 = vmatpush.msra.mxu0 0.0
  %1437 = vmatpush.msra.mxu0 0.0
  %1438 = vmatpush.msra.mxu0 0.0
  %1439 = vmatpush.msra.mxu0 0.0
  %1440 = vmatpush.msra.mxu0 0.0
  %1441 = vmatpush.msra.mxu0 0.0
  %1442 = vmatpush.msra.mxu0 %v1420
  %1443 = vmatpush.msra.mxu0 %v1419
  %1444 = vmatmul.f32.gmra.mxu0 %v1426
  %v1445 = vpop.f32.mrf.mxu0
  %v1446 = vadd.f32 %v1423, %v1445
  %1447 = vdwg.mxu0
  %v1448 = vld [vmem:[%s13] sm:$0x3]
  %v1449 = vmul.f32 %v1446, 0.5
  %v1450 = vmul.f32 %v1449, 1.442695
  %v1451 = vpow.pop %v1450
  %v1452 = vmul.f32 %v1448, %v1451
  %v1453 = vadd.f32 %v1452, %v760
  %v1454 = vld [vmem:[%s14] sm:$0xff]
  %v1455 = vld [vmem:[%s14 + $0x8] sm:$0xff]
  %v1456 = vld [vmem:[%s14 + $0x10] sm:$0xff]
  %v1457 = vld [vmem:[%s14 + $0x18] sm:$0xff]
  %v1458 = vld [vmem:[%s14 + $0x20] sm:$0xff]
  %v1459 = vld [vmem:[%s14 + $0x28] sm:$0xff]
  %v1460 = vld [vmem:[%s14 + $0x30] sm:$0xff]
  %v1461 = vld [vmem:[%s14 + $0x38] sm:$0xff]
  %v1462 = vld [vmem:[%s14 + $0x40] sm:$0xff]
  %v1463 = vld [vmem:[%s14 + $0x48] sm:$0xff]
  %v1464 = vld [vmem:[%s14 + $0x50] sm:$0xff]
  %v1465 = vld [vmem:[%s14 + $0x58] sm:$0xff]
  %v1466 = vld [vmem:[%s14 + $0x60] sm:$0xff]
  %v1467 = vld [vmem:[%s14 + $0x68] sm:$0xff]
  %v1468 = vld [vmem:[%s14 + $0x70] sm:$0xff]
  %v1469 = vld [vmem:[%s14 + $0x78] sm:$0xff]
  %v1470 = vld [vmem:[%s14 + $0x80] sm:$0xff]
  %v1471 = vld [vmem:[%s14 + $0x88] sm:$0xff]
  %v1472 = vld [vmem:[%s14 + $0x90] sm:$0xff]
  %v1473 = vld [vmem:[%s14 + $0x98] sm:$0xff]
  %v1474 = vld [vmem:[%s14 + $0xa0] sm:$0xff]
  %v1475 = vld [vmem:[%s14 + $0xa8] sm:$0xff]
  %v1476 = vld [vmem:[%s14 + $0xb0] sm:$0xff]
  %v1477 = vld [vmem:[%s14 + $0xb8] sm:$0xff]
  %v1478 = vld [vmem:[%s14 + $0xc0] sm:$0xff]
  %v1479 = vld [vmem:[%s14 + $0xc8] sm:$0xff]
  %v1480 = vld [vmem:[%s14 + $0xd0] sm:$0xff]
  %v1481 = vld [vmem:[%s14 + $0xd8] sm:$0xff]
  %v1482 = vld [vmem:[%s14 + $0xe0] sm:$0xff]
  %v1483 = vld [vmem:[%s14 + $0xe8] sm:$0xff]
  %v1484 = vld [vmem:[%s14 + $0xf0] sm:$0xff]
  %v1485 = vld [vmem:[%s14 + $0xf8] sm:$0xff]
  %v1486 = vld [vmem:[%s15] sm:$0xff]
  %v1487 = vld [vmem:[%s15 + $0x8] sm:$0xff]
  %v1490 = vperm.slane %v1486, 0
  %v1491 = vperm.slane %v1486, 1
  %v1492 = vperm.slane %v1486, 2
  %v1493 = vperm.slane %v1486, 3
  %v1494 = vperm.slane %v1486, 4
  %v1495 = vperm.slane %v1486, 5
  %v1496 = vperm.slane %v1486, 6
  %v1497 = vperm.slane %v1486, 7
  %v1498 = vperm.slane %v1487, 0
  %v1499 = vperm.slane %v1487, 1
  %v1500 = vperm.slane %v1487, 2
  %v1501 = vperm.slane %v1487, 3
  %v1502 = vperm.slane %v1487, 4
  %v1503 = vperm.slane %v1487, 5
  %v1504 = vperm.slane %v1487, 6
  %v1505 = vperm.slane %v1487, 7
  %v1523 = vsel %vm738, %v1453, 0
  %1525 = vmatpush.msra.mxu0 0.0
  %1526 = vmatpush.msra.mxu0 0.0
  %1527 = vmatpush.msra.mxu0 0.0
  %1528 = vmatpush.msra.mxu0 0.0
  %1529 = vmatpush.msra.mxu0 0.0
  %1530 = vmatpush.msra.mxu0 0.0
  %1531 = vmatpush.msra.mxu0 0.0
  %1532 = vmatpush.msra.mxu0 0.0
  %1533 = vmatpush.msra.mxu0 0.0
  %1534 = vmatpush.msra.mxu0 0.0
  %1535 = vmatpush.msra.mxu0 0.0
  %1536 = vmatpush.msra.mxu0 0.0
  %1537 = vmatpush.msra.mxu0 0.0
  %1538 = vmatpush.msra.mxu0 0.0
  %1539 = vmatpush.msra.mxu0 %v1470
  %1540 = vmatpush.msra.mxu0 %v1454
  %1541 = vmatmul.f32.gmra.mxu0 %v1523
  %v1542 = vpop.f32.mrf.mxu0
  %v1543 = vadd.f32 %v1490, %v1542
  %1544 = vdwg.mxu0
  %1545 = vmatpush.msra.mxu0 0.0
  %1546 = vmatpush.msra.mxu0 0.0
  %1547 = vmatpush.msra.mxu0 0.0
  %1548 = vmatpush.msra.mxu0 0.0
  %1549 = vmatpush.msra.mxu0 0.0
  %1550 = vmatpush.msra.mxu0 0.0
  %1551 = vmatpush.msra.mxu0 0.0
  %1552 = vmatpush.msra.mxu0 0.0
  %1553 = vmatpush.msra.mxu0 0.0
  %1554 = vmatpush.msra.mxu0 0.0
  %1555 = vmatpush.msra.mxu0 0.0
  %1556 = vmatpush.msra.mxu0 0.0
  %1557 = vmatpush.msra.mxu0 0.0
  %1558 = vmatpush.msra.mxu0 0.0
  %1559 = vmatpush.msra.mxu0 %v1471
  %1560 = vmatpush.msra.mxu0 %v1455
  %1561 = vmatmul.f32.gmra.mxu0 %v1523
  %v1562 = vpop.f32.mrf.mxu0
  %v1563 = vadd.f32 %v1491, %v1562
  %1564 = vdwg.mxu0
  %1565 = vmatpush.msra.mxu0 0.0
  %1566 = vmatpush.msra.mxu0 0.0
  %1567 = vmatpush.msra.mxu0 0.0
  %1568 = vmatpush.msra.mxu0 0.0
  %1569 = vmatpush.msra.mxu0 0.0
  %1570 = vmatpush.msra.mxu0 0.0
  %1571 = vmatpush.msra.mxu0 0.0
  %1572 = vmatpush.msra.mxu0 0.0
  %1573 = vmatpush.msra.mxu0 0.0
  %1574 = vmatpush.msra.mxu0 0.0
  %1575 = vmatpush.msra.mxu0 0.0
  %1576 = vmatpush.msra.mxu0 0.0
  %1577 = vmatpush.msra.mxu0 0.0
  %1578 = vmatpush.msra.mxu0 0.0
  %1579 = vmatpush.msra.mxu0 %v1472
  %1580 = vmatpush.msra.mxu0 %v1456
  %1581 = vmatmul.f32.gmra.mxu0 %v1523
  %v1582 = vpop.f32.mrf.mxu0
  %v1583 = vadd.f32 %v1492, %v1582
  %1584 = vdwg.mxu0
  %1585 = vmatpush.msra.mxu0 0.0
  %1586 = vmatpush.msra.mxu0 0.0
  %1587 = vmatpush.msra.mxu0 0.0
  %1588 = vmatpush.msra.mxu0 0.0
  %1589 = vmatpush.msra.mxu0 0.0
  %1590 = vmatpush.msra.mxu0 0.0
  %1591 = vmatpush.msra.mxu0 0.0
  %1592 = vmatpush.msra.mxu0 0.0
  %1593 = vmatpush.msra.mxu0 0.0
  %1594 = vmatpush.msra.mxu0 0.0
  %1595 = vmatpush.msra.mxu0 0.0
  %1596 = vmatpush.msra.mxu0 0.0
  %1597 = vmatpush.msra.mxu0 0.0
  %1598 = vmatpush.msra.mxu0 0.0
  %1599 = vmatpush.msra.mxu0 %v1473
  %1600 = vmatpush.msra.mxu0 %v1457
  %1601 = vmatmul.f32.gmra.mxu0 %v1523
  %v1602 = vpop.f32.mrf.mxu0
  %v1603 = vadd.f32 %v1493, %v1602
  %1604 = vdwg.mxu0
  %1605 = vmatpush.msra.mxu0 0.0
  %1606 = vmatpush.msra.mxu0 0.0
  %1607 = vmatpush.msra.mxu0 0.0
  %1608 = vmatpush.msra.mxu0 0.0
  %1609 = vmatpush.msra.mxu0 0.0
  %1610 = vmatpush.msra.mxu0 0.0
  %1611 = vmatpush.msra.mxu0 0.0
  %1612 = vmatpush.msra.mxu0 0.0
  %1613 = vmatpush.msra.mxu0 0.0
  %1614 = vmatpush.msra.mxu0 0.0
  %1615 = vmatpush.msra.mxu0 0.0
  %1616 = vmatpush.msra.mxu0 0.0
  %1617 = vmatpush.msra.mxu0 0.0
  %1618 = vmatpush.msra.mxu0 0.0
  %1619 = vmatpush.msra.mxu0 %v1474
  %1620 = vmatpush.msra.mxu0 %v1458
  %1621 = vmatmul.f32.gmra.mxu0 %v1523
  %v1622 = vpop.f32.mrf.mxu0
  %v1623 = vadd.f32 %v1494, %v1622
  %1624 = vdwg.mxu0
  %1625 = vmatpush.msra.mxu0 0.0
  %1626 = vmatpush.msra.mxu0 0.0
  %1627 = vmatpush.msra.mxu0 0.0
  %1628 = vmatpush.msra.mxu0 0.0
  %1629 = vmatpush.msra.mxu0 0.0
  %1630 = vmatpush.msra.mxu0 0.0
  %1631 = vmatpush.msra.mxu0 0.0
  %1632 = vmatpush.msra.mxu0 0.0
  %1633 = vmatpush.msra.mxu0 0.0
  %1634 = vmatpush.msra.mxu0 0.0
  %1635 = vmatpush.msra.mxu0 0.0
  %1636 = vmatpush.msra.mxu0 0.0
  %1637 = vmatpush.msra.mxu0 0.0
  %1638 = vmatpush.msra.mxu0 0.0
  %1639 = vmatpush.msra.mxu0 %v1475
  %1640 = vmatpush.msra.mxu0 %v1459
  %1641 = vmatmul.f32.gmra.mxu0 %v1523
  %v1642 = vpop.f32.mrf.mxu0
  %v1643 = vadd.f32 %v1495, %v1642
  %1644 = vdwg.mxu0
  %1645 = vmatpush.msra.mxu0 0.0
  %1646 = vmatpush.msra.mxu0 0.0
  %1647 = vmatpush.msra.mxu0 0.0
  %1648 = vmatpush.msra.mxu0 0.0
  %1649 = vmatpush.msra.mxu0 0.0
  %1650 = vmatpush.msra.mxu0 0.0
  %1651 = vmatpush.msra.mxu0 0.0
  %1652 = vmatpush.msra.mxu0 0.0
  %1653 = vmatpush.msra.mxu0 0.0
  %1654 = vmatpush.msra.mxu0 0.0
  %1655 = vmatpush.msra.mxu0 0.0
  %1656 = vmatpush.msra.mxu0 0.0
  %1657 = vmatpush.msra.mxu0 0.0
  %1658 = vmatpush.msra.mxu0 0.0
  %1659 = vmatpush.msra.mxu0 %v1476
  %1660 = vmatpush.msra.mxu0 %v1460
  %1661 = vmatmul.f32.gmra.mxu0 %v1523
  %v1662 = vpop.f32.mrf.mxu0
  %v1663 = vadd.f32 %v1496, %v1662
  %1664 = vdwg.mxu0
  %1665 = vmatpush.msra.mxu0 0.0
  %1666 = vmatpush.msra.mxu0 0.0
  %1667 = vmatpush.msra.mxu0 0.0
  %1668 = vmatpush.msra.mxu0 0.0
  %1669 = vmatpush.msra.mxu0 0.0
  %1670 = vmatpush.msra.mxu0 0.0
  %1671 = vmatpush.msra.mxu0 0.0
  %1672 = vmatpush.msra.mxu0 0.0
  %1673 = vmatpush.msra.mxu0 0.0
  %1674 = vmatpush.msra.mxu0 0.0
  %1675 = vmatpush.msra.mxu0 0.0
  %1676 = vmatpush.msra.mxu0 0.0
  %1677 = vmatpush.msra.mxu0 0.0
  %1678 = vmatpush.msra.mxu0 0.0
  %1679 = vmatpush.msra.mxu0 %v1477
  %1680 = vmatpush.msra.mxu0 %v1461
  %1681 = vmatmul.f32.gmra.mxu0 %v1523
  %v1682 = vpop.f32.mrf.mxu0
  %v1683 = vadd.f32 %v1497, %v1682
  %1684 = vdwg.mxu0
  %1685 = vmatpush.msra.mxu0 0.0
  %1686 = vmatpush.msra.mxu0 0.0
  %1687 = vmatpush.msra.mxu0 0.0
  %1688 = vmatpush.msra.mxu0 0.0
  %1689 = vmatpush.msra.mxu0 0.0
  %1690 = vmatpush.msra.mxu0 0.0
  %1691 = vmatpush.msra.mxu0 0.0
  %1692 = vmatpush.msra.mxu0 0.0
  %1693 = vmatpush.msra.mxu0 0.0
  %1694 = vmatpush.msra.mxu0 0.0
  %1695 = vmatpush.msra.mxu0 0.0
  %1696 = vmatpush.msra.mxu0 0.0
  %1697 = vmatpush.msra.mxu0 0.0
  %1698 = vmatpush.msra.mxu0 0.0
  %1699 = vmatpush.msra.mxu0 %v1478
  %1700 = vmatpush.msra.mxu0 %v1462
  %1701 = vmatmul.f32.gmra.mxu0 %v1523
  %v1702 = vpop.f32.mrf.mxu0
  %v1703 = vadd.f32 %v1498, %v1702
  %1704 = vdwg.mxu0
  %1705 = vmatpush.msra.mxu0 0.0
  %1706 = vmatpush.msra.mxu0 0.0
  %1707 = vmatpush.msra.mxu0 0.0
  %1708 = vmatpush.msra.mxu0 0.0
  %1709 = vmatpush.msra.mxu0 0.0
  %1710 = vmatpush.msra.mxu0 0.0
  %1711 = vmatpush.msra.mxu0 0.0
  %1712 = vmatpush.msra.mxu0 0.0
  %1713 = vmatpush.msra.mxu0 0.0
  %1714 = vmatpush.msra.mxu0 0.0
  %1715 = vmatpush.msra.mxu0 0.0
  %1716 = vmatpush.msra.mxu0 0.0
  %1717 = vmatpush.msra.mxu0 0.0
  %1718 = vmatpush.msra.mxu0 0.0
  %1719 = vmatpush.msra.mxu0 %v1479
  %1720 = vmatpush.msra.mxu0 %v1463
  %1721 = vmatmul.f32.gmra.mxu0 %v1523
  %v1722 = vpop.f32.mrf.mxu0
  %v1723 = vadd.f32 %v1499, %v1722
  %1724 = vdwg.mxu0
  %1725 = vmatpush.msra.mxu0 0.0
  %1726 = vmatpush.msra.mxu0 0.0
  %1727 = vmatpush.msra.mxu0 0.0
  %1728 = vmatpush.msra.mxu0 0.0
  %1729 = vmatpush.msra.mxu0 0.0
  %1730 = vmatpush.msra.mxu0 0.0
  %1731 = vmatpush.msra.mxu0 0.0
  %1732 = vmatpush.msra.mxu0 0.0
  %1733 = vmatpush.msra.mxu0 0.0
  %1734 = vmatpush.msra.mxu0 0.0
  %1735 = vmatpush.msra.mxu0 0.0
  %1736 = vmatpush.msra.mxu0 0.0
  %1737 = vmatpush.msra.mxu0 0.0
  %1738 = vmatpush.msra.mxu0 0.0
  %1739 = vmatpush.msra.mxu0 %v1480
  %1740 = vmatpush.msra.mxu0 %v1464
  %1741 = vmatmul.f32.gmra.mxu0 %v1523
  %v1742 = vpop.f32.mrf.mxu0
  %v1743 = vadd.f32 %v1500, %v1742
  %1744 = vdwg.mxu0
  %1745 = vmatpush.msra.mxu0 0.0
  %1746 = vmatpush.msra.mxu0 0.0
  %1747 = vmatpush.msra.mxu0 0.0
  %1748 = vmatpush.msra.mxu0 0.0
  %1749 = vmatpush.msra.mxu0 0.0
  %1750 = vmatpush.msra.mxu0 0.0
  %1751 = vmatpush.msra.mxu0 0.0
  %1752 = vmatpush.msra.mxu0 0.0
  %1753 = vmatpush.msra.mxu0 0.0
  %1754 = vmatpush.msra.mxu0 0.0
  %1755 = vmatpush.msra.mxu0 0.0
  %1756 = vmatpush.msra.mxu0 0.0
  %1757 = vmatpush.msra.mxu0 0.0
  %1758 = vmatpush.msra.mxu0 0.0
  %1759 = vmatpush.msra.mxu0 %v1481
  %1760 = vmatpush.msra.mxu0 %v1465
  %1761 = vmatmul.f32.gmra.mxu0 %v1523
  %v1762 = vpop.f32.mrf.mxu0
  %v1763 = vadd.f32 %v1501, %v1762
  %1764 = vdwg.mxu0
  %1765 = vmatpush.msra.mxu0 0.0
  %1766 = vmatpush.msra.mxu0 0.0
  %1767 = vmatpush.msra.mxu0 0.0
  %1768 = vmatpush.msra.mxu0 0.0
  %1769 = vmatpush.msra.mxu0 0.0
  %1770 = vmatpush.msra.mxu0 0.0
  %1771 = vmatpush.msra.mxu0 0.0
  %1772 = vmatpush.msra.mxu0 0.0
  %1773 = vmatpush.msra.mxu0 0.0
  %1774 = vmatpush.msra.mxu0 0.0
  %1775 = vmatpush.msra.mxu0 0.0
  %1776 = vmatpush.msra.mxu0 0.0
  %1777 = vmatpush.msra.mxu0 0.0
  %1778 = vmatpush.msra.mxu0 0.0
  %1779 = vmatpush.msra.mxu0 %v1482
  %1780 = vmatpush.msra.mxu0 %v1466
  %1781 = vmatmul.f32.gmra.mxu0 %v1523
  %v1782 = vpop.f32.mrf.mxu0
  %v1783 = vadd.f32 %v1502, %v1782
  %1784 = vdwg.mxu0
  %1785 = vmatpush.msra.mxu0 0.0
  %1786 = vmatpush.msra.mxu0 0.0
  %1787 = vmatpush.msra.mxu0 0.0
  %1788 = vmatpush.msra.mxu0 0.0
  %1789 = vmatpush.msra.mxu0 0.0
  %1790 = vmatpush.msra.mxu0 0.0
  %1791 = vmatpush.msra.mxu0 0.0
  %1792 = vmatpush.msra.mxu0 0.0
  %1793 = vmatpush.msra.mxu0 0.0
  %1794 = vmatpush.msra.mxu0 0.0
  %1795 = vmatpush.msra.mxu0 0.0
  %1796 = vmatpush.msra.mxu0 0.0
  %1797 = vmatpush.msra.mxu0 0.0
  %1798 = vmatpush.msra.mxu0 0.0
  %1799 = vmatpush.msra.mxu0 %v1483
  %1800 = vmatpush.msra.mxu0 %v1467
  %1801 = vmatmul.f32.gmra.mxu0 %v1523
  %v1802 = vpop.f32.mrf.mxu0
  %v1803 = vadd.f32 %v1503, %v1802
  %1804 = vdwg.mxu0
  %1805 = vmatpush.msra.mxu0 0.0
  %1806 = vmatpush.msra.mxu0 0.0
  %1807 = vmatpush.msra.mxu0 0.0
  %1808 = vmatpush.msra.mxu0 0.0
  %1809 = vmatpush.msra.mxu0 0.0
  %1810 = vmatpush.msra.mxu0 0.0
  %1811 = vmatpush.msra.mxu0 0.0
  %1812 = vmatpush.msra.mxu0 0.0
  %1813 = vmatpush.msra.mxu0 0.0
  %1814 = vmatpush.msra.mxu0 0.0
  %1815 = vmatpush.msra.mxu0 0.0
  %1816 = vmatpush.msra.mxu0 0.0
  %1817 = vmatpush.msra.mxu0 0.0
  %1818 = vmatpush.msra.mxu0 0.0
  %1819 = vmatpush.msra.mxu0 %v1484
  %1820 = vmatpush.msra.mxu0 %v1468
  %1821 = vmatmul.f32.gmra.mxu0 %v1523
  %v1822 = vpop.f32.mrf.mxu0
  %v1823 = vadd.f32 %v1504, %v1822
  %1824 = vdwg.mxu0
  %1825 = vmatpush.msra.mxu0 0.0
  %1826 = vmatpush.msra.mxu0 0.0
  %1827 = vmatpush.msra.mxu0 0.0
  %1828 = vmatpush.msra.mxu0 0.0
  %1829 = vmatpush.msra.mxu0 0.0
  %1830 = vmatpush.msra.mxu0 0.0
  %1831 = vmatpush.msra.mxu0 0.0
  %1832 = vmatpush.msra.mxu0 0.0
  %1833 = vmatpush.msra.mxu0 0.0
  %1834 = vmatpush.msra.mxu0 0.0
  %1835 = vmatpush.msra.mxu0 0.0
  %1836 = vmatpush.msra.mxu0 0.0
  %1837 = vmatpush.msra.mxu0 0.0
  %1838 = vmatpush.msra.mxu0 0.0
  %1839 = vmatpush.msra.mxu0 %v1485
  %1840 = vmatpush.msra.mxu0 %v1469
  %1841 = vmatmul.f32.gmra.mxu0 %v1523
  %v1842 = vpop.f32.mrf.mxu0
  %v1843 = vadd.f32 %v1505, %v1842
  %1844 = vdwg.mxu0
  %v1845 = vld [vmem:[%s16] sm:$0xff]
  %v1846 = vld [vmem:[%s16 + $0x8] sm:$0xff]
  %v1847 = vld [vmem:[%s17] sm:$0xff]
  %v1848 = vld [vmem:[%s17 + $0x8] sm:$0xff]
  %vm1849 = vcmask 1041408
  %v1850 = vsel %vm1849, %v1543, 0.0
  %v1851 = vrot.slane %v1850, 4
  %v1852 = vadd.f32 %v1850, %v1851
  %v1853 = vrot.slane %v1852, 2
  %v1854 = vadd.f32 %v1852, %v1853
  %v1855 = vrot.slane %v1854, 1
  %v1856 = vadd.f32 %v1854, %v1855
  %v1857 = vsel %vm1849, %v1563, 0.0
  %v1858 = vrot.slane %v1857, 4
  %v1859 = vadd.f32 %v1857, %v1858
  %v1860 = vrot.slane %v1859, 2
  %v1861 = vadd.f32 %v1859, %v1860
  %v1862 = vrot.slane %v1861, 1
  %v1863 = vadd.f32 %v1861, %v1862
  %v1864 = vsel %vm1849, %v1583, 0.0
  %v1865 = vrot.slane %v1864, 4
  %v1866 = vadd.f32 %v1864, %v1865
  %v1867 = vrot.slane %v1866, 2
  %v1868 = vadd.f32 %v1866, %v1867
  %v1869 = vrot.slane %v1868, 1
  %v1870 = vadd.f32 %v1868, %v1869
  %v1871 = vsel %vm1849, %v1603, 0.0
  %v1872 = vrot.slane %v1871, 4
  %v1873 = vadd.f32 %v1871, %v1872
  %v1874 = vrot.slane %v1873, 2
  %v1875 = vadd.f32 %v1873, %v1874
  %v1876 = vrot.slane %v1875, 1
  %v1877 = vadd.f32 %v1875, %v1876
  %v1878 = vsel %vm1849, %v1623, 0.0
  %v1879 = vrot.slane %v1878, 4
  %v1880 = vadd.f32 %v1878, %v1879
  %v1881 = vrot.slane %v1880, 2
  %v1882 = vadd.f32 %v1880, %v1881
  %v1883 = vrot.slane %v1882, 1
  %v1884 = vadd.f32 %v1882, %v1883
  %v1885 = vsel %vm1849, %v1643, 0.0
  %v1886 = vrot.slane %v1885, 4
  %v1887 = vadd.f32 %v1885, %v1886
  %v1888 = vrot.slane %v1887, 2
  %v1889 = vadd.f32 %v1887, %v1888
  %v1890 = vrot.slane %v1889, 1
  %v1891 = vadd.f32 %v1889, %v1890
  %v1892 = vsel %vm1849, %v1663, 0.0
  %v1893 = vrot.slane %v1892, 4
  %v1894 = vadd.f32 %v1892, %v1893
  %v1895 = vrot.slane %v1894, 2
  %v1896 = vadd.f32 %v1894, %v1895
  %v1897 = vrot.slane %v1896, 1
  %v1898 = vadd.f32 %v1896, %v1897
  %v1899 = vsel %vm1849, %v1683, 0.0
  %v1900 = vrot.slane %v1899, 4
  %v1901 = vadd.f32 %v1899, %v1900
  %v1902 = vrot.slane %v1901, 2
  %v1903 = vadd.f32 %v1901, %v1902
  %v1904 = vrot.slane %v1903, 1
  %v1905 = vadd.f32 %v1903, %v1904
  %v1906 = vsel %vm1849, %v1703, 0.0
  %v1907 = vrot.slane %v1906, 4
  %v1908 = vadd.f32 %v1906, %v1907
  %v1909 = vrot.slane %v1908, 2
  %v1910 = vadd.f32 %v1908, %v1909
  %v1911 = vrot.slane %v1910, 1
  %v1912 = vadd.f32 %v1910, %v1911
  %v1913 = vsel %vm1849, %v1723, 0.0
  %v1914 = vrot.slane %v1913, 4
  %v1915 = vadd.f32 %v1913, %v1914
  %v1916 = vrot.slane %v1915, 2
  %v1917 = vadd.f32 %v1915, %v1916
  %v1918 = vrot.slane %v1917, 1
  %v1919 = vadd.f32 %v1917, %v1918
  %v1920 = vsel %vm1849, %v1743, 0.0
  %v1921 = vrot.slane %v1920, 4
  %v1922 = vadd.f32 %v1920, %v1921
  %v1923 = vrot.slane %v1922, 2
  %v1924 = vadd.f32 %v1922, %v1923
  %v1925 = vrot.slane %v1924, 1
  %v1926 = vadd.f32 %v1924, %v1925
  %v1927 = vsel %vm1849, %v1763, 0.0
  %v1928 = vrot.slane %v1927, 4
  %v1929 = vadd.f32 %v1927, %v1928
  %v1930 = vrot.slane %v1929, 2
  %v1931 = vadd.f32 %v1929, %v1930
  %v1932 = vrot.slane %v1931, 1
  %v1933 = vadd.f32 %v1931, %v1932
  %v1934 = vsel %vm1849, %v1783, 0.0
  %v1935 = vrot.slane %v1934, 4
  %v1936 = vadd.f32 %v1934, %v1935
  %v1937 = vrot.slane %v1936, 2
  %v1938 = vadd.f32 %v1936, %v1937
  %v1939 = vrot.slane %v1938, 1
  %v1940 = vadd.f32 %v1938, %v1939
  %v1941 = vsel %vm1849, %v1803, 0.0
  %v1942 = vrot.slane %v1941, 4
  %v1943 = vadd.f32 %v1941, %v1942
  %v1944 = vrot.slane %v1943, 2
  %v1945 = vadd.f32 %v1943, %v1944
  %v1946 = vrot.slane %v1945, 1
  %v1947 = vadd.f32 %v1945, %v1946
  %v1948 = vsel %vm1849, %v1823, 0.0
  %v1949 = vrot.slane %v1948, 4
  %v1950 = vadd.f32 %v1948, %v1949
  %v1951 = vrot.slane %v1950, 2
  %v1952 = vadd.f32 %v1950, %v1951
  %v1953 = vrot.slane %v1952, 1
  %v1954 = vadd.f32 %v1952, %v1953
  %v1955 = vsel %vm1849, %v1843, 0.0
  %v1956 = vrot.slane %v1955, 4
  %v1957 = vadd.f32 %v1955, %v1956
  %v1958 = vrot.slane %v1957, 2
  %v1959 = vadd.f32 %v1957, %v1958
  %v1960 = vrot.slane %v1959, 1
  %v1961 = vadd.f32 %v1959, %v1960
  %v1962 = vmul.f32 %v1856, %v700
  %v1963 = vmul.f32 %v1863, %v700
  %v1964 = vmul.f32 %v1870, %v700
  %v1965 = vmul.f32 %v1877, %v700
  %v1966 = vmul.f32 %v1884, %v700
  %v1967 = vmul.f32 %v1891, %v700
  %v1968 = vmul.f32 %v1898, %v700
  %v1969 = vmul.f32 %v1905, %v700
  %v1970 = vmul.f32 %v1912, %v700
  %v1971 = vmul.f32 %v1919, %v700
  %v1972 = vmul.f32 %v1926, %v700
  %v1973 = vmul.f32 %v1933, %v700
  %v1974 = vmul.f32 %v1940, %v700
  %v1975 = vmul.f32 %v1947, %v700
  %v1976 = vmul.f32 %v1954, %v700
  %v1977 = vmul.f32 %v1961, %v700
  %v1978 = vsub.f32 %v1543, %v1962
  %v1979 = vsub.f32 %v1563, %v1963
  %v1980 = vsub.f32 %v1583, %v1964
  %v1981 = vsub.f32 %v1603, %v1965
  %v1982 = vsub.f32 %v1623, %v1966
  %v1983 = vsub.f32 %v1643, %v1967
  %v1984 = vsub.f32 %v1663, %v1968
  %v1985 = vsub.f32 %v1683, %v1969
  %v1986 = vsub.f32 %v1703, %v1970
  %v1987 = vsub.f32 %v1723, %v1971
  %v1988 = vsub.f32 %v1743, %v1972
  %v1989 = vsub.f32 %v1763, %v1973
  %v1990 = vsub.f32 %v1783, %v1974
  %v1991 = vsub.f32 %v1803, %v1975
  %v1992 = vsub.f32 %v1823, %v1976
  %v1993 = vsub.f32 %v1843, %v1977
  %v1994 = vmul.f32 %v1978, %v1978
  %v1995 = vmul.f32 %v1979, %v1979
  %v1996 = vmul.f32 %v1980, %v1980
  %v1997 = vmul.f32 %v1981, %v1981
  %v1998 = vmul.f32 %v1982, %v1982
  %v1999 = vmul.f32 %v1983, %v1983
  %v2000 = vmul.f32 %v1984, %v1984
  %v2001 = vmul.f32 %v1985, %v1985
  %v2002 = vmul.f32 %v1986, %v1986
  %v2003 = vmul.f32 %v1987, %v1987
  %v2004 = vmul.f32 %v1988, %v1988
  %v2005 = vmul.f32 %v1989, %v1989
  %v2006 = vmul.f32 %v1990, %v1990
  %v2007 = vmul.f32 %v1991, %v1991
  %v2008 = vmul.f32 %v1992, %v1992
  %v2009 = vmul.f32 %v1993, %v1993
  %v2010 = vsel %vm1849, %v1994, 0.0
  %v2011 = vrot.slane %v2010, 4
  %v2012 = vadd.f32 %v2010, %v2011
  %v2013 = vrot.slane %v2012, 2
  %v2014 = vadd.f32 %v2012, %v2013
  %v2015 = vrot.slane %v2014, 1
  %v2016 = vadd.f32 %v2014, %v2015
  %v2017 = vsel %vm1849, %v1995, 0.0
  %v2018 = vrot.slane %v2017, 4
  %v2019 = vadd.f32 %v2017, %v2018
  %v2020 = vrot.slane %v2019, 2
  %v2021 = vadd.f32 %v2019, %v2020
  %v2022 = vrot.slane %v2021, 1
  %v2023 = vadd.f32 %v2021, %v2022
  %v2024 = vsel %vm1849, %v1996, 0.0
  %v2025 = vrot.slane %v2024, 4
  %v2026 = vadd.f32 %v2024, %v2025
  %v2027 = vrot.slane %v2026, 2
  %v2028 = vadd.f32 %v2026, %v2027
  %v2029 = vrot.slane %v2028, 1
  %v2030 = vadd.f32 %v2028, %v2029
  %v2031 = vsel %vm1849, %v1997, 0.0
  %v2032 = vrot.slane %v2031, 4
  %v2033 = vadd.f32 %v2031, %v2032
  %v2034 = vrot.slane %v2033, 2
  %v2035 = vadd.f32 %v2033, %v2034
  %v2036 = vrot.slane %v2035, 1
  %v2037 = vadd.f32 %v2035, %v2036
  %v2038 = vsel %vm1849, %v1998, 0.0
  %v2039 = vrot.slane %v2038, 4
  %v2040 = vadd.f32 %v2038, %v2039
  %v2041 = vrot.slane %v2040, 2
  %v2042 = vadd.f32 %v2040, %v2041
  %v2043 = vrot.slane %v2042, 1
  %v2044 = vadd.f32 %v2042, %v2043
  %v2045 = vsel %vm1849, %v1999, 0.0
  %v2046 = vrot.slane %v2045, 4
  %v2047 = vadd.f32 %v2045, %v2046
  %v2048 = vrot.slane %v2047, 2
  %v2049 = vadd.f32 %v2047, %v2048
  %v2050 = vrot.slane %v2049, 1
  %v2051 = vadd.f32 %v2049, %v2050
  %v2052 = vsel %vm1849, %v2000, 0.0
  %v2053 = vrot.slane %v2052, 4
  %v2054 = vadd.f32 %v2052, %v2053
  %v2055 = vrot.slane %v2054, 2
  %v2056 = vadd.f32 %v2054, %v2055
  %v2057 = vrot.slane %v2056, 1
  %v2058 = vadd.f32 %v2056, %v2057
  %v2059 = vsel %vm1849, %v2001, 0.0
  %v2060 = vrot.slane %v2059, 4
  %v2061 = vadd.f32 %v2059, %v2060
  %v2062 = vrot.slane %v2061, 2
  %v2063 = vadd.f32 %v2061, %v2062
  %v2064 = vrot.slane %v2063, 1
  %v2065 = vadd.f32 %v2063, %v2064
  %v2066 = vsel %vm1849, %v2002, 0.0
  %v2067 = vrot.slane %v2066, 4
  %v2068 = vadd.f32 %v2066, %v2067
  %v2069 = vrot.slane %v2068, 2
  %v2070 = vadd.f32 %v2068, %v2069
  %v2071 = vrot.slane %v2070, 1
  %v2072 = vadd.f32 %v2070, %v2071
  %v2073 = vsel %vm1849, %v2003, 0.0
  %v2074 = vrot.slane %v2073, 4
  %v2075 = vadd.f32 %v2073, %v2074
  %v2076 = vrot.slane %v2075, 2
  %v2077 = vadd.f32 %v2075, %v2076
  %v2078 = vrot.slane %v2077, 1
  %v2079 = vadd.f32 %v2077, %v2078
  %v2080 = vsel %vm1849, %v2004, 0.0
  %v2081 = vrot.slane %v2080, 4
  %v2082 = vadd.f32 %v2080, %v2081
  %v2083 = vrot.slane %v2082, 2
  %v2084 = vadd.f32 %v2082, %v2083
  %v2085 = vrot.slane %v2084, 1
  %v2086 = vadd.f32 %v2084, %v2085
  %v2087 = vsel %vm1849, %v2005, 0.0
  %v2088 = vrot.slane %v2087, 4
  %v2089 = vadd.f32 %v2087, %v2088
  %v2090 = vrot.slane %v2089, 2
  %v2091 = vadd.f32 %v2089, %v2090
  %v2092 = vrot.slane %v2091, 1
  %v2093 = vadd.f32 %v2091, %v2092
  %v2094 = vsel %vm1849, %v2006, 0.0
  %v2095 = vrot.slane %v2094, 4
  %v2096 = vadd.f32 %v2094, %v2095
  %v2097 = vrot.slane %v2096, 2
  %v2098 = vadd.f32 %v2096, %v2097
  %v2099 = vrot.slane %v2098, 1
  %v2100 = vadd.f32 %v2098, %v2099
  %v2101 = vsel %vm1849, %v2007, 0.0
  %v2102 = vrot.slane %v2101, 4
  %v2103 = vadd.f32 %v2101, %v2102
  %v2104 = vrot.slane %v2103, 2
  %v2105 = vadd.f32 %v2103, %v2104
  %v2106 = vrot.slane %v2105, 1
  %v2107 = vadd.f32 %v2105, %v2106
  %v2108 = vsel %vm1849, %v2008, 0.0
  %v2109 = vrot.slane %v2108, 4
  %v2110 = vadd.f32 %v2108, %v2109
  %v2111 = vrot.slane %v2110, 2
  %v2112 = vadd.f32 %v2110, %v2111
  %v2113 = vrot.slane %v2112, 1
  %v2114 = vadd.f32 %v2112, %v2113
  %v2115 = vsel %vm1849, %v2009, 0.0
  %v2116 = vrot.slane %v2115, 4
  %v2117 = vadd.f32 %v2115, %v2116
  %v2118 = vrot.slane %v2117, 2
  %v2119 = vadd.f32 %v2117, %v2118
  %v2120 = vrot.slane %v2119, 1
  %v2121 = vadd.f32 %v2119, %v2120
  %v2122 = vmul.f32 %v2016, %v700
  %v2123 = vmul.f32 %v2023, %v700
  %v2124 = vmul.f32 %v2030, %v700
  %v2125 = vmul.f32 %v2037, %v700
  %v2126 = vmul.f32 %v2044, %v700
  %v2127 = vmul.f32 %v2051, %v700
  %v2128 = vmul.f32 %v2058, %v700
  %v2129 = vmul.f32 %v2065, %v700
  %v2130 = vmul.f32 %v2072, %v700
  %v2131 = vmul.f32 %v2079, %v700
  %v2132 = vmul.f32 %v2086, %v700
  %v2133 = vmul.f32 %v2093, %v700
  %v2134 = vmul.f32 %v2100, %v700
  %v2135 = vmul.f32 %v2107, %v700
  %v2136 = vmul.f32 %v2114, %v700
  %v2137 = vmul.f32 %v2121, %v700
  %v2138 = vadd.f32 %v2122, 1e-05
  %v2139 = vadd.f32 %v2123, 1e-05
  %v2140 = vadd.f32 %v2124, 1e-05
  %v2141 = vadd.f32 %v2125, 1e-05
  %v2142 = vadd.f32 %v2126, 1e-05
  %v2143 = vadd.f32 %v2127, 1e-05
  %v2144 = vadd.f32 %v2128, 1e-05
  %v2145 = vadd.f32 %v2129, 1e-05
  %v2146 = vadd.f32 %v2130, 1e-05
  %v2147 = vadd.f32 %v2131, 1e-05
  %v2148 = vadd.f32 %v2132, 1e-05
  %v2149 = vadd.f32 %v2133, 1e-05
  %v2150 = vadd.f32 %v2134, 1e-05
  %v2151 = vadd.f32 %v2135, 1e-05
  %v2152 = vadd.f32 %v2136, 1e-05
  %v2153 = vadd.f32 %v2137, 1e-05
  %v2154 = vrsqrt.pop %v2138
  %v2155 = vmul.f32 %v2154, %v2138
  %v2156 = vmul.f32 %v2155, %v2154
  %v2157 = vmul.f32 0.5, %v2156
  %v2158 = vsub.f32 1.5, %v2157
  %v2159 = vmul.f32 %v2154, %v2158
  %vm2160 = vweird.f32 %v2138
  %vm2161 = vweird.f32 %v2154
  %vm2162 = vmor %vm2160, %vm2161
  %v2163 = vsel %vm2162, %v2154, %v2159
  %v2164 = vrsqrt.pop %v2139
  %v2165 = vmul.f32 %v2164, %v2139
  %v2166 = vmul.f32 %v2165, %v2164
  %v2167 = vmul.f32 0.5, %v2166
  %v2168 = vsub.f32 1.5, %v2167
  %v2169 = vmul.f32 %v2164, %v2168
  %vm2170 = vweird.f32 %v2139
  %vm2171 = vweird.f32 %v2164
  %vm2172 = vmor %vm2170, %vm2171
  %v2173 = vsel %vm2172, %v2164, %v2169
  %v2174 = vrsqrt.pop %v2140
  %v2175 = vmul.f32 %v2174, %v2140
  %v2176 = vmul.f32 %v2175, %v2174
  %v2177 = vmul.f32 0.5, %v2176
  %v2178 = vsub.f32 1.5, %v2177
  %v2179 = vmul.f32 %v2174, %v2178
  %vm2180 = vweird.f32 %v2140
  %vm2181 = vweird.f32 %v2174
  %vm2182 = vmor %vm2180, %vm2181
  %v2183 = vsel %vm2182, %v2174, %v2179
  %v2184 = vrsqrt.pop %v2141
  %v2185 = vmul.f32 %v2184, %v2141
  %v2186 = vmul.f32 %v2185, %v2184
  %v2187 = vmul.f32 0.5, %v2186
  %v2188 = vsub.f32 1.5, %v2187
  %v2189 = vmul.f32 %v2184, %v2188
  %vm2190 = vweird.f32 %v2141
  %vm2191 = vweird.f32 %v2184
  %vm2192 = vmor %vm2190, %vm2191
  %v2193 = vsel %vm2192, %v2184, %v2189
  %v2194 = vrsqrt.pop %v2142
  %v2195 = vmul.f32 %v2194, %v2142
  %v2196 = vmul.f32 %v2195, %v2194
  %v2197 = vmul.f32 0.5, %v2196
  %v2198 = vsub.f32 1.5, %v2197
  %v2199 = vmul.f32 %v2194, %v2198
  %vm2200 = vweird.f32 %v2142
  %vm2201 = vweird.f32 %v2194
  %vm2202 = vmor %vm2200, %vm2201
  %v2203 = vsel %vm2202, %v2194, %v2199
  %v2204 = vrsqrt.pop %v2143
  %v2205 = vmul.f32 %v2204, %v2143
  %v2206 = vmul.f32 %v2205, %v2204
  %v2207 = vmul.f32 0.5, %v2206
  %v2208 = vsub.f32 1.5, %v2207
  %v2209 = vmul.f32 %v2204, %v2208
  %vm2210 = vweird.f32 %v2143
  %vm2211 = vweird.f32 %v2204
  %vm2212 = vmor %vm2210, %vm2211
  %v2213 = vsel %vm2212, %v2204, %v2209
  %v2214 = vrsqrt.pop %v2144
  %v2215 = vmul.f32 %v2214, %v2144
  %v2216 = vmul.f32 %v2215, %v2214
  %v2217 = vmul.f32 0.5, %v2216
  %v2218 = vsub.f32 1.5, %v2217
  %v2219 = vmul.f32 %v2214, %v2218
  %vm2220 = vweird.f32 %v2144
  %vm2221 = vweird.f32 %v2214
  %vm2222 = vmor %vm2220, %vm2221
  %v2223 = vsel %vm2222, %v2214, %v2219
  %v2224 = vrsqrt.pop %v2145
  %v2225 = vmul.f32 %v2224, %v2145
  %v2226 = vmul.f32 %v2225, %v2224
  %v2227 = vmul.f32 0.5, %v2226
  %v2228 = vsub.f32 1.5, %v2227
  %v2229 = vmul.f32 %v2224, %v2228
  %vm2230 = vweird.f32 %v2145
  %vm2231 = vweird.f32 %v2224
  %vm2232 = vmor %vm2230, %vm2231
  %v2233 = vsel %vm2232, %v2224, %v2229
  %v2234 = vrsqrt.pop %v2146
  %v2235 = vmul.f32 %v2234, %v2146
  %v2236 = vmul.f32 %v2235, %v2234
  %v2237 = vmul.f32 0.5, %v2236
  %v2238 = vsub.f32 1.5, %v2237
  %v2239 = vmul.f32 %v2234, %v2238
  %vm2240 = vweird.f32 %v2146
  %vm2241 = vweird.f32 %v2234
  %vm2242 = vmor %vm2240, %vm2241
  %v2243 = vsel %vm2242, %v2234, %v2239
  %v2244 = vrsqrt.pop %v2147
  %v2245 = vmul.f32 %v2244, %v2147
  %v2246 = vmul.f32 %v2245, %v2244
  %v2247 = vmul.f32 0.5, %v2246
  %v2248 = vsub.f32 1.5, %v2247
  %v2249 = vmul.f32 %v2244, %v2248
  %vm2250 = vweird.f32 %v2147
  %vm2251 = vweird.f32 %v2244
  %vm2252 = vmor %vm2250, %vm2251
  %v2253 = vsel %vm2252, %v2244, %v2249
  %v2254 = vrsqrt.pop %v2148
  %v2255 = vmul.f32 %v2254, %v2148
  %v2256 = vmul.f32 %v2255, %v2254
  %v2257 = vmul.f32 0.5, %v2256
  %v2258 = vsub.f32 1.5, %v2257
  %v2259 = vmul.f32 %v2254, %v2258
  %vm2260 = vweird.f32 %v2148
  %vm2261 = vweird.f32 %v2254
  %vm2262 = vmor %vm2260, %vm2261
  %v2263 = vsel %vm2262, %v2254, %v2259
  %v2264 = vrsqrt.pop %v2149
  %v2265 = vmul.f32 %v2264, %v2149
  %v2266 = vmul.f32 %v2265, %v2264
  %v2267 = vmul.f32 0.5, %v2266
  %v2268 = vsub.f32 1.5, %v2267
  %v2269 = vmul.f32 %v2264, %v2268
  %vm2270 = vweird.f32 %v2149
  %vm2271 = vweird.f32 %v2264
  %vm2272 = vmor %vm2270, %vm2271
  %v2273 = vsel %vm2272, %v2264, %v2269
  %v2274 = vrsqrt.pop %v2150
  %v2275 = vmul.f32 %v2274, %v2150
  %v2276 = vmul.f32 %v2275, %v2274
  %v2277 = vmul.f32 0.5, %v2276
  %v2278 = vsub.f32 1.5, %v2277
  %v2279 = vmul.f32 %v2274, %v2278
  %vm2280 = vweird.f32 %v2150
  %vm2281 = vweird.f32 %v2274
  %vm2282 = vmor %vm2280, %vm2281
  %v2283 = vsel %vm2282, %v2274, %v2279
  %v2284 = vrsqrt.pop %v2151
  %v2285 = vmul.f32 %v2284, %v2151
  %v2286 = vmul.f32 %v2285, %v2284
  %v2287 = vmul.f32 0.5, %v2286
  %v2288 = vsub.f32 1.5, %v2287
  %v2289 = vmul.f32 %v2284, %v2288
  %vm2290 = vweird.f32 %v2151
  %vm2291 = vweird.f32 %v2284
  %vm2292 = vmor %vm2290, %vm2291
  %v2293 = vsel %vm2292, %v2284, %v2289
  %v2294 = vrsqrt.pop %v2152
  %v2295 = vmul.f32 %v2294, %v2152
  %v2296 = vmul.f32 %v2295, %v2294
  %v2297 = vmul.f32 0.5, %v2296
  %v2298 = vsub.f32 1.5, %v2297
  %v2299 = vmul.f32 %v2294, %v2298
  %vm2300 = vweird.f32 %v2152
  %vm2301 = vweird.f32 %v2294
  %vm2302 = vmor %vm2300, %vm2301
  %v2303 = vsel %vm2302, %v2294, %v2299
  %v2304 = vrsqrt.pop %v2153
  %v2305 = vmul.f32 %v2304, %v2153
  %v2306 = vmul.f32 %v2305, %v2304
  %v2307 = vmul.f32 0.5, %v2306
  %v2308 = vsub.f32 1.5, %v2307
  %v2309 = vmul.f32 %v2304, %v2308
  %vm2310 = vweird.f32 %v2153
  %vm2311 = vweird.f32 %v2304
  %vm2312 = vmor %vm2310, %vm2311
  %v2313 = vsel %vm2312, %v2304, %v2309
  %v2314 = vmul.f32 %v1978, %v2163
  %v2315 = vmul.f32 %v1979, %v2173
  %v2316 = vmul.f32 %v1980, %v2183
  %v2317 = vmul.f32 %v1981, %v2193
  %v2318 = vmul.f32 %v1982, %v2203
  %v2319 = vmul.f32 %v1983, %v2213
  %v2320 = vmul.f32 %v1984, %v2223
  %v2321 = vmul.f32 %v1985, %v2233
  %v2322 = vmul.f32 %v1986, %v2243
  %v2323 = vmul.f32 %v1987, %v2253
  %v2324 = vmul.f32 %v1988, %v2263
  %v2325 = vmul.f32 %v1989, %v2273
  %v2326 = vmul.f32 %v1990, %v2283
  %v2327 = vmul.f32 %v1991, %v2293
  %v2328 = vmul.f32 %v1992, %v2303
  %v2329 = vmul.f32 %v1993, %v2313
  %v2332 = vperm.slane %v1845, 0
  %v2333 = vperm.slane %v1845, 1
  %v2334 = vperm.slane %v1845, 2
  %v2335 = vperm.slane %v1845, 3
  %v2336 = vperm.slane %v1845, 4
  %v2337 = vperm.slane %v1845, 5
  %v2338 = vperm.slane %v1845, 6
  %v2339 = vperm.slane %v1845, 7
  %v2340 = vperm.slane %v1846, 0
  %v2341 = vperm.slane %v1846, 1
  %v2342 = vperm.slane %v1846, 2
  %v2343 = vperm.slane %v1846, 3
  %v2344 = vperm.slane %v1846, 4
  %v2345 = vperm.slane %v1846, 5
  %v2346 = vperm.slane %v1846, 6
  %v2347 = vperm.slane %v1846, 7
  %v2364 = vmul.f32 %v2314, %v2332
  %v2365 = vmul.f32 %v2315, %v2333
  %v2366 = vmul.f32 %v2316, %v2334
  %v2367 = vmul.f32 %v2317, %v2335
  %v2368 = vmul.f32 %v2318, %v2336
  %v2369 = vmul.f32 %v2319, %v2337
  %v2370 = vmul.f32 %v2320, %v2338
  %v2371 = vmul.f32 %v2321, %v2339
  %v2372 = vmul.f32 %v2322, %v2340
  %v2373 = vmul.f32 %v2323, %v2341
  %v2374 = vmul.f32 %v2324, %v2342
  %v2375 = vmul.f32 %v2325, %v2343
  %v2376 = vmul.f32 %v2326, %v2344
  %v2377 = vmul.f32 %v2327, %v2345
  %v2378 = vmul.f32 %v2328, %v2346
  %v2379 = vmul.f32 %v2329, %v2347
  %v2382 = vperm.slane %v1847, 0
  %v2383 = vperm.slane %v1847, 1
  %v2384 = vperm.slane %v1847, 2
  %v2385 = vperm.slane %v1847, 3
  %v2386 = vperm.slane %v1847, 4
  %v2387 = vperm.slane %v1847, 5
  %v2388 = vperm.slane %v1847, 6
  %v2389 = vperm.slane %v1847, 7
  %v2390 = vperm.slane %v1848, 0
  %v2391 = vperm.slane %v1848, 1
  %v2392 = vperm.slane %v1848, 2
  %v2393 = vperm.slane %v1848, 3
  %v2394 = vperm.slane %v1848, 4
  %v2395 = vperm.slane %v1848, 5
  %v2396 = vperm.slane %v1848, 6
  %v2397 = vperm.slane %v1848, 7
  %v2414 = vadd.f32 %v2364, %v2382
  %v2415 = vadd.f32 %v2365, %v2383
  %v2416 = vadd.f32 %v2366, %v2384
  %v2417 = vadd.f32 %v2367, %v2385
  %v2418 = vadd.f32 %v2368, %v2386
  %v2419 = vadd.f32 %v2369, %v2387
  %v2420 = vadd.f32 %v2370, %v2388
  %v2421 = vadd.f32 %v2371, %v2389
  %v2422 = vadd.f32 %v2372, %v2390
  %v2423 = vadd.f32 %v2373, %v2391
  %v2424 = vadd.f32 %v2374, %v2392
  %v2425 = vadd.f32 %v2375, %v2393
  %v2426 = vadd.f32 %v2376, %v2394
  %v2427 = vadd.f32 %v2377, %v2395
  %v2428 = vadd.f32 %v2378, %v2396
  %v2429 = vadd.f32 %v2379, %v2397
  %v2430 = vmax.f32 %v2414, 0.0
  %v2431 = vmax.f32 %v2415, 0.0
  %v2432 = vmax.f32 %v2416, 0.0
  %v2433 = vmax.f32 %v2417, 0.0
  %v2434 = vmax.f32 %v2418, 0.0
  %v2435 = vmax.f32 %v2419, 0.0
  %v2436 = vmax.f32 %v2420, 0.0
  %v2437 = vmax.f32 %v2421, 0.0
  %v2438 = vmax.f32 %v2422, 0.0
  %v2439 = vmax.f32 %v2423, 0.0
  %v2440 = vmax.f32 %v2424, 0.0
  %v2441 = vmax.f32 %v2425, 0.0
  %v2442 = vmax.f32 %v2426, 0.0
  %v2443 = vmax.f32 %v2427, 0.0
  %v2444 = vmax.f32 %v2428, 0.0
  %v2445 = vmax.f32 %v2429, 0.0
  %v2462 = vrot.slane %v2431, 6
  %v2463 = vrot.slane %v2432, 4
  %v2464 = vrot.slane %v2433, 2
  %v2465 = vrot.slane %v2435, 6
  %v2466 = vrot.slane %v2436, 4
  %v2467 = vrot.slane %v2437, 2
  %v2468 = vrot.slane %v2439, 6
  %v2469 = vrot.slane %v2440, 4
  %v2470 = vrot.slane %v2441, 2
  %v2471 = vrot.slane %v2443, 6
  %v2472 = vrot.slane %v2444, 4
  %v2473 = vrot.slane %v2445, 2
  %v2474 = vsel %vm1849, %v2430, %v2462
  %vm2475 = vcmask 1045508
  %v2476 = vsel %vm2475, %v2463, %v2464
  %vm2477 = vcmask 1043456
  %v2478 = vsel %vm2477, %v2474, %v2476
  %v2479 = vsel %vm1849, %v2434, %v2465
  %v2480 = vsel %vm2475, %v2466, %v2467
  %v2481 = vsel %vm2477, %v2479, %v2480
  %v2482 = vsel %vm1849, %v2438, %v2468
  %v2483 = vsel %vm2475, %v2469, %v2470
  %v2484 = vsel %vm2477, %v2482, %v2483
  %v2485 = vsel %vm1849, %v2442, %v2471
  %v2486 = vsel %vm2475, %v2472, %v2473
  %v2487 = vsel %vm2477, %v2485, %v2486
  %2492 = vst [vmem:[%s18] sm:$0xff] %v2478
  %2493 = vst [vmem:[%s18 + $0x8] sm:$0xff] %v2481
  %2494 = vst [vmem:[%s18 + $0x10] sm:$0xff] %v2484
  %2495 = vst [vmem:[%s18 + $0x18] sm:$0xff] %v2487
  // Predicated region
  $region74: #{netG_forward.11} parent=0 // pred_check
    _
  $region75: #{netG_forward.11} parent=0 // pred_check_branch
    %2497 = sbr.rel (0) target = $region77
  $region76: #{netG_forward.11} parent=0 // pred_region
    _
  $region77: #{netG_forward.11} parent=0 // pred_fallthru
    _
  // Predicated region
  $region78: #{netG_forward.11} parent=0 // pred_check
    _
  $region79: #{netG_forward.11} parent=0 // pred_check_branch
    %2499 = sbr.rel (0) target = $region81
  $region80: #{netG_forward.11} parent=0 // pred_region
    _
  $region81: #{netG_forward.11} parent=0 // pred_fallthru
    _

// kernel: netG_forward.12
$region0: #{netG_forward.12}
  #allocation0 [shape = 'u32[]', space=smem, size = 0x4, offset = 0x4, fixed_abs, tag = 'smem constant byte address 0x4 - core index']
  #allocation1 [shape = 'u32[72,128]{1,0:T(1,128)}', space=vmem, size = 0x9000, scoped, tag = 'internal scratch']
  %s0 = inlined_call_operand.vmem [shape: bf16[128,128], index: 0, kind: input, shape index: {}]
  %s1 = inlined_call_operand.vmem [shape: bf16[128,896], index: 1, kind: input, shape index: {}]
  %s2 = inlined_call_operand.vmem [shape: f32[1,896], index: 2, kind: input, shape index: {}]
  %s3 = inlined_call_operand.vmem [shape: f32[128,896], index: 3, kind: output, shape index: {}]
  %s4 = sld [smem:[#allocation0]]
  $region45: #{netG_forward.12} parent=0
    _
  %s6 = ssub.s32 1, %s4
  %s7 = scalar_select 0, %s6, %s4
  loop: start=0, step=1, limit=4
  $region2: #{netG_forward.12} parent=0 // loop_pre_header
    _
  $region3: #{netG_forward.12} parent=0 // loop_header
    %s9 = sphi 0, %s13
    %p10 = scmp.ge.s32.totalorder %s9, 4
    %s19 = sphi 0, %s21
    %s22 = sphi 0, %s19
    %s23 = sphi 0, %s22
    %s39 = sphi 0, %s23
    %s43 = sphi 0, %s43
    %s45 = sphi 0, %s43
    %s46 = sphi 0, %s45
    %s60 = sphi 0, %s46
    %s64 = sphi 0, %s64
    %s66 = sphi 0, %s64
    %s67 = sphi 0, %s66
    %s81 = sphi 0, %s67
    %s87 = sphi 0, %s89
    %s90 = sphi 0, %s87
    %s91 = sphi 0, %s90
    %s107 = sphi 0, %s91
  $region4: #{netG_forward.12} parent=0 // loop_header_branch
    %12 = sbr.rel (%p10) target = $region8
  $region5: #{netG_forward.12} parent=0 // loop_body
    %s14 = ssub.s32 %s9, 1
    %s15 = ssub.s32 %s9, 2
    %s16 = sadd.s32 %s9, 1
    %s17 = ssub.s32 %s9, %s16
    %p18 = scmp.eq.s32.totalorder %s17, 0
    %s20 = sadd.s32 %s19, 1
    %s21 = scalar_select %p18, %s19, %s20
    %p24 = pneg %p18
    %p25 = scmp.eq.s32.totalorder %s9, 1
    %p26 = por %p24, %p25
    %p27 = scmp.ne.s32.totalorder %s19, %s22
    %p28 = scmp.eq.s32.totalorder %s9, 0
    %p29 = por %p27, %p28
    %p30 = scmp.ne.s32.totalorder %s19, %s22
    %p31 = scmp.eq.s32.totalorder %s14, 1
    %p32 = por %p30, %p31
    %p33 = scmp.ne.s32.totalorder %s22, %s23
    %p34 = scmp.eq.s32.totalorder %s14, 0
    %p35 = por %p33, %p34
    %p36 = scmp.ne.s32.totalorder %s22, %s23
    %p37 = scmp.eq.s32.totalorder %s15, 1
    %p38 = por %p36, %p37
    %p40 = scmp.ne.s32.totalorder %s23, %s39
    %p41 = scmp.eq.s32.totalorder %s15, 0
    %p42 = por %p40, %p41
    %s44 = sadd.s32 %s43, 1
    %p47 = scmp.eq.s32.totalorder %s9, 1
    %p48 = scmp.ne.s32.totalorder %s43, %s45
    %p49 = scmp.eq.s32.totalorder %s9, 0
    %p50 = por %p48, %p49
    %p51 = scmp.ne.s32.totalorder %s43, %s45
    %p52 = scmp.eq.s32.totalorder %s14, 1
    %p53 = por %p51, %p52
    %p54 = scmp.ne.s32.totalorder %s45, %s46
    %p55 = scmp.eq.s32.totalorder %s14, 0
    %p56 = por %p54, %p55
    %p57 = scmp.ne.s32.totalorder %s45, %s46
    %p58 = scmp.eq.s32.totalorder %s15, 1
    %p59 = por %p57, %p58
    %p61 = scmp.ne.s32.totalorder %s46, %s60
    %p62 = scmp.eq.s32.totalorder %s15, 0
    %p63 = por %p61, %p62
    %s65 = sadd.s32 %s64, 1
    %p68 = scmp.eq.s32.totalorder %s9, 1
    %p69 = scmp.ne.s32.totalorder %s64, %s66
    %p70 = scmp.eq.s32.totalorder %s9, 0
    %p71 = por %p69, %p70
    %p72 = scmp.ne.s32.totalorder %s64, %s66
    %p73 = scmp.eq.s32.totalorder %s14, 1
    %p74 = por %p72, %p73
    %p75 = scmp.ne.s32.totalorder %s66, %s67
    %p76 = scmp.eq.s32.totalorder %s14, 0
    %p77 = por %p75, %p76
    %p78 = scmp.ne.s32.totalorder %s66, %s67
    %p79 = scmp.eq.s32.totalorder %s15, 1
    %p80 = por %p78, %p79
    %p82 = scmp.ne.s32.totalorder %s67, %s81
    %p83 = scmp.eq.s32.totalorder %s15, 0
    %p84 = por %p82, %p83
    %s85 = ssub.s32 %s9, %s16
    %p86 = scmp.eq.s32.totalorder %s85, 0
    %s88 = sadd.s32 %s87, 1
    %s89 = scalar_select %p86, %s87, %s88
    %p92 = pneg %p86
    %p93 = scmp.eq.s32.totalorder %s9, 1
    %p94 = por %p92, %p93
    %p95 = scmp.ne.s32.totalorder %s87, %s90
    %p96 = scmp.eq.s32.totalorder %s9, 0
    %p97 = por %p95, %p96
    %p98 = scmp.ne.s32.totalorder %s87, %s90
    %p99 = scmp.eq.s32.totalorder %s14, 1
    %p100 = por %p98, %p99
    %p101 = scmp.ne.s32.totalorder %s90, %s91
    %p102 = scmp.eq.s32.totalorder %s14, 0
    %p103 = por %p101, %p102
    %p104 = scmp.ne.s32.totalorder %s90, %s91
    %p105 = scmp.eq.s32.totalorder %s15, 1
    %p106 = por %p104, %p105
    %p108 = scmp.ne.s32.totalorder %s91, %s107
    %p109 = scmp.eq.s32.totalorder %s15, 0
    %p110 = por %p108, %p109
    %p111 = scmp.le.s32.totalorder 1, %s9
    %p112 = scmp.lt.s32.totalorder %s9, 3
    %p113 = pnand %p111, %p112
    %p114 = pneg %p113
    // Predicated region
    $region9: #{netG_forward.12} parent=5 // pred_check
      _
    $region10: #{netG_forward.12} parent=5 // pred_check_branch
      %116 = sbr.rel (%p113) target = $region12
    $region11: #{netG_forward.12} parent=5 // pred_region
      %s117 = ssub.s32 %s9, 1
      // Predicated region
      $region13: #{netG_forward.12} parent=11 // pred_check
        %p118 = pneg %p56
      $region14: #{netG_forward.12} parent=11 // pred_check_branch
        %120 = sbr.rel (%p118) target = $region16
      $region15: #{netG_forward.12} parent=11 // pred_region
        _
      $region16: #{netG_forward.12} parent=11 // pred_fallthru
        _
      // Predicated region
      $region17: #{netG_forward.12} parent=11 // pred_check
        %p121 = pneg %p77
      $region18: #{netG_forward.12} parent=11 // pred_check_branch
        %123 = sbr.rel (%p121) target = $region20
      $region19: #{netG_forward.12} parent=11 // pred_region
        _
      $region20: #{netG_forward.12} parent=11 // pred_fallthru
        _
    $region12: #{netG_forward.12} parent=5 // pred_fallthru
      _
    %p124 = scmp.lt.s32.totalorder %s9, 2
    // Predicated region
    $region21: #{netG_forward.12} parent=5 // pred_check
      %p125 = pneg %p124
    $region22: #{netG_forward.12} parent=5 // pred_check_branch
      %127 = sbr.rel (%p125) target = $region24
    $region23: #{netG_forward.12} parent=5 // pred_region
      // Predicated region
      $region25: #{netG_forward.12} parent=23 // pred_check
        %p128 = pneg %p29
      $region26: #{netG_forward.12} parent=23 // pred_check_branch
        %130 = sbr.rel (%p128) target = $region28
      $region27: #{netG_forward.12} parent=23 // pred_region
        %s131 = smul.u32 8, %s9
        %p132 = scmp.lt.s32.totalorder %s131, 15
        %s133 = scalar_select %p132, %s131, 15
        %s134 = smul.addr %s133, 4
        %s135 = scalar_lea.vmem %s0, %s134
        %s136 = smul.u32 8, %s9
      $region28: #{netG_forward.12} parent=23 // pred_fallthru
        _
    $region24: #{netG_forward.12} parent=5 // pred_fallthru
      _
    %p137 = scmp.le.s32.totalorder 1, %s9
    %p138 = scmp.lt.s32.totalorder %s9, 3
    %p139 = pnand %p137, %p138
    %p140 = pneg %p139
    // Predicated region
    $region29: #{netG_forward.12} parent=5 // pred_check
      _
    $region30: #{netG_forward.12} parent=5 // pred_check_branch
      %142 = sbr.rel (%p139) target = $region32
    $region31: #{netG_forward.12} parent=5 // pred_region
      %s143 = ssub.s32 %s9, 1
      %s144 = smul.u32 8, %s14
      %p145 = scmp.lt.s32.totalorder %s144, 15
      %s146 = scalar_select %p145, %s144, 15
      %s147 = smul.addr %s146, 4
      %s148 = scalar_lea.vmem %s0, %s147
      %p149 = pneg %p35
      %p150 = pneg %p32
      %p151 = pneg %p56
      %p152 = pneg %p53
      %p153 = pneg %p77
      %p154 = pneg %p74
      %p155 = pneg %p103
      %p156 = pneg %p100
      %s157 = smul.u32 8, %s14
      %p158 = scmp.lt.s32.totalorder %s157, 15
      %s159 = scalar_select %p158, %s157, 15
      %s160 = smul.addr %s159, 7
      %s161 = smul.addr %s160, 8
      %s162 = scalar_lea.vmem %s3, %s161
      %s163 = smul.u32 8, %s14
      %p164 = scmp.lt.s32.totalorder %s163, 15
      %s165 = scalar_select %p164, %s163, 15
      %s166 = smul.addr %s165, 4
      %s167 = scalar_lea.vmem %s0, %s166
      %s168 = smul.u32 8, %s14
      %s169 = smul.u32 8, %s14
      %p170 = scmp.lt.s32.totalorder %s169, 15
      %s171 = scalar_select %p170, %s169, 15
      %s172 = smul.addr %s171, 7
      %s173 = smul.addr %s172, 8
      %s174 = scalar_lea.vmem %s3, %s173
      %s175 = smul.u32 8, %s14
      %v176 = vld [vmem:[%s167] sm:$0xf]
      %v177 = vld [vmem:[%s167 + $0x4] sm:$0xf]
      %v178 = vld [vmem:[%s167 + $0x8] sm:$0xf]
      %v179 = vld [vmem:[%s167 + $0xc] sm:$0xf]
      %v180 = vld [vmem:[%s167 + $0x10] sm:$0xf]
      %v181 = vld [vmem:[%s167 + $0x14] sm:$0xf]
      %v182 = vld [vmem:[%s167 + $0x18] sm:$0xf]
      %v183 = vld [vmem:[%s167 + $0x1c] sm:$0xf]
      %v184 = vld [vmem:[%s1] sm:$0xff]
      %v185 = vld [vmem:[%s1 + $0x8] sm:$0xff]
      %v186 = vld [vmem:[%s1 + $0x10] sm:$0xff]
      %v187 = vld [vmem:[%s1 + $0x18] sm:$0xf]
      %v188 = vld [vmem:[%s1 + $0x1c] sm:$0xff]
      %v189 = vld [vmem:[%s1 + $0x24] sm:$0xff]
      %v190 = vld [vmem:[%s1 + $0x2c] sm:$0xff]
      %v191 = vld [vmem:[%s1 + $0x34] sm:$0xf]
      %v192 = vld [vmem:[%s1 + $0x38] sm:$0xff]
      %v193 = vld [vmem:[%s1 + $0x40] sm:$0xff]
      %v194 = vld [vmem:[%s1 + $0x48] sm:$0xff]
      %v195 = vld [vmem:[%s1 + $0x50] sm:$0xf]
      %v196 = vld [vmem:[%s1 + $0x54] sm:$0xff]
      %v197 = vld [vmem:[%s1 + $0x5c] sm:$0xff]
      %v198 = vld [vmem:[%s1 + $0x64] sm:$0xff]
      %v199 = vld [vmem:[%s1 + $0x6c] sm:$0xf]
      %v200 = vld [vmem:[%s1 + $0x70] sm:$0xff]
      %v201 = vld [vmem:[%s1 + $0x78] sm:$0xff]
      %v202 = vld [vmem:[%s1 + $0x80] sm:$0xff]
      %v203 = vld [vmem:[%s1 + $0x88] sm:$0xf]
      %v204 = vld [vmem:[%s1 + $0x8c] sm:$0xff]
      %v205 = vld [vmem:[%s1 + $0x94] sm:$0xff]
      %v206 = vld [vmem:[%s1 + $0x9c] sm:$0xff]
      %v207 = vld [vmem:[%s1 + $0xa4] sm:$0xf]
      %v208 = vld [vmem:[%s1 + $0xa8] sm:$0xff]
      %v209 = vld [vmem:[%s1 + $0xb0] sm:$0xff]
      %v210 = vld [vmem:[%s1 + $0xb8] sm:$0xff]
      %v211 = vld [vmem:[%s1 + $0xc0] sm:$0xf]
      %v212 = vld [vmem:[%s1 + $0xc4] sm:$0xff]
      %v213 = vld [vmem:[%s1 + $0xcc] sm:$0xff]
      %v214 = vld [vmem:[%s1 + $0xd4] sm:$0xff]
      %v215 = vld [vmem:[%s1 + $0xdc] sm:$0xf]
      %v216 = vld [vmem:[%s1 + $0xe0] sm:$0xff]
      %v217 = vld [vmem:[%s1 + $0xe8] sm:$0xff]
      %v218 = vld [vmem:[%s1 + $0xf0] sm:$0xff]
      %v219 = vld [vmem:[%s1 + $0xf8] sm:$0xf]
      %v220 = vld [vmem:[%s1 + $0xfc] sm:$0xff]
      %v221 = vld [vmem:[%s1 + $0x104] sm:$0xff]
      %v222 = vld [vmem:[%s1 + $0x10c] sm:$0xff]
      %v223 = vld [vmem:[%s1 + $0x114] sm:$0xf]
      %v224 = vld [vmem:[%s1 + $0x118] sm:$0xff]
      %v225 = vld [vmem:[%s1 + $0x120] sm:$0xff]
      %v226 = vld [vmem:[%s1 + $0x128] sm:$0xff]
      %v227 = vld [vmem:[%s1 + $0x130] sm:$0xf]
      %v228 = vld [vmem:[%s1 + $0x134] sm:$0xff]
      %v229 = vld [vmem:[%s1 + $0x13c] sm:$0xff]
      %v230 = vld [vmem:[%s1 + $0x144] sm:$0xff]
      %v231 = vld [vmem:[%s1 + $0x14c] sm:$0xf]
      %v232 = vld [vmem:[%s1 + $0x150] sm:$0xff]
      %v233 = vld [vmem:[%s1 + $0x158] sm:$0xff]
      %v234 = vld [vmem:[%s1 + $0x160] sm:$0xff]
      %v235 = vld [vmem:[%s1 + $0x168] sm:$0xf]
      %v236 = vld [vmem:[%s1 + $0x16c] sm:$0xff]
      %v237 = vld [vmem:[%s1 + $0x174] sm:$0xff]
      %v238 = vld [vmem:[%s1 + $0x17c] sm:$0xff]
      %v239 = vld [vmem:[%s1 + $0x184] sm:$0xf]
      %v240 = vld [vmem:[%s1 + $0x188] sm:$0xff]
      %v241 = vld [vmem:[%s1 + $0x190] sm:$0xff]
      %v242 = vld [vmem:[%s1 + $0x198] sm:$0xff]
      %v243 = vld [vmem:[%s1 + $0x1a0] sm:$0xf]
      %v244 = vld [vmem:[%s1 + $0x1a4] sm:$0xff]
      %v245 = vld [vmem:[%s1 + $0x1ac] sm:$0xff]
      %v246 = vld [vmem:[%s1 + $0x1b4] sm:$0xff]
      %v247 = vld [vmem:[%s1 + $0x1bc] sm:$0xf]
      %v248 = vld [vmem:[%s2] sm:$0xff]
      %v250 = vperm.slane %v248, 0
      %v251 = vperm.slane %v248, 1
      %v252 = vperm.slane %v248, 2
      %v253 = vperm.slane %v248, 3
      %v254 = vperm.slane %v248, 4
      %v255 = vperm.slane %v248, 5
      %v256 = vperm.slane %v248, 6
      %v272 = vunpack.c.l.b16 %v176
      %v273 = vunpack.c.l.b16 %v177
      %v274 = vunpack.c.l.b16 %v178
      %v275 = vunpack.c.l.b16 %v179
      %v276 = vunpack.c.l.b16 %v180
      %v277 = vunpack.c.l.b16 %v181
      %v278 = vunpack.c.l.b16 %v182
      %v279 = vunpack.c.l.b16 %v183
      %v280 = vpack.c.b16 %v273, %v272
      %v281 = vpack.c.b16 %v275, %v274
      %v282 = vpack.c.b16 %v277, %v276
      %v283 = vpack.c.b16 %v279, %v278
      %v352 = vunpack.c.l.b16 %v184
      %v353 = vunpack.c.h.b16 %v184
      %v354 = vunpack.c.l.b16 %v185
      %v355 = vunpack.c.h.b16 %v185
      %v356 = vunpack.c.l.b16 %v186
      %v357 = vunpack.c.h.b16 %v186
      %v358 = vunpack.c.l.b16 %v187
      %v359 = vunpack.c.l.b16 %v188
      %v360 = vunpack.c.h.b16 %v188
      %v361 = vunpack.c.l.b16 %v189
      %v362 = vunpack.c.h.b16 %v189
      %v363 = vunpack.c.l.b16 %v190
      %v364 = vunpack.c.h.b16 %v190
      %v365 = vunpack.c.l.b16 %v191
      %v366 = vunpack.c.l.b16 %v192
      %v367 = vunpack.c.h.b16 %v192
      %v368 = vunpack.c.l.b16 %v193
      %v369 = vunpack.c.h.b16 %v193
      %v370 = vunpack.c.l.b16 %v194
      %v371 = vunpack.c.h.b16 %v194
      %v372 = vunpack.c.l.b16 %v195
      %v373 = vunpack.c.l.b16 %v196
      %v374 = vunpack.c.h.b16 %v196
      %v375 = vunpack.c.l.b16 %v197
      %v376 = vunpack.c.h.b16 %v197
      %v377 = vunpack.c.l.b16 %v198
      %v378 = vunpack.c.h.b16 %v198
      %v379 = vunpack.c.l.b16 %v199
      %v380 = vunpack.c.l.b16 %v200
      %v381 = vunpack.c.h.b16 %v200
      %v382 = vunpack.c.l.b16 %v201
      %v383 = vunpack.c.h.b16 %v201
      %v384 = vunpack.c.l.b16 %v202
      %v385 = vunpack.c.h.b16 %v202
      %v386 = vunpack.c.l.b16 %v203
      %v387 = vunpack.c.l.b16 %v204
      %v388 = vunpack.c.h.b16 %v204
      %v389 = vunpack.c.l.b16 %v205
      %v390 = vunpack.c.h.b16 %v205
      %v391 = vunpack.c.l.b16 %v206
      %v392 = vunpack.c.h.b16 %v206
      %v393 = vunpack.c.l.b16 %v207
      %v394 = vunpack.c.l.b16 %v208
      %v395 = vunpack.c.h.b16 %v208
      %v396 = vunpack.c.l.b16 %v209
      %v397 = vunpack.c.h.b16 %v209
      %v398 = vunpack.c.l.b16 %v210
      %v399 = vunpack.c.h.b16 %v210
      %v400 = vunpack.c.l.b16 %v211
      %v401 = vunpack.c.l.b16 %v212
      %v402 = vunpack.c.h.b16 %v212
      %v403 = vunpack.c.l.b16 %v213
      %v404 = vunpack.c.h.b16 %v213
      %v405 = vunpack.c.l.b16 %v214
      %v406 = vunpack.c.h.b16 %v214
      %v407 = vunpack.c.l.b16 %v215
      %v408 = vunpack.c.l.b16 %v216
      %v409 = vunpack.c.h.b16 %v216
      %v410 = vunpack.c.l.b16 %v217
      %v411 = vunpack.c.h.b16 %v217
      %v412 = vunpack.c.l.b16 %v218
      %v413 = vunpack.c.h.b16 %v218
      %v414 = vunpack.c.l.b16 %v219
      %v415 = vunpack.c.l.b16 %v220
      %v416 = vunpack.c.h.b16 %v220
      %v417 = vunpack.c.l.b16 %v221
      %v418 = vunpack.c.h.b16 %v221
      %v419 = vunpack.c.l.b16 %v222
      %v420 = vunpack.c.h.b16 %v222
      %v421 = vunpack.c.l.b16 %v223
      %v422 = vunpack.c.l.b16 %v224
      %v423 = vunpack.c.h.b16 %v224
      %v424 = vunpack.c.l.b16 %v225
      %v425 = vunpack.c.h.b16 %v225
      %v426 = vunpack.c.l.b16 %v226
      %v427 = vunpack.c.h.b16 %v226
      %v428 = vunpack.c.l.b16 %v227
      %v429 = vunpack.c.l.b16 %v228
      %v430 = vunpack.c.h.b16 %v228
      %v431 = vunpack.c.l.b16 %v229
      %v432 = vunpack.c.h.b16 %v229
      %v433 = vunpack.c.l.b16 %v230
      %v434 = vunpack.c.h.b16 %v230
      %v435 = vunpack.c.l.b16 %v231
      %v436 = vunpack.c.l.b16 %v232
      %v437 = vunpack.c.h.b16 %v232
      %v438 = vunpack.c.l.b16 %v233
      %v439 = vunpack.c.h.b16 %v233
      %v440 = vunpack.c.l.b16 %v234
      %v441 = vunpack.c.h.b16 %v234
      %v442 = vunpack.c.l.b16 %v235
      %v443 = vunpack.c.l.b16 %v236
      %v444 = vunpack.c.h.b16 %v236
      %v445 = vunpack.c.l.b16 %v237
      %v446 = vunpack.c.h.b16 %v237
      %v447 = vunpack.c.l.b16 %v238
      %v448 = vunpack.c.h.b16 %v238
      %v449 = vunpack.c.l.b16 %v239
      %v450 = vunpack.c.l.b16 %v240
      %v451 = vunpack.c.h.b16 %v240
      %v452 = vunpack.c.l.b16 %v241
      %v453 = vunpack.c.h.b16 %v241
      %v454 = vunpack.c.l.b16 %v242
      %v455 = vunpack.c.h.b16 %v242
      %v456 = vunpack.c.l.b16 %v243
      %v457 = vunpack.c.l.b16 %v244
      %v458 = vunpack.c.h.b16 %v244
      %v459 = vunpack.c.l.b16 %v245
      %v460 = vunpack.c.h.b16 %v245
      %v461 = vunpack.c.l.b16 %v246
      %v462 = vunpack.c.h.b16 %v246
      %v463 = vunpack.c.l.b16 %v247
      %v464 = vpack.c.b16 %v359, %v352
      %v465 = vpack.c.b16 %v360, %v353
      %v466 = vpack.c.b16 %v361, %v354
      %v467 = vpack.c.b16 %v362, %v355
      %v468 = vpack.c.b16 %v363, %v356
      %v469 = vpack.c.b16 %v364, %v357
      %v470 = vpack.c.b16 %v365, %v358
      %v471 = vpack.c.b16 %v373, %v366
      %v472 = vpack.c.b16 %v374, %v367
      %v473 = vpack.c.b16 %v375, %v368
      %v474 = vpack.c.b16 %v376, %v369
      %v475 = vpack.c.b16 %v377, %v370
      %v476 = vpack.c.b16 %v378, %v371
      %v477 = vpack.c.b16 %v379, %v372
      %v478 = vpack.c.b16 %v387, %v380
      %v479 = vpack.c.b16 %v388, %v381
      %v480 = vpack.c.b16 %v389, %v382
      %v481 = vpack.c.b16 %v390, %v383
      %v482 = vpack.c.b16 %v391, %v384
      %v483 = vpack.c.b16 %v392, %v385
      %v484 = vpack.c.b16 %v393, %v386
      %v485 = vpack.c.b16 %v401, %v394
      %v486 = vpack.c.b16 %v402, %v395
      %v487 = vpack.c.b16 %v403, %v396
      %v488 = vpack.c.b16 %v404, %v397
      %v489 = vpack.c.b16 %v405, %v398
      %v490 = vpack.c.b16 %v406, %v399
      %v491 = vpack.c.b16 %v407, %v400
      %v492 = vpack.c.b16 %v415, %v408
      %v493 = vpack.c.b16 %v416, %v409
      %v494 = vpack.c.b16 %v417, %v410
      %v495 = vpack.c.b16 %v418, %v411
      %v496 = vpack.c.b16 %v419, %v412
      %v497 = vpack.c.b16 %v420, %v413
      %v498 = vpack.c.b16 %v421, %v414
      %v499 = vpack.c.b16 %v429, %v422
      %v500 = vpack.c.b16 %v430, %v423
      %v501 = vpack.c.b16 %v431, %v424
      %v502 = vpack.c.b16 %v432, %v425
      %v503 = vpack.c.b16 %v433, %v426
      %v504 = vpack.c.b16 %v434, %v427
      %v505 = vpack.c.b16 %v435, %v428
      %v506 = vpack.c.b16 %v443, %v436
      %v507 = vpack.c.b16 %v444, %v437
      %v508 = vpack.c.b16 %v445, %v438
      %v509 = vpack.c.b16 %v446, %v439
      %v510 = vpack.c.b16 %v447, %v440
      %v511 = vpack.c.b16 %v448, %v441
      %v512 = vpack.c.b16 %v449, %v442
      %v513 = vpack.c.b16 %v457, %v450
      %v514 = vpack.c.b16 %v458, %v451
      %v515 = vpack.c.b16 %v459, %v452
      %v516 = vpack.c.b16 %v460, %v453
      %v517 = vpack.c.b16 %v461, %v454
      %v518 = vpack.c.b16 %v462, %v455
      %v519 = vpack.c.b16 %v463, %v456
      %576 = vmatpush.bf16.msra.mxu0 %v513
      %577 = vmatpush.bf16.msra.mxu0 %v506
      %578 = vmatpush.bf16.msra.mxu0 %v499
      %579 = vmatpush.bf16.msra.mxu0 %v492
      %580 = vmatpush.bf16.msra.mxu0 %v485
      %581 = vmatpush.bf16.msra.mxu0 %v478
      %582 = vmatpush.bf16.msra.mxu0 %v471
      %583 = vmatpush.bf16.msra.mxu0 %v464
      %584 = vmatmul.bf16.gmra.mxu0 %v280
      %v585 = vpop.f32.mrf.mxu0
      %v586 = vadd.f32 %v250, %v585
      %v587 = vpop.f32.mrf.mxu0
      %v588 = vadd.f32 %v250, %v587
      %589 = vmatmul.bf16.gmra.mxu0 %v281
      %v590 = vpop.f32.mrf.mxu0
      %v591 = vadd.f32 %v250, %v590
      %v592 = vpop.f32.mrf.mxu0
      %v593 = vadd.f32 %v250, %v592
      %594 = vmatmul.bf16.gmra.mxu0 %v282
      %v595 = vpop.f32.mrf.mxu0
      %v596 = vadd.f32 %v250, %v595
      %v597 = vpop.f32.mrf.mxu0
      %v598 = vadd.f32 %v250, %v597
      %599 = vmatmul.bf16.gmra.mxu0 %v283
      %v600 = vpop.f32.mrf.mxu0
      %v601 = vadd.f32 %v250, %v600
      %v602 = vpop.f32.mrf.mxu0
      %v603 = vadd.f32 %v250, %v602
      %604 = vdwg.mxu0
      %605 = vmatpush.bf16.msra.mxu0 %v514
      %606 = vmatpush.bf16.msra.mxu0 %v507
      %607 = vmatpush.bf16.msra.mxu0 %v500
      %608 = vmatpush.bf16.msra.mxu0 %v493
      %609 = vmatpush.bf16.msra.mxu0 %v486
      %610 = vmatpush.bf16.msra.mxu0 %v479
      %611 = vmatpush.bf16.msra.mxu0 %v472
      %612 = vmatpush.bf16.msra.mxu0 %v465
      %613 = vmatmul.bf16.gmra.mxu0 %v280
      %v614 = vpop.f32.mrf.mxu0
      %v615 = vadd.f32 %v251, %v614
      %v616 = vpop.f32.mrf.mxu0
      %v617 = vadd.f32 %v251, %v616
      %618 = vmatmul.bf16.gmra.mxu0 %v281
      %v619 = vpop.f32.mrf.mxu0
      %v620 = vadd.f32 %v251, %v619
      %v621 = vpop.f32.mrf.mxu0
      %v622 = vadd.f32 %v251, %v621
      %623 = vmatmul.bf16.gmra.mxu0 %v282
      %v624 = vpop.f32.mrf.mxu0
      %v625 = vadd.f32 %v251, %v624
      %v626 = vpop.f32.mrf.mxu0
      %v627 = vadd.f32 %v251, %v626
      %628 = vmatmul.bf16.gmra.mxu0 %v283
      %v629 = vpop.f32.mrf.mxu0
      %v630 = vadd.f32 %v251, %v629
      %v631 = vpop.f32.mrf.mxu0
      %v632 = vadd.f32 %v251, %v631
      %633 = vdwg.mxu0
      %634 = vmatpush.bf16.msra.mxu0 %v515
      %635 = vmatpush.bf16.msra.mxu0 %v508
      %636 = vmatpush.bf16.msra.mxu0 %v501
      %637 = vmatpush.bf16.msra.mxu0 %v494
      %638 = vmatpush.bf16.msra.mxu0 %v487
      %639 = vmatpush.bf16.msra.mxu0 %v480
      %640 = vmatpush.bf16.msra.mxu0 %v473
      %641 = vmatpush.bf16.msra.mxu0 %v466
      %642 = vmatmul.bf16.gmra.mxu0 %v280
      %v643 = vpop.f32.mrf.mxu0
      %v644 = vadd.f32 %v252, %v643
      %v645 = vpop.f32.mrf.mxu0
      %v646 = vadd.f32 %v252, %v645
      %647 = vmatmul.bf16.gmra.mxu0 %v281
      %v648 = vpop.f32.mrf.mxu0
      %v649 = vadd.f32 %v252, %v648
      %v650 = vpop.f32.mrf.mxu0
      %v651 = vadd.f32 %v252, %v650
      %652 = vmatmul.bf16.gmra.mxu0 %v282
      %v653 = vpop.f32.mrf.mxu0
      %v654 = vadd.f32 %v252, %v653
      %v655 = vpop.f32.mrf.mxu0
      %v656 = vadd.f32 %v252, %v655
      %657 = vmatmul.bf16.gmra.mxu0 %v283
      %v658 = vpop.f32.mrf.mxu0
      %v659 = vadd.f32 %v252, %v658
      %v660 = vpop.f32.mrf.mxu0
      %v661 = vadd.f32 %v252, %v660
      %662 = vdwg.mxu0
      %663 = vmatpush.bf16.msra.mxu0 %v516
      %664 = vmatpush.bf16.msra.mxu0 %v509
      %665 = vmatpush.bf16.msra.mxu0 %v502
      %666 = vmatpush.bf16.msra.mxu0 %v495
      %667 = vmatpush.bf16.msra.mxu0 %v488
      %668 = vmatpush.bf16.msra.mxu0 %v481
      %669 = vmatpush.bf16.msra.mxu0 %v474
      %670 = vmatpush.bf16.msra.mxu0 %v467
      %671 = vmatmul.bf16.gmra.mxu0 %v280
      %v672 = vpop.f32.mrf.mxu0
      %v673 = vadd.f32 %v253, %v672
      %v674 = vpop.f32.mrf.mxu0
      %v675 = vadd.f32 %v253, %v674
      %676 = vmatmul.bf16.gmra.mxu0 %v281
      %v677 = vpop.f32.mrf.mxu0
      %v678 = vadd.f32 %v253, %v677
      %v679 = vpop.f32.mrf.mxu0
      %v680 = vadd.f32 %v253, %v679
      %681 = vmatmul.bf16.gmra.mxu0 %v282
      %v682 = vpop.f32.mrf.mxu0
      %v683 = vadd.f32 %v253, %v682
      %v684 = vpop.f32.mrf.mxu0
      %v685 = vadd.f32 %v253, %v684
      %686 = vmatmul.bf16.gmra.mxu0 %v283
      %v687 = vpop.f32.mrf.mxu0
      %v688 = vadd.f32 %v253, %v687
      %v689 = vpop.f32.mrf.mxu0
      %v690 = vadd.f32 %v253, %v689
      %691 = vdwg.mxu0
      %692 = vmatpush.bf16.msra.mxu0 %v517
      %693 = vmatpush.bf16.msra.mxu0 %v510
      %694 = vmatpush.bf16.msra.mxu0 %v503
      %695 = vmatpush.bf16.msra.mxu0 %v496
      %696 = vmatpush.bf16.msra.mxu0 %v489
      %697 = vmatpush.bf16.msra.mxu0 %v482
      %698 = vmatpush.bf16.msra.mxu0 %v475
      %699 = vmatpush.bf16.msra.mxu0 %v468
      %700 = vmatmul.bf16.gmra.mxu0 %v280
      %v701 = vpop.f32.mrf.mxu0
      %v702 = vadd.f32 %v254, %v701
      %v703 = vpop.f32.mrf.mxu0
      %v704 = vadd.f32 %v254, %v703
      %705 = vmatmul.bf16.gmra.mxu0 %v281
      %v706 = vpop.f32.mrf.mxu0
      %v707 = vadd.f32 %v254, %v706
      %v708 = vpop.f32.mrf.mxu0
      %v709 = vadd.f32 %v254, %v708
      %710 = vmatmul.bf16.gmra.mxu0 %v282
      %v711 = vpop.f32.mrf.mxu0
      %v712 = vadd.f32 %v254, %v711
      %v713 = vpop.f32.mrf.mxu0
      %v714 = vadd.f32 %v254, %v713
      %715 = vmatmul.bf16.gmra.mxu0 %v283
      %v716 = vpop.f32.mrf.mxu0
      %v717 = vadd.f32 %v254, %v716
      %v718 = vpop.f32.mrf.mxu0
      %v719 = vadd.f32 %v254, %v718
      %720 = vdwg.mxu0
      %721 = vmatpush.bf16.msra.mxu0 %v518
      %722 = vmatpush.bf16.msra.mxu0 %v511
      %723 = vmatpush.bf16.msra.mxu0 %v504
      %724 = vmatpush.bf16.msra.mxu0 %v497
      %725 = vmatpush.bf16.msra.mxu0 %v490
      %726 = vmatpush.bf16.msra.mxu0 %v483
      %727 = vmatpush.bf16.msra.mxu0 %v476
      %728 = vmatpush.bf16.msra.mxu0 %v469
      %729 = vmatmul.bf16.gmra.mxu0 %v280
      %v730 = vpop.f32.mrf.mxu0
      %v731 = vadd.f32 %v255, %v730
      %v732 = vpop.f32.mrf.mxu0
      %v733 = vadd.f32 %v255, %v732
      %734 = vmatmul.bf16.gmra.mxu0 %v281
      %v735 = vpop.f32.mrf.mxu0
      %v736 = vadd.f32 %v255, %v735
      %v737 = vpop.f32.mrf.mxu0
      %v738 = vadd.f32 %v255, %v737
      %739 = vmatmul.bf16.gmra.mxu0 %v282
      %v740 = vpop.f32.mrf.mxu0
      %v741 = vadd.f32 %v255, %v740
      %v742 = vpop.f32.mrf.mxu0
      %v743 = vadd.f32 %v255, %v742
      %744 = vmatmul.bf16.gmra.mxu0 %v283
      %v745 = vpop.f32.mrf.mxu0
      %v746 = vadd.f32 %v255, %v745
      %v747 = vpop.f32.mrf.mxu0
      %v748 = vadd.f32 %v255, %v747
      %749 = vdwg.mxu0
      %750 = vmatpush.bf16.msra.mxu0 %v519
      %751 = vmatpush.bf16.msra.mxu0 %v512
      %752 = vmatpush.bf16.msra.mxu0 %v505
      %753 = vmatpush.bf16.msra.mxu0 %v498
      %754 = vmatpush.bf16.msra.mxu0 %v491
      %755 = vmatpush.bf16.msra.mxu0 %v484
      %756 = vmatpush.bf16.msra.mxu0 %v477
      %757 = vmatpush.bf16.msra.mxu0 %v470
      %758 = vmatmul.bf16.gmra.mxu0 %v280
      %v759 = vpop.f32.mrf.mxu0
      %v760 = vadd.f32 %v256, %v759
      %v761 = vpop.f32.mrf.mxu0
      %v762 = vadd.f32 %v256, %v761
      %763 = vmatmul.bf16.gmra.mxu0 %v281
      %v764 = vpop.f32.mrf.mxu0
      %v765 = vadd.f32 %v256, %v764
      %v766 = vpop.f32.mrf.mxu0
      %v767 = vadd.f32 %v256, %v766
      %768 = vmatmul.bf16.gmra.mxu0 %v282
      %v769 = vpop.f32.mrf.mxu0
      %v770 = vadd.f32 %v256, %v769
      %v771 = vpop.f32.mrf.mxu0
      %v772 = vadd.f32 %v256, %v771
      %773 = vmatmul.bf16.gmra.mxu0 %v283
      %v774 = vpop.f32.mrf.mxu0
      %v775 = vadd.f32 %v256, %v774
      %v776 = vpop.f32.mrf.mxu0
      %v777 = vadd.f32 %v256, %v776
      %778 = vdwg.mxu0
      %779 = vst [vmem:[%s174] sm:$0xff] %v586
      %780 = vst [vmem:[%s174 + $0x8] sm:$0xff] %v615
      %781 = vst [vmem:[%s174 + $0x10] sm:$0xff] %v644
      %782 = vst [vmem:[%s174 + $0x18] sm:$0xff] %v673
      %783 = vst [vmem:[%s174 + $0x20] sm:$0xff] %v702
      %784 = vst [vmem:[%s174 + $0x28] sm:$0xff] %v731
      %785 = vst [vmem:[%s174 + $0x30] sm:$0xff] %v760
      %786 = vst [vmem:[%s174 + $0x38] sm:$0xff] %v588
      %787 = vst [vmem:[%s174 + $0x40] sm:$0xff] %v617
      %788 = vst [vmem:[%s174 + $0x48] sm:$0xff] %v646
      %789 = vst [vmem:[%s174 + $0x50] sm:$0xff] %v675
      %790 = vst [vmem:[%s174 + $0x58] sm:$0xff] %v704
      %791 = vst [vmem:[%s174 + $0x60] sm:$0xff] %v733
      %792 = vst [vmem:[%s174 + $0x68] sm:$0xff] %v762
      %793 = vst [vmem:[%s174 + $0x70] sm:$0xff] %v591
      %794 = vst [vmem:[%s174 + $0x78] sm:$0xff] %v620
      %795 = vst [vmem:[%s174 + $0x80] sm:$0xff] %v649
      %796 = vst [vmem:[%s174 + $0x88] sm:$0xff] %v678
      %797 = vst [vmem:[%s174 + $0x90] sm:$0xff] %v707
      %798 = vst [vmem:[%s174 + $0x98] sm:$0xff] %v736
      %799 = vst [vmem:[%s174 + $0xa0] sm:$0xff] %v765
      %800 = vst [vmem:[%s174 + $0xa8] sm:$0xff] %v593
      %801 = vst [vmem:[%s174 + $0xb0] sm:$0xff] %v622
      %802 = vst [vmem:[%s174 + $0xb8] sm:$0xff] %v651
      %803 = vst [vmem:[%s174 + $0xc0] sm:$0xff] %v680
      %804 = vst [vmem:[%s174 + $0xc8] sm:$0xff] %v709
      %805 = vst [vmem:[%s174 + $0xd0] sm:$0xff] %v738
      %806 = vst [vmem:[%s174 + $0xd8] sm:$0xff] %v767
      %807 = vst [vmem:[%s174 + $0xe0] sm:$0xff] %v596
      %808 = vst [vmem:[%s174 + $0xe8] sm:$0xff] %v625
      %809 = vst [vmem:[%s174 + $0xf0] sm:$0xff] %v654
      %810 = vst [vmem:[%s174 + $0xf8] sm:$0xff] %v683
      %811 = vst [vmem:[%s174 + $0x100] sm:$0xff] %v712
      %812 = vst [vmem:[%s174 + $0x108] sm:$0xff] %v741
      %813 = vst [vmem:[%s174 + $0x110] sm:$0xff] %v770
      %814 = vst [vmem:[%s174 + $0x118] sm:$0xff] %v598
      %815 = vst [vmem:[%s174 + $0x120] sm:$0xff] %v627
      %816 = vst [vmem:[%s174 + $0x128] sm:$0xff] %v656
      %817 = vst [vmem:[%s174 + $0x130] sm:$0xff] %v685
      %818 = vst [vmem:[%s174 + $0x138] sm:$0xff] %v714
      %819 = vst [vmem:[%s174 + $0x140] sm:$0xff] %v743
      %820 = vst [vmem:[%s174 + $0x148] sm:$0xff] %v772
      %821 = vst [vmem:[%s174 + $0x150] sm:$0xff] %v601
      %822 = vst [vmem:[%s174 + $0x158] sm:$0xff] %v630
      %823 = vst [vmem:[%s174 + $0x160] sm:$0xff] %v659
      %824 = vst [vmem:[%s174 + $0x168] sm:$0xff] %v688
      %825 = vst [vmem:[%s174 + $0x170] sm:$0xff] %v717
      %826 = vst [vmem:[%s174 + $0x178] sm:$0xff] %v746
      %827 = vst [vmem:[%s174 + $0x180] sm:$0xff] %v775
      %828 = vst [vmem:[%s174 + $0x188] sm:$0xff] %v603
      %829 = vst [vmem:[%s174 + $0x190] sm:$0xff] %v632
      %830 = vst [vmem:[%s174 + $0x198] sm:$0xff] %v661
      %831 = vst [vmem:[%s174 + $0x1a0] sm:$0xff] %v690
      %832 = vst [vmem:[%s174 + $0x1a8] sm:$0xff] %v719
      %833 = vst [vmem:[%s174 + $0x1b0] sm:$0xff] %v748
      %834 = vst [vmem:[%s174 + $0x1b8] sm:$0xff] %v777
      %s835 = smul.u32 8, %s14
      %p836 = scmp.lt.s32.totalorder %s835, 15
      %s837 = scalar_select %p836, %s835, 15
      %s838 = smul.addr %s837, 7
      %s839 = smul.addr %s838, 8
      %s840 = scalar_lea.vmem %s3, %s839
      // Predicated region
      $region33: #{netG_forward.12} parent=31 // pred_check
        %p841 = pneg %p100
      $region34: #{netG_forward.12} parent=31 // pred_check_branch
        %843 = sbr.rel (%p841) target = $region36
      $region35: #{netG_forward.12} parent=31 // pred_region
        %s844 = smul.u32 8, %s14
      $region36: #{netG_forward.12} parent=31 // pred_fallthru
        _
    $region32: #{netG_forward.12} parent=5 // pred_fallthru
      _
    %p845 = scmp.le.s32.totalorder 2, %s9
    // Predicated region
    $region37: #{netG_forward.12} parent=5 // pred_check
      %p846 = pneg %p845
    $region38: #{netG_forward.12} parent=5 // pred_check_branch
      %848 = sbr.rel (%p846) target = $region40
    $region39: #{netG_forward.12} parent=5 // pred_region
      %s849 = ssub.s32 %s9, 2
      // Predicated region
      $region41: #{netG_forward.12} parent=39 // pred_check
        %p850 = pneg %p106
      $region42: #{netG_forward.12} parent=39 // pred_check_branch
        %852 = sbr.rel (%p850) target = $region44
      $region43: #{netG_forward.12} parent=39 // pred_region
        %s853 = smul.u32 8, %s15
        %p854 = scmp.lt.s32.totalorder %s853, 15
        %s855 = scalar_select %p854, %s853, 15
        %s856 = smul.addr %s855, 7
        %s857 = smul.addr %s856, 8
        %s858 = scalar_lea.vmem %s3, %s857
      $region44: #{netG_forward.12} parent=39 // pred_fallthru
        _
    $region40: #{netG_forward.12} parent=5 // pred_fallthru
      _
  $region6: #{netG_forward.12} parent=0 // loop_footer
    %s13 = sadd.s32 1, %s9
  $region7: #{netG_forward.12} parent=0 // loop_footer_branch
    %8 = sbr.rel target = $region3
  $region8: #{netG_forward.12} parent=0 // loop_exit
    _

// kernel: netG_forward.13
$region0: #{netG_forward.13}
  #allocation0 [shape = 'u32[]', space=smem, size = 0x4, offset = 0x4, fixed_abs, tag = 'smem constant byte address 0x4 - core index']
  #allocation1 [shape = 'u32[72,128]{1,0:T(1,128)}', space=vmem, size = 0x9000, scoped, tag = 'internal scratch']
  %s0 = inlined_call_operand.vmem [shape: bf16[512,128], index: 0, kind: input, shape index: {}]
  %s1 = inlined_call_operand.vmem [shape: bf16[128,512], index: 1, kind: input, shape index: {}]
  %s2 = inlined_call_operand.vmem [shape: f32[1,512], index: 2, kind: input, shape index: {}]
  %s3 = inlined_call_operand.vmem [shape: f32[512,512], index: 3, kind: output, shape index: {}]
  %s4 = sld [smem:[#allocation0]]
  $region45: #{netG_forward.13} parent=0
    _
  %s6 = ssub.s32 1, %s4
  %s7 = scalar_select 0, %s6, %s4
  loop: start=0, step=1, limit=6
  $region2: #{netG_forward.13} parent=0 // loop_pre_header
    _
  $region3: #{netG_forward.13} parent=0 // loop_header
    %s9 = sphi 0, %s13
    %p10 = scmp.ge.s32.totalorder %s9, 6
    %s19 = sphi 0, %s21
    %s22 = sphi 0, %s19
    %s23 = sphi 0, %s22
    %s39 = sphi 0, %s23
    %s43 = sphi 0, %s43
    %s45 = sphi 0, %s43
    %s46 = sphi 0, %s45
    %s60 = sphi 0, %s46
    %s64 = sphi 0, %s64
    %s66 = sphi 0, %s64
    %s67 = sphi 0, %s66
    %s81 = sphi 0, %s67
    %s87 = sphi 0, %s89
    %s90 = sphi 0, %s87
    %s91 = sphi 0, %s90
    %s107 = sphi 0, %s91
  $region4: #{netG_forward.13} parent=0 // loop_header_branch
    %12 = sbr.rel (%p10) target = $region8
  $region5: #{netG_forward.13} parent=0 // loop_body
    %s14 = ssub.s32 %s9, 1
    %s15 = ssub.s32 %s9, 2
    %s16 = sadd.s32 %s9, 1
    %s17 = ssub.s32 %s9, %s16
    %p18 = scmp.eq.s32.totalorder %s17, 0
    %s20 = sadd.s32 %s19, 1
    %s21 = scalar_select %p18, %s19, %s20
    %p24 = pneg %p18
    %p25 = scmp.eq.s32.totalorder %s9, 3
    %p26 = por %p24, %p25
    %p27 = scmp.ne.s32.totalorder %s19, %s22
    %p28 = scmp.eq.s32.totalorder %s9, 0
    %p29 = por %p27, %p28
    %p30 = scmp.ne.s32.totalorder %s19, %s22
    %p31 = scmp.eq.s32.totalorder %s14, 3
    %p32 = por %p30, %p31
    %p33 = scmp.ne.s32.totalorder %s22, %s23
    %p34 = scmp.eq.s32.totalorder %s14, 0
    %p35 = por %p33, %p34
    %p36 = scmp.ne.s32.totalorder %s22, %s23
    %p37 = scmp.eq.s32.totalorder %s15, 3
    %p38 = por %p36, %p37
    %p40 = scmp.ne.s32.totalorder %s23, %s39
    %p41 = scmp.eq.s32.totalorder %s15, 0
    %p42 = por %p40, %p41
    %s44 = sadd.s32 %s43, 1
    %p47 = scmp.eq.s32.totalorder %s9, 3
    %p48 = scmp.ne.s32.totalorder %s43, %s45
    %p49 = scmp.eq.s32.totalorder %s9, 0
    %p50 = por %p48, %p49
    %p51 = scmp.ne.s32.totalorder %s43, %s45
    %p52 = scmp.eq.s32.totalorder %s14, 3
    %p53 = por %p51, %p52
    %p54 = scmp.ne.s32.totalorder %s45, %s46
    %p55 = scmp.eq.s32.totalorder %s14, 0
    %p56 = por %p54, %p55
    %p57 = scmp.ne.s32.totalorder %s45, %s46
    %p58 = scmp.eq.s32.totalorder %s15, 3
    %p59 = por %p57, %p58
    %p61 = scmp.ne.s32.totalorder %s46, %s60
    %p62 = scmp.eq.s32.totalorder %s15, 0
    %p63 = por %p61, %p62
    %s65 = sadd.s32 %s64, 1
    %p68 = scmp.eq.s32.totalorder %s9, 3
    %p69 = scmp.ne.s32.totalorder %s64, %s66
    %p70 = scmp.eq.s32.totalorder %s9, 0
    %p71 = por %p69, %p70
    %p72 = scmp.ne.s32.totalorder %s64, %s66
    %p73 = scmp.eq.s32.totalorder %s14, 3
    %p74 = por %p72, %p73
    %p75 = scmp.ne.s32.totalorder %s66, %s67
    %p76 = scmp.eq.s32.totalorder %s14, 0
    %p77 = por %p75, %p76
    %p78 = scmp.ne.s32.totalorder %s66, %s67
    %p79 = scmp.eq.s32.totalorder %s15, 3
    %p80 = por %p78, %p79
    %p82 = scmp.ne.s32.totalorder %s67, %s81
    %p83 = scmp.eq.s32.totalorder %s15, 0
    %p84 = por %p82, %p83
    %s85 = ssub.s32 %s9, %s16
    %p86 = scmp.eq.s32.totalorder %s85, 0
    %s88 = sadd.s32 %s87, 1
    %s89 = scalar_select %p86, %s87, %s88
    %p92 = pneg %p86
    %p93 = scmp.eq.s32.totalorder %s9, 3
    %p94 = por %p92, %p93
    %p95 = scmp.ne.s32.totalorder %s87, %s90
    %p96 = scmp.eq.s32.totalorder %s9, 0
    %p97 = por %p95, %p96
    %p98 = scmp.ne.s32.totalorder %s87, %s90
    %p99 = scmp.eq.s32.totalorder %s14, 3
    %p100 = por %p98, %p99
    %p101 = scmp.ne.s32.totalorder %s90, %s91
    %p102 = scmp.eq.s32.totalorder %s14, 0
    %p103 = por %p101, %p102
    %p104 = scmp.ne.s32.totalorder %s90, %s91
    %p105 = scmp.eq.s32.totalorder %s15, 3
    %p106 = por %p104, %p105
    %p108 = scmp.ne.s32.totalorder %s91, %s107
    %p109 = scmp.eq.s32.totalorder %s15, 0
    %p110 = por %p108, %p109
    %p111 = scmp.le.s32.totalorder 1, %s9
    %p112 = scmp.lt.s32.totalorder %s9, 5
    %p113 = pnand %p111, %p112
    %p114 = pneg %p113
    // Predicated region
    $region9: #{netG_forward.13} parent=5 // pred_check
      _
    $region10: #{netG_forward.13} parent=5 // pred_check_branch
      %116 = sbr.rel (%p113) target = $region12
    $region11: #{netG_forward.13} parent=5 // pred_region
      %s117 = ssub.s32 %s9, 1
      // Predicated region
      $region13: #{netG_forward.13} parent=11 // pred_check
        %p118 = pneg %p56
      $region14: #{netG_forward.13} parent=11 // pred_check_branch
        %120 = sbr.rel (%p118) target = $region16
      $region15: #{netG_forward.13} parent=11 // pred_region
        _
      $region16: #{netG_forward.13} parent=11 // pred_fallthru
        _
      // Predicated region
      $region17: #{netG_forward.13} parent=11 // pred_check
        %p121 = pneg %p77
      $region18: #{netG_forward.13} parent=11 // pred_check_branch
        %123 = sbr.rel (%p121) target = $region20
      $region19: #{netG_forward.13} parent=11 // pred_region
        _
      $region20: #{netG_forward.13} parent=11 // pred_fallthru
        _
    $region12: #{netG_forward.13} parent=5 // pred_fallthru
      _
    %p124 = scmp.lt.s32.totalorder %s9, 4
    // Predicated region
    $region21: #{netG_forward.13} parent=5 // pred_check
      %p125 = pneg %p124
    $region22: #{netG_forward.13} parent=5 // pred_check_branch
      %127 = sbr.rel (%p125) target = $region24
    $region23: #{netG_forward.13} parent=5 // pred_region
      // Predicated region
      $region25: #{netG_forward.13} parent=23 // pred_check
        %p128 = pneg %p29
      $region26: #{netG_forward.13} parent=23 // pred_check_branch
        %130 = sbr.rel (%p128) target = $region28
      $region27: #{netG_forward.13} parent=23 // pred_region
        %s131 = smul.u32 16, %s9
        %p132 = scmp.lt.s32.totalorder %s131, 63
        %s133 = scalar_select %p132, %s131, 63
        %s134 = smul.addr %s133, 4
        %s135 = scalar_lea.vmem %s0, %s134
        %s136 = smul.u32 16, %s9
      $region28: #{netG_forward.13} parent=23 // pred_fallthru
        _
    $region24: #{netG_forward.13} parent=5 // pred_fallthru
      _
    %p137 = scmp.le.s32.totalorder 1, %s9
    %p138 = scmp.lt.s32.totalorder %s9, 5
    %p139 = pnand %p137, %p138
    %p140 = pneg %p139
    // Predicated region
    $region29: #{netG_forward.13} parent=5 // pred_check
      _
    $region30: #{netG_forward.13} parent=5 // pred_check_branch
      %142 = sbr.rel (%p139) target = $region32
    $region31: #{netG_forward.13} parent=5 // pred_region
      %s143 = ssub.s32 %s9, 1
      %s144 = smul.u32 16, %s14
      %p145 = scmp.lt.s32.totalorder %s144, 63
      %s146 = scalar_select %p145, %s144, 63
      %s147 = smul.addr %s146, 4
      %s148 = scalar_lea.vmem %s0, %s147
      %p149 = pneg %p35
      %p150 = pneg %p32
      %p151 = pneg %p56
      %p152 = pneg %p53
      %p153 = pneg %p77
      %p154 = pneg %p74
      %p155 = pneg %p103
      %p156 = pneg %p100
      %s157 = smul.u32 16, %s14
      %p158 = scmp.lt.s32.totalorder %s157, 63
      %s159 = scalar_select %p158, %s157, 63
      %s160 = smul.addr %s159, 4
      %s161 = smul.addr %s160, 8
      %s162 = scalar_lea.vmem %s3, %s161
      %s163 = smul.u32 16, %s14
      %p164 = scmp.lt.s32.totalorder %s163, 63
      %s165 = scalar_select %p164, %s163, 63
      %s166 = smul.addr %s165, 4
      %s167 = scalar_lea.vmem %s0, %s166
      %s168 = smul.u32 16, %s14
      %s169 = smul.u32 16, %s14
      %p170 = scmp.lt.s32.totalorder %s169, 63
      %s171 = scalar_select %p170, %s169, 63
      %s172 = smul.addr %s171, 4
      %s173 = smul.addr %s172, 8
      %s174 = scalar_lea.vmem %s3, %s173
      %s175 = smul.u32 16, %s14
      %v176 = vld [vmem:[%s167] sm:$0xf]
      %v177 = vld [vmem:[%s167 + $0x4] sm:$0xf]
      %v178 = vld [vmem:[%s167 + $0x8] sm:$0xf]
      %v179 = vld [vmem:[%s167 + $0xc] sm:$0xf]
      %v180 = vld [vmem:[%s167 + $0x10] sm:$0xf]
      %v181 = vld [vmem:[%s167 + $0x14] sm:$0xf]
      %v182 = vld [vmem:[%s167 + $0x18] sm:$0xf]
      %v183 = vld [vmem:[%s167 + $0x1c] sm:$0xf]
      %v184 = vld [vmem:[%s167 + $0x20] sm:$0xf]
      %v185 = vld [vmem:[%s167 + $0x24] sm:$0xf]
      %v186 = vld [vmem:[%s167 + $0x28] sm:$0xf]
      %v187 = vld [vmem:[%s167 + $0x2c] sm:$0xf]
      %v188 = vld [vmem:[%s167 + $0x30] sm:$0xf]
      %v189 = vld [vmem:[%s167 + $0x34] sm:$0xf]
      %v190 = vld [vmem:[%s167 + $0x38] sm:$0xf]
      %v191 = vld [vmem:[%s167 + $0x3c] sm:$0xf]
      %v192 = vld [vmem:[%s1] sm:$0xff]
      %v193 = vld [vmem:[%s1 + $0x8] sm:$0xff]
      %v194 = vld [vmem:[%s1 + $0x10] sm:$0xff]
      %v195 = vld [vmem:[%s1 + $0x18] sm:$0xff]
      %v196 = vld [vmem:[%s1 + $0x20] sm:$0xff]
      %v197 = vld [vmem:[%s1 + $0x28] sm:$0xff]
      %v198 = vld [vmem:[%s1 + $0x30] sm:$0xff]
      %v199 = vld [vmem:[%s1 + $0x38] sm:$0xff]
      %v200 = vld [vmem:[%s1 + $0x40] sm:$0xff]
      %v201 = vld [vmem:[%s1 + $0x48] sm:$0xff]
      %v202 = vld [vmem:[%s1 + $0x50] sm:$0xff]
      %v203 = vld [vmem:[%s1 + $0x58] sm:$0xff]
      %v204 = vld [vmem:[%s1 + $0x60] sm:$0xff]
      %v205 = vld [vmem:[%s1 + $0x68] sm:$0xff]
      %v206 = vld [vmem:[%s1 + $0x70] sm:$0xff]
      %v207 = vld [vmem:[%s1 + $0x78] sm:$0xff]
      %v208 = vld [vmem:[%s1 + $0x80] sm:$0xff]
      %v209 = vld [vmem:[%s1 + $0x88] sm:$0xff]
      %v210 = vld [vmem:[%s1 + $0x90] sm:$0xff]
      %v211 = vld [vmem:[%s1 + $0x98] sm:$0xff]
      %v212 = vld [vmem:[%s1 + $0xa0] sm:$0xff]
      %v213 = vld [vmem:[%s1 + $0xa8] sm:$0xff]
      %v214 = vld [vmem:[%s1 + $0xb0] sm:$0xff]
      %v215 = vld [vmem:[%s1 + $0xb8] sm:$0xff]
      %v216 = vld [vmem:[%s1 + $0xc0] sm:$0xff]
      %v217 = vld [vmem:[%s1 + $0xc8] sm:$0xff]
      %v218 = vld [vmem:[%s1 + $0xd0] sm:$0xff]
      %v219 = vld [vmem:[%s1 + $0xd8] sm:$0xff]
      %v220 = vld [vmem:[%s1 + $0xe0] sm:$0xff]
      %v221 = vld [vmem:[%s1 + $0xe8] sm:$0xff]
      %v222 = vld [vmem:[%s1 + $0xf0] sm:$0xff]
      %v223 = vld [vmem:[%s1 + $0xf8] sm:$0xff]
      %v224 = vld [vmem:[%s2] sm:$0xf]
      %v226 = vperm.slane %v224, 0
      %v227 = vperm.slane %v224, 1
      %v228 = vperm.slane %v224, 2
      %v229 = vperm.slane %v224, 3
      %v250 = vunpack.c.l.b16 %v176
      %v251 = vunpack.c.l.b16 %v177
      %v252 = vunpack.c.l.b16 %v178
      %v253 = vunpack.c.l.b16 %v179
      %v254 = vunpack.c.l.b16 %v180
      %v255 = vunpack.c.l.b16 %v181
      %v256 = vunpack.c.l.b16 %v182
      %v257 = vunpack.c.l.b16 %v183
      %v258 = vunpack.c.l.b16 %v184
      %v259 = vunpack.c.l.b16 %v185
      %v260 = vunpack.c.l.b16 %v186
      %v261 = vunpack.c.l.b16 %v187
      %v262 = vunpack.c.l.b16 %v188
      %v263 = vunpack.c.l.b16 %v189
      %v264 = vunpack.c.l.b16 %v190
      %v265 = vunpack.c.l.b16 %v191
      %v266 = vpack.c.b16 %v251, %v250
      %v267 = vpack.c.b16 %v253, %v252
      %v268 = vpack.c.b16 %v255, %v254
      %v269 = vpack.c.b16 %v257, %v256
      %v270 = vpack.c.b16 %v259, %v258
      %v271 = vpack.c.b16 %v261, %v260
      %v272 = vpack.c.b16 %v263, %v262
      %v273 = vpack.c.b16 %v265, %v264
      %v314 = vunpack.c.l.b16 %v192
      %v315 = vunpack.c.h.b16 %v192
      %v316 = vunpack.c.l.b16 %v193
      %v317 = vunpack.c.h.b16 %v193
      %v318 = vunpack.c.l.b16 %v194
      %v319 = vunpack.c.h.b16 %v194
      %v320 = vunpack.c.l.b16 %v195
      %v321 = vunpack.c.h.b16 %v195
      %v322 = vunpack.c.l.b16 %v196
      %v323 = vunpack.c.h.b16 %v196
      %v324 = vunpack.c.l.b16 %v197
      %v325 = vunpack.c.h.b16 %v197
      %v326 = vunpack.c.l.b16 %v198
      %v327 = vunpack.c.h.b16 %v198
      %v328 = vunpack.c.l.b16 %v199
      %v329 = vunpack.c.h.b16 %v199
      %v330 = vunpack.c.l.b16 %v200
      %v331 = vunpack.c.h.b16 %v200
      %v332 = vunpack.c.l.b16 %v201
      %v333 = vunpack.c.h.b16 %v201
      %v334 = vunpack.c.l.b16 %v202
      %v335 = vunpack.c.h.b16 %v202
      %v336 = vunpack.c.l.b16 %v203
      %v337 = vunpack.c.h.b16 %v203
      %v338 = vunpack.c.l.b16 %v204
      %v339 = vunpack.c.h.b16 %v204
      %v340 = vunpack.c.l.b16 %v205
      %v341 = vunpack.c.h.b16 %v205
      %v342 = vunpack.c.l.b16 %v206
      %v343 = vunpack.c.h.b16 %v206
      %v344 = vunpack.c.l.b16 %v207
      %v345 = vunpack.c.h.b16 %v207
      %v346 = vunpack.c.l.b16 %v208
      %v347 = vunpack.c.h.b16 %v208
      %v348 = vunpack.c.l.b16 %v209
      %v349 = vunpack.c.h.b16 %v209
      %v350 = vunpack.c.l.b16 %v210
      %v351 = vunpack.c.h.b16 %v210
      %v352 = vunpack.c.l.b16 %v211
      %v353 = vunpack.c.h.b16 %v211
      %v354 = vunpack.c.l.b16 %v212
      %v355 = vunpack.c.h.b16 %v212
      %v356 = vunpack.c.l.b16 %v213
      %v357 = vunpack.c.h.b16 %v213
      %v358 = vunpack.c.l.b16 %v214
      %v359 = vunpack.c.h.b16 %v214
      %v360 = vunpack.c.l.b16 %v215
      %v361 = vunpack.c.h.b16 %v215
      %v362 = vunpack.c.l.b16 %v216
      %v363 = vunpack.c.h.b16 %v216
      %v364 = vunpack.c.l.b16 %v217
      %v365 = vunpack.c.h.b16 %v217
      %v366 = vunpack.c.l.b16 %v218
      %v367 = vunpack.c.h.b16 %v218
      %v368 = vunpack.c.l.b16 %v219
      %v369 = vunpack.c.h.b16 %v219
      %v370 = vunpack.c.l.b16 %v220
      %v371 = vunpack.c.h.b16 %v220
      %v372 = vunpack.c.l.b16 %v221
      %v373 = vunpack.c.h.b16 %v221
      %v374 = vunpack.c.l.b16 %v222
      %v375 = vunpack.c.h.b16 %v222
      %v376 = vunpack.c.l.b16 %v223
      %v377 = vunpack.c.h.b16 %v223
      %v378 = vpack.c.b16 %v318, %v314
      %v379 = vpack.c.b16 %v319, %v315
      %v380 = vpack.c.b16 %v320, %v316
      %v381 = vpack.c.b16 %v321, %v317
      %v382 = vpack.c.b16 %v326, %v322
      %v383 = vpack.c.b16 %v327, %v323
      %v384 = vpack.c.b16 %v328, %v324
      %v385 = vpack.c.b16 %v329, %v325
      %v386 = vpack.c.b16 %v334, %v330
      %v387 = vpack.c.b16 %v335, %v331
      %v388 = vpack.c.b16 %v336, %v332
      %v389 = vpack.c.b16 %v337, %v333
      %v390 = vpack.c.b16 %v342, %v338
      %v391 = vpack.c.b16 %v343, %v339
      %v392 = vpack.c.b16 %v344, %v340
      %v393 = vpack.c.b16 %v345, %v341
      %v394 = vpack.c.b16 %v350, %v346
      %v395 = vpack.c.b16 %v351, %v347
      %v396 = vpack.c.b16 %v352, %v348
      %v397 = vpack.c.b16 %v353, %v349
      %v398 = vpack.c.b16 %v358, %v354
      %v399 = vpack.c.b16 %v359, %v355
      %v400 = vpack.c.b16 %v360, %v356
      %v401 = vpack.c.b16 %v361, %v357
      %v402 = vpack.c.b16 %v366, %v362
      %v403 = vpack.c.b16 %v367, %v363
      %v404 = vpack.c.b16 %v368, %v364
      %v405 = vpack.c.b16 %v369, %v365
      %v406 = vpack.c.b16 %v374, %v370
      %v407 = vpack.c.b16 %v375, %v371
      %v408 = vpack.c.b16 %v376, %v372
      %v409 = vpack.c.b16 %v377, %v373
      %442 = vmatpush.bf16.msra.mxu0 %v406
      %443 = vmatpush.bf16.msra.mxu0 %v402
      %444 = vmatpush.bf16.msra.mxu0 %v398
      %445 = vmatpush.bf16.msra.mxu0 %v394
      %446 = vmatpush.bf16.msra.mxu0 %v390
      %447 = vmatpush.bf16.msra.mxu0 %v386
      %448 = vmatpush.bf16.msra.mxu0 %v382
      %449 = vmatpush.bf16.msra.mxu0 %v378
      %450 = vmatmul.bf16.gmra.mxu0 %v266
      %v451 = vpop.f32.mrf.mxu0
      %v452 = vadd.f32 %v226, %v451
      %v453 = vpop.f32.mrf.mxu0
      %v454 = vadd.f32 %v226, %v453
      %455 = vmatmul.bf16.gmra.mxu0 %v267
      %v456 = vpop.f32.mrf.mxu0
      %v457 = vadd.f32 %v226, %v456
      %v458 = vpop.f32.mrf.mxu0
      %v459 = vadd.f32 %v226, %v458
      %460 = vmatmul.bf16.gmra.mxu0 %v268
      %v461 = vpop.f32.mrf.mxu0
      %v462 = vadd.f32 %v226, %v461
      %v463 = vpop.f32.mrf.mxu0
      %v464 = vadd.f32 %v226, %v463
      %465 = vmatmul.bf16.gmra.mxu0 %v269
      %v466 = vpop.f32.mrf.mxu0
      %v467 = vadd.f32 %v226, %v466
      %v468 = vpop.f32.mrf.mxu0
      %v469 = vadd.f32 %v226, %v468
      %470 = vmatmul.bf16.gmra.mxu0 %v270
      %v471 = vpop.f32.mrf.mxu0
      %v472 = vadd.f32 %v226, %v471
      %v473 = vpop.f32.mrf.mxu0
      %v474 = vadd.f32 %v226, %v473
      %475 = vmatmul.bf16.gmra.mxu0 %v271
      %v476 = vpop.f32.mrf.mxu0
      %v477 = vadd.f32 %v226, %v476
      %v478 = vpop.f32.mrf.mxu0
      %v479 = vadd.f32 %v226, %v478
      %480 = vmatmul.bf16.gmra.mxu0 %v272
      %v481 = vpop.f32.mrf.mxu0
      %v482 = vadd.f32 %v226, %v481
      %v483 = vpop.f32.mrf.mxu0
      %v484 = vadd.f32 %v226, %v483
      %485 = vmatmul.bf16.gmra.mxu0 %v273
      %v486 = vpop.f32.mrf.mxu0
      %v487 = vadd.f32 %v226, %v486
      %v488 = vpop.f32.mrf.mxu0
      %v489 = vadd.f32 %v226, %v488
      %490 = vdwg.mxu0
      %491 = vmatpush.bf16.msra.mxu0 %v407
      %492 = vmatpush.bf16.msra.mxu0 %v403
      %493 = vmatpush.bf16.msra.mxu0 %v399
      %494 = vmatpush.bf16.msra.mxu0 %v395
      %495 = vmatpush.bf16.msra.mxu0 %v391
      %496 = vmatpush.bf16.msra.mxu0 %v387
      %497 = vmatpush.bf16.msra.mxu0 %v383
      %498 = vmatpush.bf16.msra.mxu0 %v379
      %499 = vmatmul.bf16.gmra.mxu0 %v266
      %v500 = vpop.f32.mrf.mxu0
      %v501 = vadd.f32 %v227, %v500
      %v502 = vpop.f32.mrf.mxu0
      %v503 = vadd.f32 %v227, %v502
      %504 = vmatmul.bf16.gmra.mxu0 %v267
      %v505 = vpop.f32.mrf.mxu0
      %v506 = vadd.f32 %v227, %v505
      %v507 = vpop.f32.mrf.mxu0
      %v508 = vadd.f32 %v227, %v507
      %509 = vmatmul.bf16.gmra.mxu0 %v268
      %v510 = vpop.f32.mrf.mxu0
      %v511 = vadd.f32 %v227, %v510
      %v512 = vpop.f32.mrf.mxu0
      %v513 = vadd.f32 %v227, %v512
      %514 = vmatmul.bf16.gmra.mxu0 %v269
      %v515 = vpop.f32.mrf.mxu0
      %v516 = vadd.f32 %v227, %v515
      %v517 = vpop.f32.mrf.mxu0
      %v518 = vadd.f32 %v227, %v517
      %519 = vmatmul.bf16.gmra.mxu0 %v270
      %v520 = vpop.f32.mrf.mxu0
      %v521 = vadd.f32 %v227, %v520
      %v522 = vpop.f32.mrf.mxu0
      %v523 = vadd.f32 %v227, %v522
      %524 = vmatmul.bf16.gmra.mxu0 %v271
      %v525 = vpop.f32.mrf.mxu0
      %v526 = vadd.f32 %v227, %v525
      %v527 = vpop.f32.mrf.mxu0
      %v528 = vadd.f32 %v227, %v527
      %529 = vmatmul.bf16.gmra.mxu0 %v272
      %v530 = vpop.f32.mrf.mxu0
      %v531 = vadd.f32 %v227, %v530
      %v532 = vpop.f32.mrf.mxu0
      %v533 = vadd.f32 %v227, %v532
      %534 = vmatmul.bf16.gmra.mxu0 %v273
      %v535 = vpop.f32.mrf.mxu0
      %v536 = vadd.f32 %v227, %v535
      %v537 = vpop.f32.mrf.mxu0
      %v538 = vadd.f32 %v227, %v537
      %539 = vdwg.mxu0
      %540 = vmatpush.bf16.msra.mxu0 %v408
      %541 = vmatpush.bf16.msra.mxu0 %v404
      %542 = vmatpush.bf16.msra.mxu0 %v400
      %543 = vmatpush.bf16.msra.mxu0 %v396
      %544 = vmatpush.bf16.msra.mxu0 %v392
      %545 = vmatpush.bf16.msra.mxu0 %v388
      %546 = vmatpush.bf16.msra.mxu0 %v384
      %547 = vmatpush.bf16.msra.mxu0 %v380
      %548 = vmatmul.bf16.gmra.mxu0 %v266
      %v549 = vpop.f32.mrf.mxu0
      %v550 = vadd.f32 %v228, %v549
      %v551 = vpop.f32.mrf.mxu0
      %v552 = vadd.f32 %v228, %v551
      %553 = vmatmul.bf16.gmra.mxu0 %v267
      %v554 = vpop.f32.mrf.mxu0
      %v555 = vadd.f32 %v228, %v554
      %v556 = vpop.f32.mrf.mxu0
      %v557 = vadd.f32 %v228, %v556
      %558 = vmatmul.bf16.gmra.mxu0 %v268
      %v559 = vpop.f32.mrf.mxu0
      %v560 = vadd.f32 %v228, %v559
      %v561 = vpop.f32.mrf.mxu0
      %v562 = vadd.f32 %v228, %v561
      %563 = vmatmul.bf16.gmra.mxu0 %v269
      %v564 = vpop.f32.mrf.mxu0
      %v565 = vadd.f32 %v228, %v564
      %v566 = vpop.f32.mrf.mxu0
      %v567 = vadd.f32 %v228, %v566
      %568 = vmatmul.bf16.gmra.mxu0 %v270
      %v569 = vpop.f32.mrf.mxu0
      %v570 = vadd.f32 %v228, %v569
      %v571 = vpop.f32.mrf.mxu0
      %v572 = vadd.f32 %v228, %v571
      %573 = vmatmul.bf16.gmra.mxu0 %v271
      %v574 = vpop.f32.mrf.mxu0
      %v575 = vadd.f32 %v228, %v574
      %v576 = vpop.f32.mrf.mxu0
      %v577 = vadd.f32 %v228, %v576
      %578 = vmatmul.bf16.gmra.mxu0 %v272
      %v579 = vpop.f32.mrf.mxu0
      %v580 = vadd.f32 %v228, %v579
      %v581 = vpop.f32.mrf.mxu0
      %v582 = vadd.f32 %v228, %v581
      %583 = vmatmul.bf16.gmra.mxu0 %v273
      %v584 = vpop.f32.mrf.mxu0
      %v585 = vadd.f32 %v228, %v584
      %v586 = vpop.f32.mrf.mxu0
      %v587 = vadd.f32 %v228, %v586
      %588 = vdwg.mxu0
      %589 = vmatpush.bf16.msra.mxu0 %v409
      %590 = vmatpush.bf16.msra.mxu0 %v405
      %591 = vmatpush.bf16.msra.mxu0 %v401
      %592 = vmatpush.bf16.msra.mxu0 %v397
      %593 = vmatpush.bf16.msra.mxu0 %v393
      %594 = vmatpush.bf16.msra.mxu0 %v389
      %595 = vmatpush.bf16.msra.mxu0 %v385
      %596 = vmatpush.bf16.msra.mxu0 %v381
      %597 = vmatmul.bf16.gmra.mxu0 %v266
      %v598 = vpop.f32.mrf.mxu0
      %v599 = vadd.f32 %v229, %v598
      %v600 = vpop.f32.mrf.mxu0
      %v601 = vadd.f32 %v229, %v600
      %602 = vmatmul.bf16.gmra.mxu0 %v267
      %v603 = vpop.f32.mrf.mxu0
      %v604 = vadd.f32 %v229, %v603
      %v605 = vpop.f32.mrf.mxu0
      %v606 = vadd.f32 %v229, %v605
      %607 = vmatmul.bf16.gmra.mxu0 %v268
      %v608 = vpop.f32.mrf.mxu0
      %v609 = vadd.f32 %v229, %v608
      %v610 = vpop.f32.mrf.mxu0
      %v611 = vadd.f32 %v229, %v610
      %612 = vmatmul.bf16.gmra.mxu0 %v269
      %v613 = vpop.f32.mrf.mxu0
      %v614 = vadd.f32 %v229, %v613
      %v615 = vpop.f32.mrf.mxu0
      %v616 = vadd.f32 %v229, %v615
      %617 = vmatmul.bf16.gmra.mxu0 %v270
      %v618 = vpop.f32.mrf.mxu0
      %v619 = vadd.f32 %v229, %v618
      %v620 = vpop.f32.mrf.mxu0
      %v621 = vadd.f32 %v229, %v620
      %622 = vmatmul.bf16.gmra.mxu0 %v271
      %v623 = vpop.f32.mrf.mxu0
      %v624 = vadd.f32 %v229, %v623
      %v625 = vpop.f32.mrf.mxu0
      %v626 = vadd.f32 %v229, %v625
      %627 = vmatmul.bf16.gmra.mxu0 %v272
      %v628 = vpop.f32.mrf.mxu0
      %v629 = vadd.f32 %v229, %v628
      %v630 = vpop.f32.mrf.mxu0
      %v631 = vadd.f32 %v229, %v630
      %632 = vmatmul.bf16.gmra.mxu0 %v273
      %v633 = vpop.f32.mrf.mxu0
      %v634 = vadd.f32 %v229, %v633
      %v635 = vpop.f32.mrf.mxu0
      %v636 = vadd.f32 %v229, %v635
      %637 = vdwg.mxu0
      %638 = vst [vmem:[%s174] sm:$0xff] %v452
      %639 = vst [vmem:[%s174 + $0x8] sm:$0xff] %v501
      %640 = vst [vmem:[%s174 + $0x10] sm:$0xff] %v550
      %641 = vst [vmem:[%s174 + $0x18] sm:$0xff] %v599
      %642 = vst [vmem:[%s174 + $0x20] sm:$0xff] %v454
      %643 = vst [vmem:[%s174 + $0x28] sm:$0xff] %v503
      %644 = vst [vmem:[%s174 + $0x30] sm:$0xff] %v552
      %645 = vst [vmem:[%s174 + $0x38] sm:$0xff] %v601
      %646 = vst [vmem:[%s174 + $0x40] sm:$0xff] %v457
      %647 = vst [vmem:[%s174 + $0x48] sm:$0xff] %v506
      %648 = vst [vmem:[%s174 + $0x50] sm:$0xff] %v555
      %649 = vst [vmem:[%s174 + $0x58] sm:$0xff] %v604
      %650 = vst [vmem:[%s174 + $0x60] sm:$0xff] %v459
      %651 = vst [vmem:[%s174 + $0x68] sm:$0xff] %v508
      %652 = vst [vmem:[%s174 + $0x70] sm:$0xff] %v557
      %653 = vst [vmem:[%s174 + $0x78] sm:$0xff] %v606
      %654 = vst [vmem:[%s174 + $0x80] sm:$0xff] %v462
      %655 = vst [vmem:[%s174 + $0x88] sm:$0xff] %v511
      %656 = vst [vmem:[%s174 + $0x90] sm:$0xff] %v560
      %657 = vst [vmem:[%s174 + $0x98] sm:$0xff] %v609
      %658 = vst [vmem:[%s174 + $0xa0] sm:$0xff] %v464
      %659 = vst [vmem:[%s174 + $0xa8] sm:$0xff] %v513
      %660 = vst [vmem:[%s174 + $0xb0] sm:$0xff] %v562
      %661 = vst [vmem:[%s174 + $0xb8] sm:$0xff] %v611
      %662 = vst [vmem:[%s174 + $0xc0] sm:$0xff] %v467
      %663 = vst [vmem:[%s174 + $0xc8] sm:$0xff] %v516
      %664 = vst [vmem:[%s174 + $0xd0] sm:$0xff] %v565
      %665 = vst [vmem:[%s174 + $0xd8] sm:$0xff] %v614
      %666 = vst [vmem:[%s174 + $0xe0] sm:$0xff] %v469
      %667 = vst [vmem:[%s174 + $0xe8] sm:$0xff] %v518
      %668 = vst [vmem:[%s174 + $0xf0] sm:$0xff] %v567
      %669 = vst [vmem:[%s174 + $0xf8] sm:$0xff] %v616
      %670 = vst [vmem:[%s174 + $0x100] sm:$0xff] %v472
      %671 = vst [vmem:[%s174 + $0x108] sm:$0xff] %v521
      %672 = vst [vmem:[%s174 + $0x110] sm:$0xff] %v570
      %673 = vst [vmem:[%s174 + $0x118] sm:$0xff] %v619
      %674 = vst [vmem:[%s174 + $0x120] sm:$0xff] %v474
      %675 = vst [vmem:[%s174 + $0x128] sm:$0xff] %v523
      %676 = vst [vmem:[%s174 + $0x130] sm:$0xff] %v572
      %677 = vst [vmem:[%s174 + $0x138] sm:$0xff] %v621
      %678 = vst [vmem:[%s174 + $0x140] sm:$0xff] %v477
      %679 = vst [vmem:[%s174 + $0x148] sm:$0xff] %v526
      %680 = vst [vmem:[%s174 + $0x150] sm:$0xff] %v575
      %681 = vst [vmem:[%s174 + $0x158] sm:$0xff] %v624
      %682 = vst [vmem:[%s174 + $0x160] sm:$0xff] %v479
      %683 = vst [vmem:[%s174 + $0x168] sm:$0xff] %v528
      %684 = vst [vmem:[%s174 + $0x170] sm:$0xff] %v577
      %685 = vst [vmem:[%s174 + $0x178] sm:$0xff] %v626
      %686 = vst [vmem:[%s174 + $0x180] sm:$0xff] %v482
      %687 = vst [vmem:[%s174 + $0x188] sm:$0xff] %v531
      %688 = vst [vmem:[%s174 + $0x190] sm:$0xff] %v580
      %689 = vst [vmem:[%s174 + $0x198] sm:$0xff] %v629
      %690 = vst [vmem:[%s174 + $0x1a0] sm:$0xff] %v484
      %691 = vst [vmem:[%s174 + $0x1a8] sm:$0xff] %v533
      %692 = vst [vmem:[%s174 + $0x1b0] sm:$0xff] %v582
      %693 = vst [vmem:[%s174 + $0x1b8] sm:$0xff] %v631
      %694 = vst [vmem:[%s174 + $0x1c0] sm:$0xff] %v487
      %695 = vst [vmem:[%s174 + $0x1c8] sm:$0xff] %v536
      %696 = vst [vmem:[%s174 + $0x1d0] sm:$0xff] %v585
      %697 = vst [vmem:[%s174 + $0x1d8] sm:$0xff] %v634
      %698 = vst [vmem:[%s174 + $0x1e0] sm:$0xff] %v489
      %699 = vst [vmem:[%s174 + $0x1e8] sm:$0xff] %v538
      %700 = vst [vmem:[%s174 + $0x1f0] sm:$0xff] %v587
      %701 = vst [vmem:[%s174 + $0x1f8] sm:$0xff] %v636
      %s702 = smul.u32 16, %s14
      %p703 = scmp.lt.s32.totalorder %s702, 63
      %s704 = scalar_select %p703, %s702, 63
      %s705 = smul.addr %s704, 4
      %s706 = smul.addr %s705, 8
      %s707 = scalar_lea.vmem %s3, %s706
      // Predicated region
      $region33: #{netG_forward.13} parent=31 // pred_check
        %p708 = pneg %p100
      $region34: #{netG_forward.13} parent=31 // pred_check_branch
        %710 = sbr.rel (%p708) target = $region36
      $region35: #{netG_forward.13} parent=31 // pred_region
        %s711 = smul.u32 16, %s14
      $region36: #{netG_forward.13} parent=31 // pred_fallthru
        _
    $region32: #{netG_forward.13} parent=5 // pred_fallthru
      _
    %p712 = scmp.le.s32.totalorder 2, %s9
    // Predicated region
    $region37: #{netG_forward.13} parent=5 // pred_check
      %p713 = pneg %p712
    $region38: #{netG_forward.13} parent=5 // pred_check_branch
      %715 = sbr.rel (%p713) target = $region40
    $region39: #{netG_forward.13} parent=5 // pred_region
      %s716 = ssub.s32 %s9, 2
      // Predicated region
      $region41: #{netG_forward.13} parent=39 // pred_check
        %p717 = pneg %p106
      $region42: #{netG_forward.13} parent=39 // pred_check_branch
        %719 = sbr.rel (%p717) target = $region44
      $region43: #{netG_forward.13} parent=39 // pred_region
        %s720 = smul.u32 16, %s15
        %p721 = scmp.lt.s32.totalorder %s720, 63
        %s722 = scalar_select %p721, %s720, 63
        %s723 = smul.addr %s722, 4
        %s724 = smul.addr %s723, 8
        %s725 = scalar_lea.vmem %s3, %s724
      $region44: #{netG_forward.13} parent=39 // pred_fallthru
        _
    $region40: #{netG_forward.13} parent=5 // pred_fallthru
      _
  $region6: #{netG_forward.13} parent=0 // loop_footer
    %s13 = sadd.s32 1, %s9
  $region7: #{netG_forward.13} parent=0 // loop_footer_branch
    %8 = sbr.rel target = $region3
  $region8: #{netG_forward.13} parent=0 // loop_exit
    _

// kernel: netG_forward.15
$region0: #{netG_forward.15}
  #allocation0 [shape = 'u32[]', space=smem, size = 0x4, offset = 0x4, fixed_abs, tag = 'smem constant byte address 0x4 - core index']
  #allocation1 [shape = 'u32[72,128]{1,0:T(1,128)}', space=vmem, size = 0x9000, scoped, tag = 'internal scratch']
  %s0 = inlined_call_operand.vmem [shape: bf16[8192,128], index: 0, kind: input, shape index: {}]
  %s1 = inlined_call_operand.vmem [shape: bf16[128,128], index: 1, kind: input, shape index: {}]
  %s2 = inlined_call_operand.vmem [shape: f32[1,128], index: 2, kind: input, shape index: {}]
  %s3 = inlined_call_operand.vmem [shape: f32[8192,128], index: 3, kind: output, shape index: {}]
  %s4 = sld [smem:[#allocation0]]
  $region45: #{netG_forward.15} parent=0
    _
  %s6 = ssub.s32 1, %s4
  %s7 = scalar_select 0, %s6, %s4
  loop: start=0, step=1, limit=18
  $region2: #{netG_forward.15} parent=0 // loop_pre_header
    _
  $region3: #{netG_forward.15} parent=0 // loop_header
    %s9 = sphi 0, %s13
    %p10 = scmp.ge.s32.totalorder %s9, 18
    %s19 = sphi 0, %s21
    %s22 = sphi 0, %s19
    %s23 = sphi 0, %s22
    %s39 = sphi 0, %s23
    %s43 = sphi 0, %s43
    %s45 = sphi 0, %s43
    %s46 = sphi 0, %s45
    %s60 = sphi 0, %s46
    %s64 = sphi 0, %s64
    %s66 = sphi 0, %s64
    %s67 = sphi 0, %s66
    %s81 = sphi 0, %s67
    %s87 = sphi 0, %s89
    %s90 = sphi 0, %s87
    %s91 = sphi 0, %s90
    %s107 = sphi 0, %s91
  $region4: #{netG_forward.15} parent=0 // loop_header_branch
    %12 = sbr.rel (%p10) target = $region8
  $region5: #{netG_forward.15} parent=0 // loop_body
    %s14 = ssub.s32 %s9, 1
    %s15 = ssub.s32 %s9, 2
    %s16 = sadd.s32 %s9, 1
    %s17 = ssub.s32 %s9, %s16
    %p18 = scmp.eq.s32.totalorder %s17, 0
    %s20 = sadd.s32 %s19, 1
    %s21 = scalar_select %p18, %s19, %s20
    %p24 = pneg %p18
    %p25 = scmp.eq.s32.totalorder %s9, 15
    %p26 = por %p24, %p25
    %p27 = scmp.ne.s32.totalorder %s19, %s22
    %p28 = scmp.eq.s32.totalorder %s9, 0
    %p29 = por %p27, %p28
    %p30 = scmp.ne.s32.totalorder %s19, %s22
    %p31 = scmp.eq.s32.totalorder %s14, 15
    %p32 = por %p30, %p31
    %p33 = scmp.ne.s32.totalorder %s22, %s23
    %p34 = scmp.eq.s32.totalorder %s14, 0
    %p35 = por %p33, %p34
    %p36 = scmp.ne.s32.totalorder %s22, %s23
    %p37 = scmp.eq.s32.totalorder %s15, 15
    %p38 = por %p36, %p37
    %p40 = scmp.ne.s32.totalorder %s23, %s39
    %p41 = scmp.eq.s32.totalorder %s15, 0
    %p42 = por %p40, %p41
    %s44 = sadd.s32 %s43, 1
    %p47 = scmp.eq.s32.totalorder %s9, 15
    %p48 = scmp.ne.s32.totalorder %s43, %s45
    %p49 = scmp.eq.s32.totalorder %s9, 0
    %p50 = por %p48, %p49
    %p51 = scmp.ne.s32.totalorder %s43, %s45
    %p52 = scmp.eq.s32.totalorder %s14, 15
    %p53 = por %p51, %p52
    %p54 = scmp.ne.s32.totalorder %s45, %s46
    %p55 = scmp.eq.s32.totalorder %s14, 0
    %p56 = por %p54, %p55
    %p57 = scmp.ne.s32.totalorder %s45, %s46
    %p58 = scmp.eq.s32.totalorder %s15, 15
    %p59 = por %p57, %p58
    %p61 = scmp.ne.s32.totalorder %s46, %s60
    %p62 = scmp.eq.s32.totalorder %s15, 0
    %p63 = por %p61, %p62
    %s65 = sadd.s32 %s64, 1
    %p68 = scmp.eq.s32.totalorder %s9, 15
    %p69 = scmp.ne.s32.totalorder %s64, %s66
    %p70 = scmp.eq.s32.totalorder %s9, 0
    %p71 = por %p69, %p70
    %p72 = scmp.ne.s32.totalorder %s64, %s66
    %p73 = scmp.eq.s32.totalorder %s14, 15
    %p74 = por %p72, %p73
    %p75 = scmp.ne.s32.totalorder %s66, %s67
    %p76 = scmp.eq.s32.totalorder %s14, 0
    %p77 = por %p75, %p76
    %p78 = scmp.ne.s32.totalorder %s66, %s67
    %p79 = scmp.eq.s32.totalorder %s15, 15
    %p80 = por %p78, %p79
    %p82 = scmp.ne.s32.totalorder %s67, %s81
    %p83 = scmp.eq.s32.totalorder %s15, 0
    %p84 = por %p82, %p83
    %s85 = ssub.s32 %s9, %s16
    %p86 = scmp.eq.s32.totalorder %s85, 0
    %s88 = sadd.s32 %s87, 1
    %s89 = scalar_select %p86, %s87, %s88
    %p92 = pneg %p86
    %p93 = scmp.eq.s32.totalorder %s9, 15
    %p94 = por %p92, %p93
    %p95 = scmp.ne.s32.totalorder %s87, %s90
    %p96 = scmp.eq.s32.totalorder %s9, 0
    %p97 = por %p95, %p96
    %p98 = scmp.ne.s32.totalorder %s87, %s90
    %p99 = scmp.eq.s32.totalorder %s14, 15
    %p100 = por %p98, %p99
    %p101 = scmp.ne.s32.totalorder %s90, %s91
    %p102 = scmp.eq.s32.totalorder %s14, 0
    %p103 = por %p101, %p102
    %p104 = scmp.ne.s32.totalorder %s90, %s91
    %p105 = scmp.eq.s32.totalorder %s15, 15
    %p106 = por %p104, %p105
    %p108 = scmp.ne.s32.totalorder %s91, %s107
    %p109 = scmp.eq.s32.totalorder %s15, 0
    %p110 = por %p108, %p109
    %p111 = scmp.le.s32.totalorder 1, %s9
    %p112 = scmp.lt.s32.totalorder %s9, 17
    %p113 = pnand %p111, %p112
    %p114 = pneg %p113
    // Predicated region
    $region9: #{netG_forward.15} parent=5 // pred_check
      _
    $region10: #{netG_forward.15} parent=5 // pred_check_branch
      %116 = sbr.rel (%p113) target = $region12
    $region11: #{netG_forward.15} parent=5 // pred_region
      %s117 = ssub.s32 %s9, 1
      // Predicated region
      $region13: #{netG_forward.15} parent=11 // pred_check
        %p118 = pneg %p56
      $region14: #{netG_forward.15} parent=11 // pred_check_branch
        %120 = sbr.rel (%p118) target = $region16
      $region15: #{netG_forward.15} parent=11 // pred_region
        _
      $region16: #{netG_forward.15} parent=11 // pred_fallthru
        _
      // Predicated region
      $region17: #{netG_forward.15} parent=11 // pred_check
        %p121 = pneg %p77
      $region18: #{netG_forward.15} parent=11 // pred_check_branch
        %123 = sbr.rel (%p121) target = $region20
      $region19: #{netG_forward.15} parent=11 // pred_region
        _
      $region20: #{netG_forward.15} parent=11 // pred_fallthru
        _
    $region12: #{netG_forward.15} parent=5 // pred_fallthru
      _
    %p124 = scmp.lt.s32.totalorder %s9, 16
    // Predicated region
    $region21: #{netG_forward.15} parent=5 // pred_check
      %p125 = pneg %p124
    $region22: #{netG_forward.15} parent=5 // pred_check_branch
      %127 = sbr.rel (%p125) target = $region24
    $region23: #{netG_forward.15} parent=5 // pred_region
      // Predicated region
      $region25: #{netG_forward.15} parent=23 // pred_check
        %p128 = pneg %p29
      $region26: #{netG_forward.15} parent=23 // pred_check_branch
        %130 = sbr.rel (%p128) target = $region28
      $region27: #{netG_forward.15} parent=23 // pred_region
        %s131 = smul.u32 64, %s9
        %p132 = scmp.lt.s32.totalorder %s131, 1023
        %s133 = scalar_select %p132, %s131, 1023
        %s134 = smul.addr %s133, 4
        %s135 = scalar_lea.vmem %s0, %s134
        %s136 = smul.u32 64, %s9
      $region28: #{netG_forward.15} parent=23 // pred_fallthru
        _
    $region24: #{netG_forward.15} parent=5 // pred_fallthru
      _
    %p137 = scmp.le.s32.totalorder 1, %s9
    %p138 = scmp.lt.s32.totalorder %s9, 17
    %p139 = pnand %p137, %p138
    %p140 = pneg %p139
    // Predicated region
    $region29: #{netG_forward.15} parent=5 // pred_check
      _
    $region30: #{netG_forward.15} parent=5 // pred_check_branch
      %142 = sbr.rel (%p139) target = $region32
    $region31: #{netG_forward.15} parent=5 // pred_region
      %s143 = ssub.s32 %s9, 1
      %s144 = smul.u32 64, %s14
      %p145 = scmp.lt.s32.totalorder %s144, 1023
      %s146 = scalar_select %p145, %s144, 1023
      %s147 = smul.addr %s146, 4
      %s148 = scalar_lea.vmem %s0, %s147
      %p149 = pneg %p35
      %p150 = pneg %p32
      %p151 = pneg %p56
      %p152 = pneg %p53
      %p153 = pneg %p77
      %p154 = pneg %p74
      %p155 = pneg %p103
      %p156 = pneg %p100
      %s157 = smul.u32 64, %s14
      %p158 = scmp.lt.s32.totalorder %s157, 1023
      %s159 = scalar_select %p158, %s157, 1023
      %s160 = smul.addr %s159, 8
      %s161 = scalar_lea.vmem %s3, %s160
      %s162 = smul.u32 64, %s14
      %p163 = scmp.lt.s32.totalorder %s162, 1023
      %s164 = scalar_select %p163, %s162, 1023
      %s165 = smul.addr %s164, 4
      %s166 = scalar_lea.vmem %s0, %s165
      %s167 = smul.u32 64, %s14
      %s168 = smul.u32 64, %s14
      %p169 = scmp.lt.s32.totalorder %s168, 1023
      %s170 = scalar_select %p169, %s168, 1023
      %s171 = smul.addr %s170, 8
      %s172 = scalar_lea.vmem %s3, %s171
      %s173 = smul.u32 64, %s14
      %v174 = vld [vmem:[%s166] sm:$0xf]
      %v175 = vld [vmem:[%s166 + $0x4] sm:$0xf]
      %v176 = vld [vmem:[%s166 + $0x8] sm:$0xf]
      %v177 = vld [vmem:[%s166 + $0xc] sm:$0xf]
      %v178 = vld [vmem:[%s166 + $0x10] sm:$0xf]
      %v179 = vld [vmem:[%s166 + $0x14] sm:$0xf]
      %v180 = vld [vmem:[%s166 + $0x18] sm:$0xf]
      %v181 = vld [vmem:[%s166 + $0x1c] sm:$0xf]
      %v182 = vld [vmem:[%s166 + $0x20] sm:$0xf]
      %v183 = vld [vmem:[%s166 + $0x24] sm:$0xf]
      %v184 = vld [vmem:[%s166 + $0x28] sm:$0xf]
      %v185 = vld [vmem:[%s166 + $0x2c] sm:$0xf]
      %v186 = vld [vmem:[%s166 + $0x30] sm:$0xf]
      %v187 = vld [vmem:[%s166 + $0x34] sm:$0xf]
      %v188 = vld [vmem:[%s166 + $0x38] sm:$0xf]
      %v189 = vld [vmem:[%s166 + $0x3c] sm:$0xf]
      %v190 = vld [vmem:[%s166 + $0x40] sm:$0xf]
      %v191 = vld [vmem:[%s166 + $0x44] sm:$0xf]
      %v192 = vld [vmem:[%s166 + $0x48] sm:$0xf]
      %v193 = vld [vmem:[%s166 + $0x4c] sm:$0xf]
      %v194 = vld [vmem:[%s166 + $0x50] sm:$0xf]
      %v195 = vld [vmem:[%s166 + $0x54] sm:$0xf]
      %v196 = vld [vmem:[%s166 + $0x58] sm:$0xf]
      %v197 = vld [vmem:[%s166 + $0x5c] sm:$0xf]
      %v198 = vld [vmem:[%s166 + $0x60] sm:$0xf]
      %v199 = vld [vmem:[%s166 + $0x64] sm:$0xf]
      %v200 = vld [vmem:[%s166 + $0x68] sm:$0xf]
      %v201 = vld [vmem:[%s166 + $0x6c] sm:$0xf]
      %v202 = vld [vmem:[%s166 + $0x70] sm:$0xf]
      %v203 = vld [vmem:[%s166 + $0x74] sm:$0xf]
      %v204 = vld [vmem:[%s166 + $0x78] sm:$0xf]
      %v205 = vld [vmem:[%s166 + $0x7c] sm:$0xf]
      %v206 = vld [vmem:[%s166 + $0x80] sm:$0xf]
      %v207 = vld [vmem:[%s166 + $0x84] sm:$0xf]
      %v208 = vld [vmem:[%s166 + $0x88] sm:$0xf]
      %v209 = vld [vmem:[%s166 + $0x8c] sm:$0xf]
      %v210 = vld [vmem:[%s166 + $0x90] sm:$0xf]
      %v211 = vld [vmem:[%s166 + $0x94] sm:$0xf]
      %v212 = vld [vmem:[%s166 + $0x98] sm:$0xf]
      %v213 = vld [vmem:[%s166 + $0x9c] sm:$0xf]
      %v214 = vld [vmem:[%s166 + $0xa0] sm:$0xf]
      %v215 = vld [vmem:[%s166 + $0xa4] sm:$0xf]
      %v216 = vld [vmem:[%s166 + $0xa8] sm:$0xf]
      %v217 = vld [vmem:[%s166 + $0xac] sm:$0xf]
      %v218 = vld [vmem:[%s166 + $0xb0] sm:$0xf]
      %v219 = vld [vmem:[%s166 + $0xb4] sm:$0xf]
      %v220 = vld [vmem:[%s166 + $0xb8] sm:$0xf]
      %v221 = vld [vmem:[%s166 + $0xbc] sm:$0xf]
      %v222 = vld [vmem:[%s166 + $0xc0] sm:$0xf]
      %v223 = vld [vmem:[%s166 + $0xc4] sm:$0xf]
      %v224 = vld [vmem:[%s166 + $0xc8] sm:$0xf]
      %v225 = vld [vmem:[%s166 + $0xcc] sm:$0xf]
      %v226 = vld [vmem:[%s166 + $0xd0] sm:$0xf]
      %v227 = vld [vmem:[%s166 + $0xd4] sm:$0xf]
      %v228 = vld [vmem:[%s166 + $0xd8] sm:$0xf]
      %v229 = vld [vmem:[%s166 + $0xdc] sm:$0xf]
      %v230 = vld [vmem:[%s166 + $0xe0] sm:$0xf]
      %v231 = vld [vmem:[%s166 + $0xe4] sm:$0xf]
      %v232 = vld [vmem:[%s166 + $0xe8] sm:$0xf]
      %v233 = vld [vmem:[%s166 + $0xec] sm:$0xf]
      %v234 = vld [vmem:[%s166 + $0xf0] sm:$0xf]
      %v235 = vld [vmem:[%s166 + $0xf4] sm:$0xf]
      %v236 = vld [vmem:[%s166 + $0xf8] sm:$0xf]
      %v237 = vld [vmem:[%s166 + $0xfc] sm:$0xf]
      %v238 = vld [vmem:[%s1] sm:$0xf]
      %v239 = vld [vmem:[%s1 + $0x4] sm:$0xf]
      %v240 = vld [vmem:[%s1 + $0x8] sm:$0xf]
      %v241 = vld [vmem:[%s1 + $0xc] sm:$0xf]
      %v242 = vld [vmem:[%s1 + $0x10] sm:$0xf]
      %v243 = vld [vmem:[%s1 + $0x14] sm:$0xf]
      %v244 = vld [vmem:[%s1 + $0x18] sm:$0xf]
      %v245 = vld [vmem:[%s1 + $0x1c] sm:$0xf]
      %v246 = vld [vmem:[%s1 + $0x20] sm:$0xf]
      %v247 = vld [vmem:[%s1 + $0x24] sm:$0xf]
      %v248 = vld [vmem:[%s1 + $0x28] sm:$0xf]
      %v249 = vld [vmem:[%s1 + $0x2c] sm:$0xf]
      %v250 = vld [vmem:[%s1 + $0x30] sm:$0xf]
      %v251 = vld [vmem:[%s1 + $0x34] sm:$0xf]
      %v252 = vld [vmem:[%s1 + $0x38] sm:$0xf]
      %v253 = vld [vmem:[%s1 + $0x3c] sm:$0xf]
      %v254 = vld [vmem:[%s2] sm:$0x1]
      %v256 = vperm.slane %v254, 0
      %v322 = vunpack.c.l.b16 %v174
      %v323 = vunpack.c.l.b16 %v175
      %v324 = vunpack.c.l.b16 %v176
      %v325 = vunpack.c.l.b16 %v177
      %v326 = vunpack.c.l.b16 %v178
      %v327 = vunpack.c.l.b16 %v179
      %v328 = vunpack.c.l.b16 %v180
      %v329 = vunpack.c.l.b16 %v181
      %v330 = vunpack.c.l.b16 %v182
      %v331 = vunpack.c.l.b16 %v183
      %v332 = vunpack.c.l.b16 %v184
      %v333 = vunpack.c.l.b16 %v185
      %v334 = vunpack.c.l.b16 %v186
      %v335 = vunpack.c.l.b16 %v187
      %v336 = vunpack.c.l.b16 %v188
      %v337 = vunpack.c.l.b16 %v189
      %v338 = vunpack.c.l.b16 %v190
      %v339 = vunpack.c.l.b16 %v191
      %v340 = vunpack.c.l.b16 %v192
      %v341 = vunpack.c.l.b16 %v193
      %v342 = vunpack.c.l.b16 %v194
      %v343 = vunpack.c.l.b16 %v195
      %v344 = vunpack.c.l.b16 %v196
      %v345 = vunpack.c.l.b16 %v197
      %v346 = vunpack.c.l.b16 %v198
      %v347 = vunpack.c.l.b16 %v199
      %v348 = vunpack.c.l.b16 %v200
      %v349 = vunpack.c.l.b16 %v201
      %v350 = vunpack.c.l.b16 %v202
      %v351 = vunpack.c.l.b16 %v203
      %v352 = vunpack.c.l.b16 %v204
      %v353 = vunpack.c.l.b16 %v205
      %v354 = vunpack.c.l.b16 %v206
      %v355 = vunpack.c.l.b16 %v207
      %v356 = vunpack.c.l.b16 %v208
      %v357 = vunpack.c.l.b16 %v209
      %v358 = vunpack.c.l.b16 %v210
      %v359 = vunpack.c.l.b16 %v211
      %v360 = vunpack.c.l.b16 %v212
      %v361 = vunpack.c.l.b16 %v213
      %v362 = vunpack.c.l.b16 %v214
      %v363 = vunpack.c.l.b16 %v215
      %v364 = vunpack.c.l.b16 %v216
      %v365 = vunpack.c.l.b16 %v217
      %v366 = vunpack.c.l.b16 %v218
      %v367 = vunpack.c.l.b16 %v219
      %v368 = vunpack.c.l.b16 %v220
      %v369 = vunpack.c.l.b16 %v221
      %v370 = vunpack.c.l.b16 %v222
      %v371 = vunpack.c.l.b16 %v223
      %v372 = vunpack.c.l.b16 %v224
      %v373 = vunpack.c.l.b16 %v225
      %v374 = vunpack.c.l.b16 %v226
      %v375 = vunpack.c.l.b16 %v227
      %v376 = vunpack.c.l.b16 %v228
      %v377 = vunpack.c.l.b16 %v229
      %v378 = vunpack.c.l.b16 %v230
      %v379 = vunpack.c.l.b16 %v231
      %v380 = vunpack.c.l.b16 %v232
      %v381 = vunpack.c.l.b16 %v233
      %v382 = vunpack.c.l.b16 %v234
      %v383 = vunpack.c.l.b16 %v235
      %v384 = vunpack.c.l.b16 %v236
      %v385 = vunpack.c.l.b16 %v237
      %v386 = vpack.c.b16 %v323, %v322
      %v387 = vpack.c.b16 %v325, %v324
      %v388 = vpack.c.b16 %v327, %v326
      %v389 = vpack.c.b16 %v329, %v328
      %v390 = vpack.c.b16 %v331, %v330
      %v391 = vpack.c.b16 %v333, %v332
      %v392 = vpack.c.b16 %v335, %v334
      %v393 = vpack.c.b16 %v337, %v336
      %v394 = vpack.c.b16 %v339, %v338
      %v395 = vpack.c.b16 %v341, %v340
      %v396 = vpack.c.b16 %v343, %v342
      %v397 = vpack.c.b16 %v345, %v344
      %v398 = vpack.c.b16 %v347, %v346
      %v399 = vpack.c.b16 %v349, %v348
      %v400 = vpack.c.b16 %v351, %v350
      %v401 = vpack.c.b16 %v353, %v352
      %v402 = vpack.c.b16 %v355, %v354
      %v403 = vpack.c.b16 %v357, %v356
      %v404 = vpack.c.b16 %v359, %v358
      %v405 = vpack.c.b16 %v361, %v360
      %v406 = vpack.c.b16 %v363, %v362
      %v407 = vpack.c.b16 %v365, %v364
      %v408 = vpack.c.b16 %v367, %v366
      %v409 = vpack.c.b16 %v369, %v368
      %v410 = vpack.c.b16 %v371, %v370
      %v411 = vpack.c.b16 %v373, %v372
      %v412 = vpack.c.b16 %v375, %v374
      %v413 = vpack.c.b16 %v377, %v376
      %v414 = vpack.c.b16 %v379, %v378
      %v415 = vpack.c.b16 %v381, %v380
      %v416 = vpack.c.b16 %v383, %v382
      %v417 = vpack.c.b16 %v385, %v384
      %v466 = vunpack.c.l.b16 %v238
      %v467 = vunpack.c.l.b16 %v239
      %v468 = vunpack.c.l.b16 %v240
      %v469 = vunpack.c.l.b16 %v241
      %v470 = vunpack.c.l.b16 %v242
      %v471 = vunpack.c.l.b16 %v243
      %v472 = vunpack.c.l.b16 %v244
      %v473 = vunpack.c.l.b16 %v245
      %v474 = vunpack.c.l.b16 %v246
      %v475 = vunpack.c.l.b16 %v247
      %v476 = vunpack.c.l.b16 %v248
      %v477 = vunpack.c.l.b16 %v249
      %v478 = vunpack.c.l.b16 %v250
      %v479 = vunpack.c.l.b16 %v251
      %v480 = vunpack.c.l.b16 %v252
      %v481 = vunpack.c.l.b16 %v253
      %v482 = vpack.c.b16 %v467, %v466
      %v483 = vpack.c.b16 %v469, %v468
      %v484 = vpack.c.b16 %v471, %v470
      %v485 = vpack.c.b16 %v473, %v472
      %v486 = vpack.c.b16 %v475, %v474
      %v487 = vpack.c.b16 %v477, %v476
      %v488 = vpack.c.b16 %v479, %v478
      %v489 = vpack.c.b16 %v481, %v480
      %498 = vmatpush.bf16.msra.mxu0 %v489
      %499 = vmatpush.bf16.msra.mxu0 %v488
      %500 = vmatpush.bf16.msra.mxu0 %v487
      %501 = vmatpush.bf16.msra.mxu0 %v486
      %502 = vmatpush.bf16.msra.mxu0 %v485
      %503 = vmatpush.bf16.msra.mxu0 %v484
      %504 = vmatpush.bf16.msra.mxu0 %v483
      %505 = vmatpush.bf16.msra.mxu0 %v482
      %506 = vmatmul.bf16.gmra.mxu0 %v386
      %v507 = vpop.f32.mrf.mxu0
      %v508 = vadd.f32 %v256, %v507
      %v509 = vpop.f32.mrf.mxu0
      %v510 = vadd.f32 %v256, %v509
      %511 = vmatmul.bf16.gmra.mxu0 %v387
      %v512 = vpop.f32.mrf.mxu0
      %v513 = vadd.f32 %v256, %v512
      %v514 = vpop.f32.mrf.mxu0
      %v515 = vadd.f32 %v256, %v514
      %516 = vmatmul.bf16.gmra.mxu0 %v388
      %v517 = vpop.f32.mrf.mxu0
      %v518 = vadd.f32 %v256, %v517
      %v519 = vpop.f32.mrf.mxu0
      %v520 = vadd.f32 %v256, %v519
      %521 = vmatmul.bf16.gmra.mxu0 %v389
      %v522 = vpop.f32.mrf.mxu0
      %v523 = vadd.f32 %v256, %v522
      %v524 = vpop.f32.mrf.mxu0
      %v525 = vadd.f32 %v256, %v524
      %526 = vmatmul.bf16.gmra.mxu0 %v390
      %v527 = vpop.f32.mrf.mxu0
      %v528 = vadd.f32 %v256, %v527
      %v529 = vpop.f32.mrf.mxu0
      %v530 = vadd.f32 %v256, %v529
      %531 = vmatmul.bf16.gmra.mxu0 %v391
      %v532 = vpop.f32.mrf.mxu0
      %v533 = vadd.f32 %v256, %v532
      %v534 = vpop.f32.mrf.mxu0
      %v535 = vadd.f32 %v256, %v534
      %536 = vmatmul.bf16.gmra.mxu0 %v392
      %v537 = vpop.f32.mrf.mxu0
      %v538 = vadd.f32 %v256, %v537
      %v539 = vpop.f32.mrf.mxu0
      %v540 = vadd.f32 %v256, %v539
      %541 = vmatmul.bf16.gmra.mxu0 %v393
      %v542 = vpop.f32.mrf.mxu0
      %v543 = vadd.f32 %v256, %v542
      %v544 = vpop.f32.mrf.mxu0
      %v545 = vadd.f32 %v256, %v544
      %546 = vmatmul.bf16.gmra.mxu0 %v394
      %v547 = vpop.f32.mrf.mxu0
      %v548 = vadd.f32 %v256, %v547
      %v549 = vpop.f32.mrf.mxu0
      %v550 = vadd.f32 %v256, %v549
      %551 = vmatmul.bf16.gmra.mxu0 %v395
      %v552 = vpop.f32.mrf.mxu0
      %v553 = vadd.f32 %v256, %v552
      %v554 = vpop.f32.mrf.mxu0
      %v555 = vadd.f32 %v256, %v554
      %556 = vmatmul.bf16.gmra.mxu0 %v396
      %v557 = vpop.f32.mrf.mxu0
      %v558 = vadd.f32 %v256, %v557
      %v559 = vpop.f32.mrf.mxu0
      %v560 = vadd.f32 %v256, %v559
      %561 = vmatmul.bf16.gmra.mxu0 %v397
      %v562 = vpop.f32.mrf.mxu0
      %v563 = vadd.f32 %v256, %v562
      %v564 = vpop.f32.mrf.mxu0
      %v565 = vadd.f32 %v256, %v564
      %566 = vmatmul.bf16.gmra.mxu0 %v398
      %v567 = vpop.f32.mrf.mxu0
      %v568 = vadd.f32 %v256, %v567
      %v569 = vpop.f32.mrf.mxu0
      %v570 = vadd.f32 %v256, %v569
      %571 = vmatmul.bf16.gmra.mxu0 %v399
      %v572 = vpop.f32.mrf.mxu0
      %v573 = vadd.f32 %v256, %v572
      %v574 = vpop.f32.mrf.mxu0
      %v575 = vadd.f32 %v256, %v574
      %576 = vmatmul.bf16.gmra.mxu0 %v400
      %v577 = vpop.f32.mrf.mxu0
      %v578 = vadd.f32 %v256, %v577
      %v579 = vpop.f32.mrf.mxu0
      %v580 = vadd.f32 %v256, %v579
      %581 = vmatmul.bf16.gmra.mxu0 %v401
      %v582 = vpop.f32.mrf.mxu0
      %v583 = vadd.f32 %v256, %v582
      %v584 = vpop.f32.mrf.mxu0
      %v585 = vadd.f32 %v256, %v584
      %586 = vmatmul.bf16.gmra.mxu0 %v402
      %v587 = vpop.f32.mrf.mxu0
      %v588 = vadd.f32 %v256, %v587
      %v589 = vpop.f32.mrf.mxu0
      %v590 = vadd.f32 %v256, %v589
      %591 = vmatmul.bf16.gmra.mxu0 %v403
      %v592 = vpop.f32.mrf.mxu0
      %v593 = vadd.f32 %v256, %v592
      %v594 = vpop.f32.mrf.mxu0
      %v595 = vadd.f32 %v256, %v594
      %596 = vmatmul.bf16.gmra.mxu0 %v404
      %v597 = vpop.f32.mrf.mxu0
      %v598 = vadd.f32 %v256, %v597
      %v599 = vpop.f32.mrf.mxu0
      %v600 = vadd.f32 %v256, %v599
      %601 = vmatmul.bf16.gmra.mxu0 %v405
      %v602 = vpop.f32.mrf.mxu0
      %v603 = vadd.f32 %v256, %v602
      %v604 = vpop.f32.mrf.mxu0
      %v605 = vadd.f32 %v256, %v604
      %606 = vmatmul.bf16.gmra.mxu0 %v406
      %v607 = vpop.f32.mrf.mxu0
      %v608 = vadd.f32 %v256, %v607
      %v609 = vpop.f32.mrf.mxu0
      %v610 = vadd.f32 %v256, %v609
      %611 = vmatmul.bf16.gmra.mxu0 %v407
      %v612 = vpop.f32.mrf.mxu0
      %v613 = vadd.f32 %v256, %v612
      %v614 = vpop.f32.mrf.mxu0
      %v615 = vadd.f32 %v256, %v614
      %616 = vmatmul.bf16.gmra.mxu0 %v408
      %v617 = vpop.f32.mrf.mxu0
      %v618 = vadd.f32 %v256, %v617
      %v619 = vpop.f32.mrf.mxu0
      %v620 = vadd.f32 %v256, %v619
      %621 = vmatmul.bf16.gmra.mxu0 %v409
      %v622 = vpop.f32.mrf.mxu0
      %v623 = vadd.f32 %v256, %v622
      %v624 = vpop.f32.mrf.mxu0
      %v625 = vadd.f32 %v256, %v624
      %626 = vmatmul.bf16.gmra.mxu0 %v410
      %v627 = vpop.f32.mrf.mxu0
      %v628 = vadd.f32 %v256, %v627
      %v629 = vpop.f32.mrf.mxu0
      %v630 = vadd.f32 %v256, %v629
      %631 = vmatmul.bf16.gmra.mxu0 %v411
      %v632 = vpop.f32.mrf.mxu0
      %v633 = vadd.f32 %v256, %v632
      %v634 = vpop.f32.mrf.mxu0
      %v635 = vadd.f32 %v256, %v634
      %636 = vmatmul.bf16.gmra.mxu0 %v412
      %v637 = vpop.f32.mrf.mxu0
      %v638 = vadd.f32 %v256, %v637
      %v639 = vpop.f32.mrf.mxu0
      %v640 = vadd.f32 %v256, %v639
      %641 = vmatmul.bf16.gmra.mxu0 %v413
      %v642 = vpop.f32.mrf.mxu0
      %v643 = vadd.f32 %v256, %v642
      %v644 = vpop.f32.mrf.mxu0
      %v645 = vadd.f32 %v256, %v644
      %646 = vmatmul.bf16.gmra.mxu0 %v414
      %v647 = vpop.f32.mrf.mxu0
      %v648 = vadd.f32 %v256, %v647
      %v649 = vpop.f32.mrf.mxu0
      %v650 = vadd.f32 %v256, %v649
      %651 = vmatmul.bf16.gmra.mxu0 %v415
      %v652 = vpop.f32.mrf.mxu0
      %v653 = vadd.f32 %v256, %v652
      %v654 = vpop.f32.mrf.mxu0
      %v655 = vadd.f32 %v256, %v654
      %656 = vmatmul.bf16.gmra.mxu0 %v416
      %v657 = vpop.f32.mrf.mxu0
      %v658 = vadd.f32 %v256, %v657
      %v659 = vpop.f32.mrf.mxu0
      %v660 = vadd.f32 %v256, %v659
      %661 = vmatmul.bf16.gmra.mxu0 %v417
      %v662 = vpop.f32.mrf.mxu0
      %v663 = vadd.f32 %v256, %v662
      %v664 = vpop.f32.mrf.mxu0
      %v665 = vadd.f32 %v256, %v664
      %666 = vdwg.mxu0
      %v667 = vtanh.pop %v508
      %v668 = vtanh.pop %v510
      %v669 = vtanh.pop %v513
      %v670 = vtanh.pop %v515
      %v671 = vtanh.pop %v518
      %v672 = vtanh.pop %v520
      %v673 = vtanh.pop %v523
      %v674 = vtanh.pop %v525
      %v675 = vtanh.pop %v528
      %v676 = vtanh.pop %v530
      %v677 = vtanh.pop %v533
      %v678 = vtanh.pop %v535
      %v679 = vtanh.pop %v538
      %v680 = vtanh.pop %v540
      %v681 = vtanh.pop %v543
      %v682 = vtanh.pop %v545
      %v683 = vtanh.pop %v548
      %v684 = vtanh.pop %v550
      %v685 = vtanh.pop %v553
      %v686 = vtanh.pop %v555
      %v687 = vtanh.pop %v558
      %v688 = vtanh.pop %v560
      %v689 = vtanh.pop %v563
      %v690 = vtanh.pop %v565
      %v691 = vtanh.pop %v568
      %v692 = vtanh.pop %v570
      %v693 = vtanh.pop %v573
      %v694 = vtanh.pop %v575
      %v695 = vtanh.pop %v578
      %v696 = vtanh.pop %v580
      %v697 = vtanh.pop %v583
      %v698 = vtanh.pop %v585
      %v699 = vtanh.pop %v588
      %v700 = vtanh.pop %v590
      %v701 = vtanh.pop %v593
      %v702 = vtanh.pop %v595
      %v703 = vtanh.pop %v598
      %v704 = vtanh.pop %v600
      %v705 = vtanh.pop %v603
      %v706 = vtanh.pop %v605
      %v707 = vtanh.pop %v608
      %v708 = vtanh.pop %v610
      %v709 = vtanh.pop %v613
      %v710 = vtanh.pop %v615
      %v711 = vtanh.pop %v618
      %v712 = vtanh.pop %v620
      %v713 = vtanh.pop %v623
      %v714 = vtanh.pop %v625
      %v715 = vtanh.pop %v628
      %v716 = vtanh.pop %v630
      %v717 = vtanh.pop %v633
      %v718 = vtanh.pop %v635
      %v719 = vtanh.pop %v638
      %v720 = vtanh.pop %v640
      %v721 = vtanh.pop %v643
      %v722 = vtanh.pop %v645
      %v723 = vtanh.pop %v648
      %v724 = vtanh.pop %v650
      %v725 = vtanh.pop %v653
      %v726 = vtanh.pop %v655
      %v727 = vtanh.pop %v658
      %v728 = vtanh.pop %v660
      %v729 = vtanh.pop %v663
      %v730 = vtanh.pop %v665
      %731 = vst [vmem:[%s172] sm:$0xff] %v667
      %732 = vst [vmem:[%s172 + $0x8] sm:$0xff] %v668
      %733 = vst [vmem:[%s172 + $0x10] sm:$0xff] %v669
      %734 = vst [vmem:[%s172 + $0x18] sm:$0xff] %v670
      %735 = vst [vmem:[%s172 + $0x20] sm:$0xff] %v671
      %736 = vst [vmem:[%s172 + $0x28] sm:$0xff] %v672
      %737 = vst [vmem:[%s172 + $0x30] sm:$0xff] %v673
      %738 = vst [vmem:[%s172 + $0x38] sm:$0xff] %v674
      %739 = vst [vmem:[%s172 + $0x40] sm:$0xff] %v675
      %740 = vst [vmem:[%s172 + $0x48] sm:$0xff] %v676
      %741 = vst [vmem:[%s172 + $0x50] sm:$0xff] %v677
      %742 = vst [vmem:[%s172 + $0x58] sm:$0xff] %v678
      %743 = vst [vmem:[%s172 + $0x60] sm:$0xff] %v679
      %744 = vst [vmem:[%s172 + $0x68] sm:$0xff] %v680
      %745 = vst [vmem:[%s172 + $0x70] sm:$0xff] %v681
      %746 = vst [vmem:[%s172 + $0x78] sm:$0xff] %v682
      %747 = vst [vmem:[%s172 + $0x80] sm:$0xff] %v683
      %748 = vst [vmem:[%s172 + $0x88] sm:$0xff] %v684
      %749 = vst [vmem:[%s172 + $0x90] sm:$0xff] %v685
      %750 = vst [vmem:[%s172 + $0x98] sm:$0xff] %v686
      %751 = vst [vmem:[%s172 + $0xa0] sm:$0xff] %v687
      %752 = vst [vmem:[%s172 + $0xa8] sm:$0xff] %v688
      %753 = vst [vmem:[%s172 + $0xb0] sm:$0xff] %v689
      %754 = vst [vmem:[%s172 + $0xb8] sm:$0xff] %v690
      %755 = vst [vmem:[%s172 + $0xc0] sm:$0xff] %v691
      %756 = vst [vmem:[%s172 + $0xc8] sm:$0xff] %v692
      %757 = vst [vmem:[%s172 + $0xd0] sm:$0xff] %v693
      %758 = vst [vmem:[%s172 + $0xd8] sm:$0xff] %v694
      %759 = vst [vmem:[%s172 + $0xe0] sm:$0xff] %v695
      %760 = vst [vmem:[%s172 + $0xe8] sm:$0xff] %v696
      %761 = vst [vmem:[%s172 + $0xf0] sm:$0xff] %v697
      %762 = vst [vmem:[%s172 + $0xf8] sm:$0xff] %v698
      %763 = vst [vmem:[%s172 + $0x100] sm:$0xff] %v699
      %764 = vst [vmem:[%s172 + $0x108] sm:$0xff] %v700
      %765 = vst [vmem:[%s172 + $0x110] sm:$0xff] %v701
      %766 = vst [vmem:[%s172 + $0x118] sm:$0xff] %v702
      %767 = vst [vmem:[%s172 + $0x120] sm:$0xff] %v703
      %768 = vst [vmem:[%s172 + $0x128] sm:$0xff] %v704
      %769 = vst [vmem:[%s172 + $0x130] sm:$0xff] %v705
      %770 = vst [vmem:[%s172 + $0x138] sm:$0xff] %v706
      %771 = vst [vmem:[%s172 + $0x140] sm:$0xff] %v707
      %772 = vst [vmem:[%s172 + $0x148] sm:$0xff] %v708
      %773 = vst [vmem:[%s172 + $0x150] sm:$0xff] %v709
      %774 = vst [vmem:[%s172 + $0x158] sm:$0xff] %v710
      %775 = vst [vmem:[%s172 + $0x160] sm:$0xff] %v711
      %776 = vst [vmem:[%s172 + $0x168] sm:$0xff] %v712
      %777 = vst [vmem:[%s172 + $0x170] sm:$0xff] %v713
      %778 = vst [vmem:[%s172 + $0x178] sm:$0xff] %v714
      %779 = vst [vmem:[%s172 + $0x180] sm:$0xff] %v715
      %780 = vst [vmem:[%s172 + $0x188] sm:$0xff] %v716
      %781 = vst [vmem:[%s172 + $0x190] sm:$0xff] %v717
      %782 = vst [vmem:[%s172 + $0x198] sm:$0xff] %v718
      %783 = vst [vmem:[%s172 + $0x1a0] sm:$0xff] %v719
      %784 = vst [vmem:[%s172 + $0x1a8] sm:$0xff] %v720
      %785 = vst [vmem:[%s172 + $0x1b0] sm:$0xff] %v721
      %786 = vst [vmem:[%s172 + $0x1b8] sm:$0xff] %v722
      %787 = vst [vmem:[%s172 + $0x1c0] sm:$0xff] %v723
      %788 = vst [vmem:[%s172 + $0x1c8] sm:$0xff] %v724
      %789 = vst [vmem:[%s172 + $0x1d0] sm:$0xff] %v725
      %790 = vst [vmem:[%s172 + $0x1d8] sm:$0xff] %v726
      %791 = vst [vmem:[%s172 + $0x1e0] sm:$0xff] %v727
      %792 = vst [vmem:[%s172 + $0x1e8] sm:$0xff] %v728
      %793 = vst [vmem:[%s172 + $0x1f0] sm:$0xff] %v729
      %794 = vst [vmem:[%s172 + $0x1f8] sm:$0xff] %v730
      %s795 = smul.u32 64, %s14
      %p796 = scmp.lt.s32.totalorder %s795, 1023
      %s797 = scalar_select %p796, %s795, 1023
      %s798 = smul.addr %s797, 8
      %s799 = scalar_lea.vmem %s3, %s798
      // Predicated region
      $region33: #{netG_forward.15} parent=31 // pred_check
        %p800 = pneg %p100
      $region34: #{netG_forward.15} parent=31 // pred_check_branch
        %802 = sbr.rel (%p800) target = $region36
      $region35: #{netG_forward.15} parent=31 // pred_region
        %s803 = smul.u32 64, %s14
      $region36: #{netG_forward.15} parent=31 // pred_fallthru
        _
    $region32: #{netG_forward.15} parent=5 // pred_fallthru
      _
    %p804 = scmp.le.s32.totalorder 2, %s9
    // Predicated region
    $region37: #{netG_forward.15} parent=5 // pred_check
      %p805 = pneg %p804
    $region38: #{netG_forward.15} parent=5 // pred_check_branch
      %807 = sbr.rel (%p805) target = $region40
    $region39: #{netG_forward.15} parent=5 // pred_region
      %s808 = ssub.s32 %s9, 2
      // Predicated region
      $region41: #{netG_forward.15} parent=39 // pred_check
        %p809 = pneg %p106
      $region42: #{netG_forward.15} parent=39 // pred_check_branch
        %811 = sbr.rel (%p809) target = $region44
      $region43: #{netG_forward.15} parent=39 // pred_region
        %s812 = smul.u32 64, %s15
        %p813 = scmp.lt.s32.totalorder %s812, 1023
        %s814 = scalar_select %p813, %s812, 1023
        %s815 = smul.addr %s814, 8
        %s816 = scalar_lea.vmem %s3, %s815
      $region44: #{netG_forward.15} parent=39 // pred_fallthru
        _
    $region40: #{netG_forward.15} parent=5 // pred_fallthru
      _
  $region6: #{netG_forward.15} parent=0 // loop_footer
    %s13 = sadd.s32 1, %s9
  $region7: #{netG_forward.15} parent=0 // loop_footer_branch
    %8 = sbr.rel target = $region3
  $region8: #{netG_forward.15} parent=0 // loop_exit
    _

</llo_original>
